<compile_context>
chip_gen: v7x
topology: tpu7x:2x2x1
jax: 0.10.0
libtpu: 0.0.40
codegen_flags: <defaults>
</compile_context>

<pallas_src>
import functools

import numpy as np

import jax
import jax.numpy as jnp
from jax import lax
from jax.experimental import pallas as pl
from jax.experimental.pallas import tpu as pltpu

BN_EPS = 1e-5


# ----------------------- trace-time constant builders ------------------------

def _tap_masks(B, H, W):
    """(B*H*W, 9) f32: 1.0 where tap (di, dj) of a 3x3 SAME conv is in-bounds."""
    M = H * W
    r = np.arange(B * M)
    i = (r % M) // W
    j = r % W
    cols = []
    for di in range(3):
        for dj in range(3):
            ii = i + di - 1
            jj = j + dj - 1
            cols.append((ii >= 0) & (ii < H) & (jj >= 0) & (jj < W))
    return np.stack(cols, axis=1).astype(np.float32)


def _pool_sel(B, H, W):
    """(B*H/2*W/2, B*H*W) 0/1 matrix selecting the (even-row, even-col) entries."""
    M = H * W
    P = (H // 2) * (W // 2)
    q = np.arange(B * P)
    b = q // P
    pi = (q % P) // (W // 2)
    pj = q % (W // 2)
    src = b * M + (2 * pi) * W + 2 * pj
    sel = np.zeros((B * P, B * M), np.float32)
    sel[q, src] = 1.0
    return sel


def _avg_mat(B, M):
    """(B, B*M) matrix computing the per-image spatial mean."""
    a = np.zeros((B, B * M), np.float32)
    for b in range(B):
        a[b, b * M:(b + 1) * M] = 1.0 / M
    return a


def _build_constants(B, H, W):
    """Tap masks + (pool-selection / averaging) matrices, consolidated."""
    masks = np.concatenate(
        [_tap_masks(B, H, W),
         _tap_masks(B, H // 2, W // 2),
         _tap_masks(B, H // 4, W // 4)], axis=0)            # (BM1+BM2+BM3, 9)
    BM1 = B * H * W
    BM2 = BM1 // 4
    BM3 = BM1 // 16
    BP1, BP2 = BM1 // 4, BM2 // 4
    sels = np.zeros((BP1 + BP2 + B, BM1), np.float32)
    sels[0:BP1, :] = _pool_sel(B, H, W)
    sels[BP1:BP1 + BP2, 0:BM2] = _pool_sel(B, H // 2, W // 2)
    sels[BP1 + BP2:, 0:BM3] = _avg_mat(B, BM3 // B)
    return jnp.asarray(masks), jnp.asarray(sels)


# ----------------------------- in-kernel helpers -----------------------------

def _conv3x3(a, mask9, col_ref, w_ref, width):
    """3x3 'SAME' conv of a row-major (B*H*W, Cin) tile as ONE MXU matmul.

    Each tap is a sublane roll of `a`, masked with its precomputed boundary
    column and stored into its lane slice of the VMEM im2col scratch
    (B*H*W, 9*Cin); the conv is then a single (M, 9*Cin) @ (9*Cin, Cout)
    matmul.  `width` is the per-image row width; rolls wrap across row / image
    boundaries, but those positions are exactly the masked ones.
    """
    BM, Cin = a.shape
    for di in range(3):
        for dj in range(3):
            k = di * 3 + dj
            off = (di - 1) * width + (dj - 1)
            t = a if off == 0 else pltpu.roll(a, shift=(-off) % BM, axis=0)
            if k != 4:                         # centre tap is always in-bounds
                t = t * mask9[:, k:k + 1]
            col_ref[:, k * Cin:(k + 1) * Cin] = t
    return jnp.dot(col_ref[...], w_ref[...], preferred_element_type=jnp.float32)


def _maxpool2x2(y, sel, width):
    """2x2 / stride-2 max-pool of a row-major (B*H*W, C) tile.

    Two rolls place each 2x2 window max at its top-left entry; the precomputed
    0/1 `sel` matrix compacts the (even-row, even-col) entries with one MXU
    matmul.  Wrapped (cross-row / cross-image) entries are discarded because
    the compaction only reads even-index positions.
    """
    BM = y.shape[0]
    m = jnp.maximum(y, pltpu.roll(y, shift=BM - 1, axis=0))       # column pair
    m = jnp.maximum(m, pltpu.roll(m, shift=BM - width, axis=0))   # row pair
    return jnp.dot(sel, m, preferred_element_type=jnp.float32)


# ---------------------------------- kernel -----------------------------------

def _fused_cnn_kernel(x_ref, w1_ref, w2_ref, w3_ref, wc_ref, vec_ref, msk_ref,
                      sel_ref, out_ref, col1_ref, col2_ref, col3_ref,
                      *, B, H, W, C1, C2, C3, NCLS):
    M1 = H * W
    BM1, BM2, BM3 = B * M1, B * M1 // 4, B * M1 // 16
    BP1, BP2 = BM1 // 4, BM2 // 4

    # Consolidated per-channel vectors: [b1, t1/s1, b2, t2/s2, b3, t3@wc+bc].
    o = 0
    b1 = vec_ref[:, o:o + C1]; o += C1
    t1 = vec_ref[:, o:o + C1]; o += C1        # BN1 shift (s1 folded into w2)
    b2 = vec_ref[:, o:o + C2]; o += C2
    t2 = vec_ref[:, o:o + C2]; o += C2        # BN2 shift (s2 folded into w3)
    b3 = vec_ref[:, o:o + C3]; o += C3
    bc = vec_ref[:, o:o + NCLS]               # classifier bias (BN3 folded)

    # ---- block 1: conv(3->C1) + bias + ReLU, 2x2 maxpool, + BN shift -------
    y = _conv3x3(x_ref[...], msk_ref[0:BM1, :], col1_ref, w1_ref, W)
    y = jnp.maximum(y + b1, 0.0)
    y = _maxpool2x2(y, sel_ref[0:BP1, :], W) + t1
    # ---- block 2: conv(C1->C2) + bias + ReLU, 2x2 maxpool, + BN shift ------
    y = _conv3x3(y, msk_ref[BM1:BM1 + BM2, :], col2_ref, w2_ref, W // 2)
    y = jnp.maximum(y + b2, 0.0)
    y = _maxpool2x2(y, sel_ref[BP1:BP1 + BP2, 0:BM2], W // 2) + t2
    # ---- block 3: conv(C2->C3) + bias + ReLU --------------------------------
    y = _conv3x3(y, msk_ref[BM1 + BM2:BM1 + BM2 + BM3, :], col3_ref, w3_ref,
                 W // 4)
    y = jnp.maximum(y + b3, 0.0)
    # ---- per-image global average pool + classifier (BN3 folded) ------------
    avg = sel_ref[BP1 + BP2:BP1 + BP2 + B, 0:BM3]            # rows of 1/M3
    pooled = jnp.dot(avg, y, preferred_element_type=jnp.float32)      # (B, C3)
    logits = jnp.dot(pooled, wc_ref[...],
                     preferred_element_type=jnp.float32) + bc
    out_ref[0] = logits.astype(out_ref.dtype)                # one (B, 10) store


# ---------------------------------- wrapper -----------------------------------

def forward(x_nchw, p, *, images_per_step=None):
    """NCHW entry point (PyTorch parity).

    The NCHW->NHWC relayout below is the only op outside the fused kernel;
    callers that already hold NHWC data should call forward_nhwc directly.
    """
    x = jnp.transpose(x_nchw, (0, 2, 3, 1))
    return forward_nhwc(x, p, images_per_step=images_per_step)


def forward_nhwc(x_nhwc, p, *, images_per_step=None):
    x = x_nhwc.astype(jnp.float32)
    N, H, W, Cin = x.shape
    if H % 4 != 0 or W % 4 != 0:
        raise ValueError(f"H and W must be divisible by 4, got {(H, W)}")
    if Cin != p["w1"].shape[2]:
        raise ValueError("input channel count does not match conv1 weights")
    # One grid step processes B images stacked along the sublane axis.  For a
    # small batch do everything in a single step; on v7x use images_per_step =
    # N // 2 so both TensorCores get a "parallel" step.
    B = N if images_per_step is None else int(images_per_step)
    if N % B != 0:
        raise ValueError(f"batch {N} not divisible by images_per_step {B}")
    num_steps = N // B

    C1 = p["w1"].shape[3]
    C2 = p["w2"].shape[3]
    C3 = p["w3"].shape[3]
    NCLS = p["wc"].shape[1]

    # ---- fold BatchNorm affine into the neighbouring matmuls (trace time) ----
    # s1 -> conv2 weights, s2 -> conv3 weights (exact for scale > 0, true for
    # the default gamma=1 stats), s3/t3 -> classifier weights/bias.
    s1, t1, s2, t2, s3, t3 = (p["s1"], p["t1"], p["s2"], p["t2"],
                              p["s3"], p["t3"])
    w1f = p["w1"].reshape(9 * Cin, C1)
    w2f = (p["w2"] * s1.reshape(1, 1, C1, 1)).reshape(9 * C1, C2)
    w3f = (p["w3"] * s2.reshape(1, 1, C2, 1)).reshape(9 * C2, C3)
    wcf = s3.reshape(C3, 1) * p["wc"]
    bcf = t3 @ p["wc"] + p["bc"]
    vec = jnp.concatenate([p["b1"], t1 / s1, p["b2"], t2 / s2, p["b3"], bcf],
                          axis=1)                            # (1, 2C1+2C2+C3+10)

    # ---- trace-time constants: tap masks, pool selections, average matrix ----
    masks, sels = _build_constants(B, H, W)

    x_flat = x.reshape(N * H * W, Cin)

    kernel = functools.partial(_fused_cnn_kernel, B=B, H=H, W=W,
                               C1=C1, C2=C2, C3=C3, NCLS=NCLS)

    def const_spec(a):
        return pl.BlockSpec(tuple(a.shape), lambda g: (0, 0))

    out = pl.pallas_call(
        kernel,
        out_shape=jax.ShapeDtypeStruct((num_steps, B, NCLS), jnp.float32),
        grid=(num_steps,),
        in_specs=[
            pl.BlockSpec((B * H * W, Cin), lambda g: (g, 0)),
            const_spec(w1f), const_spec(w2f), const_spec(w3f), const_spec(wcf),
            const_spec(vec), const_spec(masks), const_spec(sels),
        ],
        out_specs=pl.BlockSpec((1, B, NCLS), lambda g: (g, 0, 0)),
        scratch_shapes=[
            pltpu.VMEM((B * H * W, 9 * Cin), jnp.float32),        # im2col, blk1
            pltpu.VMEM((B * H * W // 4, 9 * C1), jnp.float32),    # im2col, blk2
            pltpu.VMEM((B * H * W // 16, 9 * C2), jnp.float32),   # im2col, blk3
        ],
        compiler_params=pltpu.CompilerParams(
            dimension_semantics=("parallel",),
            vmem_limit_bytes=32 * 1024 * 1024),
    )(x_flat, w1f, w2f, w3f, wcf, vec, masks, sels)
    return out.reshape(N, NCLS)


# --------------------------------- parameters ---------------------------------

def init_params(key):
    ks = jax.random.split(key, 8)

    def conv_w(k, cin, cout):
        return 0.1 * jax.random.normal(k, (3, 3, cin, cout), jnp.float32)

    p = {
        "w1": conv_w(ks[0], 3, 32),
        "b1": 0.1 * jax.random.normal(ks[1], (1, 32), jnp.float32),
        "w2": conv_w(ks[2], 32, 64),
        "b2": 0.1 * jax.random.normal(ks[3], (1, 64), jnp.float32),
        "w3": conv_w(ks[4], 64, 128),
        "b3": 0.1 * jax.random.normal(ks[5], (1, 128), jnp.float32),
        "wc": 0.1 * jax.random.normal(ks[6], (128, 10), jnp.float32),
        "bc": 0.1 * jax.random.normal(ks[7], (1, 10), jnp.float32),
    }
    # BatchNorm params (PyTorch defaults): gamma=1, beta=0, running mean/var 0/1.
    # TODO(synk): train-mode BN (batch statistics) is not implemented; inference
    # running-stats affine is used (matches the reference below).
    for i, c in zip((1, 2, 3), (32, 64, 128)):
        gamma = jnp.ones((1, c), jnp.float32)
        beta = jnp.zeros((1, c), jnp.float32)
        mean = jnp.zeros((1, c), jnp.float32)
        var = jnp.ones((1, c), jnp.float32)
        scale = gamma * lax.rsqrt(var + BN_EPS)
        p[f"s{i}"] = scale
        p[f"t{i}"] = beta - mean * scale
    return p


# ----------------------------- pure-JAX reference ------------------------------

def reference_forward(x_nchw, p):
    x = jnp.transpose(x_nchw, (0, 2, 3, 1)).astype(jnp.float32)

    def block(x, w, b, s, t):
        y = lax.conv_general_dilated(
            x, w, (1, 1), "SAME",
            dimension_numbers=("NHWC", "HWIO", "NHWC"),
            precision=lax.Precision.HIGHEST)
        y = jnp.maximum(y + b.reshape(1, 1, 1, -1), 0.0)
        return y * s.reshape(1, 1, 1, -1) + t.reshape(1, 1, 1, -1)

    def pool(y):
        N, H, W, C = y.shape
        return y.reshape(N, H // 2, 2, W // 2, 2, C).max(axis=(2, 4))

    y = pool(block(x, p["w1"], p["b1"], p["s1"], p["t1"]))
    y = pool(block(y, p["w2"], p["b2"], p["s2"], p["t2"]))
    y = block(y, p["w3"], p["b3"], p["s3"], p["t3"])
    pooled = y.mean(axis=(1, 2))
    return jnp.dot(pooled, p["wc"], precision=lax.Precision.HIGHEST) + p["bc"]


# ------------------------------------ main -------------------------------------

if __name__ == "__main__":
    key = jax.random.PRNGKey(0)
    pkey, xkey = jax.random.split(key)
    params = init_params(pkey)
    # NCHW input like PyTorch: batch=2, channels=3, 16x16 spatial.
    x = jax.random.normal(xkey, (2, 3, 16, 16), jnp.float32)

    out = jax.block_until_ready(jax.jit(forward)(x, params))
    ref = reference_forward(x, params)

    assert out.shape == (2, 10), out.shape
    max_diff = float(jnp.max(jnp.abs(out - ref)))
    if not bool(jnp.allclose(out, ref, rtol=1e-3, atol=1e-3)):
        raise AssertionError(f"mismatch vs reference: max|diff|={max_diff}")
    print("KERNEL_OK")
</pallas_src>

<mosaic_0001>
module attributes {stable_mosaic.version = 11 : i64} {
  func.func @_fused_cnn_kernel(%arg0: i32, %arg1: memref<512x3xf32, #tpu.memory_space<vmem>>, %arg2: memref<27x32xf32, #tpu.memory_space<vmem>>, %arg3: memref<288x64xf32, #tpu.memory_space<vmem>>, %arg4: memref<576x128xf32, #tpu.memory_space<vmem>>, %arg5: memref<128x10xf32, #tpu.memory_space<vmem>>, %arg6: memref<1x330xf32, #tpu.memory_space<vmem>>, %arg7: memref<672x9xf32, #tpu.memory_space<vmem>>, %arg8: memref<162x512xf32, #tpu.memory_space<vmem>>, %arg9: memref<1x2x10xf32, #tpu.memory_space<vmem>>, %arg10: memref<512x27xf32, #tpu.memory_space<vmem>>, %arg11: memref<128x288xf32, #tpu.memory_space<vmem>>, %arg12: memref<32x576xf32, #tpu.memory_space<vmem>>) attributes {dimension_semantics = [#tpu.dimension_semantics<parallel>], iteration_bounds = array<i64: 1>, scalar_prefetch = 0 : i64, scratch_operands = 3 : i64, tpu.core_type = #tpu.core_type<tc>, window_params = [{transform_indices = @transform_0, window_bounds = array<i64: 512, 3>}, {pipeline_mode = #tpu.pipeline_mode<synchronous>, transform_indices = @transform_1, window_bounds = array<i64: 27, 32>}, {pipeline_mode = #tpu.pipeline_mode<synchronous>, transform_indices = @transform_2, window_bounds = array<i64: 288, 64>}, {pipeline_mode = #tpu.pipeline_mode<synchronous>, transform_indices = @transform_3, window_bounds = array<i64: 576, 128>}, {pipeline_mode = #tpu.pipeline_mode<synchronous>, transform_indices = @transform_4, window_bounds = array<i64: 128, 10>}, {pipeline_mode = #tpu.pipeline_mode<synchronous>, transform_indices = @transform_5, window_bounds = array<i64: 1, 330>}, {pipeline_mode = #tpu.pipeline_mode<synchronous>, transform_indices = @transform_6, window_bounds = array<i64: 672, 9>}, {pipeline_mode = #tpu.pipeline_mode<synchronous>, transform_indices = @transform_7, window_bounds = array<i64: 162, 512>}, {transform_indices = @transform_8, window_bounds = array<i64: 1, 2, 10>}]} {
    %c0 = arith.constant 0 : index
    %c0_0 = arith.constant 0 : index
    %0 = vector.load %arg6[%c0, %c0_0] : memref<1x330xf32, #tpu.memory_space<vmem>>, vector<1x32xf32>
    %c0_1 = arith.constant 0 : index
    %c32 = arith.constant 32 : index
    %1 = vector.load %arg6[%c0_1, %c32] : memref<1x330xf32, #tpu.memory_space<vmem>>, vector<1x32xf32>
    %c0_2 = arith.constant 0 : index
    %c64 = arith.constant 64 : index
    %2 = vector.load %arg6[%c0_2, %c64] : memref<1x330xf32, #tpu.memory_space<vmem>>, vector<1x64xf32>
    %c0_3 = arith.constant 0 : index
    %c128 = arith.constant 128 : index
    %3 = vector.load %arg6[%c0_3, %c128] : memref<1x330xf32, #tpu.memory_space<vmem>>, vector<1x64xf32>
    %c0_4 = arith.constant 0 : index
    %c192 = arith.constant 192 : index
    %4 = vector.load %arg6[%c0_4, %c192] : memref<1x330xf32, #tpu.memory_space<vmem>>, vector<1x128xf32>
    %c0_5 = arith.constant 0 : index
    %c320 = arith.constant 320 : index
    %5 = vector.load %arg6[%c0_5, %c320] : memref<1x330xf32, #tpu.memory_space<vmem>>, vector<1x10xf32>
    %c0_6 = arith.constant 0 : index
    %c0_7 = arith.constant 0 : index
    %6 = vector.load %arg1[%c0_6, %c0_7] : memref<512x3xf32, #tpu.memory_space<vmem>>, vector<512x3xf32>
    %c0_8 = arith.constant 0 : index
    %c0_9 = arith.constant 0 : index
    %7 = vector.load %arg7[%c0_8, %c0_9] : memref<672x9xf32, #tpu.memory_space<vmem>>, vector<512x9xf32>
    %c17_i32 = arith.constant 17 : i32
    %8 = tpu.dynamic_rotate %6 by %c17_i32 dim 0 : vector<512x3xf32>, i32 -> vector<512x3xf32>
    %9 = vector.extract_strided_slice %7 {offsets = [0, 0], sizes = [512, 1], strides = [1, 1]} : vector<512x9xf32> to vector<512x1xf32>
    %10 = vector.broadcast %9 : vector<512x1xf32> to vector<512x3xf32>
    %11 = arith.mulf %8, %10 : vector<512x3xf32>
    %c0_10 = arith.constant 0 : index
    %c0_11 = arith.constant 0 : index
    %12 = vector.load %arg10[%c0_10, %c0_11] : memref<512x27xf32, #tpu.memory_space<vmem>>, vector<512x3xf32>
    tpu.vector_store %arg10[%c0_10, %c0_11], %11 {strides = array<i32>} : memref<512x27xf32, #tpu.memory_space<vmem>>, vector<512x3xf32>,
    %c16_i32 = arith.constant 16 : i32
    %13 = tpu.dynamic_rotate %6 by %c16_i32 dim 0 : vector<512x3xf32>, i32 -> vector<512x3xf32>
    %14 = vector.extract_strided_slice %7 {offsets = [0, 1], sizes = [512, 1], strides = [1, 1]} : vector<512x9xf32> to vector<512x1xf32>
    %15 = vector.broadcast %14 : vector<512x1xf32> to vector<512x3xf32>
    %16 = arith.mulf %13, %15 : vector<512x3xf32>
    %c0_12 = arith.constant 0 : index
    %c3 = arith.constant 3 : index
    %17 = vector.load %arg10[%c0_12, %c3] : memref<512x27xf32, #tpu.memory_space<vmem>>, vector<512x3xf32>
    tpu.vector_store %arg10[%c0_12, %c3], %16 {strides = array<i32>} : memref<512x27xf32, #tpu.memory_space<vmem>>, vector<512x3xf32>,
    %c15_i32 = arith.constant 15 : i32
    %18 = tpu.dynamic_rotate %6 by %c15_i32 dim 0 : vector<512x3xf32>, i32 -> vector<512x3xf32>
    %19 = vector.extract_strided_slice %7 {offsets = [0, 2], sizes = [512, 1], strides = [1, 1]} : vector<512x9xf32> to vector<512x1xf32>
    %20 = vector.broadcast %19 : vector<512x1xf32> to vector<512x3xf32>
    %21 = arith.mulf %18, %20 : vector<512x3xf32>
    %c0_13 = arith.constant 0 : index
    %c6 = arith.constant 6 : index
    %22 = vector.load %arg10[%c0_13, %c6] : memref<512x27xf32, #tpu.memory_space<vmem>>, vector<512x3xf32>
    tpu.vector_store %arg10[%c0_13, %c6], %21 {strides = array<i32>} : memref<512x27xf32, #tpu.memory_space<vmem>>, vector<512x3xf32>,
    %c1_i32 = arith.constant 1 : i32
    %23 = tpu.dynamic_rotate %6 by %c1_i32 dim 0 : vector<512x3xf32>, i32 -> vector<512x3xf32>
    %24 = vector.extract_strided_slice %7 {offsets = [0, 3], sizes = [512, 1], strides = [1, 1]} : vector<512x9xf32> to vector<512x1xf32>
    %25 = vector.broadcast %24 : vector<512x1xf32> to vector<512x3xf32>
    %26 = arith.mulf %23, %25 : vector<512x3xf32>
    %c0_14 = arith.constant 0 : index
    %c9 = arith.constant 9 : index
    %27 = vector.load %arg10[%c0_14, %c9] : memref<512x27xf32, #tpu.memory_space<vmem>>, vector<512x3xf32>
    tpu.vector_store %arg10[%c0_14, %c9], %26 {strides = array<i32>} : memref<512x27xf32, #tpu.memory_space<vmem>>, vector<512x3xf32>,
    %c0_15 = arith.constant 0 : index
    %c12 = arith.constant 12 : index
    %28 = vector.load %arg10[%c0_15, %c12] : memref<512x27xf32, #tpu.memory_space<vmem>>, vector<512x3xf32>
    tpu.vector_store %arg10[%c0_15, %c12], %6 {strides = array<i32>} : memref<512x27xf32, #tpu.memory_space<vmem>>, vector<512x3xf32>,
    %c511_i32 = arith.constant 511 : i32
    %29 = tpu.dynamic_rotate %6 by %c511_i32 dim 0 : vector<512x3xf32>, i32 -> vector<512x3xf32>
    %30 = vector.extract_strided_slice %7 {offsets = [0, 5], sizes = [512, 1], strides = [1, 1]} : vector<512x9xf32> to vector<512x1xf32>
    %31 = vector.broadcast %30 : vector<512x1xf32> to vector<512x3xf32>
    %32 = arith.mulf %29, %31 : vector<512x3xf32>
    %c0_16 = arith.constant 0 : index
    %c15 = arith.constant 15 : index
    %33 = vector.load %arg10[%c0_16, %c15] : memref<512x27xf32, #tpu.memory_space<vmem>>, vector<512x3xf32>
    tpu.vector_store %arg10[%c0_16, %c15], %32 {strides = array<i32>} : memref<512x27xf32, #tpu.memory_space<vmem>>, vector<512x3xf32>,
    %c497_i32 = arith.constant 497 : i32
    %34 = tpu.dynamic_rotate %6 by %c497_i32 dim 0 : vector<512x3xf32>, i32 -> vector<512x3xf32>
    %35 = vector.extract_strided_slice %7 {offsets = [0, 6], sizes = [512, 1], strides = [1, 1]} : vector<512x9xf32> to vector<512x1xf32>
    %36 = vector.broadcast %35 : vector<512x1xf32> to vector<512x3xf32>
    %37 = arith.mulf %34, %36 : vector<512x3xf32>
    %c0_17 = arith.constant 0 : index
    %c18 = arith.constant 18 : index
    %38 = vector.load %arg10[%c0_17, %c18] : memref<512x27xf32, #tpu.memory_space<vmem>>, vector<512x3xf32>
    tpu.vector_store %arg10[%c0_17, %c18], %37 {strides = array<i32>} : memref<512x27xf32, #tpu.memory_space<vmem>>, vector<512x3xf32>,
    %c496_i32 = arith.constant 496 : i32
    %39 = tpu.dynamic_rotate %6 by %c496_i32 dim 0 : vector<512x3xf32>, i32 -> vector<512x3xf32>
    %40 = vector.extract_strided_slice %7 {offsets = [0, 7], sizes = [512, 1], strides = [1, 1]} : vector<512x9xf32> to vector<512x1xf32>
    %41 = vector.broadcast %40 : vector<512x1xf32> to vector<512x3xf32>
    %42 = arith.mulf %39, %41 : vector<512x3xf32>
    %c0_18 = arith.constant 0 : index
    %c21 = arith.constant 21 : index
    %43 = vector.load %arg10[%c0_18, %c21] : memref<512x27xf32, #tpu.memory_space<vmem>>, vector<512x3xf32>
    tpu.vector_store %arg10[%c0_18, %c21], %42 {strides = array<i32>} : memref<512x27xf32, #tpu.memory_space<vmem>>, vector<512x3xf32>,
    %c495_i32 = arith.constant 495 : i32
    %44 = tpu.dynamic_rotate %6 by %c495_i32 dim 0 : vector<512x3xf32>, i32 -> vector<512x3xf32>
    %45 = vector.extract_strided_slice %7 {offsets = [0, 8], sizes = [512, 1], strides = [1, 1]} : vector<512x9xf32> to vector<512x1xf32>
    %46 = vector.broadcast %45 : vector<512x1xf32> to vector<512x3xf32>
    %47 = arith.mulf %44, %46 : vector<512x3xf32>
    %c0_19 = arith.constant 0 : index
    %c24 = arith.constant 24 : index
    %48 = vector.load %arg10[%c0_19, %c24] : memref<512x27xf32, #tpu.memory_space<vmem>>, vector<512x3xf32>
    tpu.vector_store %arg10[%c0_19, %c24], %47 {strides = array<i32>} : memref<512x27xf32, #tpu.memory_space<vmem>>, vector<512x3xf32>,
    %c0_20 = arith.constant 0 : index
    %c0_21 = arith.constant 0 : index
    %49 = vector.load %arg10[%c0_20, %c0_21] : memref<512x27xf32, #tpu.memory_space<vmem>>, vector<512x27xf32>
    %c0_22 = arith.constant 0 : index
    %c0_23 = arith.constant 0 : index
    %50 = vector.load %arg2[%c0_22, %c0_23] : memref<27x32xf32, #tpu.memory_space<vmem>>, vector<27x32xf32>
    %cst = arith.constant dense<0.000000e+00> : vector<512x32xf32>
    %51 = tpu.matmul %49, %50, %cst {dimension_numbers = #tpu.dot_dimension_numbers<[1], [0], [0], [1], [0, 0, 1, 1], [], []>} : vector<512x27xf32>, vector<27x32xf32>, vector<512x32xf32> -> vector<512x32xf32>
    %52 = vector.broadcast %0 : vector<1x32xf32> to vector<512x32xf32>
    %53 = arith.addf %51, %52 : vector<512x32xf32>
    %cst_24 = arith.constant 0.000000e+00 : f32
    %54 = vector.broadcast %cst_24 : f32 to vector<512x32xf32>
    %55 = arith.maximumf %53, %54 : vector<512x32xf32>
    %c0_25 = arith.constant 0 : index
    %c0_26 = arith.constant 0 : index
    %56 = vector.load %arg8[%c0_25, %c0_26] : memref<162x512xf32, #tpu.memory_space<vmem>>, vector<128x512xf32>
    %c511_i32_27 = arith.constant 511 : i32
    %57 = tpu.dynamic_rotate %55 by %c511_i32_27 dim 0 : vector<512x32xf32>, i32 -> vector<512x32xf32>
    %58 = arith.maximumf %55, %57 : vector<512x32xf32>
    %c496_i32_28 = arith.constant 496 : i32
    %59 = tpu.dynamic_rotate %58 by %c496_i32_28 dim 0 : vector<512x32xf32>, i32 -> vector<512x32xf32>
    %60 = arith.maximumf %58, %59 : vector<512x32xf32>
    %cst_29 = arith.constant dense<0.000000e+00> : vector<128x32xf32>
    %61 = tpu.matmul %56, %60, %cst_29 {dimension_numbers = #tpu.dot_dimension_numbers<[1], [0], [0], [1], [0, 0, 1, 1], [], []>} : vector<128x512xf32>, vector<512x32xf32>, vector<128x32xf32> -> vector<128x32xf32>
    %62 = vector.broadcast %1 : vector<1x32xf32> to vector<128x32xf32>
    %63 = arith.addf %61, %62 : vector<128x32xf32>
    %c512 = arith.constant 512 : index
    %c0_30 = arith.constant 0 : index
    %64 = vector.load %arg7[%c512, %c0_30] : memref<672x9xf32, #tpu.memory_space<vmem>>, vector<128x9xf32>
    %c9_i32 = arith.constant 9 : i32
    %65 = tpu.dynamic_rotate %63 by %c9_i32 dim 0 : vector<128x32xf32>, i32 -> vector<128x32xf32>
    %66 = vector.extract_strided_slice %64 {offsets = [0, 0], sizes = [128, 1], strides = [1, 1]} : vector<128x9xf32> to vector<128x1xf32>
    %67 = vector.broadcast %66 : vector<128x1xf32> to vector<128x32xf32>
    %68 = arith.mulf %65, %67 : vector<128x32xf32>
    %c0_31 = arith.constant 0 : index
    %c0_32 = arith.constant 0 : index
    %69 = vector.load %arg11[%c0_31, %c0_32] : memref<128x288xf32, #tpu.memory_space<vmem>>, vector<128x32xf32>
    tpu.vector_store %arg11[%c0_31, %c0_32], %68 {strides = array<i32>} : memref<128x288xf32, #tpu.memory_space<vmem>>, vector<128x32xf32>,
    %c8_i32 = arith.constant 8 : i32
    %70 = tpu.dynamic_rotate %63 by %c8_i32 dim 0 : vector<128x32xf32>, i32 -> vector<128x32xf32>
    %71 = vector.extract_strided_slice %64 {offsets = [0, 1], sizes = [128, 1], strides = [1, 1]} : vector<128x9xf32> to vector<128x1xf32>
    %72 = vector.broadcast %71 : vector<128x1xf32> to vector<128x32xf32>
    %73 = arith.mulf %70, %72 : vector<128x32xf32>
    %c0_33 = arith.constant 0 : index
    %c32_34 = arith.constant 32 : index
    %74 = vector.load %arg11[%c0_33, %c32_34] : memref<128x288xf32, #tpu.memory_space<vmem>>, vector<128x32xf32>
    tpu.vector_store %arg11[%c0_33, %c32_34], %73 {strides = array<i32>} : memref<128x288xf32, #tpu.memory_space<vmem>>, vector<128x32xf32>,
    %c7_i32 = arith.constant 7 : i32
    %75 = tpu.dynamic_rotate %63 by %c7_i32 dim 0 : vector<128x32xf32>, i32 -> vector<128x32xf32>
    %76 = vector.extract_strided_slice %64 {offsets = [0, 2], sizes = [128, 1], strides = [1, 1]} : vector<128x9xf32> to vector<128x1xf32>
    %77 = vector.broadcast %76 : vector<128x1xf32> to vector<128x32xf32>
    %78 = arith.mulf %75, %77 : vector<128x32xf32>
    %c0_35 = arith.constant 0 : index
    %c64_36 = arith.constant 64 : index
    %79 = vector.load %arg11[%c0_35, %c64_36] : memref<128x288xf32, #tpu.memory_space<vmem>>, vector<128x32xf32>
    tpu.vector_store %arg11[%c0_35, %c64_36], %78 {strides = array<i32>} : memref<128x288xf32, #tpu.memory_space<vmem>>, vector<128x32xf32>,
    %c1_i32_37 = arith.constant 1 : i32
    %80 = tpu.dynamic_rotate %63 by %c1_i32_37 dim 0 : vector<128x32xf32>, i32 -> vector<128x32xf32>
    %81 = vector.extract_strided_slice %64 {offsets = [0, 3], sizes = [128, 1], strides = [1, 1]} : vector<128x9xf32> to vector<128x1xf32>
    %82 = vector.broadcast %81 : vector<128x1xf32> to vector<128x32xf32>
    %83 = arith.mulf %80, %82 : vector<128x32xf32>
    %c0_38 = arith.constant 0 : index
    %c96 = arith.constant 96 : index
    %84 = vector.load %arg11[%c0_38, %c96] : memref<128x288xf32, #tpu.memory_space<vmem>>, vector<128x32xf32>
    tpu.vector_store %arg11[%c0_38, %c96], %83 {strides = array<i32>} : memref<128x288xf32, #tpu.memory_space<vmem>>, vector<128x32xf32>,
    %c0_39 = arith.constant 0 : index
    %c128_40 = arith.constant 128 : index
    %85 = vector.load %arg11[%c0_39, %c128_40] : memref<128x288xf32, #tpu.memory_space<vmem>>, vector<128x32xf32>
    tpu.vector_store %arg11[%c0_39, %c128_40], %63 {strides = array<i32>} : memref<128x288xf32, #tpu.memory_space<vmem>>, vector<128x32xf32>,
    %c127_i32 = arith.constant 127 : i32
    %86 = tpu.dynamic_rotate %63 by %c127_i32 dim 0 : vector<128x32xf32>, i32 -> vector<128x32xf32>
    %87 = vector.extract_strided_slice %64 {offsets = [0, 5], sizes = [128, 1], strides = [1, 1]} : vector<128x9xf32> to vector<128x1xf32>
    %88 = vector.broadcast %87 : vector<128x1xf32> to vector<128x32xf32>
    %89 = arith.mulf %86, %88 : vector<128x32xf32>
    %c0_41 = arith.constant 0 : index
    %c160 = arith.constant 160 : index
    %90 = vector.load %arg11[%c0_41, %c160] : memref<128x288xf32, #tpu.memory_space<vmem>>, vector<128x32xf32>
    tpu.vector_store %arg11[%c0_41, %c160], %89 {strides = array<i32>} : memref<128x288xf32, #tpu.memory_space<vmem>>, vector<128x32xf32>,
    %c121_i32 = arith.constant 121 : i32
    %91 = tpu.dynamic_rotate %63 by %c121_i32 dim 0 : vector<128x32xf32>, i32 -> vector<128x32xf32>
    %92 = vector.extract_strided_slice %64 {offsets = [0, 6], sizes = [128, 1], strides = [1, 1]} : vector<128x9xf32> to vector<128x1xf32>
    %93 = vector.broadcast %92 : vector<128x1xf32> to vector<128x32xf32>
    %94 = arith.mulf %91, %93 : vector<128x32xf32>
    %c0_42 = arith.constant 0 : index
    %c192_43 = arith.constant 192 : index
    %95 = vector.load %arg11[%c0_42, %c192_43] : memref<128x288xf32, #tpu.memory_space<vmem>>, vector<128x32xf32>
    tpu.vector_store %arg11[%c0_42, %c192_43], %94 {strides = array<i32>} : memref<128x288xf32, #tpu.memory_space<vmem>>, vector<128x32xf32>,
    %c120_i32 = arith.constant 120 : i32
    %96 = tpu.dynamic_rotate %63 by %c120_i32 dim 0 : vector<128x32xf32>, i32 -> vector<128x32xf32>
    %97 = vector.extract_strided_slice %64 {offsets = [0, 7], sizes = [128, 1], strides = [1, 1]} : vector<128x9xf32> to vector<128x1xf32>
    %98 = vector.broadcast %97 : vector<128x1xf32> to vector<128x32xf32>
    %99 = arith.mulf %96, %98 : vector<128x32xf32>
    %c0_44 = arith.constant 0 : index
    %c224 = arith.constant 224 : index
    %100 = vector.load %arg11[%c0_44, %c224] : memref<128x288xf32, #tpu.memory_space<vmem>>, vector<128x32xf32>
    tpu.vector_store %arg11[%c0_44, %c224], %99 {strides = array<i32>} : memref<128x288xf32, #tpu.memory_space<vmem>>, vector<128x32xf32>,
    %c119_i32 = arith.constant 119 : i32
    %101 = tpu.dynamic_rotate %63 by %c119_i32 dim 0 : vector<128x32xf32>, i32 -> vector<128x32xf32>
    %102 = vector.extract_strided_slice %64 {offsets = [0, 8], sizes = [128, 1], strides = [1, 1]} : vector<128x9xf32> to vector<128x1xf32>
    %103 = vector.broadcast %102 : vector<128x1xf32> to vector<128x32xf32>
    %104 = arith.mulf %101, %103 : vector<128x32xf32>
    %c0_45 = arith.constant 0 : index
    %c256 = arith.constant 256 : index
    %105 = vector.load %arg11[%c0_45, %c256] : memref<128x288xf32, #tpu.memory_space<vmem>>, vector<128x32xf32>
    tpu.vector_store %arg11[%c0_45, %c256], %104 {strides = array<i32>} : memref<128x288xf32, #tpu.memory_space<vmem>>, vector<128x32xf32>,
    %c0_46 = arith.constant 0 : index
    %c0_47 = arith.constant 0 : index
    %106 = vector.load %arg11[%c0_46, %c0_47] : memref<128x288xf32, #tpu.memory_space<vmem>>, vector<128x288xf32>
    %c0_48 = arith.constant 0 : index
    %c0_49 = arith.constant 0 : index
    %107 = vector.load %arg3[%c0_48, %c0_49] : memref<288x64xf32, #tpu.memory_space<vmem>>, vector<288x64xf32>
    %cst_50 = arith.constant dense<0.000000e+00> : vector<128x64xf32>
    %108 = tpu.matmul %106, %107, %cst_50 {dimension_numbers = #tpu.dot_dimension_numbers<[1], [0], [0], [1], [0, 0, 1, 1], [], []>} : vector<128x288xf32>, vector<288x64xf32>, vector<128x64xf32> -> vector<128x64xf32>
    %109 = vector.broadcast %2 : vector<1x64xf32> to vector<128x64xf32>
    %110 = arith.addf %108, %109 : vector<128x64xf32>
    %cst_51 = arith.constant 0.000000e+00 : f32
    %111 = vector.broadcast %cst_51 : f32 to vector<128x64xf32>
    %112 = arith.maximumf %110, %111 : vector<128x64xf32>
    %c128_52 = arith.constant 128 : index
    %c0_53 = arith.constant 0 : index
    %113 = vector.load %arg8[%c128_52, %c0_53] : memref<162x512xf32, #tpu.memory_space<vmem>>, vector<32x128xf32>
    %c127_i32_54 = arith.constant 127 : i32
    %114 = tpu.dynamic_rotate %112 by %c127_i32_54 dim 0 : vector<128x64xf32>, i32 -> vector<128x64xf32>
    %115 = arith.maximumf %112, %114 : vector<128x64xf32>
    %c120_i32_55 = arith.constant 120 : i32
    %116 = tpu.dynamic_rotate %115 by %c120_i32_55 dim 0 : vector<128x64xf32>, i32 -> vector<128x64xf32>
    %117 = arith.maximumf %115, %116 : vector<128x64xf32>
    %cst_56 = arith.constant dense<0.000000e+00> : vector<32x64xf32>
    %118 = tpu.matmul %113, %117, %cst_56 {dimension_numbers = #tpu.dot_dimension_numbers<[1], [0], [0], [1], [0, 0, 1, 1], [], []>} : vector<32x128xf32>, vector<128x64xf32>, vector<32x64xf32> -> vector<32x64xf32>
    %119 = vector.broadcast %3 : vector<1x64xf32> to vector<32x64xf32>
    %120 = arith.addf %118, %119 : vector<32x64xf32>
    %c640 = arith.constant 640 : index
    %c0_57 = arith.constant 0 : index
    %121 = vector.load %arg7[%c640, %c0_57] : memref<672x9xf32, #tpu.memory_space<vmem>>, vector<32x9xf32>
    %c5_i32 = arith.constant 5 : i32
    %122 = tpu.dynamic_rotate %120 by %c5_i32 dim 0 : vector<32x64xf32>, i32 -> vector<32x64xf32>
    %123 = vector.extract_strided_slice %121 {offsets = [0, 0], sizes = [32, 1], strides = [1, 1]} : vector<32x9xf32> to vector<32x1xf32>
    %124 = vector.broadcast %123 : vector<32x1xf32> to vector<32x64xf32>
    %125 = arith.mulf %122, %124 : vector<32x64xf32>
    %c0_58 = arith.constant 0 : index
    %c0_59 = arith.constant 0 : index
    %126 = vector.load %arg12[%c0_58, %c0_59] : memref<32x576xf32, #tpu.memory_space<vmem>>, vector<32x64xf32>
    tpu.vector_store %arg12[%c0_58, %c0_59], %125 {strides = array<i32>} : memref<32x576xf32, #tpu.memory_space<vmem>>, vector<32x64xf32>,
    %c4_i32 = arith.constant 4 : i32
    %127 = tpu.dynamic_rotate %120 by %c4_i32 dim 0 : vector<32x64xf32>, i32 -> vector<32x64xf32>
    %128 = vector.extract_strided_slice %121 {offsets = [0, 1], sizes = [32, 1], strides = [1, 1]} : vector<32x9xf32> to vector<32x1xf32>
    %129 = vector.broadcast %128 : vector<32x1xf32> to vector<32x64xf32>
    %130 = arith.mulf %127, %129 : vector<32x64xf32>
    %c0_60 = arith.constant 0 : index
    %c64_61 = arith.constant 64 : index
    %131 = vector.load %arg12[%c0_60, %c64_61] : memref<32x576xf32, #tpu.memory_space<vmem>>, vector<32x64xf32>
    tpu.vector_store %arg12[%c0_60, %c64_61], %130 {strides = array<i32>} : memref<32x576xf32, #tpu.memory_space<vmem>>, vector<32x64xf32>,
    %c3_i32 = arith.constant 3 : i32
    %132 = tpu.dynamic_rotate %120 by %c3_i32 dim 0 : vector<32x64xf32>, i32 -> vector<32x64xf32>
    %133 = vector.extract_strided_slice %121 {offsets = [0, 2], sizes = [32, 1], strides = [1, 1]} : vector<32x9xf32> to vector<32x1xf32>
    %134 = vector.broadcast %133 : vector<32x1xf32> to vector<32x64xf32>
    %135 = arith.mulf %132, %134 : vector<32x64xf32>
    %c0_62 = arith.constant 0 : index
    %c128_63 = arith.constant 128 : index
    %136 = vector.load %arg12[%c0_62, %c128_63] : memref<32x576xf32, #tpu.memory_space<vmem>>, vector<32x64xf32>
    tpu.vector_store %arg12[%c0_62, %c128_63], %135 {strides = array<i32>} : memref<32x576xf32, #tpu.memory_space<vmem>>, vector<32x64xf32>,
    %c1_i32_64 = arith.constant 1 : i32
    %137 = tpu.dynamic_rotate %120 by %c1_i32_64 dim 0 : vector<32x64xf32>, i32 -> vector<32x64xf32>
    %138 = vector.extract_strided_slice %121 {offsets = [0, 3], sizes = [32, 1], strides = [1, 1]} : vector<32x9xf32> to vector<32x1xf32>
    %139 = vector.broadcast %138 : vector<32x1xf32> to vector<32x64xf32>
    %140 = arith.mulf %137, %139 : vector<32x64xf32>
    %c0_65 = arith.constant 0 : index
    %c192_66 = arith.constant 192 : index
    %141 = vector.load %arg12[%c0_65, %c192_66] : memref<32x576xf32, #tpu.memory_space<vmem>>, vector<32x64xf32>
    tpu.vector_store %arg12[%c0_65, %c192_66], %140 {strides = array<i32>} : memref<32x576xf32, #tpu.memory_space<vmem>>, vector<32x64xf32>,
    %c0_67 = arith.constant 0 : index
    %c256_68 = arith.constant 256 : index
    %142 = vector.load %arg12[%c0_67, %c256_68] : memref<32x576xf32, #tpu.memory_space<vmem>>, vector<32x64xf32>
    tpu.vector_store %arg12[%c0_67, %c256_68], %120 {strides = array<i32>} : memref<32x576xf32, #tpu.memory_space<vmem>>, vector<32x64xf32>,
    %c31_i32 = arith.constant 31 : i32
    %143 = tpu.dynamic_rotate %120 by %c31_i32 dim 0 : vector<32x64xf32>, i32 -> vector<32x64xf32>
    %144 = vector.extract_strided_slice %121 {offsets = [0, 5], sizes = [32, 1], strides = [1, 1]} : vector<32x9xf32> to vector<32x1xf32>
    %145 = vector.broadcast %144 : vector<32x1xf32> to vector<32x64xf32>
    %146 = arith.mulf %143, %145 : vector<32x64xf32>
    %c0_69 = arith.constant 0 : index
    %c320_70 = arith.constant 320 : index
    %147 = vector.load %arg12[%c0_69, %c320_70] : memref<32x576xf32, #tpu.memory_space<vmem>>, vector<32x64xf32>
    tpu.vector_store %arg12[%c0_69, %c320_70], %146 {strides = array<i32>} : memref<32x576xf32, #tpu.memory_space<vmem>>, vector<32x64xf32>,
    %c29_i32 = arith.constant 29 : i32
    %148 = tpu.dynamic_rotate %120 by %c29_i32 dim 0 : vector<32x64xf32>, i32 -> vector<32x64xf32>
    %149 = vector.extract_strided_slice %121 {offsets = [0, 6], sizes = [32, 1], strides = [1, 1]} : vector<32x9xf32> to vector<32x1xf32>
    %150 = vector.broadcast %149 : vector<32x1xf32> to vector<32x64xf32>
    %151 = arith.mulf %148, %150 : vector<32x64xf32>
    %c0_71 = arith.constant 0 : index
    %c384 = arith.constant 384 : index
    %152 = vector.load %arg12[%c0_71, %c384] : memref<32x576xf32, #tpu.memory_space<vmem>>, vector<32x64xf32>
    tpu.vector_store %arg12[%c0_71, %c384], %151 {strides = array<i32>} : memref<32x576xf32, #tpu.memory_space<vmem>>, vector<32x64xf32>,
    %c28_i32 = arith.constant 28 : i32
    %153 = tpu.dynamic_rotate %120 by %c28_i32 dim 0 : vector<32x64xf32>, i32 -> vector<32x64xf32>
    %154 = vector.extract_strided_slice %121 {offsets = [0, 7], sizes = [32, 1], strides = [1, 1]} : vector<32x9xf32> to vector<32x1xf32>
    %155 = vector.broadcast %154 : vector<32x1xf32> to vector<32x64xf32>
    %156 = arith.mulf %153, %155 : vector<32x64xf32>
    %c0_72 = arith.constant 0 : index
    %c448 = arith.constant 448 : index
    %157 = vector.load %arg12[%c0_72, %c448] : memref<32x576xf32, #tpu.memory_space<vmem>>, vector<32x64xf32>
    tpu.vector_store %arg12[%c0_72, %c448], %156 {strides = array<i32>} : memref<32x576xf32, #tpu.memory_space<vmem>>, vector<32x64xf32>,
    %c27_i32 = arith.constant 27 : i32
    %158 = tpu.dynamic_rotate %120 by %c27_i32 dim 0 : vector<32x64xf32>, i32 -> vector<32x64xf32>
    %159 = vector.extract_strided_slice %121 {offsets = [0, 8], sizes = [32, 1], strides = [1, 1]} : vector<32x9xf32> to vector<32x1xf32>
    %160 = vector.broadcast %159 : vector<32x1xf32> to vector<32x64xf32>
    %161 = arith.mulf %158, %160 : vector<32x64xf32>
    %c0_73 = arith.constant 0 : index
    %c512_74 = arith.constant 512 : index
    %162 = vector.load %arg12[%c0_73, %c512_74] : memref<32x576xf32, #tpu.memory_space<vmem>>, vector<32x64xf32>
    tpu.vector_store %arg12[%c0_73, %c512_74], %161 {strides = array<i32>} : memref<32x576xf32, #tpu.memory_space<vmem>>, vector<32x64xf32>,
    %c0_75 = arith.constant 0 : index
    %c0_76 = arith.constant 0 : index
    %163 = vector.load %arg12[%c0_75, %c0_76] : memref<32x576xf32, #tpu.memory_space<vmem>>, vector<32x576xf32>
    %c0_77 = arith.constant 0 : index
    %c0_78 = arith.constant 0 : index
    %164 = vector.load %arg4[%c0_77, %c0_78] : memref<576x128xf32, #tpu.memory_space<vmem>>, vector<576x128xf32>
    %cst_79 = arith.constant dense<0.000000e+00> : vector<32x128xf32>
    %165 = tpu.matmul %163, %164, %cst_79 {dimension_numbers = #tpu.dot_dimension_numbers<[1], [0], [0], [1], [0, 0, 1, 1], [], []>} : vector<32x576xf32>, vector<576x128xf32>, vector<32x128xf32> -> vector<32x128xf32>
    %166 = vector.broadcast %4 : vector<1x128xf32> to vector<32x128xf32>
    %167 = arith.addf %165, %166 : vector<32x128xf32>
    %cst_80 = arith.constant 0.000000e+00 : f32
    %168 = vector.broadcast %cst_80 : f32 to vector<32x128xf32>
    %169 = arith.maximumf %167, %168 : vector<32x128xf32>
    %c160_81 = arith.constant 160 : index
    %c0_82 = arith.constant 0 : index
    %170 = vector.load %arg8[%c160_81, %c0_82] : memref<162x512xf32, #tpu.memory_space<vmem>>, vector<2x32xf32>
    %cst_83 = arith.constant dense<0.000000e+00> : vector<2x128xf32>
    %171 = tpu.matmul %170, %169, %cst_83 {dimension_numbers = #tpu.dot_dimension_numbers<[1], [0], [0], [1], [0, 0, 1, 1], [], []>} : vector<2x32xf32>, vector<32x128xf32>, vector<2x128xf32> -> vector<2x128xf32>
    %c0_84 = arith.constant 0 : index
    %c0_85 = arith.constant 0 : index
    %172 = vector.load %arg5[%c0_84, %c0_85] : memref<128x10xf32, #tpu.memory_space<vmem>>, vector<128x10xf32>
    %cst_86 = arith.constant dense<0.000000e+00> : vector<2x10xf32>
    %173 = tpu.matmul %171, %172, %cst_86 {dimension_numbers = #tpu.dot_dimension_numbers<[1], [0], [0], [1], [0, 0, 1, 1], [], []>} : vector<2x128xf32>, vector<128x10xf32>, vector<2x10xf32> -> vector<2x10xf32>
    %174 = vector.broadcast %5 : vector<1x10xf32> to vector<2x10xf32>
    %175 = arith.addf %173, %174 : vector<2x10xf32>
    %c0_87 = arith.constant 0 : index
    %c0_88 = arith.constant 0 : index
    %c0_89 = arith.constant 0 : index
    %176 = vector.load %arg9[%c0_87, %c0_88, %c0_89] : memref<1x2x10xf32, #tpu.memory_space<vmem>>, vector<1x2x10xf32>
    %177 = vector.shape_cast %176 : vector<1x2x10xf32> to vector<2x10xf32>
    %178 = vector.shape_cast %175 : vector<2x10xf32> to vector<1x2x10xf32>
    tpu.vector_store %arg9[%c0_87, %c0_88, %c0_89], %178 {strides = array<i32>} : memref<1x2x10xf32, #tpu.memory_space<vmem>>, vector<1x2x10xf32>,
    return
  }
  func.func @transform_0(%arg0: i32) -> (i32, i32) {
    %c0_i32 = arith.constant 0 : i32
    %c0_i32_0 = arith.constant 0 : i32
    return %arg0, %c0_i32 : i32, i32
  }
  func.func @transform_1(%arg0: i32) -> (i32, i32) {
    %c0_i32 = arith.constant 0 : i32
    %c0_i32_0 = arith.constant 0 : i32
    %c0_i32_1 = arith.constant 0 : i32
    return %c0_i32, %c0_i32_0 : i32, i32
  }
  func.func @transform_2(%arg0: i32) -> (i32, i32) {
    %c0_i32 = arith.constant 0 : i32
    %c0_i32_0 = arith.constant 0 : i32
    %c0_i32_1 = arith.constant 0 : i32
    return %c0_i32, %c0_i32_0 : i32, i32
  }
  func.func @transform_3(%arg0: i32) -> (i32, i32) {
    %c0_i32 = arith.constant 0 : i32
    %c0_i32_0 = arith.constant 0 : i32
    %c0_i32_1 = arith.constant 0 : i32
    return %c0_i32, %c0_i32_0 : i32, i32
  }
  func.func @transform_4(%arg0: i32) -> (i32, i32) {
    %c0_i32 = arith.constant 0 : i32
    %c0_i32_0 = arith.constant 0 : i32
    %c0_i32_1 = arith.constant 0 : i32
    return %c0_i32, %c0_i32_0 : i32, i32
  }
  func.func @transform_5(%arg0: i32) -> (i32, i32) {
    %c0_i32 = arith.constant 0 : i32
    %c0_i32_0 = arith.constant 0 : i32
    %c0_i32_1 = arith.constant 0 : i32
    return %c0_i32, %c0_i32_0 : i32, i32
  }
  func.func @transform_6(%arg0: i32) -> (i32, i32) {
    %c0_i32 = arith.constant 0 : i32
    %c0_i32_0 = arith.constant 0 : i32
    %c0_i32_1 = arith.constant 0 : i32
    return %c0_i32, %c0_i32_0 : i32, i32
  }
  func.func @transform_7(%arg0: i32) -> (i32, i32) {
    %c0_i32 = arith.constant 0 : i32
    %c0_i32_0 = arith.constant 0 : i32
    %c0_i32_1 = arith.constant 0 : i32
    return %c0_i32, %c0_i32_0 : i32, i32
  }
  func.func @transform_8(%arg0: i32) -> (i32, i32, i32) {
    %c0_i32 = arith.constant 0 : i32
    %c0_i32_0 = arith.constant 0 : i32
    %c0_i32_1 = arith.constant 0 : i32
    return %arg0, %c0_i32, %c0_i32_0 : i32, i32, i32
  }
}

</mosaic_0001>

<llo_original>
// kernel: div.3
$region0: #{div.3}
  #allocation2 [shape = 's32[1]{0}', space=sflag, size = 0x4, scoped, tag = 'scoped memory for div.3']
  %s0 = inlined_call_operand.hbm [shape: f32[1,64], index: 0, kind: input, shape index: {}]
  %s1 = inlined_call_operand.vmem [shape: f32[1,64], index: 1, kind: input, shape index: {}]
  %s2 = inlined_call_operand.vmem [shape: f32[1,64], index: 2, kind: output, shape index: {}]
  $region1: #{div.3} parent=0
    #allocation0 [shape = 'u8[512]{0}', space=vmem, size = 0x400, scoped, tag = 'operand span for operand 0']
    #allocation1 [shape = 's32[1]{0}', space=sflag, size = 0x4, scoped, tag = 'scoped memory for div.3']
    %3 = vsyncpa [#allocation1], 0
    %s5 = ssub.s32 16, 16
    %6 = vsyncadd [#allocation1], %s5
    %s8 = sshll.u32 [#allocation0], 4
    %s9 = int_to_ptr.vmem [resolvable:$true] %s8
    %11 = dma.hbm_to_vmem [thread:$0]  %s0, 16, %s9, [#allocation1]
    %12 = dma.done [#allocation1], 16
    %v13 = vld [vmem:[#allocation0] sm:$0x1]
    %v14 = vld [vmem:[%s1] sm:$0x1]
    %15 = xla_tuple %v13, %v14
    %16 = xla_tuple %15
    %v17 = vrcp.pop %v14
    %v18 = vmul.f32 %v13, %v17
    %19 = xla_tuple %v18
    %20 = vst [vmem:[%s2] sm:$0x1] %v18
    %21 = vsyncpa [#allocation1], 1

// kernel: div.2
$region0: #{div.2}
  #allocation2 [shape = 's32[1]{0}', space=sflag, size = 0x4, scoped, tag = 'scoped memory for div.2']
  %s0 = inlined_call_operand.hbm [shape: f32[1,32], index: 0, kind: input, shape index: {}]
  %s1 = inlined_call_operand.vmem [shape: f32[1,32], index: 1, kind: input, shape index: {}]
  %s2 = inlined_call_operand.vmem [shape: f32[1,32], index: 2, kind: output, shape index: {}]
  $region1: #{div.2} parent=0
    #allocation0 [shape = 'u8[512]{0}', space=vmem, size = 0x400, scoped, tag = 'operand span for operand 0']
    #allocation1 [shape = 's32[1]{0}', space=sflag, size = 0x4, scoped, tag = 'scoped memory for div.2']
    %3 = vsyncpa [#allocation1], 0
    %s5 = ssub.s32 16, 16
    %6 = vsyncadd [#allocation1], %s5
    %s8 = sshll.u32 [#allocation0], 4
    %s9 = int_to_ptr.vmem [resolvable:$true] %s8
    %11 = dma.hbm_to_vmem [thread:$0]  %s0, 16, %s9, [#allocation1]
    %12 = dma.done [#allocation1], 16
    %v13 = vld [vmem:[#allocation0] sm:$0x1]
    %v14 = vld [vmem:[%s1] sm:$0x1]
    %15 = xla_tuple %v13, %v14
    %16 = xla_tuple %15
    %v17 = vrcp.pop %v14
    %v18 = vmul.f32 %v13, %v17
    %19 = xla_tuple %v18
    %20 = vst [vmem:[%s2] sm:$0x1] %v18
    %21 = vsyncpa [#allocation1], 1

// kernel: forward.1
$region0: #{forward.1}
  #allocation0 [shape = 'u32[]', space=smem, size = 0x4, offset = 0x4, fixed_abs, tag = 'smem constant byte address 0x4 - core index']
  #allocation1 [shape = 'u32[144,128]{1,0:T(1,128)}', space=vmem, size = 0x12000, scoped, tag = 'internal scratch']
  #allocation2 [shape = 'f32[512,27]{1,0:T(8,128)}', space=vmem, size = 0x40000, scoped, tag = 'scratch operand']
  #allocation3 [shape = 'f32[128,288]{1,0:T(8,128)}', space=vmem, size = 0x30000, scoped, tag = 'scratch operand']
  #allocation4 [shape = 'f32[32,576]{1,0:T(8,128)}', space=vmem, size = 0x14000, scoped, tag = 'scratch operand']
  %s0 = inlined_call_operand.vmem [shape: f32[512,3], index: 0, kind: input, shape index: {}]
  %s1 = inlined_call_operand.vmem [shape: f32[27,32], index: 1, kind: input, shape index: {}]
  %s2 = inlined_call_operand.vmem [shape: f32[288,64], index: 2, kind: input, shape index: {}]
  %s3 = inlined_call_operand.vmem [shape: f32[576,128], index: 3, kind: input, shape index: {}]
  %s4 = inlined_call_operand.vmem [shape: f32[128,10], index: 4, kind: input, shape index: {}]
  %s5 = inlined_call_operand.vmem [shape: f32[1,330], index: 5, kind: input, shape index: {}]
  %s6 = inlined_call_operand.vmem [shape: f32[672,9], index: 6, kind: input, shape index: {}]
  %s7 = inlined_call_operand.vmem [shape: f32[162,512], index: 7, kind: input, shape index: {}]
  %s8 = inlined_call_operand.hbm [shape: f32[1,2,10], index: 8, kind: output, shape index: {}]
  %s9 = sld [smem:[#allocation0]]
  $region42: #{forward.1} parent=0
    _
  %s11 = ssub.s32 1, %s9
  %s12 = scalar_select 0, %s11, %s9
  $region1: #{forward.1} parent=0
    #allocation5 [shape = 'u8[1024]{0}', space=vmem, size = 0x400, scoped, tag = 'output window, operand 0, single buffered']
    #allocation6 [shape = 's32[1]{0}', space=sflag, size = 0x4, scoped, tag = 'scoped memory for forward.1']
    %13 = vsyncpa [#allocation6], 0
    // Predicated region
    $region2: #{forward.1} parent=1 // pred_check
      _
    $region3: #{forward.1} parent=1 // pred_check_branch
      %15 = sbr.rel (0) target = $region5
    $region4: #{forward.1} parent=1 // pred_region
      _
    $region5: #{forward.1} parent=1 // pred_fallthru
      _
    // Predicated region
    $region6: #{forward.1} parent=1 // pred_check
      _
    $region7: #{forward.1} parent=1 // pred_check_branch
      %17 = sbr.rel (0) target = $region9
    $region8: #{forward.1} parent=1 // pred_region
      _
    $region9: #{forward.1} parent=1 // pred_fallthru
      _
    // Predicated region
    $region10: #{forward.1} parent=1 // pred_check
      _
    $region11: #{forward.1} parent=1 // pred_check_branch
      %19 = sbr.rel (0) target = $region13
    $region12: #{forward.1} parent=1 // pred_region
      _
    $region13: #{forward.1} parent=1 // pred_fallthru
      _
    // Predicated region
    $region14: #{forward.1} parent=1 // pred_check
      _
    $region15: #{forward.1} parent=1 // pred_check_branch
      %21 = sbr.rel (0) target = $region17
    $region16: #{forward.1} parent=1 // pred_region
      _
    $region17: #{forward.1} parent=1 // pred_fallthru
      _
    // Predicated region
    $region18: #{forward.1} parent=1 // pred_check
      _
    $region19: #{forward.1} parent=1 // pred_check_branch
      %23 = sbr.rel (0) target = $region21
    $region20: #{forward.1} parent=1 // pred_region
      _
    $region21: #{forward.1} parent=1 // pred_fallthru
      _
    // Predicated region
    $region22: #{forward.1} parent=1 // pred_check
      _
    $region23: #{forward.1} parent=1 // pred_check_branch
      %25 = sbr.rel (0) target = $region25
    $region24: #{forward.1} parent=1 // pred_region
      _
    $region25: #{forward.1} parent=1 // pred_fallthru
      _
    // Predicated region
    $region26: #{forward.1} parent=1 // pred_check
      _
    $region27: #{forward.1} parent=1 // pred_check_branch
      %27 = sbr.rel (0) target = $region29
    $region28: #{forward.1} parent=1 // pred_region
      _
    $region29: #{forward.1} parent=1 // pred_fallthru
      _
    // Predicated region
    $region30: #{forward.1} parent=1 // pred_check
      _
    $region31: #{forward.1} parent=1 // pred_check_branch
      %29 = sbr.rel (0) target = $region33
    $region32: #{forward.1} parent=1 // pred_region
      _
    $region33: #{forward.1} parent=1 // pred_fallthru
      _
    %v30 = vld [vmem:[%s5] sm:$0x1]
    %v31 = vld [vmem:[%s5 + $0x1] sm:$0x1]
    %v32 = vld [vmem:[%s5 + $0x1] sm:$0x3]
    %v33 = vld [vmem:[%s5 + $0x2] sm:$0x1]
    %v34 = vld [vmem:[%s0] sm:$0xff]
    %v35 = vld [vmem:[%s0 + $0x8] sm:$0xff]
    %v36 = vld [vmem:[%s0 + $0x10] sm:$0xff]
    %v37 = vld [vmem:[%s0 + $0x18] sm:$0xff]
    %v38 = vld [vmem:[%s0 + $0x20] sm:$0xff]
    %v39 = vld [vmem:[%s0 + $0x28] sm:$0xff]
    %v40 = vld [vmem:[%s0 + $0x30] sm:$0xff]
    %v41 = vld [vmem:[%s0 + $0x38] sm:$0xff]
    %v42 = vld [vmem:[%s0 + $0x40] sm:$0xff]
    %v43 = vld [vmem:[%s0 + $0x48] sm:$0xff]
    %v44 = vld [vmem:[%s0 + $0x50] sm:$0xff]
    %v45 = vld [vmem:[%s0 + $0x58] sm:$0xff]
    %v46 = vld [vmem:[%s0 + $0x60] sm:$0xff]
    %v47 = vld [vmem:[%s0 + $0x68] sm:$0xff]
    %v48 = vld [vmem:[%s0 + $0x70] sm:$0xff]
    %v49 = vld [vmem:[%s0 + $0x78] sm:$0xff]
    %v50 = vld [vmem:[%s0 + $0x80] sm:$0xff]
    %v51 = vld [vmem:[%s0 + $0x88] sm:$0xff]
    %v52 = vld [vmem:[%s0 + $0x90] sm:$0xff]
    %v53 = vld [vmem:[%s0 + $0x98] sm:$0xff]
    %v54 = vld [vmem:[%s0 + $0xa0] sm:$0xff]
    %v55 = vld [vmem:[%s0 + $0xa8] sm:$0xff]
    %v56 = vld [vmem:[%s0 + $0xb0] sm:$0xff]
    %v57 = vld [vmem:[%s0 + $0xb8] sm:$0xff]
    %v58 = vld [vmem:[%s0 + $0xc0] sm:$0xff]
    %v59 = vld [vmem:[%s0 + $0xc8] sm:$0xff]
    %v60 = vld [vmem:[%s0 + $0xd0] sm:$0xff]
    %v61 = vld [vmem:[%s0 + $0xd8] sm:$0xff]
    %v62 = vld [vmem:[%s0 + $0xe0] sm:$0xff]
    %v63 = vld [vmem:[%s0 + $0xe8] sm:$0xff]
    %v64 = vld [vmem:[%s0 + $0xf0] sm:$0xff]
    %v65 = vld [vmem:[%s0 + $0xf8] sm:$0xff]
    %v66 = vld [vmem:[%s0 + $0x100] sm:$0xff]
    %v67 = vld [vmem:[%s0 + $0x108] sm:$0xff]
    %v68 = vld [vmem:[%s0 + $0x110] sm:$0xff]
    %v69 = vld [vmem:[%s0 + $0x118] sm:$0xff]
    %v70 = vld [vmem:[%s0 + $0x120] sm:$0xff]
    %v71 = vld [vmem:[%s0 + $0x128] sm:$0xff]
    %v72 = vld [vmem:[%s0 + $0x130] sm:$0xff]
    %v73 = vld [vmem:[%s0 + $0x138] sm:$0xff]
    %v74 = vld [vmem:[%s0 + $0x140] sm:$0xff]
    %v75 = vld [vmem:[%s0 + $0x148] sm:$0xff]
    %v76 = vld [vmem:[%s0 + $0x150] sm:$0xff]
    %v77 = vld [vmem:[%s0 + $0x158] sm:$0xff]
    %v78 = vld [vmem:[%s0 + $0x160] sm:$0xff]
    %v79 = vld [vmem:[%s0 + $0x168] sm:$0xff]
    %v80 = vld [vmem:[%s0 + $0x170] sm:$0xff]
    %v81 = vld [vmem:[%s0 + $0x178] sm:$0xff]
    %v82 = vld [vmem:[%s0 + $0x180] sm:$0xff]
    %v83 = vld [vmem:[%s0 + $0x188] sm:$0xff]
    %v84 = vld [vmem:[%s0 + $0x190] sm:$0xff]
    %v85 = vld [vmem:[%s0 + $0x198] sm:$0xff]
    %v86 = vld [vmem:[%s0 + $0x1a0] sm:$0xff]
    %v87 = vld [vmem:[%s0 + $0x1a8] sm:$0xff]
    %v88 = vld [vmem:[%s0 + $0x1b0] sm:$0xff]
    %v89 = vld [vmem:[%s0 + $0x1b8] sm:$0xff]
    %v90 = vld [vmem:[%s0 + $0x1c0] sm:$0xff]
    %v91 = vld [vmem:[%s0 + $0x1c8] sm:$0xff]
    %v92 = vld [vmem:[%s0 + $0x1d0] sm:$0xff]
    %v93 = vld [vmem:[%s0 + $0x1d8] sm:$0xff]
    %v94 = vld [vmem:[%s0 + $0x1e0] sm:$0xff]
    %v95 = vld [vmem:[%s0 + $0x1e8] sm:$0xff]
    %v96 = vld [vmem:[%s0 + $0x1f0] sm:$0xff]
    %v97 = vld [vmem:[%s0 + $0x1f8] sm:$0xff]
    %v98 = vld [vmem:[%s6] sm:$0xff]
    %v99 = vld [vmem:[%s6 + $0x8] sm:$0xff]
    %v100 = vld [vmem:[%s6 + $0x10] sm:$0xff]
    %v101 = vld [vmem:[%s6 + $0x18] sm:$0xff]
    %v102 = vld [vmem:[%s6 + $0x20] sm:$0xff]
    %v103 = vld [vmem:[%s6 + $0x28] sm:$0xff]
    %v104 = vld [vmem:[%s6 + $0x30] sm:$0xff]
    %v105 = vld [vmem:[%s6 + $0x38] sm:$0xff]
    %v106 = vld [vmem:[%s6 + $0x40] sm:$0xff]
    %v107 = vld [vmem:[%s6 + $0x48] sm:$0xff]
    %v108 = vld [vmem:[%s6 + $0x50] sm:$0xff]
    %v109 = vld [vmem:[%s6 + $0x58] sm:$0xff]
    %v110 = vld [vmem:[%s6 + $0x60] sm:$0xff]
    %v111 = vld [vmem:[%s6 + $0x68] sm:$0xff]
    %v112 = vld [vmem:[%s6 + $0x70] sm:$0xff]
    %v113 = vld [vmem:[%s6 + $0x78] sm:$0xff]
    %v114 = vld [vmem:[%s6 + $0x80] sm:$0xff]
    %v115 = vld [vmem:[%s6 + $0x88] sm:$0xff]
    %v116 = vld [vmem:[%s6 + $0x90] sm:$0xff]
    %v117 = vld [vmem:[%s6 + $0x98] sm:$0xff]
    %v118 = vld [vmem:[%s6 + $0xa0] sm:$0xff]
    %v119 = vld [vmem:[%s6 + $0xa8] sm:$0xff]
    %v120 = vld [vmem:[%s6 + $0xb0] sm:$0xff]
    %v121 = vld [vmem:[%s6 + $0xb8] sm:$0xff]
    %v122 = vld [vmem:[%s6 + $0xc0] sm:$0xff]
    %v123 = vld [vmem:[%s6 + $0xc8] sm:$0xff]
    %v124 = vld [vmem:[%s6 + $0xd0] sm:$0xff]
    %v125 = vld [vmem:[%s6 + $0xd8] sm:$0xff]
    %v126 = vld [vmem:[%s6 + $0xe0] sm:$0xff]
    %v127 = vld [vmem:[%s6 + $0xe8] sm:$0xff]
    %v128 = vld [vmem:[%s6 + $0xf0] sm:$0xff]
    %v129 = vld [vmem:[%s6 + $0xf8] sm:$0xff]
    %v130 = vld [vmem:[%s6 + $0x100] sm:$0xff]
    %v131 = vld [vmem:[%s6 + $0x108] sm:$0xff]
    %v132 = vld [vmem:[%s6 + $0x110] sm:$0xff]
    %v133 = vld [vmem:[%s6 + $0x118] sm:$0xff]
    %v134 = vld [vmem:[%s6 + $0x120] sm:$0xff]
    %v135 = vld [vmem:[%s6 + $0x128] sm:$0xff]
    %v136 = vld [vmem:[%s6 + $0x130] sm:$0xff]
    %v137 = vld [vmem:[%s6 + $0x138] sm:$0xff]
    %v138 = vld [vmem:[%s6 + $0x140] sm:$0xff]
    %v139 = vld [vmem:[%s6 + $0x148] sm:$0xff]
    %v140 = vld [vmem:[%s6 + $0x150] sm:$0xff]
    %v141 = vld [vmem:[%s6 + $0x158] sm:$0xff]
    %v142 = vld [vmem:[%s6 + $0x160] sm:$0xff]
    %v143 = vld [vmem:[%s6 + $0x168] sm:$0xff]
    %v144 = vld [vmem:[%s6 + $0x170] sm:$0xff]
    %v145 = vld [vmem:[%s6 + $0x178] sm:$0xff]
    %v146 = vld [vmem:[%s6 + $0x180] sm:$0xff]
    %v147 = vld [vmem:[%s6 + $0x188] sm:$0xff]
    %v148 = vld [vmem:[%s6 + $0x190] sm:$0xff]
    %v149 = vld [vmem:[%s6 + $0x198] sm:$0xff]
    %v150 = vld [vmem:[%s6 + $0x1a0] sm:$0xff]
    %v151 = vld [vmem:[%s6 + $0x1a8] sm:$0xff]
    %v152 = vld [vmem:[%s6 + $0x1b0] sm:$0xff]
    %v153 = vld [vmem:[%s6 + $0x1b8] sm:$0xff]
    %v154 = vld [vmem:[%s6 + $0x1c0] sm:$0xff]
    %v155 = vld [vmem:[%s6 + $0x1c8] sm:$0xff]
    %v156 = vld [vmem:[%s6 + $0x1d0] sm:$0xff]
    %v157 = vld [vmem:[%s6 + $0x1d8] sm:$0xff]
    %v158 = vld [vmem:[%s6 + $0x1e0] sm:$0xff]
    %v159 = vld [vmem:[%s6 + $0x1e8] sm:$0xff]
    %v160 = vld [vmem:[%s6 + $0x1f0] sm:$0xff]
    %v161 = vld [vmem:[%s6 + $0x1f8] sm:$0xff]
    %v162 = vrot.slane %v34, 7
    %v163 = vrot.slane %v35, 7
    %v164 = vrot.slane %v36, 7
    %v165 = vrot.slane %v37, 7
    %v166 = vrot.slane %v38, 7
    %v167 = vrot.slane %v39, 7
    %v168 = vrot.slane %v40, 7
    %v169 = vrot.slane %v41, 7
    %v170 = vrot.slane %v42, 7
    %v171 = vrot.slane %v43, 7
    %v172 = vrot.slane %v44, 7
    %v173 = vrot.slane %v45, 7
    %v174 = vrot.slane %v46, 7
    %v175 = vrot.slane %v47, 7
    %v176 = vrot.slane %v48, 7
    %v177 = vrot.slane %v49, 7
    %v178 = vrot.slane %v50, 7
    %v179 = vrot.slane %v51, 7
    %v180 = vrot.slane %v52, 7
    %v181 = vrot.slane %v53, 7
    %v182 = vrot.slane %v54, 7
    %v183 = vrot.slane %v55, 7
    %v184 = vrot.slane %v56, 7
    %v185 = vrot.slane %v57, 7
    %v186 = vrot.slane %v58, 7
    %v187 = vrot.slane %v59, 7
    %v188 = vrot.slane %v60, 7
    %v189 = vrot.slane %v61, 7
    %v190 = vrot.slane %v62, 7
    %v191 = vrot.slane %v63, 7
    %v192 = vrot.slane %v64, 7
    %v193 = vrot.slane %v65, 7
    %v194 = vrot.slane %v66, 7
    %v195 = vrot.slane %v67, 7
    %v196 = vrot.slane %v68, 7
    %v197 = vrot.slane %v69, 7
    %v198 = vrot.slane %v70, 7
    %v199 = vrot.slane %v71, 7
    %v200 = vrot.slane %v72, 7
    %v201 = vrot.slane %v73, 7
    %v202 = vrot.slane %v74, 7
    %v203 = vrot.slane %v75, 7
    %v204 = vrot.slane %v76, 7
    %v205 = vrot.slane %v77, 7
    %v206 = vrot.slane %v78, 7
    %v207 = vrot.slane %v79, 7
    %v208 = vrot.slane %v80, 7
    %v209 = vrot.slane %v81, 7
    %v210 = vrot.slane %v82, 7
    %v211 = vrot.slane %v83, 7
    %v212 = vrot.slane %v84, 7
    %v213 = vrot.slane %v85, 7
    %v214 = vrot.slane %v86, 7
    %v215 = vrot.slane %v87, 7
    %v216 = vrot.slane %v88, 7
    %v217 = vrot.slane %v89, 7
    %v218 = vrot.slane %v90, 7
    %v219 = vrot.slane %v91, 7
    %v220 = vrot.slane %v92, 7
    %v221 = vrot.slane %v93, 7
    %v222 = vrot.slane %v94, 7
    %v223 = vrot.slane %v95, 7
    %v224 = vrot.slane %v96, 7
    %v225 = vrot.slane %v97, 7
    %v226 = vlaneseq
    %v227 = vshrl.u32 %v226, 7
    %vm228 = vcmp.lt.s32.totalorder %v227, 1
    %v229 = vsel %vm228, %v224, %v225
    %v230 = vsel %vm228, %v223, %v224
    %v231 = vsel %vm228, %v222, %v223
    %v232 = vsel %vm228, %v221, %v222
    %v233 = vsel %vm228, %v220, %v221
    %v234 = vsel %vm228, %v219, %v220
    %v235 = vsel %vm228, %v218, %v219
    %v236 = vsel %vm228, %v217, %v218
    %v237 = vsel %vm228, %v216, %v217
    %v238 = vsel %vm228, %v215, %v216
    %v239 = vsel %vm228, %v214, %v215
    %v240 = vsel %vm228, %v213, %v214
    %v241 = vsel %vm228, %v212, %v213
    %v242 = vsel %vm228, %v211, %v212
    %v243 = vsel %vm228, %v210, %v211
    %v244 = vsel %vm228, %v209, %v210
    %v245 = vsel %vm228, %v208, %v209
    %v246 = vsel %vm228, %v207, %v208
    %v247 = vsel %vm228, %v206, %v207
    %v248 = vsel %vm228, %v205, %v206
    %v249 = vsel %vm228, %v204, %v205
    %v250 = vsel %vm228, %v203, %v204
    %v251 = vsel %vm228, %v202, %v203
    %v252 = vsel %vm228, %v201, %v202
    %v253 = vsel %vm228, %v200, %v201
    %v254 = vsel %vm228, %v199, %v200
    %v255 = vsel %vm228, %v198, %v199
    %v256 = vsel %vm228, %v197, %v198
    %v257 = vsel %vm228, %v196, %v197
    %v258 = vsel %vm228, %v195, %v196
    %v259 = vsel %vm228, %v194, %v195
    %v260 = vsel %vm228, %v193, %v194
    %v261 = vsel %vm228, %v192, %v193
    %v262 = vsel %vm228, %v191, %v192
    %v263 = vsel %vm228, %v190, %v191
    %v264 = vsel %vm228, %v189, %v190
    %v265 = vsel %vm228, %v188, %v189
    %v266 = vsel %vm228, %v187, %v188
    %v267 = vsel %vm228, %v186, %v187
    %v268 = vsel %vm228, %v185, %v186
    %v269 = vsel %vm228, %v184, %v185
    %v270 = vsel %vm228, %v183, %v184
    %v271 = vsel %vm228, %v182, %v183
    %v272 = vsel %vm228, %v181, %v182
    %v273 = vsel %vm228, %v180, %v181
    %v274 = vsel %vm228, %v179, %v180
    %v275 = vsel %vm228, %v178, %v179
    %v276 = vsel %vm228, %v177, %v178
    %v277 = vsel %vm228, %v176, %v177
    %v278 = vsel %vm228, %v175, %v176
    %v279 = vsel %vm228, %v174, %v175
    %v280 = vsel %vm228, %v173, %v174
    %v281 = vsel %vm228, %v172, %v173
    %v282 = vsel %vm228, %v171, %v172
    %v283 = vsel %vm228, %v170, %v171
    %v284 = vsel %vm228, %v169, %v170
    %v285 = vsel %vm228, %v168, %v169
    %v286 = vsel %vm228, %v167, %v168
    %v287 = vsel %vm228, %v166, %v167
    %v288 = vsel %vm228, %v165, %v166
    %v289 = vsel %vm228, %v164, %v165
    %v290 = vsel %vm228, %v163, %v164
    %v291 = vsel %vm228, %v162, %v163
    %v292 = vsel %vm228, %v225, %v162
    %294 = vset.pattern.permute.xlu0 0
    %295 = vperm.xlu0 %294, %v98
    %v296 = vpop.permute.xlu0 %295
    %299 = vset.pattern.permute.xlu0 0
    %300 = vperm.xlu0 %299, %v99
    %v301 = vpop.permute.xlu0 %300
    %304 = vset.pattern.permute.xlu0 0
    %305 = vperm.xlu0 %304, %v100
    %v306 = vpop.permute.xlu0 %305
    %309 = vset.pattern.permute.xlu0 0
    %310 = vperm.xlu0 %309, %v101
    %v311 = vpop.permute.xlu0 %310
    %314 = vset.pattern.permute.xlu0 0
    %315 = vperm.xlu0 %314, %v102
    %v316 = vpop.permute.xlu0 %315
    %319 = vset.pattern.permute.xlu0 0
    %320 = vperm.xlu0 %319, %v103
    %v321 = vpop.permute.xlu0 %320
    %324 = vset.pattern.permute.xlu0 0
    %325 = vperm.xlu0 %324, %v104
    %v326 = vpop.permute.xlu0 %325
    %329 = vset.pattern.permute.xlu0 0
    %330 = vperm.xlu0 %329, %v105
    %v331 = vpop.permute.xlu0 %330
    %334 = vset.pattern.permute.xlu0 0
    %335 = vperm.xlu0 %334, %v106
    %v336 = vpop.permute.xlu0 %335
    %339 = vset.pattern.permute.xlu0 0
    %340 = vperm.xlu0 %339, %v107
    %v341 = vpop.permute.xlu0 %340
    %344 = vset.pattern.permute.xlu0 0
    %345 = vperm.xlu0 %344, %v108
    %v346 = vpop.permute.xlu0 %345
    %349 = vset.pattern.permute.xlu0 0
    %350 = vperm.xlu0 %349, %v109
    %v351 = vpop.permute.xlu0 %350
    %354 = vset.pattern.permute.xlu0 0
    %355 = vperm.xlu0 %354, %v110
    %v356 = vpop.permute.xlu0 %355
    %359 = vset.pattern.permute.xlu0 0
    %360 = vperm.xlu0 %359, %v111
    %v361 = vpop.permute.xlu0 %360
    %364 = vset.pattern.permute.xlu0 0
    %365 = vperm.xlu0 %364, %v112
    %v366 = vpop.permute.xlu0 %365
    %369 = vset.pattern.permute.xlu0 0
    %370 = vperm.xlu0 %369, %v113
    %v371 = vpop.permute.xlu0 %370
    %374 = vset.pattern.permute.xlu0 0
    %375 = vperm.xlu0 %374, %v114
    %v376 = vpop.permute.xlu0 %375
    %379 = vset.pattern.permute.xlu0 0
    %380 = vperm.xlu0 %379, %v115
    %v381 = vpop.permute.xlu0 %380
    %384 = vset.pattern.permute.xlu0 0
    %385 = vperm.xlu0 %384, %v116
    %v386 = vpop.permute.xlu0 %385
    %389 = vset.pattern.permute.xlu0 0
    %390 = vperm.xlu0 %389, %v117
    %v391 = vpop.permute.xlu0 %390
    %394 = vset.pattern.permute.xlu0 0
    %395 = vperm.xlu0 %394, %v118
    %v396 = vpop.permute.xlu0 %395
    %399 = vset.pattern.permute.xlu0 0
    %400 = vperm.xlu0 %399, %v119
    %v401 = vpop.permute.xlu0 %400
    %404 = vset.pattern.permute.xlu0 0
    %405 = vperm.xlu0 %404, %v120
    %v406 = vpop.permute.xlu0 %405
    %409 = vset.pattern.permute.xlu0 0
    %410 = vperm.xlu0 %409, %v121
    %v411 = vpop.permute.xlu0 %410
    %414 = vset.pattern.permute.xlu0 0
    %415 = vperm.xlu0 %414, %v122
    %v416 = vpop.permute.xlu0 %415
    %419 = vset.pattern.permute.xlu0 0
    %420 = vperm.xlu0 %419, %v123
    %v421 = vpop.permute.xlu0 %420
    %424 = vset.pattern.permute.xlu0 0
    %425 = vperm.xlu0 %424, %v124
    %v426 = vpop.permute.xlu0 %425
    %429 = vset.pattern.permute.xlu0 0
    %430 = vperm.xlu0 %429, %v125
    %v431 = vpop.permute.xlu0 %430
    %434 = vset.pattern.permute.xlu0 0
    %435 = vperm.xlu0 %434, %v126
    %v436 = vpop.permute.xlu0 %435
    %439 = vset.pattern.permute.xlu0 0
    %440 = vperm.xlu0 %439, %v127
    %v441 = vpop.permute.xlu0 %440
    %444 = vset.pattern.permute.xlu0 0
    %445 = vperm.xlu0 %444, %v128
    %v446 = vpop.permute.xlu0 %445
    %449 = vset.pattern.permute.xlu0 0
    %450 = vperm.xlu0 %449, %v129
    %v451 = vpop.permute.xlu0 %450
    %454 = vset.pattern.permute.xlu0 0
    %455 = vperm.xlu0 %454, %v130
    %v456 = vpop.permute.xlu0 %455
    %459 = vset.pattern.permute.xlu0 0
    %460 = vperm.xlu0 %459, %v131
    %v461 = vpop.permute.xlu0 %460
    %464 = vset.pattern.permute.xlu0 0
    %465 = vperm.xlu0 %464, %v132
    %v466 = vpop.permute.xlu0 %465
    %469 = vset.pattern.permute.xlu0 0
    %470 = vperm.xlu0 %469, %v133
    %v471 = vpop.permute.xlu0 %470
    %474 = vset.pattern.permute.xlu0 0
    %475 = vperm.xlu0 %474, %v134
    %v476 = vpop.permute.xlu0 %475
    %479 = vset.pattern.permute.xlu0 0
    %480 = vperm.xlu0 %479, %v135
    %v481 = vpop.permute.xlu0 %480
    %484 = vset.pattern.permute.xlu0 0
    %485 = vperm.xlu0 %484, %v136
    %v486 = vpop.permute.xlu0 %485
    %489 = vset.pattern.permute.xlu0 0
    %490 = vperm.xlu0 %489, %v137
    %v491 = vpop.permute.xlu0 %490
    %494 = vset.pattern.permute.xlu0 0
    %495 = vperm.xlu0 %494, %v138
    %v496 = vpop.permute.xlu0 %495
    %499 = vset.pattern.permute.xlu0 0
    %500 = vperm.xlu0 %499, %v139
    %v501 = vpop.permute.xlu0 %500
    %504 = vset.pattern.permute.xlu0 0
    %505 = vperm.xlu0 %504, %v140
    %v506 = vpop.permute.xlu0 %505
    %509 = vset.pattern.permute.xlu0 0
    %510 = vperm.xlu0 %509, %v141
    %v511 = vpop.permute.xlu0 %510
    %514 = vset.pattern.permute.xlu0 0
    %515 = vperm.xlu0 %514, %v142
    %v516 = vpop.permute.xlu0 %515
    %519 = vset.pattern.permute.xlu0 0
    %520 = vperm.xlu0 %519, %v143
    %v521 = vpop.permute.xlu0 %520
    %524 = vset.pattern.permute.xlu0 0
    %525 = vperm.xlu0 %524, %v144
    %v526 = vpop.permute.xlu0 %525
    %529 = vset.pattern.permute.xlu0 0
    %530 = vperm.xlu0 %529, %v145
    %v531 = vpop.permute.xlu0 %530
    %534 = vset.pattern.permute.xlu0 0
    %535 = vperm.xlu0 %534, %v146
    %v536 = vpop.permute.xlu0 %535
    %539 = vset.pattern.permute.xlu0 0
    %540 = vperm.xlu0 %539, %v147
    %v541 = vpop.permute.xlu0 %540
    %544 = vset.pattern.permute.xlu0 0
    %545 = vperm.xlu0 %544, %v148
    %v546 = vpop.permute.xlu0 %545
    %549 = vset.pattern.permute.xlu0 0
    %550 = vperm.xlu0 %549, %v149
    %v551 = vpop.permute.xlu0 %550
    %554 = vset.pattern.permute.xlu0 0
    %555 = vperm.xlu0 %554, %v150
    %v556 = vpop.permute.xlu0 %555
    %559 = vset.pattern.permute.xlu0 0
    %560 = vperm.xlu0 %559, %v151
    %v561 = vpop.permute.xlu0 %560
    %564 = vset.pattern.permute.xlu0 0
    %565 = vperm.xlu0 %564, %v152
    %v566 = vpop.permute.xlu0 %565
    %569 = vset.pattern.permute.xlu0 0
    %570 = vperm.xlu0 %569, %v153
    %v571 = vpop.permute.xlu0 %570
    %574 = vset.pattern.permute.xlu0 0
    %575 = vperm.xlu0 %574, %v154
    %v576 = vpop.permute.xlu0 %575
    %579 = vset.pattern.permute.xlu0 0
    %580 = vperm.xlu0 %579, %v155
    %v581 = vpop.permute.xlu0 %580
    %584 = vset.pattern.permute.xlu0 0
    %585 = vperm.xlu0 %584, %v156
    %v586 = vpop.permute.xlu0 %585
    %589 = vset.pattern.permute.xlu0 0
    %590 = vperm.xlu0 %589, %v157
    %v591 = vpop.permute.xlu0 %590
    %594 = vset.pattern.permute.xlu0 0
    %595 = vperm.xlu0 %594, %v158
    %v596 = vpop.permute.xlu0 %595
    %599 = vset.pattern.permute.xlu0 0
    %600 = vperm.xlu0 %599, %v159
    %v601 = vpop.permute.xlu0 %600
    %604 = vset.pattern.permute.xlu0 0
    %605 = vperm.xlu0 %604, %v160
    %v606 = vpop.permute.xlu0 %605
    %609 = vset.pattern.permute.xlu0 0
    %610 = vperm.xlu0 %609, %v161
    %v611 = vpop.permute.xlu0 %610
    %v613 = vmul.f32 %v230, %v296
    %v614 = vmul.f32 %v229, %v301
    %v615 = vmul.f32 %v292, %v306
    %v616 = vmul.f32 %v291, %v311
    %v617 = vmul.f32 %v290, %v316
    %v618 = vmul.f32 %v289, %v321
    %v619 = vmul.f32 %v288, %v326
    %v620 = vmul.f32 %v287, %v331
    %v621 = vmul.f32 %v286, %v336
    %v622 = vmul.f32 %v285, %v341
    %v623 = vmul.f32 %v284, %v346
    %v624 = vmul.f32 %v283, %v351
    %v625 = vmul.f32 %v282, %v356
    %v626 = vmul.f32 %v281, %v361
    %v627 = vmul.f32 %v280, %v366
    %v628 = vmul.f32 %v279, %v371
    %v629 = vmul.f32 %v278, %v376
    %v630 = vmul.f32 %v277, %v381
    %v631 = vmul.f32 %v276, %v386
    %v632 = vmul.f32 %v275, %v391
    %v633 = vmul.f32 %v274, %v396
    %v634 = vmul.f32 %v273, %v401
    %v635 = vmul.f32 %v272, %v406
    %v636 = vmul.f32 %v271, %v411
    %v637 = vmul.f32 %v270, %v416
    %v638 = vmul.f32 %v269, %v421
    %v639 = vmul.f32 %v268, %v426
    %v640 = vmul.f32 %v267, %v431
    %v641 = vmul.f32 %v266, %v436
    %v642 = vmul.f32 %v265, %v441
    %v643 = vmul.f32 %v264, %v446
    %v644 = vmul.f32 %v263, %v451
    %v645 = vmul.f32 %v262, %v456
    %v646 = vmul.f32 %v261, %v461
    %v647 = vmul.f32 %v260, %v466
    %v648 = vmul.f32 %v259, %v471
    %v649 = vmul.f32 %v258, %v476
    %v650 = vmul.f32 %v257, %v481
    %v651 = vmul.f32 %v256, %v486
    %v652 = vmul.f32 %v255, %v491
    %v653 = vmul.f32 %v254, %v496
    %v654 = vmul.f32 %v253, %v501
    %v655 = vmul.f32 %v252, %v506
    %v656 = vmul.f32 %v251, %v511
    %v657 = vmul.f32 %v250, %v516
    %v658 = vmul.f32 %v249, %v521
    %v659 = vmul.f32 %v248, %v526
    %v660 = vmul.f32 %v247, %v531
    %v661 = vmul.f32 %v246, %v536
    %v662 = vmul.f32 %v245, %v541
    %v663 = vmul.f32 %v244, %v546
    %v664 = vmul.f32 %v243, %v551
    %v665 = vmul.f32 %v242, %v556
    %v666 = vmul.f32 %v241, %v561
    %v667 = vmul.f32 %v240, %v566
    %v668 = vmul.f32 %v239, %v571
    %v669 = vmul.f32 %v238, %v576
    %v670 = vmul.f32 %v237, %v581
    %v671 = vmul.f32 %v236, %v586
    %v672 = vmul.f32 %v235, %v591
    %v673 = vmul.f32 %v234, %v596
    %v674 = vmul.f32 %v233, %v601
    %v675 = vmul.f32 %v232, %v606
    %v676 = vmul.f32 %v231, %v611
    %vm677 = vcmask 23552
    %678 = vst.msk [vmem:[#allocation2] sm:$0xff] %vm677, %v613
    %679 = vst.msk [vmem:[#allocation2 + $0x8] sm:$0xff] %vm677, %v614
    %680 = vst.msk [vmem:[#allocation2 + $0x10] sm:$0xff] %vm677, %v615
    %681 = vst.msk [vmem:[#allocation2 + $0x18] sm:$0xff] %vm677, %v616
    %682 = vst.msk [vmem:[#allocation2 + $0x20] sm:$0xff] %vm677, %v617
    %683 = vst.msk [vmem:[#allocation2 + $0x28] sm:$0xff] %vm677, %v618
    %684 = vst.msk [vmem:[#allocation2 + $0x30] sm:$0xff] %vm677, %v619
    %685 = vst.msk [vmem:[#allocation2 + $0x38] sm:$0xff] %vm677, %v620
    %686 = vst.msk [vmem:[#allocation2 + $0x40] sm:$0xff] %vm677, %v621
    %687 = vst.msk [vmem:[#allocation2 + $0x48] sm:$0xff] %vm677, %v622
    %688 = vst.msk [vmem:[#allocation2 + $0x50] sm:$0xff] %vm677, %v623
    %689 = vst.msk [vmem:[#allocation2 + $0x58] sm:$0xff] %vm677, %v624
    %690 = vst.msk [vmem:[#allocation2 + $0x60] sm:$0xff] %vm677, %v625
    %691 = vst.msk [vmem:[#allocation2 + $0x68] sm:$0xff] %vm677, %v626
    %692 = vst.msk [vmem:[#allocation2 + $0x70] sm:$0xff] %vm677, %v627
    %693 = vst.msk [vmem:[#allocation2 + $0x78] sm:$0xff] %vm677, %v628
    %694 = vst.msk [vmem:[#allocation2 + $0x80] sm:$0xff] %vm677, %v629
    %695 = vst.msk [vmem:[#allocation2 + $0x88] sm:$0xff] %vm677, %v630
    %696 = vst.msk [vmem:[#allocation2 + $0x90] sm:$0xff] %vm677, %v631
    %697 = vst.msk [vmem:[#allocation2 + $0x98] sm:$0xff] %vm677, %v632
    %698 = vst.msk [vmem:[#allocation2 + $0xa0] sm:$0xff] %vm677, %v633
    %699 = vst.msk [vmem:[#allocation2 + $0xa8] sm:$0xff] %vm677, %v634
    %700 = vst.msk [vmem:[#allocation2 + $0xb0] sm:$0xff] %vm677, %v635
    %701 = vst.msk [vmem:[#allocation2 + $0xb8] sm:$0xff] %vm677, %v636
    %702 = vst.msk [vmem:[#allocation2 + $0xc0] sm:$0xff] %vm677, %v637
    %703 = vst.msk [vmem:[#allocation2 + $0xc8] sm:$0xff] %vm677, %v638
    %704 = vst.msk [vmem:[#allocation2 + $0xd0] sm:$0xff] %vm677, %v639
    %705 = vst.msk [vmem:[#allocation2 + $0xd8] sm:$0xff] %vm677, %v640
    %706 = vst.msk [vmem:[#allocation2 + $0xe0] sm:$0xff] %vm677, %v641
    %707 = vst.msk [vmem:[#allocation2 + $0xe8] sm:$0xff] %vm677, %v642
    %708 = vst.msk [vmem:[#allocation2 + $0xf0] sm:$0xff] %vm677, %v643
    %709 = vst.msk [vmem:[#allocation2 + $0xf8] sm:$0xff] %vm677, %v644
    %710 = vst.msk [vmem:[#allocation2 + $0x100] sm:$0xff] %vm677, %v645
    %711 = vst.msk [vmem:[#allocation2 + $0x108] sm:$0xff] %vm677, %v646
    %712 = vst.msk [vmem:[#allocation2 + $0x110] sm:$0xff] %vm677, %v647
    %713 = vst.msk [vmem:[#allocation2 + $0x118] sm:$0xff] %vm677, %v648
    %714 = vst.msk [vmem:[#allocation2 + $0x120] sm:$0xff] %vm677, %v649
    %715 = vst.msk [vmem:[#allocation2 + $0x128] sm:$0xff] %vm677, %v650
    %716 = vst.msk [vmem:[#allocation2 + $0x130] sm:$0xff] %vm677, %v651
    %717 = vst.msk [vmem:[#allocation2 + $0x138] sm:$0xff] %vm677, %v652
    %718 = vst.msk [vmem:[#allocation2 + $0x140] sm:$0xff] %vm677, %v653
    %719 = vst.msk [vmem:[#allocation2 + $0x148] sm:$0xff] %vm677, %v654
    %720 = vst.msk [vmem:[#allocation2 + $0x150] sm:$0xff] %vm677, %v655
    %721 = vst.msk [vmem:[#allocation2 + $0x158] sm:$0xff] %vm677, %v656
    %722 = vst.msk [vmem:[#allocation2 + $0x160] sm:$0xff] %vm677, %v657
    %723 = vst.msk [vmem:[#allocation2 + $0x168] sm:$0xff] %vm677, %v658
    %724 = vst.msk [vmem:[#allocation2 + $0x170] sm:$0xff] %vm677, %v659
    %725 = vst.msk [vmem:[#allocation2 + $0x178] sm:$0xff] %vm677, %v660
    %726 = vst.msk [vmem:[#allocation2 + $0x180] sm:$0xff] %vm677, %v661
    %727 = vst.msk [vmem:[#allocation2 + $0x188] sm:$0xff] %vm677, %v662
    %728 = vst.msk [vmem:[#allocation2 + $0x190] sm:$0xff] %vm677, %v663
    %729 = vst.msk [vmem:[#allocation2 + $0x198] sm:$0xff] %vm677, %v664
    %730 = vst.msk [vmem:[#allocation2 + $0x1a0] sm:$0xff] %vm677, %v665
    %731 = vst.msk [vmem:[#allocation2 + $0x1a8] sm:$0xff] %vm677, %v666
    %732 = vst.msk [vmem:[#allocation2 + $0x1b0] sm:$0xff] %vm677, %v667
    %733 = vst.msk [vmem:[#allocation2 + $0x1b8] sm:$0xff] %vm677, %v668
    %734 = vst.msk [vmem:[#allocation2 + $0x1c0] sm:$0xff] %vm677, %v669
    %735 = vst.msk [vmem:[#allocation2 + $0x1c8] sm:$0xff] %vm677, %v670
    %736 = vst.msk [vmem:[#allocation2 + $0x1d0] sm:$0xff] %vm677, %v671
    %737 = vst.msk [vmem:[#allocation2 + $0x1d8] sm:$0xff] %vm677, %v672
    %738 = vst.msk [vmem:[#allocation2 + $0x1e0] sm:$0xff] %vm677, %v673
    %739 = vst.msk [vmem:[#allocation2 + $0x1e8] sm:$0xff] %vm677, %v674
    %740 = vst.msk [vmem:[#allocation2 + $0x1f0] sm:$0xff] %vm677, %v675
    %741 = vst.msk [vmem:[#allocation2 + $0x1f8] sm:$0xff] %vm677, %v676
    %742 = vset.pattern.permute.xlu0 1
    %743 = vperm.xlu0 %742, %v98
    %v744 = vpop.permute.xlu0 %743
    %746 = vset.pattern.permute.xlu0 1
    %747 = vperm.xlu0 %746, %v99
    %v748 = vpop.permute.xlu0 %747
    %750 = vset.pattern.permute.xlu0 1
    %751 = vperm.xlu0 %750, %v100
    %v752 = vpop.permute.xlu0 %751
    %754 = vset.pattern.permute.xlu0 1
    %755 = vperm.xlu0 %754, %v101
    %v756 = vpop.permute.xlu0 %755
    %758 = vset.pattern.permute.xlu0 1
    %759 = vperm.xlu0 %758, %v102
    %v760 = vpop.permute.xlu0 %759
    %762 = vset.pattern.permute.xlu0 1
    %763 = vperm.xlu0 %762, %v103
    %v764 = vpop.permute.xlu0 %763
    %766 = vset.pattern.permute.xlu0 1
    %767 = vperm.xlu0 %766, %v104
    %v768 = vpop.permute.xlu0 %767
    %770 = vset.pattern.permute.xlu0 1
    %771 = vperm.xlu0 %770, %v105
    %v772 = vpop.permute.xlu0 %771
    %774 = vset.pattern.permute.xlu0 1
    %775 = vperm.xlu0 %774, %v106
    %v776 = vpop.permute.xlu0 %775
    %778 = vset.pattern.permute.xlu0 1
    %779 = vperm.xlu0 %778, %v107
    %v780 = vpop.permute.xlu0 %779
    %782 = vset.pattern.permute.xlu0 1
    %783 = vperm.xlu0 %782, %v108
    %v784 = vpop.permute.xlu0 %783
    %786 = vset.pattern.permute.xlu0 1
    %787 = vperm.xlu0 %786, %v109
    %v788 = vpop.permute.xlu0 %787
    %790 = vset.pattern.permute.xlu0 1
    %791 = vperm.xlu0 %790, %v110
    %v792 = vpop.permute.xlu0 %791
    %794 = vset.pattern.permute.xlu0 1
    %795 = vperm.xlu0 %794, %v111
    %v796 = vpop.permute.xlu0 %795
    %798 = vset.pattern.permute.xlu0 1
    %799 = vperm.xlu0 %798, %v112
    %v800 = vpop.permute.xlu0 %799
    %802 = vset.pattern.permute.xlu0 1
    %803 = vperm.xlu0 %802, %v113
    %v804 = vpop.permute.xlu0 %803
    %806 = vset.pattern.permute.xlu0 1
    %807 = vperm.xlu0 %806, %v114
    %v808 = vpop.permute.xlu0 %807
    %810 = vset.pattern.permute.xlu0 1
    %811 = vperm.xlu0 %810, %v115
    %v812 = vpop.permute.xlu0 %811
    %814 = vset.pattern.permute.xlu0 1
    %815 = vperm.xlu0 %814, %v116
    %v816 = vpop.permute.xlu0 %815
    %818 = vset.pattern.permute.xlu0 1
    %819 = vperm.xlu0 %818, %v117
    %v820 = vpop.permute.xlu0 %819
    %822 = vset.pattern.permute.xlu0 1
    %823 = vperm.xlu0 %822, %v118
    %v824 = vpop.permute.xlu0 %823
    %826 = vset.pattern.permute.xlu0 1
    %827 = vperm.xlu0 %826, %v119
    %v828 = vpop.permute.xlu0 %827
    %830 = vset.pattern.permute.xlu0 1
    %831 = vperm.xlu0 %830, %v120
    %v832 = vpop.permute.xlu0 %831
    %834 = vset.pattern.permute.xlu0 1
    %835 = vperm.xlu0 %834, %v121
    %v836 = vpop.permute.xlu0 %835
    %838 = vset.pattern.permute.xlu0 1
    %839 = vperm.xlu0 %838, %v122
    %v840 = vpop.permute.xlu0 %839
    %842 = vset.pattern.permute.xlu0 1
    %843 = vperm.xlu0 %842, %v123
    %v844 = vpop.permute.xlu0 %843
    %846 = vset.pattern.permute.xlu0 1
    %847 = vperm.xlu0 %846, %v124
    %v848 = vpop.permute.xlu0 %847
    %850 = vset.pattern.permute.xlu0 1
    %851 = vperm.xlu0 %850, %v125
    %v852 = vpop.permute.xlu0 %851
    %854 = vset.pattern.permute.xlu0 1
    %855 = vperm.xlu0 %854, %v126
    %v856 = vpop.permute.xlu0 %855
    %858 = vset.pattern.permute.xlu0 1
    %859 = vperm.xlu0 %858, %v127
    %v860 = vpop.permute.xlu0 %859
    %862 = vset.pattern.permute.xlu0 1
    %863 = vperm.xlu0 %862, %v128
    %v864 = vpop.permute.xlu0 %863
    %866 = vset.pattern.permute.xlu0 1
    %867 = vperm.xlu0 %866, %v129
    %v868 = vpop.permute.xlu0 %867
    %870 = vset.pattern.permute.xlu0 1
    %871 = vperm.xlu0 %870, %v130
    %v872 = vpop.permute.xlu0 %871
    %874 = vset.pattern.permute.xlu0 1
    %875 = vperm.xlu0 %874, %v131
    %v876 = vpop.permute.xlu0 %875
    %878 = vset.pattern.permute.xlu0 1
    %879 = vperm.xlu0 %878, %v132
    %v880 = vpop.permute.xlu0 %879
    %882 = vset.pattern.permute.xlu0 1
    %883 = vperm.xlu0 %882, %v133
    %v884 = vpop.permute.xlu0 %883
    %886 = vset.pattern.permute.xlu0 1
    %887 = vperm.xlu0 %886, %v134
    %v888 = vpop.permute.xlu0 %887
    %890 = vset.pattern.permute.xlu0 1
    %891 = vperm.xlu0 %890, %v135
    %v892 = vpop.permute.xlu0 %891
    %894 = vset.pattern.permute.xlu0 1
    %895 = vperm.xlu0 %894, %v136
    %v896 = vpop.permute.xlu0 %895
    %898 = vset.pattern.permute.xlu0 1
    %899 = vperm.xlu0 %898, %v137
    %v900 = vpop.permute.xlu0 %899
    %902 = vset.pattern.permute.xlu0 1
    %903 = vperm.xlu0 %902, %v138
    %v904 = vpop.permute.xlu0 %903
    %906 = vset.pattern.permute.xlu0 1
    %907 = vperm.xlu0 %906, %v139
    %v908 = vpop.permute.xlu0 %907
    %910 = vset.pattern.permute.xlu0 1
    %911 = vperm.xlu0 %910, %v140
    %v912 = vpop.permute.xlu0 %911
    %914 = vset.pattern.permute.xlu0 1
    %915 = vperm.xlu0 %914, %v141
    %v916 = vpop.permute.xlu0 %915
    %918 = vset.pattern.permute.xlu0 1
    %919 = vperm.xlu0 %918, %v142
    %v920 = vpop.permute.xlu0 %919
    %922 = vset.pattern.permute.xlu0 1
    %923 = vperm.xlu0 %922, %v143
    %v924 = vpop.permute.xlu0 %923
    %926 = vset.pattern.permute.xlu0 1
    %927 = vperm.xlu0 %926, %v144
    %v928 = vpop.permute.xlu0 %927
    %930 = vset.pattern.permute.xlu0 1
    %931 = vperm.xlu0 %930, %v145
    %v932 = vpop.permute.xlu0 %931
    %934 = vset.pattern.permute.xlu0 1
    %935 = vperm.xlu0 %934, %v146
    %v936 = vpop.permute.xlu0 %935
    %938 = vset.pattern.permute.xlu0 1
    %939 = vperm.xlu0 %938, %v147
    %v940 = vpop.permute.xlu0 %939
    %942 = vset.pattern.permute.xlu0 1
    %943 = vperm.xlu0 %942, %v148
    %v944 = vpop.permute.xlu0 %943
    %946 = vset.pattern.permute.xlu0 1
    %947 = vperm.xlu0 %946, %v149
    %v948 = vpop.permute.xlu0 %947
    %950 = vset.pattern.permute.xlu0 1
    %951 = vperm.xlu0 %950, %v150
    %v952 = vpop.permute.xlu0 %951
    %954 = vset.pattern.permute.xlu0 1
    %955 = vperm.xlu0 %954, %v151
    %v956 = vpop.permute.xlu0 %955
    %958 = vset.pattern.permute.xlu0 1
    %959 = vperm.xlu0 %958, %v152
    %v960 = vpop.permute.xlu0 %959
    %962 = vset.pattern.permute.xlu0 1
    %963 = vperm.xlu0 %962, %v153
    %v964 = vpop.permute.xlu0 %963
    %966 = vset.pattern.permute.xlu0 1
    %967 = vperm.xlu0 %966, %v154
    %v968 = vpop.permute.xlu0 %967
    %970 = vset.pattern.permute.xlu0 1
    %971 = vperm.xlu0 %970, %v155
    %v972 = vpop.permute.xlu0 %971
    %974 = vset.pattern.permute.xlu0 1
    %975 = vperm.xlu0 %974, %v156
    %v976 = vpop.permute.xlu0 %975
    %978 = vset.pattern.permute.xlu0 1
    %979 = vperm.xlu0 %978, %v157
    %v980 = vpop.permute.xlu0 %979
    %982 = vset.pattern.permute.xlu0 1
    %983 = vperm.xlu0 %982, %v158
    %v984 = vpop.permute.xlu0 %983
    %986 = vset.pattern.permute.xlu0 1
    %987 = vperm.xlu0 %986, %v159
    %v988 = vpop.permute.xlu0 %987
    %990 = vset.pattern.permute.xlu0 1
    %991 = vperm.xlu0 %990, %v160
    %v992 = vpop.permute.xlu0 %991
    %994 = vset.pattern.permute.xlu0 1
    %995 = vperm.xlu0 %994, %v161
    %v996 = vpop.permute.xlu0 %995
    %v998 = vmul.f32 %v96, %v744
    %v999 = vmul.f32 %v97, %v748
    %v1000 = vmul.f32 %v34, %v752
    %v1001 = vmul.f32 %v35, %v756
    %v1002 = vmul.f32 %v36, %v760
    %v1003 = vmul.f32 %v37, %v764
    %v1004 = vmul.f32 %v38, %v768
    %v1005 = vmul.f32 %v39, %v772
    %v1006 = vmul.f32 %v40, %v776
    %v1007 = vmul.f32 %v41, %v780
    %v1008 = vmul.f32 %v42, %v784
    %v1009 = vmul.f32 %v43, %v788
    %v1010 = vmul.f32 %v44, %v792
    %v1011 = vmul.f32 %v45, %v796
    %v1012 = vmul.f32 %v46, %v800
    %v1013 = vmul.f32 %v47, %v804
    %v1014 = vmul.f32 %v48, %v808
    %v1015 = vmul.f32 %v49, %v812
    %v1016 = vmul.f32 %v50, %v816
    %v1017 = vmul.f32 %v51, %v820
    %v1018 = vmul.f32 %v52, %v824
    %v1019 = vmul.f32 %v53, %v828
    %v1020 = vmul.f32 %v54, %v832
    %v1021 = vmul.f32 %v55, %v836
    %v1022 = vmul.f32 %v56, %v840
    %v1023 = vmul.f32 %v57, %v844
    %v1024 = vmul.f32 %v58, %v848
    %v1025 = vmul.f32 %v59, %v852
    %v1026 = vmul.f32 %v60, %v856
    %v1027 = vmul.f32 %v61, %v860
    %v1028 = vmul.f32 %v62, %v864
    %v1029 = vmul.f32 %v63, %v868
    %v1030 = vmul.f32 %v64, %v872
    %v1031 = vmul.f32 %v65, %v876
    %v1032 = vmul.f32 %v66, %v880
    %v1033 = vmul.f32 %v67, %v884
    %v1034 = vmul.f32 %v68, %v888
    %v1035 = vmul.f32 %v69, %v892
    %v1036 = vmul.f32 %v70, %v896
    %v1037 = vmul.f32 %v71, %v900
    %v1038 = vmul.f32 %v72, %v904
    %v1039 = vmul.f32 %v73, %v908
    %v1040 = vmul.f32 %v74, %v912
    %v1041 = vmul.f32 %v75, %v916
    %v1042 = vmul.f32 %v76, %v920
    %v1043 = vmul.f32 %v77, %v924
    %v1044 = vmul.f32 %v78, %v928
    %v1045 = vmul.f32 %v79, %v932
    %v1046 = vmul.f32 %v80, %v936
    %v1047 = vmul.f32 %v81, %v940
    %v1048 = vmul.f32 %v82, %v944
    %v1049 = vmul.f32 %v83, %v948
    %v1050 = vmul.f32 %v84, %v952
    %v1051 = vmul.f32 %v85, %v956
    %v1052 = vmul.f32 %v86, %v960
    %v1053 = vmul.f32 %v87, %v964
    %v1054 = vmul.f32 %v88, %v968
    %v1055 = vmul.f32 %v89, %v972
    %v1056 = vmul.f32 %v90, %v976
    %v1057 = vmul.f32 %v91, %v980
    %v1058 = vmul.f32 %v92, %v984
    %v1059 = vmul.f32 %v93, %v988
    %v1060 = vmul.f32 %v94, %v992
    %v1061 = vmul.f32 %v95, %v996
    %1126 = vrot.lane.b32.xlu0 %v998, 3
    %v1127 = vpop.permute.xlu0 %1126
    %1128 = vrot.lane.b32.xlu0 %v999, 3
    %v1129 = vpop.permute.xlu0 %1128
    %1130 = vrot.lane.b32.xlu0 %v1000, 3
    %v1131 = vpop.permute.xlu0 %1130
    %1132 = vrot.lane.b32.xlu0 %v1001, 3
    %v1133 = vpop.permute.xlu0 %1132
    %1134 = vrot.lane.b32.xlu0 %v1002, 3
    %v1135 = vpop.permute.xlu0 %1134
    %1136 = vrot.lane.b32.xlu0 %v1003, 3
    %v1137 = vpop.permute.xlu0 %1136
    %1138 = vrot.lane.b32.xlu0 %v1004, 3
    %v1139 = vpop.permute.xlu0 %1138
    %1140 = vrot.lane.b32.xlu0 %v1005, 3
    %v1141 = vpop.permute.xlu0 %1140
    %1142 = vrot.lane.b32.xlu0 %v1006, 3
    %v1143 = vpop.permute.xlu0 %1142
    %1144 = vrot.lane.b32.xlu0 %v1007, 3
    %v1145 = vpop.permute.xlu0 %1144
    %1146 = vrot.lane.b32.xlu0 %v1008, 3
    %v1147 = vpop.permute.xlu0 %1146
    %1148 = vrot.lane.b32.xlu0 %v1009, 3
    %v1149 = vpop.permute.xlu0 %1148
    %1150 = vrot.lane.b32.xlu0 %v1010, 3
    %v1151 = vpop.permute.xlu0 %1150
    %1152 = vrot.lane.b32.xlu0 %v1011, 3
    %v1153 = vpop.permute.xlu0 %1152
    %1154 = vrot.lane.b32.xlu0 %v1012, 3
    %v1155 = vpop.permute.xlu0 %1154
    %1156 = vrot.lane.b32.xlu0 %v1013, 3
    %v1157 = vpop.permute.xlu0 %1156
    %1158 = vrot.lane.b32.xlu0 %v1014, 3
    %v1159 = vpop.permute.xlu0 %1158
    %1160 = vrot.lane.b32.xlu0 %v1015, 3
    %v1161 = vpop.permute.xlu0 %1160
    %1162 = vrot.lane.b32.xlu0 %v1016, 3
    %v1163 = vpop.permute.xlu0 %1162
    %1164 = vrot.lane.b32.xlu0 %v1017, 3
    %v1165 = vpop.permute.xlu0 %1164
    %1166 = vrot.lane.b32.xlu0 %v1018, 3
    %v1167 = vpop.permute.xlu0 %1166
    %1168 = vrot.lane.b32.xlu0 %v1019, 3
    %v1169 = vpop.permute.xlu0 %1168
    %1170 = vrot.lane.b32.xlu0 %v1020, 3
    %v1171 = vpop.permute.xlu0 %1170
    %1172 = vrot.lane.b32.xlu0 %v1021, 3
    %v1173 = vpop.permute.xlu0 %1172
    %1174 = vrot.lane.b32.xlu0 %v1022, 3
    %v1175 = vpop.permute.xlu0 %1174
    %1176 = vrot.lane.b32.xlu0 %v1023, 3
    %v1177 = vpop.permute.xlu0 %1176
    %1178 = vrot.lane.b32.xlu0 %v1024, 3
    %v1179 = vpop.permute.xlu0 %1178
    %1180 = vrot.lane.b32.xlu0 %v1025, 3
    %v1181 = vpop.permute.xlu0 %1180
    %1182 = vrot.lane.b32.xlu0 %v1026, 3
    %v1183 = vpop.permute.xlu0 %1182
    %1184 = vrot.lane.b32.xlu0 %v1027, 3
    %v1185 = vpop.permute.xlu0 %1184
    %1186 = vrot.lane.b32.xlu0 %v1028, 3
    %v1187 = vpop.permute.xlu0 %1186
    %1188 = vrot.lane.b32.xlu0 %v1029, 3
    %v1189 = vpop.permute.xlu0 %1188
    %1190 = vrot.lane.b32.xlu0 %v1030, 3
    %v1191 = vpop.permute.xlu0 %1190
    %1192 = vrot.lane.b32.xlu0 %v1031, 3
    %v1193 = vpop.permute.xlu0 %1192
    %1194 = vrot.lane.b32.xlu0 %v1032, 3
    %v1195 = vpop.permute.xlu0 %1194
    %1196 = vrot.lane.b32.xlu0 %v1033, 3
    %v1197 = vpop.permute.xlu0 %1196
    %1198 = vrot.lane.b32.xlu0 %v1034, 3
    %v1199 = vpop.permute.xlu0 %1198
    %1200 = vrot.lane.b32.xlu0 %v1035, 3
    %v1201 = vpop.permute.xlu0 %1200
    %1202 = vrot.lane.b32.xlu0 %v1036, 3
    %v1203 = vpop.permute.xlu0 %1202
    %1204 = vrot.lane.b32.xlu0 %v1037, 3
    %v1205 = vpop.permute.xlu0 %1204
    %1206 = vrot.lane.b32.xlu0 %v1038, 3
    %v1207 = vpop.permute.xlu0 %1206
    %1208 = vrot.lane.b32.xlu0 %v1039, 3
    %v1209 = vpop.permute.xlu0 %1208
    %1210 = vrot.lane.b32.xlu0 %v1040, 3
    %v1211 = vpop.permute.xlu0 %1210
    %1212 = vrot.lane.b32.xlu0 %v1041, 3
    %v1213 = vpop.permute.xlu0 %1212
    %1214 = vrot.lane.b32.xlu0 %v1042, 3
    %v1215 = vpop.permute.xlu0 %1214
    %1216 = vrot.lane.b32.xlu0 %v1043, 3
    %v1217 = vpop.permute.xlu0 %1216
    %1218 = vrot.lane.b32.xlu0 %v1044, 3
    %v1219 = vpop.permute.xlu0 %1218
    %1220 = vrot.lane.b32.xlu0 %v1045, 3
    %v1221 = vpop.permute.xlu0 %1220
    %1222 = vrot.lane.b32.xlu0 %v1046, 3
    %v1223 = vpop.permute.xlu0 %1222
    %1224 = vrot.lane.b32.xlu0 %v1047, 3
    %v1225 = vpop.permute.xlu0 %1224
    %1226 = vrot.lane.b32.xlu0 %v1048, 3
    %v1227 = vpop.permute.xlu0 %1226
    %1228 = vrot.lane.b32.xlu0 %v1049, 3
    %v1229 = vpop.permute.xlu0 %1228
    %1230 = vrot.lane.b32.xlu0 %v1050, 3
    %v1231 = vpop.permute.xlu0 %1230
    %1232 = vrot.lane.b32.xlu0 %v1051, 3
    %v1233 = vpop.permute.xlu0 %1232
    %1234 = vrot.lane.b32.xlu0 %v1052, 3
    %v1235 = vpop.permute.xlu0 %1234
    %1236 = vrot.lane.b32.xlu0 %v1053, 3
    %v1237 = vpop.permute.xlu0 %1236
    %1238 = vrot.lane.b32.xlu0 %v1054, 3
    %v1239 = vpop.permute.xlu0 %1238
    %1240 = vrot.lane.b32.xlu0 %v1055, 3
    %v1241 = vpop.permute.xlu0 %1240
    %1242 = vrot.lane.b32.xlu0 %v1056, 3
    %v1243 = vpop.permute.xlu0 %1242
    %1244 = vrot.lane.b32.xlu0 %v1057, 3
    %v1245 = vpop.permute.xlu0 %1244
    %1246 = vrot.lane.b32.xlu0 %v1058, 3
    %v1247 = vpop.permute.xlu0 %1246
    %1248 = vrot.lane.b32.xlu0 %v1059, 3
    %v1249 = vpop.permute.xlu0 %1248
    %1250 = vrot.lane.b32.xlu0 %v1060, 3
    %v1251 = vpop.permute.xlu0 %1250
    %1252 = vrot.lane.b32.xlu0 %v1061, 3
    %v1253 = vpop.permute.xlu0 %1252
    %vm1318 = vcmask 48152
    %1319 = vst.msk [vmem:[#allocation2] sm:$0xff] %vm1318, %v1127
    %1320 = vst.msk [vmem:[#allocation2 + $0x8] sm:$0xff] %vm1318, %v1129
    %1321 = vst.msk [vmem:[#allocation2 + $0x10] sm:$0xff] %vm1318, %v1131
    %1322 = vst.msk [vmem:[#allocation2 + $0x18] sm:$0xff] %vm1318, %v1133
    %1323 = vst.msk [vmem:[#allocation2 + $0x20] sm:$0xff] %vm1318, %v1135
    %1324 = vst.msk [vmem:[#allocation2 + $0x28] sm:$0xff] %vm1318, %v1137
    %1325 = vst.msk [vmem:[#allocation2 + $0x30] sm:$0xff] %vm1318, %v1139
    %1326 = vst.msk [vmem:[#allocation2 + $0x38] sm:$0xff] %vm1318, %v1141
    %1327 = vst.msk [vmem:[#allocation2 + $0x40] sm:$0xff] %vm1318, %v1143
    %1328 = vst.msk [vmem:[#allocation2 + $0x48] sm:$0xff] %vm1318, %v1145
    %1329 = vst.msk [vmem:[#allocation2 + $0x50] sm:$0xff] %vm1318, %v1147
    %1330 = vst.msk [vmem:[#allocation2 + $0x58] sm:$0xff] %vm1318, %v1149
    %1331 = vst.msk [vmem:[#allocation2 + $0x60] sm:$0xff] %vm1318, %v1151
    %1332 = vst.msk [vmem:[#allocation2 + $0x68] sm:$0xff] %vm1318, %v1153
    %1333 = vst.msk [vmem:[#allocation2 + $0x70] sm:$0xff] %vm1318, %v1155
    %1334 = vst.msk [vmem:[#allocation2 + $0x78] sm:$0xff] %vm1318, %v1157
    %1335 = vst.msk [vmem:[#allocation2 + $0x80] sm:$0xff] %vm1318, %v1159
    %1336 = vst.msk [vmem:[#allocation2 + $0x88] sm:$0xff] %vm1318, %v1161
    %1337 = vst.msk [vmem:[#allocation2 + $0x90] sm:$0xff] %vm1318, %v1163
    %1338 = vst.msk [vmem:[#allocation2 + $0x98] sm:$0xff] %vm1318, %v1165
    %1339 = vst.msk [vmem:[#allocation2 + $0xa0] sm:$0xff] %vm1318, %v1167
    %1340 = vst.msk [vmem:[#allocation2 + $0xa8] sm:$0xff] %vm1318, %v1169
    %1341 = vst.msk [vmem:[#allocation2 + $0xb0] sm:$0xff] %vm1318, %v1171
    %1342 = vst.msk [vmem:[#allocation2 + $0xb8] sm:$0xff] %vm1318, %v1173
    %1343 = vst.msk [vmem:[#allocation2 + $0xc0] sm:$0xff] %vm1318, %v1175
    %1344 = vst.msk [vmem:[#allocation2 + $0xc8] sm:$0xff] %vm1318, %v1177
    %1345 = vst.msk [vmem:[#allocation2 + $0xd0] sm:$0xff] %vm1318, %v1179
    %1346 = vst.msk [vmem:[#allocation2 + $0xd8] sm:$0xff] %vm1318, %v1181
    %1347 = vst.msk [vmem:[#allocation2 + $0xe0] sm:$0xff] %vm1318, %v1183
    %1348 = vst.msk [vmem:[#allocation2 + $0xe8] sm:$0xff] %vm1318, %v1185
    %1349 = vst.msk [vmem:[#allocation2 + $0xf0] sm:$0xff] %vm1318, %v1187
    %1350 = vst.msk [vmem:[#allocation2 + $0xf8] sm:$0xff] %vm1318, %v1189
    %1351 = vst.msk [vmem:[#allocation2 + $0x100] sm:$0xff] %vm1318, %v1191
    %1352 = vst.msk [vmem:[#allocation2 + $0x108] sm:$0xff] %vm1318, %v1193
    %1353 = vst.msk [vmem:[#allocation2 + $0x110] sm:$0xff] %vm1318, %v1195
    %1354 = vst.msk [vmem:[#allocation2 + $0x118] sm:$0xff] %vm1318, %v1197
    %1355 = vst.msk [vmem:[#allocation2 + $0x120] sm:$0xff] %vm1318, %v1199
    %1356 = vst.msk [vmem:[#allocation2 + $0x128] sm:$0xff] %vm1318, %v1201
    %1357 = vst.msk [vmem:[#allocation2 + $0x130] sm:$0xff] %vm1318, %v1203
    %1358 = vst.msk [vmem:[#allocation2 + $0x138] sm:$0xff] %vm1318, %v1205
    %1359 = vst.msk [vmem:[#allocation2 + $0x140] sm:$0xff] %vm1318, %v1207
    %1360 = vst.msk [vmem:[#allocation2 + $0x148] sm:$0xff] %vm1318, %v1209
    %1361 = vst.msk [vmem:[#allocation2 + $0x150] sm:$0xff] %vm1318, %v1211
    %1362 = vst.msk [vmem:[#allocation2 + $0x158] sm:$0xff] %vm1318, %v1213
    %1363 = vst.msk [vmem:[#allocation2 + $0x160] sm:$0xff] %vm1318, %v1215
    %1364 = vst.msk [vmem:[#allocation2 + $0x168] sm:$0xff] %vm1318, %v1217
    %1365 = vst.msk [vmem:[#allocation2 + $0x170] sm:$0xff] %vm1318, %v1219
    %1366 = vst.msk [vmem:[#allocation2 + $0x178] sm:$0xff] %vm1318, %v1221
    %1367 = vst.msk [vmem:[#allocation2 + $0x180] sm:$0xff] %vm1318, %v1223
    %1368 = vst.msk [vmem:[#allocation2 + $0x188] sm:$0xff] %vm1318, %v1225
    %1369 = vst.msk [vmem:[#allocation2 + $0x190] sm:$0xff] %vm1318, %v1227
    %1370 = vst.msk [vmem:[#allocation2 + $0x198] sm:$0xff] %vm1318, %v1229
    %1371 = vst.msk [vmem:[#allocation2 + $0x1a0] sm:$0xff] %vm1318, %v1231
    %1372 = vst.msk [vmem:[#allocation2 + $0x1a8] sm:$0xff] %vm1318, %v1233
    %1373 = vst.msk [vmem:[#allocation2 + $0x1b0] sm:$0xff] %vm1318, %v1235
    %1374 = vst.msk [vmem:[#allocation2 + $0x1b8] sm:$0xff] %vm1318, %v1237
    %1375 = vst.msk [vmem:[#allocation2 + $0x1c0] sm:$0xff] %vm1318, %v1239
    %1376 = vst.msk [vmem:[#allocation2 + $0x1c8] sm:$0xff] %vm1318, %v1241
    %1377 = vst.msk [vmem:[#allocation2 + $0x1d0] sm:$0xff] %vm1318, %v1243
    %1378 = vst.msk [vmem:[#allocation2 + $0x1d8] sm:$0xff] %vm1318, %v1245
    %1379 = vst.msk [vmem:[#allocation2 + $0x1e0] sm:$0xff] %vm1318, %v1247
    %1380 = vst.msk [vmem:[#allocation2 + $0x1e8] sm:$0xff] %vm1318, %v1249
    %1381 = vst.msk [vmem:[#allocation2 + $0x1f0] sm:$0xff] %vm1318, %v1251
    %1382 = vst.msk [vmem:[#allocation2 + $0x1f8] sm:$0xff] %vm1318, %v1253
    %v1383 = vrot.slane %v34, 1
    %v1384 = vrot.slane %v35, 1
    %v1385 = vrot.slane %v36, 1
    %v1386 = vrot.slane %v37, 1
    %v1387 = vrot.slane %v38, 1
    %v1388 = vrot.slane %v39, 1
    %v1389 = vrot.slane %v40, 1
    %v1390 = vrot.slane %v41, 1
    %v1391 = vrot.slane %v42, 1
    %v1392 = vrot.slane %v43, 1
    %v1393 = vrot.slane %v44, 1
    %v1394 = vrot.slane %v45, 1
    %v1395 = vrot.slane %v46, 1
    %v1396 = vrot.slane %v47, 1
    %v1397 = vrot.slane %v48, 1
    %v1398 = vrot.slane %v49, 1
    %v1399 = vrot.slane %v50, 1
    %v1400 = vrot.slane %v51, 1
    %v1401 = vrot.slane %v52, 1
    %v1402 = vrot.slane %v53, 1
    %v1403 = vrot.slane %v54, 1
    %v1404 = vrot.slane %v55, 1
    %v1405 = vrot.slane %v56, 1
    %v1406 = vrot.slane %v57, 1
    %v1407 = vrot.slane %v58, 1
    %v1408 = vrot.slane %v59, 1
    %v1409 = vrot.slane %v60, 1
    %v1410 = vrot.slane %v61, 1
    %v1411 = vrot.slane %v62, 1
    %v1412 = vrot.slane %v63, 1
    %v1413 = vrot.slane %v64, 1
    %v1414 = vrot.slane %v65, 1
    %v1415 = vrot.slane %v66, 1
    %v1416 = vrot.slane %v67, 1
    %v1417 = vrot.slane %v68, 1
    %v1418 = vrot.slane %v69, 1
    %v1419 = vrot.slane %v70, 1
    %v1420 = vrot.slane %v71, 1
    %v1421 = vrot.slane %v72, 1
    %v1422 = vrot.slane %v73, 1
    %v1423 = vrot.slane %v74, 1
    %v1424 = vrot.slane %v75, 1
    %v1425 = vrot.slane %v76, 1
    %v1426 = vrot.slane %v77, 1
    %v1427 = vrot.slane %v78, 1
    %v1428 = vrot.slane %v79, 1
    %v1429 = vrot.slane %v80, 1
    %v1430 = vrot.slane %v81, 1
    %v1431 = vrot.slane %v82, 1
    %v1432 = vrot.slane %v83, 1
    %v1433 = vrot.slane %v84, 1
    %v1434 = vrot.slane %v85, 1
    %v1435 = vrot.slane %v86, 1
    %v1436 = vrot.slane %v87, 1
    %v1437 = vrot.slane %v88, 1
    %v1438 = vrot.slane %v89, 1
    %v1439 = vrot.slane %v90, 1
    %v1440 = vrot.slane %v91, 1
    %v1441 = vrot.slane %v92, 1
    %v1442 = vrot.slane %v93, 1
    %v1443 = vrot.slane %v94, 1
    %v1444 = vrot.slane %v95, 1
    %v1445 = vrot.slane %v96, 1
    %v1446 = vrot.slane %v97, 1
    %vm1447 = vcmp.lt.s32.totalorder %v227, 7
    %v1448 = vsel %vm1447, %v1445, %v1446
    %v1449 = vsel %vm1447, %v1444, %v1445
    %v1450 = vsel %vm1447, %v1443, %v1444
    %v1451 = vsel %vm1447, %v1442, %v1443
    %v1452 = vsel %vm1447, %v1441, %v1442
    %v1453 = vsel %vm1447, %v1440, %v1441
    %v1454 = vsel %vm1447, %v1439, %v1440
    %v1455 = vsel %vm1447, %v1438, %v1439
    %v1456 = vsel %vm1447, %v1437, %v1438
    %v1457 = vsel %vm1447, %v1436, %v1437
    %v1458 = vsel %vm1447, %v1435, %v1436
    %v1459 = vsel %vm1447, %v1434, %v1435
    %v1460 = vsel %vm1447, %v1433, %v1434
    %v1461 = vsel %vm1447, %v1432, %v1433
    %v1462 = vsel %vm1447, %v1431, %v1432
    %v1463 = vsel %vm1447, %v1430, %v1431
    %v1464 = vsel %vm1447, %v1429, %v1430
    %v1465 = vsel %vm1447, %v1428, %v1429
    %v1466 = vsel %vm1447, %v1427, %v1428
    %v1467 = vsel %vm1447, %v1426, %v1427
    %v1468 = vsel %vm1447, %v1425, %v1426
    %v1469 = vsel %vm1447, %v1424, %v1425
    %v1470 = vsel %vm1447, %v1423, %v1424
    %v1471 = vsel %vm1447, %v1422, %v1423
    %v1472 = vsel %vm1447, %v1421, %v1422
    %v1473 = vsel %vm1447, %v1420, %v1421
    %v1474 = vsel %vm1447, %v1419, %v1420
    %v1475 = vsel %vm1447, %v1418, %v1419
    %v1476 = vsel %vm1447, %v1417, %v1418
    %v1477 = vsel %vm1447, %v1416, %v1417
    %v1478 = vsel %vm1447, %v1415, %v1416
    %v1479 = vsel %vm1447, %v1414, %v1415
    %v1480 = vsel %vm1447, %v1413, %v1414
    %v1481 = vsel %vm1447, %v1412, %v1413
    %v1482 = vsel %vm1447, %v1411, %v1412
    %v1483 = vsel %vm1447, %v1410, %v1411
    %v1484 = vsel %vm1447, %v1409, %v1410
    %v1485 = vsel %vm1447, %v1408, %v1409
    %v1486 = vsel %vm1447, %v1407, %v1408
    %v1487 = vsel %vm1447, %v1406, %v1407
    %v1488 = vsel %vm1447, %v1405, %v1406
    %v1489 = vsel %vm1447, %v1404, %v1405
    %v1490 = vsel %vm1447, %v1403, %v1404
    %v1491 = vsel %vm1447, %v1402, %v1403
    %v1492 = vsel %vm1447, %v1401, %v1402
    %v1493 = vsel %vm1447, %v1400, %v1401
    %v1494 = vsel %vm1447, %v1399, %v1400
    %v1495 = vsel %vm1447, %v1398, %v1399
    %v1496 = vsel %vm1447, %v1397, %v1398
    %v1497 = vsel %vm1447, %v1396, %v1397
    %v1498 = vsel %vm1447, %v1395, %v1396
    %v1499 = vsel %vm1447, %v1394, %v1395
    %v1500 = vsel %vm1447, %v1393, %v1394
    %v1501 = vsel %vm1447, %v1392, %v1393
    %v1502 = vsel %vm1447, %v1391, %v1392
    %v1503 = vsel %vm1447, %v1390, %v1391
    %v1504 = vsel %vm1447, %v1389, %v1390
    %v1505 = vsel %vm1447, %v1388, %v1389
    %v1506 = vsel %vm1447, %v1387, %v1388
    %v1507 = vsel %vm1447, %v1386, %v1387
    %v1508 = vsel %vm1447, %v1385, %v1386
    %v1509 = vsel %vm1447, %v1384, %v1385
    %v1510 = vsel %vm1447, %v1383, %v1384
    %v1511 = vsel %vm1447, %v1446, %v1383
    %1512 = vset.pattern.permute.xlu0 2
    %1513 = vperm.xlu0 %1512, %v98
    %v1514 = vpop.permute.xlu0 %1513
    %1516 = vset.pattern.permute.xlu0 2
    %1517 = vperm.xlu0 %1516, %v99
    %v1518 = vpop.permute.xlu0 %1517
    %1520 = vset.pattern.permute.xlu0 2
    %1521 = vperm.xlu0 %1520, %v100
    %v1522 = vpop.permute.xlu0 %1521
    %1524 = vset.pattern.permute.xlu0 2
    %1525 = vperm.xlu0 %1524, %v101
    %v1526 = vpop.permute.xlu0 %1525
    %1528 = vset.pattern.permute.xlu0 2
    %1529 = vperm.xlu0 %1528, %v102
    %v1530 = vpop.permute.xlu0 %1529
    %1532 = vset.pattern.permute.xlu0 2
    %1533 = vperm.xlu0 %1532, %v103
    %v1534 = vpop.permute.xlu0 %1533
    %1536 = vset.pattern.permute.xlu0 2
    %1537 = vperm.xlu0 %1536, %v104
    %v1538 = vpop.permute.xlu0 %1537
    %1540 = vset.pattern.permute.xlu0 2
    %1541 = vperm.xlu0 %1540, %v105
    %v1542 = vpop.permute.xlu0 %1541
    %1544 = vset.pattern.permute.xlu0 2
    %1545 = vperm.xlu0 %1544, %v106
    %v1546 = vpop.permute.xlu0 %1545
    %1548 = vset.pattern.permute.xlu0 2
    %1549 = vperm.xlu0 %1548, %v107
    %v1550 = vpop.permute.xlu0 %1549
    %1552 = vset.pattern.permute.xlu0 2
    %1553 = vperm.xlu0 %1552, %v108
    %v1554 = vpop.permute.xlu0 %1553
    %1556 = vset.pattern.permute.xlu0 2
    %1557 = vperm.xlu0 %1556, %v109
    %v1558 = vpop.permute.xlu0 %1557
    %1560 = vset.pattern.permute.xlu0 2
    %1561 = vperm.xlu0 %1560, %v110
    %v1562 = vpop.permute.xlu0 %1561
    %1564 = vset.pattern.permute.xlu0 2
    %1565 = vperm.xlu0 %1564, %v111
    %v1566 = vpop.permute.xlu0 %1565
    %1568 = vset.pattern.permute.xlu0 2
    %1569 = vperm.xlu0 %1568, %v112
    %v1570 = vpop.permute.xlu0 %1569
    %1572 = vset.pattern.permute.xlu0 2
    %1573 = vperm.xlu0 %1572, %v113
    %v1574 = vpop.permute.xlu0 %1573
    %1576 = vset.pattern.permute.xlu0 2
    %1577 = vperm.xlu0 %1576, %v114
    %v1578 = vpop.permute.xlu0 %1577
    %1580 = vset.pattern.permute.xlu0 2
    %1581 = vperm.xlu0 %1580, %v115
    %v1582 = vpop.permute.xlu0 %1581
    %1584 = vset.pattern.permute.xlu0 2
    %1585 = vperm.xlu0 %1584, %v116
    %v1586 = vpop.permute.xlu0 %1585
    %1588 = vset.pattern.permute.xlu0 2
    %1589 = vperm.xlu0 %1588, %v117
    %v1590 = vpop.permute.xlu0 %1589
    %1592 = vset.pattern.permute.xlu0 2
    %1593 = vperm.xlu0 %1592, %v118
    %v1594 = vpop.permute.xlu0 %1593
    %1596 = vset.pattern.permute.xlu0 2
    %1597 = vperm.xlu0 %1596, %v119
    %v1598 = vpop.permute.xlu0 %1597
    %1600 = vset.pattern.permute.xlu0 2
    %1601 = vperm.xlu0 %1600, %v120
    %v1602 = vpop.permute.xlu0 %1601
    %1604 = vset.pattern.permute.xlu0 2
    %1605 = vperm.xlu0 %1604, %v121
    %v1606 = vpop.permute.xlu0 %1605
    %1608 = vset.pattern.permute.xlu0 2
    %1609 = vperm.xlu0 %1608, %v122
    %v1610 = vpop.permute.xlu0 %1609
    %1612 = vset.pattern.permute.xlu0 2
    %1613 = vperm.xlu0 %1612, %v123
    %v1614 = vpop.permute.xlu0 %1613
    %1616 = vset.pattern.permute.xlu0 2
    %1617 = vperm.xlu0 %1616, %v124
    %v1618 = vpop.permute.xlu0 %1617
    %1620 = vset.pattern.permute.xlu0 2
    %1621 = vperm.xlu0 %1620, %v125
    %v1622 = vpop.permute.xlu0 %1621
    %1624 = vset.pattern.permute.xlu0 2
    %1625 = vperm.xlu0 %1624, %v126
    %v1626 = vpop.permute.xlu0 %1625
    %1628 = vset.pattern.permute.xlu0 2
    %1629 = vperm.xlu0 %1628, %v127
    %v1630 = vpop.permute.xlu0 %1629
    %1632 = vset.pattern.permute.xlu0 2
    %1633 = vperm.xlu0 %1632, %v128
    %v1634 = vpop.permute.xlu0 %1633
    %1636 = vset.pattern.permute.xlu0 2
    %1637 = vperm.xlu0 %1636, %v129
    %v1638 = vpop.permute.xlu0 %1637
    %1640 = vset.pattern.permute.xlu0 2
    %1641 = vperm.xlu0 %1640, %v130
    %v1642 = vpop.permute.xlu0 %1641
    %1644 = vset.pattern.permute.xlu0 2
    %1645 = vperm.xlu0 %1644, %v131
    %v1646 = vpop.permute.xlu0 %1645
    %1648 = vset.pattern.permute.xlu0 2
    %1649 = vperm.xlu0 %1648, %v132
    %v1650 = vpop.permute.xlu0 %1649
    %1652 = vset.pattern.permute.xlu0 2
    %1653 = vperm.xlu0 %1652, %v133
    %v1654 = vpop.permute.xlu0 %1653
    %1656 = vset.pattern.permute.xlu0 2
    %1657 = vperm.xlu0 %1656, %v134
    %v1658 = vpop.permute.xlu0 %1657
    %1660 = vset.pattern.permute.xlu0 2
    %1661 = vperm.xlu0 %1660, %v135
    %v1662 = vpop.permute.xlu0 %1661
    %1664 = vset.pattern.permute.xlu0 2
    %1665 = vperm.xlu0 %1664, %v136
    %v1666 = vpop.permute.xlu0 %1665
    %1668 = vset.pattern.permute.xlu0 2
    %1669 = vperm.xlu0 %1668, %v137
    %v1670 = vpop.permute.xlu0 %1669
    %1672 = vset.pattern.permute.xlu0 2
    %1673 = vperm.xlu0 %1672, %v138
    %v1674 = vpop.permute.xlu0 %1673
    %1676 = vset.pattern.permute.xlu0 2
    %1677 = vperm.xlu0 %1676, %v139
    %v1678 = vpop.permute.xlu0 %1677
    %1680 = vset.pattern.permute.xlu0 2
    %1681 = vperm.xlu0 %1680, %v140
    %v1682 = vpop.permute.xlu0 %1681
    %1684 = vset.pattern.permute.xlu0 2
    %1685 = vperm.xlu0 %1684, %v141
    %v1686 = vpop.permute.xlu0 %1685
    %1688 = vset.pattern.permute.xlu0 2
    %1689 = vperm.xlu0 %1688, %v142
    %v1690 = vpop.permute.xlu0 %1689
    %1692 = vset.pattern.permute.xlu0 2
    %1693 = vperm.xlu0 %1692, %v143
    %v1694 = vpop.permute.xlu0 %1693
    %1696 = vset.pattern.permute.xlu0 2
    %1697 = vperm.xlu0 %1696, %v144
    %v1698 = vpop.permute.xlu0 %1697
    %1700 = vset.pattern.permute.xlu0 2
    %1701 = vperm.xlu0 %1700, %v145
    %v1702 = vpop.permute.xlu0 %1701
    %1704 = vset.pattern.permute.xlu0 2
    %1705 = vperm.xlu0 %1704, %v146
    %v1706 = vpop.permute.xlu0 %1705
    %1708 = vset.pattern.permute.xlu0 2
    %1709 = vperm.xlu0 %1708, %v147
    %v1710 = vpop.permute.xlu0 %1709
    %1712 = vset.pattern.permute.xlu0 2
    %1713 = vperm.xlu0 %1712, %v148
    %v1714 = vpop.permute.xlu0 %1713
    %1716 = vset.pattern.permute.xlu0 2
    %1717 = vperm.xlu0 %1716, %v149
    %v1718 = vpop.permute.xlu0 %1717
    %1720 = vset.pattern.permute.xlu0 2
    %1721 = vperm.xlu0 %1720, %v150
    %v1722 = vpop.permute.xlu0 %1721
    %1724 = vset.pattern.permute.xlu0 2
    %1725 = vperm.xlu0 %1724, %v151
    %v1726 = vpop.permute.xlu0 %1725
    %1728 = vset.pattern.permute.xlu0 2
    %1729 = vperm.xlu0 %1728, %v152
    %v1730 = vpop.permute.xlu0 %1729
    %1732 = vset.pattern.permute.xlu0 2
    %1733 = vperm.xlu0 %1732, %v153
    %v1734 = vpop.permute.xlu0 %1733
    %1736 = vset.pattern.permute.xlu0 2
    %1737 = vperm.xlu0 %1736, %v154
    %v1738 = vpop.permute.xlu0 %1737
    %1740 = vset.pattern.permute.xlu0 2
    %1741 = vperm.xlu0 %1740, %v155
    %v1742 = vpop.permute.xlu0 %1741
    %1744 = vset.pattern.permute.xlu0 2
    %1745 = vperm.xlu0 %1744, %v156
    %v1746 = vpop.permute.xlu0 %1745
    %1748 = vset.pattern.permute.xlu0 2
    %1749 = vperm.xlu0 %1748, %v157
    %v1750 = vpop.permute.xlu0 %1749
    %1752 = vset.pattern.permute.xlu0 2
    %1753 = vperm.xlu0 %1752, %v158
    %v1754 = vpop.permute.xlu0 %1753
    %1756 = vset.pattern.permute.xlu0 2
    %1757 = vperm.xlu0 %1756, %v159
    %v1758 = vpop.permute.xlu0 %1757
    %1760 = vset.pattern.permute.xlu0 2
    %1761 = vperm.xlu0 %1760, %v160
    %v1762 = vpop.permute.xlu0 %1761
    %1764 = vset.pattern.permute.xlu0 2
    %1765 = vperm.xlu0 %1764, %v161
    %v1766 = vpop.permute.xlu0 %1765
    %v1768 = vmul.f32 %v1448, %v1514
    %v1769 = vmul.f32 %v1511, %v1518
    %v1770 = vmul.f32 %v1510, %v1522
    %v1771 = vmul.f32 %v1509, %v1526
    %v1772 = vmul.f32 %v1508, %v1530
    %v1773 = vmul.f32 %v1507, %v1534
    %v1774 = vmul.f32 %v1506, %v1538
    %v1775 = vmul.f32 %v1505, %v1542
    %v1776 = vmul.f32 %v1504, %v1546
    %v1777 = vmul.f32 %v1503, %v1550
    %v1778 = vmul.f32 %v1502, %v1554
    %v1779 = vmul.f32 %v1501, %v1558
    %v1780 = vmul.f32 %v1500, %v1562
    %v1781 = vmul.f32 %v1499, %v1566
    %v1782 = vmul.f32 %v1498, %v1570
    %v1783 = vmul.f32 %v1497, %v1574
    %v1784 = vmul.f32 %v1496, %v1578
    %v1785 = vmul.f32 %v1495, %v1582
    %v1786 = vmul.f32 %v1494, %v1586
    %v1787 = vmul.f32 %v1493, %v1590
    %v1788 = vmul.f32 %v1492, %v1594
    %v1789 = vmul.f32 %v1491, %v1598
    %v1790 = vmul.f32 %v1490, %v1602
    %v1791 = vmul.f32 %v1489, %v1606
    %v1792 = vmul.f32 %v1488, %v1610
    %v1793 = vmul.f32 %v1487, %v1614
    %v1794 = vmul.f32 %v1486, %v1618
    %v1795 = vmul.f32 %v1485, %v1622
    %v1796 = vmul.f32 %v1484, %v1626
    %v1797 = vmul.f32 %v1483, %v1630
    %v1798 = vmul.f32 %v1482, %v1634
    %v1799 = vmul.f32 %v1481, %v1638
    %v1800 = vmul.f32 %v1480, %v1642
    %v1801 = vmul.f32 %v1479, %v1646
    %v1802 = vmul.f32 %v1478, %v1650
    %v1803 = vmul.f32 %v1477, %v1654
    %v1804 = vmul.f32 %v1476, %v1658
    %v1805 = vmul.f32 %v1475, %v1662
    %v1806 = vmul.f32 %v1474, %v1666
    %v1807 = vmul.f32 %v1473, %v1670
    %v1808 = vmul.f32 %v1472, %v1674
    %v1809 = vmul.f32 %v1471, %v1678
    %v1810 = vmul.f32 %v1470, %v1682
    %v1811 = vmul.f32 %v1469, %v1686
    %v1812 = vmul.f32 %v1468, %v1690
    %v1813 = vmul.f32 %v1467, %v1694
    %v1814 = vmul.f32 %v1466, %v1698
    %v1815 = vmul.f32 %v1465, %v1702
    %v1816 = vmul.f32 %v1464, %v1706
    %v1817 = vmul.f32 %v1463, %v1710
    %v1818 = vmul.f32 %v1462, %v1714
    %v1819 = vmul.f32 %v1461, %v1718
    %v1820 = vmul.f32 %v1460, %v1722
    %v1821 = vmul.f32 %v1459, %v1726
    %v1822 = vmul.f32 %v1458, %v1730
    %v1823 = vmul.f32 %v1457, %v1734
    %v1824 = vmul.f32 %v1456, %v1738
    %v1825 = vmul.f32 %v1455, %v1742
    %v1826 = vmul.f32 %v1454, %v1746
    %v1827 = vmul.f32 %v1453, %v1750
    %v1828 = vmul.f32 %v1452, %v1754
    %v1829 = vmul.f32 %v1451, %v1758
    %v1830 = vmul.f32 %v1450, %v1762
    %v1831 = vmul.f32 %v1449, %v1766
    %1896 = vrot.lane.b32.xlu0 %v1768, 6
    %v1897 = vpop.permute.xlu0 %1896
    %1898 = vrot.lane.b32.xlu0 %v1769, 6
    %v1899 = vpop.permute.xlu0 %1898
    %1900 = vrot.lane.b32.xlu0 %v1770, 6
    %v1901 = vpop.permute.xlu0 %1900
    %1902 = vrot.lane.b32.xlu0 %v1771, 6
    %v1903 = vpop.permute.xlu0 %1902
    %1904 = vrot.lane.b32.xlu0 %v1772, 6
    %v1905 = vpop.permute.xlu0 %1904
    %1906 = vrot.lane.b32.xlu0 %v1773, 6
    %v1907 = vpop.permute.xlu0 %1906
    %1908 = vrot.lane.b32.xlu0 %v1774, 6
    %v1909 = vpop.permute.xlu0 %1908
    %1910 = vrot.lane.b32.xlu0 %v1775, 6
    %v1911 = vpop.permute.xlu0 %1910
    %1912 = vrot.lane.b32.xlu0 %v1776, 6
    %v1913 = vpop.permute.xlu0 %1912
    %1914 = vrot.lane.b32.xlu0 %v1777, 6
    %v1915 = vpop.permute.xlu0 %1914
    %1916 = vrot.lane.b32.xlu0 %v1778, 6
    %v1917 = vpop.permute.xlu0 %1916
    %1918 = vrot.lane.b32.xlu0 %v1779, 6
    %v1919 = vpop.permute.xlu0 %1918
    %1920 = vrot.lane.b32.xlu0 %v1780, 6
    %v1921 = vpop.permute.xlu0 %1920
    %1922 = vrot.lane.b32.xlu0 %v1781, 6
    %v1923 = vpop.permute.xlu0 %1922
    %1924 = vrot.lane.b32.xlu0 %v1782, 6
    %v1925 = vpop.permute.xlu0 %1924
    %1926 = vrot.lane.b32.xlu0 %v1783, 6
    %v1927 = vpop.permute.xlu0 %1926
    %1928 = vrot.lane.b32.xlu0 %v1784, 6
    %v1929 = vpop.permute.xlu0 %1928
    %1930 = vrot.lane.b32.xlu0 %v1785, 6
    %v1931 = vpop.permute.xlu0 %1930
    %1932 = vrot.lane.b32.xlu0 %v1786, 6
    %v1933 = vpop.permute.xlu0 %1932
    %1934 = vrot.lane.b32.xlu0 %v1787, 6
    %v1935 = vpop.permute.xlu0 %1934
    %1936 = vrot.lane.b32.xlu0 %v1788, 6
    %v1937 = vpop.permute.xlu0 %1936
    %1938 = vrot.lane.b32.xlu0 %v1789, 6
    %v1939 = vpop.permute.xlu0 %1938
    %1940 = vrot.lane.b32.xlu0 %v1790, 6
    %v1941 = vpop.permute.xlu0 %1940
    %1942 = vrot.lane.b32.xlu0 %v1791, 6
    %v1943 = vpop.permute.xlu0 %1942
    %1944 = vrot.lane.b32.xlu0 %v1792, 6
    %v1945 = vpop.permute.xlu0 %1944
    %1946 = vrot.lane.b32.xlu0 %v1793, 6
    %v1947 = vpop.permute.xlu0 %1946
    %1948 = vrot.lane.b32.xlu0 %v1794, 6
    %v1949 = vpop.permute.xlu0 %1948
    %1950 = vrot.lane.b32.xlu0 %v1795, 6
    %v1951 = vpop.permute.xlu0 %1950
    %1952 = vrot.lane.b32.xlu0 %v1796, 6
    %v1953 = vpop.permute.xlu0 %1952
    %1954 = vrot.lane.b32.xlu0 %v1797, 6
    %v1955 = vpop.permute.xlu0 %1954
    %1956 = vrot.lane.b32.xlu0 %v1798, 6
    %v1957 = vpop.permute.xlu0 %1956
    %1958 = vrot.lane.b32.xlu0 %v1799, 6
    %v1959 = vpop.permute.xlu0 %1958
    %1960 = vrot.lane.b32.xlu0 %v1800, 6
    %v1961 = vpop.permute.xlu0 %1960
    %1962 = vrot.lane.b32.xlu0 %v1801, 6
    %v1963 = vpop.permute.xlu0 %1962
    %1964 = vrot.lane.b32.xlu0 %v1802, 6
    %v1965 = vpop.permute.xlu0 %1964
    %1966 = vrot.lane.b32.xlu0 %v1803, 6
    %v1967 = vpop.permute.xlu0 %1966
    %1968 = vrot.lane.b32.xlu0 %v1804, 6
    %v1969 = vpop.permute.xlu0 %1968
    %1970 = vrot.lane.b32.xlu0 %v1805, 6
    %v1971 = vpop.permute.xlu0 %1970
    %1972 = vrot.lane.b32.xlu0 %v1806, 6
    %v1973 = vpop.permute.xlu0 %1972
    %1974 = vrot.lane.b32.xlu0 %v1807, 6
    %v1975 = vpop.permute.xlu0 %1974
    %1976 = vrot.lane.b32.xlu0 %v1808, 6
    %v1977 = vpop.permute.xlu0 %1976
    %1978 = vrot.lane.b32.xlu0 %v1809, 6
    %v1979 = vpop.permute.xlu0 %1978
    %1980 = vrot.lane.b32.xlu0 %v1810, 6
    %v1981 = vpop.permute.xlu0 %1980
    %1982 = vrot.lane.b32.xlu0 %v1811, 6
    %v1983 = vpop.permute.xlu0 %1982
    %1984 = vrot.lane.b32.xlu0 %v1812, 6
    %v1985 = vpop.permute.xlu0 %1984
    %1986 = vrot.lane.b32.xlu0 %v1813, 6
    %v1987 = vpop.permute.xlu0 %1986
    %1988 = vrot.lane.b32.xlu0 %v1814, 6
    %v1989 = vpop.permute.xlu0 %1988
    %1990 = vrot.lane.b32.xlu0 %v1815, 6
    %v1991 = vpop.permute.xlu0 %1990
    %1992 = vrot.lane.b32.xlu0 %v1816, 6
    %v1993 = vpop.permute.xlu0 %1992
    %1994 = vrot.lane.b32.xlu0 %v1817, 6
    %v1995 = vpop.permute.xlu0 %1994
    %1996 = vrot.lane.b32.xlu0 %v1818, 6
    %v1997 = vpop.permute.xlu0 %1996
    %1998 = vrot.lane.b32.xlu0 %v1819, 6
    %v1999 = vpop.permute.xlu0 %1998
    %2000 = vrot.lane.b32.xlu0 %v1820, 6
    %v2001 = vpop.permute.xlu0 %2000
    %2002 = vrot.lane.b32.xlu0 %v1821, 6
    %v2003 = vpop.permute.xlu0 %2002
    %2004 = vrot.lane.b32.xlu0 %v1822, 6
    %v2005 = vpop.permute.xlu0 %2004
    %2006 = vrot.lane.b32.xlu0 %v1823, 6
    %v2007 = vpop.permute.xlu0 %2006
    %2008 = vrot.lane.b32.xlu0 %v1824, 6
    %v2009 = vpop.permute.xlu0 %2008
    %2010 = vrot.lane.b32.xlu0 %v1825, 6
    %v2011 = vpop.permute.xlu0 %2010
    %2012 = vrot.lane.b32.xlu0 %v1826, 6
    %v2013 = vpop.permute.xlu0 %2012
    %2014 = vrot.lane.b32.xlu0 %v1827, 6
    %v2015 = vpop.permute.xlu0 %2014
    %2016 = vrot.lane.b32.xlu0 %v1828, 6
    %v2017 = vpop.permute.xlu0 %2016
    %2018 = vrot.lane.b32.xlu0 %v1829, 6
    %v2019 = vpop.permute.xlu0 %2018
    %2020 = vrot.lane.b32.xlu0 %v1830, 6
    %v2021 = vpop.permute.xlu0 %2020
    %2022 = vrot.lane.b32.xlu0 %v1831, 6
    %v2023 = vpop.permute.xlu0 %2022
    %vm2088 = vcmask 72752
    %2089 = vst.msk [vmem:[#allocation2] sm:$0xff] %vm2088, %v1897
    %2090 = vst.msk [vmem:[#allocation2 + $0x8] sm:$0xff] %vm2088, %v1899
    %2091 = vst.msk [vmem:[#allocation2 + $0x10] sm:$0xff] %vm2088, %v1901
    %2092 = vst.msk [vmem:[#allocation2 + $0x18] sm:$0xff] %vm2088, %v1903
    %2093 = vst.msk [vmem:[#allocation2 + $0x20] sm:$0xff] %vm2088, %v1905
    %2094 = vst.msk [vmem:[#allocation2 + $0x28] sm:$0xff] %vm2088, %v1907
    %2095 = vst.msk [vmem:[#allocation2 + $0x30] sm:$0xff] %vm2088, %v1909
    %2096 = vst.msk [vmem:[#allocation2 + $0x38] sm:$0xff] %vm2088, %v1911
    %2097 = vst.msk [vmem:[#allocation2 + $0x40] sm:$0xff] %vm2088, %v1913
    %2098 = vst.msk [vmem:[#allocation2 + $0x48] sm:$0xff] %vm2088, %v1915
    %2099 = vst.msk [vmem:[#allocation2 + $0x50] sm:$0xff] %vm2088, %v1917
    %2100 = vst.msk [vmem:[#allocation2 + $0x58] sm:$0xff] %vm2088, %v1919
    %2101 = vst.msk [vmem:[#allocation2 + $0x60] sm:$0xff] %vm2088, %v1921
    %2102 = vst.msk [vmem:[#allocation2 + $0x68] sm:$0xff] %vm2088, %v1923
    %2103 = vst.msk [vmem:[#allocation2 + $0x70] sm:$0xff] %vm2088, %v1925
    %2104 = vst.msk [vmem:[#allocation2 + $0x78] sm:$0xff] %vm2088, %v1927
    %2105 = vst.msk [vmem:[#allocation2 + $0x80] sm:$0xff] %vm2088, %v1929
    %2106 = vst.msk [vmem:[#allocation2 + $0x88] sm:$0xff] %vm2088, %v1931
    %2107 = vst.msk [vmem:[#allocation2 + $0x90] sm:$0xff] %vm2088, %v1933
    %2108 = vst.msk [vmem:[#allocation2 + $0x98] sm:$0xff] %vm2088, %v1935
    %2109 = vst.msk [vmem:[#allocation2 + $0xa0] sm:$0xff] %vm2088, %v1937
    %2110 = vst.msk [vmem:[#allocation2 + $0xa8] sm:$0xff] %vm2088, %v1939
    %2111 = vst.msk [vmem:[#allocation2 + $0xb0] sm:$0xff] %vm2088, %v1941
    %2112 = vst.msk [vmem:[#allocation2 + $0xb8] sm:$0xff] %vm2088, %v1943
    %2113 = vst.msk [vmem:[#allocation2 + $0xc0] sm:$0xff] %vm2088, %v1945
    %2114 = vst.msk [vmem:[#allocation2 + $0xc8] sm:$0xff] %vm2088, %v1947
    %2115 = vst.msk [vmem:[#allocation2 + $0xd0] sm:$0xff] %vm2088, %v1949
    %2116 = vst.msk [vmem:[#allocation2 + $0xd8] sm:$0xff] %vm2088, %v1951
    %2117 = vst.msk [vmem:[#allocation2 + $0xe0] sm:$0xff] %vm2088, %v1953
    %2118 = vst.msk [vmem:[#allocation2 + $0xe8] sm:$0xff] %vm2088, %v1955
    %2119 = vst.msk [vmem:[#allocation2 + $0xf0] sm:$0xff] %vm2088, %v1957
    %2120 = vst.msk [vmem:[#allocation2 + $0xf8] sm:$0xff] %vm2088, %v1959
    %2121 = vst.msk [vmem:[#allocation2 + $0x100] sm:$0xff] %vm2088, %v1961
    %2122 = vst.msk [vmem:[#allocation2 + $0x108] sm:$0xff] %vm2088, %v1963
    %2123 = vst.msk [vmem:[#allocation2 + $0x110] sm:$0xff] %vm2088, %v1965
    %2124 = vst.msk [vmem:[#allocation2 + $0x118] sm:$0xff] %vm2088, %v1967
    %2125 = vst.msk [vmem:[#allocation2 + $0x120] sm:$0xff] %vm2088, %v1969
    %2126 = vst.msk [vmem:[#allocation2 + $0x128] sm:$0xff] %vm2088, %v1971
    %2127 = vst.msk [vmem:[#allocation2 + $0x130] sm:$0xff] %vm2088, %v1973
    %2128 = vst.msk [vmem:[#allocation2 + $0x138] sm:$0xff] %vm2088, %v1975
    %2129 = vst.msk [vmem:[#allocation2 + $0x140] sm:$0xff] %vm2088, %v1977
    %2130 = vst.msk [vmem:[#allocation2 + $0x148] sm:$0xff] %vm2088, %v1979
    %2131 = vst.msk [vmem:[#allocation2 + $0x150] sm:$0xff] %vm2088, %v1981
    %2132 = vst.msk [vmem:[#allocation2 + $0x158] sm:$0xff] %vm2088, %v1983
    %2133 = vst.msk [vmem:[#allocation2 + $0x160] sm:$0xff] %vm2088, %v1985
    %2134 = vst.msk [vmem:[#allocation2 + $0x168] sm:$0xff] %vm2088, %v1987
    %2135 = vst.msk [vmem:[#allocation2 + $0x170] sm:$0xff] %vm2088, %v1989
    %2136 = vst.msk [vmem:[#allocation2 + $0x178] sm:$0xff] %vm2088, %v1991
    %2137 = vst.msk [vmem:[#allocation2 + $0x180] sm:$0xff] %vm2088, %v1993
    %2138 = vst.msk [vmem:[#allocation2 + $0x188] sm:$0xff] %vm2088, %v1995
    %2139 = vst.msk [vmem:[#allocation2 + $0x190] sm:$0xff] %vm2088, %v1997
    %2140 = vst.msk [vmem:[#allocation2 + $0x198] sm:$0xff] %vm2088, %v1999
    %2141 = vst.msk [vmem:[#allocation2 + $0x1a0] sm:$0xff] %vm2088, %v2001
    %2142 = vst.msk [vmem:[#allocation2 + $0x1a8] sm:$0xff] %vm2088, %v2003
    %2143 = vst.msk [vmem:[#allocation2 + $0x1b0] sm:$0xff] %vm2088, %v2005
    %2144 = vst.msk [vmem:[#allocation2 + $0x1b8] sm:$0xff] %vm2088, %v2007
    %2145 = vst.msk [vmem:[#allocation2 + $0x1c0] sm:$0xff] %vm2088, %v2009
    %2146 = vst.msk [vmem:[#allocation2 + $0x1c8] sm:$0xff] %vm2088, %v2011
    %2147 = vst.msk [vmem:[#allocation2 + $0x1d0] sm:$0xff] %vm2088, %v2013
    %2148 = vst.msk [vmem:[#allocation2 + $0x1d8] sm:$0xff] %vm2088, %v2015
    %2149 = vst.msk [vmem:[#allocation2 + $0x1e0] sm:$0xff] %vm2088, %v2017
    %2150 = vst.msk [vmem:[#allocation2 + $0x1e8] sm:$0xff] %vm2088, %v2019
    %2151 = vst.msk [vmem:[#allocation2 + $0x1f0] sm:$0xff] %vm2088, %v2021
    %2152 = vst.msk [vmem:[#allocation2 + $0x1f8] sm:$0xff] %vm2088, %v2023
    %2153 = vset.pattern.permute.xlu0 3
    %2154 = vperm.xlu0 %2153, %v98
    %v2155 = vpop.permute.xlu0 %2154
    %2157 = vset.pattern.permute.xlu0 3
    %2158 = vperm.xlu0 %2157, %v99
    %v2159 = vpop.permute.xlu0 %2158
    %2161 = vset.pattern.permute.xlu0 3
    %2162 = vperm.xlu0 %2161, %v100
    %v2163 = vpop.permute.xlu0 %2162
    %2165 = vset.pattern.permute.xlu0 3
    %2166 = vperm.xlu0 %2165, %v101
    %v2167 = vpop.permute.xlu0 %2166
    %2169 = vset.pattern.permute.xlu0 3
    %2170 = vperm.xlu0 %2169, %v102
    %v2171 = vpop.permute.xlu0 %2170
    %2173 = vset.pattern.permute.xlu0 3
    %2174 = vperm.xlu0 %2173, %v103
    %v2175 = vpop.permute.xlu0 %2174
    %2177 = vset.pattern.permute.xlu0 3
    %2178 = vperm.xlu0 %2177, %v104
    %v2179 = vpop.permute.xlu0 %2178
    %2181 = vset.pattern.permute.xlu0 3
    %2182 = vperm.xlu0 %2181, %v105
    %v2183 = vpop.permute.xlu0 %2182
    %2185 = vset.pattern.permute.xlu0 3
    %2186 = vperm.xlu0 %2185, %v106
    %v2187 = vpop.permute.xlu0 %2186
    %2189 = vset.pattern.permute.xlu0 3
    %2190 = vperm.xlu0 %2189, %v107
    %v2191 = vpop.permute.xlu0 %2190
    %2193 = vset.pattern.permute.xlu0 3
    %2194 = vperm.xlu0 %2193, %v108
    %v2195 = vpop.permute.xlu0 %2194
    %2197 = vset.pattern.permute.xlu0 3
    %2198 = vperm.xlu0 %2197, %v109
    %v2199 = vpop.permute.xlu0 %2198
    %2201 = vset.pattern.permute.xlu0 3
    %2202 = vperm.xlu0 %2201, %v110
    %v2203 = vpop.permute.xlu0 %2202
    %2205 = vset.pattern.permute.xlu0 3
    %2206 = vperm.xlu0 %2205, %v111
    %v2207 = vpop.permute.xlu0 %2206
    %2209 = vset.pattern.permute.xlu0 3
    %2210 = vperm.xlu0 %2209, %v112
    %v2211 = vpop.permute.xlu0 %2210
    %2213 = vset.pattern.permute.xlu0 3
    %2214 = vperm.xlu0 %2213, %v113
    %v2215 = vpop.permute.xlu0 %2214
    %2217 = vset.pattern.permute.xlu0 3
    %2218 = vperm.xlu0 %2217, %v114
    %v2219 = vpop.permute.xlu0 %2218
    %2221 = vset.pattern.permute.xlu0 3
    %2222 = vperm.xlu0 %2221, %v115
    %v2223 = vpop.permute.xlu0 %2222
    %2225 = vset.pattern.permute.xlu0 3
    %2226 = vperm.xlu0 %2225, %v116
    %v2227 = vpop.permute.xlu0 %2226
    %2229 = vset.pattern.permute.xlu0 3
    %2230 = vperm.xlu0 %2229, %v117
    %v2231 = vpop.permute.xlu0 %2230
    %2233 = vset.pattern.permute.xlu0 3
    %2234 = vperm.xlu0 %2233, %v118
    %v2235 = vpop.permute.xlu0 %2234
    %2237 = vset.pattern.permute.xlu0 3
    %2238 = vperm.xlu0 %2237, %v119
    %v2239 = vpop.permute.xlu0 %2238
    %2241 = vset.pattern.permute.xlu0 3
    %2242 = vperm.xlu0 %2241, %v120
    %v2243 = vpop.permute.xlu0 %2242
    %2245 = vset.pattern.permute.xlu0 3
    %2246 = vperm.xlu0 %2245, %v121
    %v2247 = vpop.permute.xlu0 %2246
    %2249 = vset.pattern.permute.xlu0 3
    %2250 = vperm.xlu0 %2249, %v122
    %v2251 = vpop.permute.xlu0 %2250
    %2253 = vset.pattern.permute.xlu0 3
    %2254 = vperm.xlu0 %2253, %v123
    %v2255 = vpop.permute.xlu0 %2254
    %2257 = vset.pattern.permute.xlu0 3
    %2258 = vperm.xlu0 %2257, %v124
    %v2259 = vpop.permute.xlu0 %2258
    %2261 = vset.pattern.permute.xlu0 3
    %2262 = vperm.xlu0 %2261, %v125
    %v2263 = vpop.permute.xlu0 %2262
    %2265 = vset.pattern.permute.xlu0 3
    %2266 = vperm.xlu0 %2265, %v126
    %v2267 = vpop.permute.xlu0 %2266
    %2269 = vset.pattern.permute.xlu0 3
    %2270 = vperm.xlu0 %2269, %v127
    %v2271 = vpop.permute.xlu0 %2270
    %2273 = vset.pattern.permute.xlu0 3
    %2274 = vperm.xlu0 %2273, %v128
    %v2275 = vpop.permute.xlu0 %2274
    %2277 = vset.pattern.permute.xlu0 3
    %2278 = vperm.xlu0 %2277, %v129
    %v2279 = vpop.permute.xlu0 %2278
    %2281 = vset.pattern.permute.xlu0 3
    %2282 = vperm.xlu0 %2281, %v130
    %v2283 = vpop.permute.xlu0 %2282
    %2285 = vset.pattern.permute.xlu0 3
    %2286 = vperm.xlu0 %2285, %v131
    %v2287 = vpop.permute.xlu0 %2286
    %2289 = vset.pattern.permute.xlu0 3
    %2290 = vperm.xlu0 %2289, %v132
    %v2291 = vpop.permute.xlu0 %2290
    %2293 = vset.pattern.permute.xlu0 3
    %2294 = vperm.xlu0 %2293, %v133
    %v2295 = vpop.permute.xlu0 %2294
    %2297 = vset.pattern.permute.xlu0 3
    %2298 = vperm.xlu0 %2297, %v134
    %v2299 = vpop.permute.xlu0 %2298
    %2301 = vset.pattern.permute.xlu0 3
    %2302 = vperm.xlu0 %2301, %v135
    %v2303 = vpop.permute.xlu0 %2302
    %2305 = vset.pattern.permute.xlu0 3
    %2306 = vperm.xlu0 %2305, %v136
    %v2307 = vpop.permute.xlu0 %2306
    %2309 = vset.pattern.permute.xlu0 3
    %2310 = vperm.xlu0 %2309, %v137
    %v2311 = vpop.permute.xlu0 %2310
    %2313 = vset.pattern.permute.xlu0 3
    %2314 = vperm.xlu0 %2313, %v138
    %v2315 = vpop.permute.xlu0 %2314
    %2317 = vset.pattern.permute.xlu0 3
    %2318 = vperm.xlu0 %2317, %v139
    %v2319 = vpop.permute.xlu0 %2318
    %2321 = vset.pattern.permute.xlu0 3
    %2322 = vperm.xlu0 %2321, %v140
    %v2323 = vpop.permute.xlu0 %2322
    %2325 = vset.pattern.permute.xlu0 3
    %2326 = vperm.xlu0 %2325, %v141
    %v2327 = vpop.permute.xlu0 %2326
    %2329 = vset.pattern.permute.xlu0 3
    %2330 = vperm.xlu0 %2329, %v142
    %v2331 = vpop.permute.xlu0 %2330
    %2333 = vset.pattern.permute.xlu0 3
    %2334 = vperm.xlu0 %2333, %v143
    %v2335 = vpop.permute.xlu0 %2334
    %2337 = vset.pattern.permute.xlu0 3
    %2338 = vperm.xlu0 %2337, %v144
    %v2339 = vpop.permute.xlu0 %2338
    %2341 = vset.pattern.permute.xlu0 3
    %2342 = vperm.xlu0 %2341, %v145
    %v2343 = vpop.permute.xlu0 %2342
    %2345 = vset.pattern.permute.xlu0 3
    %2346 = vperm.xlu0 %2345, %v146
    %v2347 = vpop.permute.xlu0 %2346
    %2349 = vset.pattern.permute.xlu0 3
    %2350 = vperm.xlu0 %2349, %v147
    %v2351 = vpop.permute.xlu0 %2350
    %2353 = vset.pattern.permute.xlu0 3
    %2354 = vperm.xlu0 %2353, %v148
    %v2355 = vpop.permute.xlu0 %2354
    %2357 = vset.pattern.permute.xlu0 3
    %2358 = vperm.xlu0 %2357, %v149
    %v2359 = vpop.permute.xlu0 %2358
    %2361 = vset.pattern.permute.xlu0 3
    %2362 = vperm.xlu0 %2361, %v150
    %v2363 = vpop.permute.xlu0 %2362
    %2365 = vset.pattern.permute.xlu0 3
    %2366 = vperm.xlu0 %2365, %v151
    %v2367 = vpop.permute.xlu0 %2366
    %2369 = vset.pattern.permute.xlu0 3
    %2370 = vperm.xlu0 %2369, %v152
    %v2371 = vpop.permute.xlu0 %2370
    %2373 = vset.pattern.permute.xlu0 3
    %2374 = vperm.xlu0 %2373, %v153
    %v2375 = vpop.permute.xlu0 %2374
    %2377 = vset.pattern.permute.xlu0 3
    %2378 = vperm.xlu0 %2377, %v154
    %v2379 = vpop.permute.xlu0 %2378
    %2381 = vset.pattern.permute.xlu0 3
    %2382 = vperm.xlu0 %2381, %v155
    %v2383 = vpop.permute.xlu0 %2382
    %2385 = vset.pattern.permute.xlu0 3
    %2386 = vperm.xlu0 %2385, %v156
    %v2387 = vpop.permute.xlu0 %2386
    %2389 = vset.pattern.permute.xlu0 3
    %2390 = vperm.xlu0 %2389, %v157
    %v2391 = vpop.permute.xlu0 %2390
    %2393 = vset.pattern.permute.xlu0 3
    %2394 = vperm.xlu0 %2393, %v158
    %v2395 = vpop.permute.xlu0 %2394
    %2397 = vset.pattern.permute.xlu0 3
    %2398 = vperm.xlu0 %2397, %v159
    %v2399 = vpop.permute.xlu0 %2398
    %2401 = vset.pattern.permute.xlu0 3
    %2402 = vperm.xlu0 %2401, %v160
    %v2403 = vpop.permute.xlu0 %2402
    %2405 = vset.pattern.permute.xlu0 3
    %2406 = vperm.xlu0 %2405, %v161
    %v2407 = vpop.permute.xlu0 %2406
    %v2409 = vmul.f32 %v292, %v2155
    %v2410 = vmul.f32 %v291, %v2159
    %v2411 = vmul.f32 %v290, %v2163
    %v2412 = vmul.f32 %v289, %v2167
    %v2413 = vmul.f32 %v288, %v2171
    %v2414 = vmul.f32 %v287, %v2175
    %v2415 = vmul.f32 %v286, %v2179
    %v2416 = vmul.f32 %v285, %v2183
    %v2417 = vmul.f32 %v284, %v2187
    %v2418 = vmul.f32 %v283, %v2191
    %v2419 = vmul.f32 %v282, %v2195
    %v2420 = vmul.f32 %v281, %v2199
    %v2421 = vmul.f32 %v280, %v2203
    %v2422 = vmul.f32 %v279, %v2207
    %v2423 = vmul.f32 %v278, %v2211
    %v2424 = vmul.f32 %v277, %v2215
    %v2425 = vmul.f32 %v276, %v2219
    %v2426 = vmul.f32 %v275, %v2223
    %v2427 = vmul.f32 %v274, %v2227
    %v2428 = vmul.f32 %v273, %v2231
    %v2429 = vmul.f32 %v272, %v2235
    %v2430 = vmul.f32 %v271, %v2239
    %v2431 = vmul.f32 %v270, %v2243
    %v2432 = vmul.f32 %v269, %v2247
    %v2433 = vmul.f32 %v268, %v2251
    %v2434 = vmul.f32 %v267, %v2255
    %v2435 = vmul.f32 %v266, %v2259
    %v2436 = vmul.f32 %v265, %v2263
    %v2437 = vmul.f32 %v264, %v2267
    %v2438 = vmul.f32 %v263, %v2271
    %v2439 = vmul.f32 %v262, %v2275
    %v2440 = vmul.f32 %v261, %v2279
    %v2441 = vmul.f32 %v260, %v2283
    %v2442 = vmul.f32 %v259, %v2287
    %v2443 = vmul.f32 %v258, %v2291
    %v2444 = vmul.f32 %v257, %v2295
    %v2445 = vmul.f32 %v256, %v2299
    %v2446 = vmul.f32 %v255, %v2303
    %v2447 = vmul.f32 %v254, %v2307
    %v2448 = vmul.f32 %v253, %v2311
    %v2449 = vmul.f32 %v252, %v2315
    %v2450 = vmul.f32 %v251, %v2319
    %v2451 = vmul.f32 %v250, %v2323
    %v2452 = vmul.f32 %v249, %v2327
    %v2453 = vmul.f32 %v248, %v2331
    %v2454 = vmul.f32 %v247, %v2335
    %v2455 = vmul.f32 %v246, %v2339
    %v2456 = vmul.f32 %v245, %v2343
    %v2457 = vmul.f32 %v244, %v2347
    %v2458 = vmul.f32 %v243, %v2351
    %v2459 = vmul.f32 %v242, %v2355
    %v2460 = vmul.f32 %v241, %v2359
    %v2461 = vmul.f32 %v240, %v2363
    %v2462 = vmul.f32 %v239, %v2367
    %v2463 = vmul.f32 %v238, %v2371
    %v2464 = vmul.f32 %v237, %v2375
    %v2465 = vmul.f32 %v236, %v2379
    %v2466 = vmul.f32 %v235, %v2383
    %v2467 = vmul.f32 %v234, %v2387
    %v2468 = vmul.f32 %v233, %v2391
    %v2469 = vmul.f32 %v232, %v2395
    %v2470 = vmul.f32 %v231, %v2399
    %v2471 = vmul.f32 %v230, %v2403
    %v2472 = vmul.f32 %v229, %v2407
    %2537 = vrot.lane.b32.xlu0 %v2409, 9
    %v2538 = vpop.permute.xlu0 %2537
    %2539 = vrot.lane.b32.xlu0 %v2410, 9
    %v2540 = vpop.permute.xlu0 %2539
    %2541 = vrot.lane.b32.xlu0 %v2411, 9
    %v2542 = vpop.permute.xlu0 %2541
    %2543 = vrot.lane.b32.xlu0 %v2412, 9
    %v2544 = vpop.permute.xlu0 %2543
    %2545 = vrot.lane.b32.xlu0 %v2413, 9
    %v2546 = vpop.permute.xlu0 %2545
    %2547 = vrot.lane.b32.xlu0 %v2414, 9
    %v2548 = vpop.permute.xlu0 %2547
    %2549 = vrot.lane.b32.xlu0 %v2415, 9
    %v2550 = vpop.permute.xlu0 %2549
    %2551 = vrot.lane.b32.xlu0 %v2416, 9
    %v2552 = vpop.permute.xlu0 %2551
    %2553 = vrot.lane.b32.xlu0 %v2417, 9
    %v2554 = vpop.permute.xlu0 %2553
    %2555 = vrot.lane.b32.xlu0 %v2418, 9
    %v2556 = vpop.permute.xlu0 %2555
    %2557 = vrot.lane.b32.xlu0 %v2419, 9
    %v2558 = vpop.permute.xlu0 %2557
    %2559 = vrot.lane.b32.xlu0 %v2420, 9
    %v2560 = vpop.permute.xlu0 %2559
    %2561 = vrot.lane.b32.xlu0 %v2421, 9
    %v2562 = vpop.permute.xlu0 %2561
    %2563 = vrot.lane.b32.xlu0 %v2422, 9
    %v2564 = vpop.permute.xlu0 %2563
    %2565 = vrot.lane.b32.xlu0 %v2423, 9
    %v2566 = vpop.permute.xlu0 %2565
    %2567 = vrot.lane.b32.xlu0 %v2424, 9
    %v2568 = vpop.permute.xlu0 %2567
    %2569 = vrot.lane.b32.xlu0 %v2425, 9
    %v2570 = vpop.permute.xlu0 %2569
    %2571 = vrot.lane.b32.xlu0 %v2426, 9
    %v2572 = vpop.permute.xlu0 %2571
    %2573 = vrot.lane.b32.xlu0 %v2427, 9
    %v2574 = vpop.permute.xlu0 %2573
    %2575 = vrot.lane.b32.xlu0 %v2428, 9
    %v2576 = vpop.permute.xlu0 %2575
    %2577 = vrot.lane.b32.xlu0 %v2429, 9
    %v2578 = vpop.permute.xlu0 %2577
    %2579 = vrot.lane.b32.xlu0 %v2430, 9
    %v2580 = vpop.permute.xlu0 %2579
    %2581 = vrot.lane.b32.xlu0 %v2431, 9
    %v2582 = vpop.permute.xlu0 %2581
    %2583 = vrot.lane.b32.xlu0 %v2432, 9
    %v2584 = vpop.permute.xlu0 %2583
    %2585 = vrot.lane.b32.xlu0 %v2433, 9
    %v2586 = vpop.permute.xlu0 %2585
    %2587 = vrot.lane.b32.xlu0 %v2434, 9
    %v2588 = vpop.permute.xlu0 %2587
    %2589 = vrot.lane.b32.xlu0 %v2435, 9
    %v2590 = vpop.permute.xlu0 %2589
    %2591 = vrot.lane.b32.xlu0 %v2436, 9
    %v2592 = vpop.permute.xlu0 %2591
    %2593 = vrot.lane.b32.xlu0 %v2437, 9
    %v2594 = vpop.permute.xlu0 %2593
    %2595 = vrot.lane.b32.xlu0 %v2438, 9
    %v2596 = vpop.permute.xlu0 %2595
    %2597 = vrot.lane.b32.xlu0 %v2439, 9
    %v2598 = vpop.permute.xlu0 %2597
    %2599 = vrot.lane.b32.xlu0 %v2440, 9
    %v2600 = vpop.permute.xlu0 %2599
    %2601 = vrot.lane.b32.xlu0 %v2441, 9
    %v2602 = vpop.permute.xlu0 %2601
    %2603 = vrot.lane.b32.xlu0 %v2442, 9
    %v2604 = vpop.permute.xlu0 %2603
    %2605 = vrot.lane.b32.xlu0 %v2443, 9
    %v2606 = vpop.permute.xlu0 %2605
    %2607 = vrot.lane.b32.xlu0 %v2444, 9
    %v2608 = vpop.permute.xlu0 %2607
    %2609 = vrot.lane.b32.xlu0 %v2445, 9
    %v2610 = vpop.permute.xlu0 %2609
    %2611 = vrot.lane.b32.xlu0 %v2446, 9
    %v2612 = vpop.permute.xlu0 %2611
    %2613 = vrot.lane.b32.xlu0 %v2447, 9
    %v2614 = vpop.permute.xlu0 %2613
    %2615 = vrot.lane.b32.xlu0 %v2448, 9
    %v2616 = vpop.permute.xlu0 %2615
    %2617 = vrot.lane.b32.xlu0 %v2449, 9
    %v2618 = vpop.permute.xlu0 %2617
    %2619 = vrot.lane.b32.xlu0 %v2450, 9
    %v2620 = vpop.permute.xlu0 %2619
    %2621 = vrot.lane.b32.xlu0 %v2451, 9
    %v2622 = vpop.permute.xlu0 %2621
    %2623 = vrot.lane.b32.xlu0 %v2452, 9
    %v2624 = vpop.permute.xlu0 %2623
    %2625 = vrot.lane.b32.xlu0 %v2453, 9
    %v2626 = vpop.permute.xlu0 %2625
    %2627 = vrot.lane.b32.xlu0 %v2454, 9
    %v2628 = vpop.permute.xlu0 %2627
    %2629 = vrot.lane.b32.xlu0 %v2455, 9
    %v2630 = vpop.permute.xlu0 %2629
    %2631 = vrot.lane.b32.xlu0 %v2456, 9
    %v2632 = vpop.permute.xlu0 %2631
    %2633 = vrot.lane.b32.xlu0 %v2457, 9
    %v2634 = vpop.permute.xlu0 %2633
    %2635 = vrot.lane.b32.xlu0 %v2458, 9
    %v2636 = vpop.permute.xlu0 %2635
    %2637 = vrot.lane.b32.xlu0 %v2459, 9
    %v2638 = vpop.permute.xlu0 %2637
    %2639 = vrot.lane.b32.xlu0 %v2460, 9
    %v2640 = vpop.permute.xlu0 %2639
    %2641 = vrot.lane.b32.xlu0 %v2461, 9
    %v2642 = vpop.permute.xlu0 %2641
    %2643 = vrot.lane.b32.xlu0 %v2462, 9
    %v2644 = vpop.permute.xlu0 %2643
    %2645 = vrot.lane.b32.xlu0 %v2463, 9
    %v2646 = vpop.permute.xlu0 %2645
    %2647 = vrot.lane.b32.xlu0 %v2464, 9
    %v2648 = vpop.permute.xlu0 %2647
    %2649 = vrot.lane.b32.xlu0 %v2465, 9
    %v2650 = vpop.permute.xlu0 %2649
    %2651 = vrot.lane.b32.xlu0 %v2466, 9
    %v2652 = vpop.permute.xlu0 %2651
    %2653 = vrot.lane.b32.xlu0 %v2467, 9
    %v2654 = vpop.permute.xlu0 %2653
    %2655 = vrot.lane.b32.xlu0 %v2468, 9
    %v2656 = vpop.permute.xlu0 %2655
    %2657 = vrot.lane.b32.xlu0 %v2469, 9
    %v2658 = vpop.permute.xlu0 %2657
    %2659 = vrot.lane.b32.xlu0 %v2470, 9
    %v2660 = vpop.permute.xlu0 %2659
    %2661 = vrot.lane.b32.xlu0 %v2471, 9
    %v2662 = vpop.permute.xlu0 %2661
    %2663 = vrot.lane.b32.xlu0 %v2472, 9
    %v2664 = vpop.permute.xlu0 %2663
    %vm2729 = vcmask 97352
    %2730 = vst.msk [vmem:[#allocation2] sm:$0xff] %vm2729, %v2538
    %2731 = vst.msk [vmem:[#allocation2 + $0x8] sm:$0xff] %vm2729, %v2540
    %2732 = vst.msk [vmem:[#allocation2 + $0x10] sm:$0xff] %vm2729, %v2542
    %2733 = vst.msk [vmem:[#allocation2 + $0x18] sm:$0xff] %vm2729, %v2544
    %2734 = vst.msk [vmem:[#allocation2 + $0x20] sm:$0xff] %vm2729, %v2546
    %2735 = vst.msk [vmem:[#allocation2 + $0x28] sm:$0xff] %vm2729, %v2548
    %2736 = vst.msk [vmem:[#allocation2 + $0x30] sm:$0xff] %vm2729, %v2550
    %2737 = vst.msk [vmem:[#allocation2 + $0x38] sm:$0xff] %vm2729, %v2552
    %2738 = vst.msk [vmem:[#allocation2 + $0x40] sm:$0xff] %vm2729, %v2554
    %2739 = vst.msk [vmem:[#allocation2 + $0x48] sm:$0xff] %vm2729, %v2556
    %2740 = vst.msk [vmem:[#allocation2 + $0x50] sm:$0xff] %vm2729, %v2558
    %2741 = vst.msk [vmem:[#allocation2 + $0x58] sm:$0xff] %vm2729, %v2560
    %2742 = vst.msk [vmem:[#allocation2 + $0x60] sm:$0xff] %vm2729, %v2562
    %2743 = vst.msk [vmem:[#allocation2 + $0x68] sm:$0xff] %vm2729, %v2564
    %2744 = vst.msk [vmem:[#allocation2 + $0x70] sm:$0xff] %vm2729, %v2566
    %2745 = vst.msk [vmem:[#allocation2 + $0x78] sm:$0xff] %vm2729, %v2568
    %2746 = vst.msk [vmem:[#allocation2 + $0x80] sm:$0xff] %vm2729, %v2570
    %2747 = vst.msk [vmem:[#allocation2 + $0x88] sm:$0xff] %vm2729, %v2572
    %2748 = vst.msk [vmem:[#allocation2 + $0x90] sm:$0xff] %vm2729, %v2574
    %2749 = vst.msk [vmem:[#allocation2 + $0x98] sm:$0xff] %vm2729, %v2576
    %2750 = vst.msk [vmem:[#allocation2 + $0xa0] sm:$0xff] %vm2729, %v2578
    %2751 = vst.msk [vmem:[#allocation2 + $0xa8] sm:$0xff] %vm2729, %v2580
    %2752 = vst.msk [vmem:[#allocation2 + $0xb0] sm:$0xff] %vm2729, %v2582
    %2753 = vst.msk [vmem:[#allocation2 + $0xb8] sm:$0xff] %vm2729, %v2584
    %2754 = vst.msk [vmem:[#allocation2 + $0xc0] sm:$0xff] %vm2729, %v2586
    %2755 = vst.msk [vmem:[#allocation2 + $0xc8] sm:$0xff] %vm2729, %v2588
    %2756 = vst.msk [vmem:[#allocation2 + $0xd0] sm:$0xff] %vm2729, %v2590
    %2757 = vst.msk [vmem:[#allocation2 + $0xd8] sm:$0xff] %vm2729, %v2592
    %2758 = vst.msk [vmem:[#allocation2 + $0xe0] sm:$0xff] %vm2729, %v2594
    %2759 = vst.msk [vmem:[#allocation2 + $0xe8] sm:$0xff] %vm2729, %v2596
    %2760 = vst.msk [vmem:[#allocation2 + $0xf0] sm:$0xff] %vm2729, %v2598
    %2761 = vst.msk [vmem:[#allocation2 + $0xf8] sm:$0xff] %vm2729, %v2600
    %2762 = vst.msk [vmem:[#allocation2 + $0x100] sm:$0xff] %vm2729, %v2602
    %2763 = vst.msk [vmem:[#allocation2 + $0x108] sm:$0xff] %vm2729, %v2604
    %2764 = vst.msk [vmem:[#allocation2 + $0x110] sm:$0xff] %vm2729, %v2606
    %2765 = vst.msk [vmem:[#allocation2 + $0x118] sm:$0xff] %vm2729, %v2608
    %2766 = vst.msk [vmem:[#allocation2 + $0x120] sm:$0xff] %vm2729, %v2610
    %2767 = vst.msk [vmem:[#allocation2 + $0x128] sm:$0xff] %vm2729, %v2612
    %2768 = vst.msk [vmem:[#allocation2 + $0x130] sm:$0xff] %vm2729, %v2614
    %2769 = vst.msk [vmem:[#allocation2 + $0x138] sm:$0xff] %vm2729, %v2616
    %2770 = vst.msk [vmem:[#allocation2 + $0x140] sm:$0xff] %vm2729, %v2618
    %2771 = vst.msk [vmem:[#allocation2 + $0x148] sm:$0xff] %vm2729, %v2620
    %2772 = vst.msk [vmem:[#allocation2 + $0x150] sm:$0xff] %vm2729, %v2622
    %2773 = vst.msk [vmem:[#allocation2 + $0x158] sm:$0xff] %vm2729, %v2624
    %2774 = vst.msk [vmem:[#allocation2 + $0x160] sm:$0xff] %vm2729, %v2626
    %2775 = vst.msk [vmem:[#allocation2 + $0x168] sm:$0xff] %vm2729, %v2628
    %2776 = vst.msk [vmem:[#allocation2 + $0x170] sm:$0xff] %vm2729, %v2630
    %2777 = vst.msk [vmem:[#allocation2 + $0x178] sm:$0xff] %vm2729, %v2632
    %2778 = vst.msk [vmem:[#allocation2 + $0x180] sm:$0xff] %vm2729, %v2634
    %2779 = vst.msk [vmem:[#allocation2 + $0x188] sm:$0xff] %vm2729, %v2636
    %2780 = vst.msk [vmem:[#allocation2 + $0x190] sm:$0xff] %vm2729, %v2638
    %2781 = vst.msk [vmem:[#allocation2 + $0x198] sm:$0xff] %vm2729, %v2640
    %2782 = vst.msk [vmem:[#allocation2 + $0x1a0] sm:$0xff] %vm2729, %v2642
    %2783 = vst.msk [vmem:[#allocation2 + $0x1a8] sm:$0xff] %vm2729, %v2644
    %2784 = vst.msk [vmem:[#allocation2 + $0x1b0] sm:$0xff] %vm2729, %v2646
    %2785 = vst.msk [vmem:[#allocation2 + $0x1b8] sm:$0xff] %vm2729, %v2648
    %2786 = vst.msk [vmem:[#allocation2 + $0x1c0] sm:$0xff] %vm2729, %v2650
    %2787 = vst.msk [vmem:[#allocation2 + $0x1c8] sm:$0xff] %vm2729, %v2652
    %2788 = vst.msk [vmem:[#allocation2 + $0x1d0] sm:$0xff] %vm2729, %v2654
    %2789 = vst.msk [vmem:[#allocation2 + $0x1d8] sm:$0xff] %vm2729, %v2656
    %2790 = vst.msk [vmem:[#allocation2 + $0x1e0] sm:$0xff] %vm2729, %v2658
    %2791 = vst.msk [vmem:[#allocation2 + $0x1e8] sm:$0xff] %vm2729, %v2660
    %2792 = vst.msk [vmem:[#allocation2 + $0x1f0] sm:$0xff] %vm2729, %v2662
    %2793 = vst.msk [vmem:[#allocation2 + $0x1f8] sm:$0xff] %vm2729, %v2664
    %2858 = vrot.lane.b32.xlu0 %v34, 12
    %v2859 = vpop.permute.xlu0 %2858
    %2860 = vrot.lane.b32.xlu0 %v35, 12
    %v2861 = vpop.permute.xlu0 %2860
    %2862 = vrot.lane.b32.xlu0 %v36, 12
    %v2863 = vpop.permute.xlu0 %2862
    %2864 = vrot.lane.b32.xlu0 %v37, 12
    %v2865 = vpop.permute.xlu0 %2864
    %2866 = vrot.lane.b32.xlu0 %v38, 12
    %v2867 = vpop.permute.xlu0 %2866
    %2868 = vrot.lane.b32.xlu0 %v39, 12
    %v2869 = vpop.permute.xlu0 %2868
    %2870 = vrot.lane.b32.xlu0 %v40, 12
    %v2871 = vpop.permute.xlu0 %2870
    %2872 = vrot.lane.b32.xlu0 %v41, 12
    %v2873 = vpop.permute.xlu0 %2872
    %2874 = vrot.lane.b32.xlu0 %v42, 12
    %v2875 = vpop.permute.xlu0 %2874
    %2876 = vrot.lane.b32.xlu0 %v43, 12
    %v2877 = vpop.permute.xlu0 %2876
    %2878 = vrot.lane.b32.xlu0 %v44, 12
    %v2879 = vpop.permute.xlu0 %2878
    %2880 = vrot.lane.b32.xlu0 %v45, 12
    %v2881 = vpop.permute.xlu0 %2880
    %2882 = vrot.lane.b32.xlu0 %v46, 12
    %v2883 = vpop.permute.xlu0 %2882
    %2884 = vrot.lane.b32.xlu0 %v47, 12
    %v2885 = vpop.permute.xlu0 %2884
    %2886 = vrot.lane.b32.xlu0 %v48, 12
    %v2887 = vpop.permute.xlu0 %2886
    %2888 = vrot.lane.b32.xlu0 %v49, 12
    %v2889 = vpop.permute.xlu0 %2888
    %2890 = vrot.lane.b32.xlu0 %v50, 12
    %v2891 = vpop.permute.xlu0 %2890
    %2892 = vrot.lane.b32.xlu0 %v51, 12
    %v2893 = vpop.permute.xlu0 %2892
    %2894 = vrot.lane.b32.xlu0 %v52, 12
    %v2895 = vpop.permute.xlu0 %2894
    %2896 = vrot.lane.b32.xlu0 %v53, 12
    %v2897 = vpop.permute.xlu0 %2896
    %2898 = vrot.lane.b32.xlu0 %v54, 12
    %v2899 = vpop.permute.xlu0 %2898
    %2900 = vrot.lane.b32.xlu0 %v55, 12
    %v2901 = vpop.permute.xlu0 %2900
    %2902 = vrot.lane.b32.xlu0 %v56, 12
    %v2903 = vpop.permute.xlu0 %2902
    %2904 = vrot.lane.b32.xlu0 %v57, 12
    %v2905 = vpop.permute.xlu0 %2904
    %2906 = vrot.lane.b32.xlu0 %v58, 12
    %v2907 = vpop.permute.xlu0 %2906
    %2908 = vrot.lane.b32.xlu0 %v59, 12
    %v2909 = vpop.permute.xlu0 %2908
    %2910 = vrot.lane.b32.xlu0 %v60, 12
    %v2911 = vpop.permute.xlu0 %2910
    %2912 = vrot.lane.b32.xlu0 %v61, 12
    %v2913 = vpop.permute.xlu0 %2912
    %2914 = vrot.lane.b32.xlu0 %v62, 12
    %v2915 = vpop.permute.xlu0 %2914
    %2916 = vrot.lane.b32.xlu0 %v63, 12
    %v2917 = vpop.permute.xlu0 %2916
    %2918 = vrot.lane.b32.xlu0 %v64, 12
    %v2919 = vpop.permute.xlu0 %2918
    %2920 = vrot.lane.b32.xlu0 %v65, 12
    %v2921 = vpop.permute.xlu0 %2920
    %2922 = vrot.lane.b32.xlu0 %v66, 12
    %v2923 = vpop.permute.xlu0 %2922
    %2924 = vrot.lane.b32.xlu0 %v67, 12
    %v2925 = vpop.permute.xlu0 %2924
    %2926 = vrot.lane.b32.xlu0 %v68, 12
    %v2927 = vpop.permute.xlu0 %2926
    %2928 = vrot.lane.b32.xlu0 %v69, 12
    %v2929 = vpop.permute.xlu0 %2928
    %2930 = vrot.lane.b32.xlu0 %v70, 12
    %v2931 = vpop.permute.xlu0 %2930
    %2932 = vrot.lane.b32.xlu0 %v71, 12
    %v2933 = vpop.permute.xlu0 %2932
    %2934 = vrot.lane.b32.xlu0 %v72, 12
    %v2935 = vpop.permute.xlu0 %2934
    %2936 = vrot.lane.b32.xlu0 %v73, 12
    %v2937 = vpop.permute.xlu0 %2936
    %2938 = vrot.lane.b32.xlu0 %v74, 12
    %v2939 = vpop.permute.xlu0 %2938
    %2940 = vrot.lane.b32.xlu0 %v75, 12
    %v2941 = vpop.permute.xlu0 %2940
    %2942 = vrot.lane.b32.xlu0 %v76, 12
    %v2943 = vpop.permute.xlu0 %2942
    %2944 = vrot.lane.b32.xlu0 %v77, 12
    %v2945 = vpop.permute.xlu0 %2944
    %2946 = vrot.lane.b32.xlu0 %v78, 12
    %v2947 = vpop.permute.xlu0 %2946
    %2948 = vrot.lane.b32.xlu0 %v79, 12
    %v2949 = vpop.permute.xlu0 %2948
    %2950 = vrot.lane.b32.xlu0 %v80, 12
    %v2951 = vpop.permute.xlu0 %2950
    %2952 = vrot.lane.b32.xlu0 %v81, 12
    %v2953 = vpop.permute.xlu0 %2952
    %2954 = vrot.lane.b32.xlu0 %v82, 12
    %v2955 = vpop.permute.xlu0 %2954
    %2956 = vrot.lane.b32.xlu0 %v83, 12
    %v2957 = vpop.permute.xlu0 %2956
    %2958 = vrot.lane.b32.xlu0 %v84, 12
    %v2959 = vpop.permute.xlu0 %2958
    %2960 = vrot.lane.b32.xlu0 %v85, 12
    %v2961 = vpop.permute.xlu0 %2960
    %2962 = vrot.lane.b32.xlu0 %v86, 12
    %v2963 = vpop.permute.xlu0 %2962
    %2964 = vrot.lane.b32.xlu0 %v87, 12
    %v2965 = vpop.permute.xlu0 %2964
    %2966 = vrot.lane.b32.xlu0 %v88, 12
    %v2967 = vpop.permute.xlu0 %2966
    %2968 = vrot.lane.b32.xlu0 %v89, 12
    %v2969 = vpop.permute.xlu0 %2968
    %2970 = vrot.lane.b32.xlu0 %v90, 12
    %v2971 = vpop.permute.xlu0 %2970
    %2972 = vrot.lane.b32.xlu0 %v91, 12
    %v2973 = vpop.permute.xlu0 %2972
    %2974 = vrot.lane.b32.xlu0 %v92, 12
    %v2975 = vpop.permute.xlu0 %2974
    %2976 = vrot.lane.b32.xlu0 %v93, 12
    %v2977 = vpop.permute.xlu0 %2976
    %2978 = vrot.lane.b32.xlu0 %v94, 12
    %v2979 = vpop.permute.xlu0 %2978
    %2980 = vrot.lane.b32.xlu0 %v95, 12
    %v2981 = vpop.permute.xlu0 %2980
    %2982 = vrot.lane.b32.xlu0 %v96, 12
    %v2983 = vpop.permute.xlu0 %2982
    %2984 = vrot.lane.b32.xlu0 %v97, 12
    %v2985 = vpop.permute.xlu0 %2984
    %vm3050 = vcmask 121952
    %3051 = vst.msk [vmem:[#allocation2] sm:$0xff] %vm3050, %v2859
    %3052 = vst.msk [vmem:[#allocation2 + $0x8] sm:$0xff] %vm3050, %v2861
    %3053 = vst.msk [vmem:[#allocation2 + $0x10] sm:$0xff] %vm3050, %v2863
    %3054 = vst.msk [vmem:[#allocation2 + $0x18] sm:$0xff] %vm3050, %v2865
    %3055 = vst.msk [vmem:[#allocation2 + $0x20] sm:$0xff] %vm3050, %v2867
    %3056 = vst.msk [vmem:[#allocation2 + $0x28] sm:$0xff] %vm3050, %v2869
    %3057 = vst.msk [vmem:[#allocation2 + $0x30] sm:$0xff] %vm3050, %v2871
    %3058 = vst.msk [vmem:[#allocation2 + $0x38] sm:$0xff] %vm3050, %v2873
    %3059 = vst.msk [vmem:[#allocation2 + $0x40] sm:$0xff] %vm3050, %v2875
    %3060 = vst.msk [vmem:[#allocation2 + $0x48] sm:$0xff] %vm3050, %v2877
    %3061 = vst.msk [vmem:[#allocation2 + $0x50] sm:$0xff] %vm3050, %v2879
    %3062 = vst.msk [vmem:[#allocation2 + $0x58] sm:$0xff] %vm3050, %v2881
    %3063 = vst.msk [vmem:[#allocation2 + $0x60] sm:$0xff] %vm3050, %v2883
    %3064 = vst.msk [vmem:[#allocation2 + $0x68] sm:$0xff] %vm3050, %v2885
    %3065 = vst.msk [vmem:[#allocation2 + $0x70] sm:$0xff] %vm3050, %v2887
    %3066 = vst.msk [vmem:[#allocation2 + $0x78] sm:$0xff] %vm3050, %v2889
    %3067 = vst.msk [vmem:[#allocation2 + $0x80] sm:$0xff] %vm3050, %v2891
    %3068 = vst.msk [vmem:[#allocation2 + $0x88] sm:$0xff] %vm3050, %v2893
    %3069 = vst.msk [vmem:[#allocation2 + $0x90] sm:$0xff] %vm3050, %v2895
    %3070 = vst.msk [vmem:[#allocation2 + $0x98] sm:$0xff] %vm3050, %v2897
    %3071 = vst.msk [vmem:[#allocation2 + $0xa0] sm:$0xff] %vm3050, %v2899
    %3072 = vst.msk [vmem:[#allocation2 + $0xa8] sm:$0xff] %vm3050, %v2901
    %3073 = vst.msk [vmem:[#allocation2 + $0xb0] sm:$0xff] %vm3050, %v2903
    %3074 = vst.msk [vmem:[#allocation2 + $0xb8] sm:$0xff] %vm3050, %v2905
    %3075 = vst.msk [vmem:[#allocation2 + $0xc0] sm:$0xff] %vm3050, %v2907
    %3076 = vst.msk [vmem:[#allocation2 + $0xc8] sm:$0xff] %vm3050, %v2909
    %3077 = vst.msk [vmem:[#allocation2 + $0xd0] sm:$0xff] %vm3050, %v2911
    %3078 = vst.msk [vmem:[#allocation2 + $0xd8] sm:$0xff] %vm3050, %v2913
    %3079 = vst.msk [vmem:[#allocation2 + $0xe0] sm:$0xff] %vm3050, %v2915
    %3080 = vst.msk [vmem:[#allocation2 + $0xe8] sm:$0xff] %vm3050, %v2917
    %3081 = vst.msk [vmem:[#allocation2 + $0xf0] sm:$0xff] %vm3050, %v2919
    %3082 = vst.msk [vmem:[#allocation2 + $0xf8] sm:$0xff] %vm3050, %v2921
    %3083 = vst.msk [vmem:[#allocation2 + $0x100] sm:$0xff] %vm3050, %v2923
    %3084 = vst.msk [vmem:[#allocation2 + $0x108] sm:$0xff] %vm3050, %v2925
    %3085 = vst.msk [vmem:[#allocation2 + $0x110] sm:$0xff] %vm3050, %v2927
    %3086 = vst.msk [vmem:[#allocation2 + $0x118] sm:$0xff] %vm3050, %v2929
    %3087 = vst.msk [vmem:[#allocation2 + $0x120] sm:$0xff] %vm3050, %v2931
    %3088 = vst.msk [vmem:[#allocation2 + $0x128] sm:$0xff] %vm3050, %v2933
    %3089 = vst.msk [vmem:[#allocation2 + $0x130] sm:$0xff] %vm3050, %v2935
    %3090 = vst.msk [vmem:[#allocation2 + $0x138] sm:$0xff] %vm3050, %v2937
    %3091 = vst.msk [vmem:[#allocation2 + $0x140] sm:$0xff] %vm3050, %v2939
    %3092 = vst.msk [vmem:[#allocation2 + $0x148] sm:$0xff] %vm3050, %v2941
    %3093 = vst.msk [vmem:[#allocation2 + $0x150] sm:$0xff] %vm3050, %v2943
    %3094 = vst.msk [vmem:[#allocation2 + $0x158] sm:$0xff] %vm3050, %v2945
    %3095 = vst.msk [vmem:[#allocation2 + $0x160] sm:$0xff] %vm3050, %v2947
    %3096 = vst.msk [vmem:[#allocation2 + $0x168] sm:$0xff] %vm3050, %v2949
    %3097 = vst.msk [vmem:[#allocation2 + $0x170] sm:$0xff] %vm3050, %v2951
    %3098 = vst.msk [vmem:[#allocation2 + $0x178] sm:$0xff] %vm3050, %v2953
    %3099 = vst.msk [vmem:[#allocation2 + $0x180] sm:$0xff] %vm3050, %v2955
    %3100 = vst.msk [vmem:[#allocation2 + $0x188] sm:$0xff] %vm3050, %v2957
    %3101 = vst.msk [vmem:[#allocation2 + $0x190] sm:$0xff] %vm3050, %v2959
    %3102 = vst.msk [vmem:[#allocation2 + $0x198] sm:$0xff] %vm3050, %v2961
    %3103 = vst.msk [vmem:[#allocation2 + $0x1a0] sm:$0xff] %vm3050, %v2963
    %3104 = vst.msk [vmem:[#allocation2 + $0x1a8] sm:$0xff] %vm3050, %v2965
    %3105 = vst.msk [vmem:[#allocation2 + $0x1b0] sm:$0xff] %vm3050, %v2967
    %3106 = vst.msk [vmem:[#allocation2 + $0x1b8] sm:$0xff] %vm3050, %v2969
    %3107 = vst.msk [vmem:[#allocation2 + $0x1c0] sm:$0xff] %vm3050, %v2971
    %3108 = vst.msk [vmem:[#allocation2 + $0x1c8] sm:$0xff] %vm3050, %v2973
    %3109 = vst.msk [vmem:[#allocation2 + $0x1d0] sm:$0xff] %vm3050, %v2975
    %3110 = vst.msk [vmem:[#allocation2 + $0x1d8] sm:$0xff] %vm3050, %v2977
    %3111 = vst.msk [vmem:[#allocation2 + $0x1e0] sm:$0xff] %vm3050, %v2979
    %3112 = vst.msk [vmem:[#allocation2 + $0x1e8] sm:$0xff] %vm3050, %v2981
    %3113 = vst.msk [vmem:[#allocation2 + $0x1f0] sm:$0xff] %vm3050, %v2983
    %3114 = vst.msk [vmem:[#allocation2 + $0x1f8] sm:$0xff] %vm3050, %v2985
    %3115 = vset.pattern.permute.xlu0 5
    %3116 = vperm.xlu0 %3115, %v98
    %v3117 = vpop.permute.xlu0 %3116
    %3119 = vset.pattern.permute.xlu0 5
    %3120 = vperm.xlu0 %3119, %v99
    %v3121 = vpop.permute.xlu0 %3120
    %3123 = vset.pattern.permute.xlu0 5
    %3124 = vperm.xlu0 %3123, %v100
    %v3125 = vpop.permute.xlu0 %3124
    %3127 = vset.pattern.permute.xlu0 5
    %3128 = vperm.xlu0 %3127, %v101
    %v3129 = vpop.permute.xlu0 %3128
    %3131 = vset.pattern.permute.xlu0 5
    %3132 = vperm.xlu0 %3131, %v102
    %v3133 = vpop.permute.xlu0 %3132
    %3135 = vset.pattern.permute.xlu0 5
    %3136 = vperm.xlu0 %3135, %v103
    %v3137 = vpop.permute.xlu0 %3136
    %3139 = vset.pattern.permute.xlu0 5
    %3140 = vperm.xlu0 %3139, %v104
    %v3141 = vpop.permute.xlu0 %3140
    %3143 = vset.pattern.permute.xlu0 5
    %3144 = vperm.xlu0 %3143, %v105
    %v3145 = vpop.permute.xlu0 %3144
    %3147 = vset.pattern.permute.xlu0 5
    %3148 = vperm.xlu0 %3147, %v106
    %v3149 = vpop.permute.xlu0 %3148
    %3151 = vset.pattern.permute.xlu0 5
    %3152 = vperm.xlu0 %3151, %v107
    %v3153 = vpop.permute.xlu0 %3152
    %3155 = vset.pattern.permute.xlu0 5
    %3156 = vperm.xlu0 %3155, %v108
    %v3157 = vpop.permute.xlu0 %3156
    %3159 = vset.pattern.permute.xlu0 5
    %3160 = vperm.xlu0 %3159, %v109
    %v3161 = vpop.permute.xlu0 %3160
    %3163 = vset.pattern.permute.xlu0 5
    %3164 = vperm.xlu0 %3163, %v110
    %v3165 = vpop.permute.xlu0 %3164
    %3167 = vset.pattern.permute.xlu0 5
    %3168 = vperm.xlu0 %3167, %v111
    %v3169 = vpop.permute.xlu0 %3168
    %3171 = vset.pattern.permute.xlu0 5
    %3172 = vperm.xlu0 %3171, %v112
    %v3173 = vpop.permute.xlu0 %3172
    %3175 = vset.pattern.permute.xlu0 5
    %3176 = vperm.xlu0 %3175, %v113
    %v3177 = vpop.permute.xlu0 %3176
    %3179 = vset.pattern.permute.xlu0 5
    %3180 = vperm.xlu0 %3179, %v114
    %v3181 = vpop.permute.xlu0 %3180
    %3183 = vset.pattern.permute.xlu0 5
    %3184 = vperm.xlu0 %3183, %v115
    %v3185 = vpop.permute.xlu0 %3184
    %3187 = vset.pattern.permute.xlu0 5
    %3188 = vperm.xlu0 %3187, %v116
    %v3189 = vpop.permute.xlu0 %3188
    %3191 = vset.pattern.permute.xlu0 5
    %3192 = vperm.xlu0 %3191, %v117
    %v3193 = vpop.permute.xlu0 %3192
    %3195 = vset.pattern.permute.xlu0 5
    %3196 = vperm.xlu0 %3195, %v118
    %v3197 = vpop.permute.xlu0 %3196
    %3199 = vset.pattern.permute.xlu0 5
    %3200 = vperm.xlu0 %3199, %v119
    %v3201 = vpop.permute.xlu0 %3200
    %3203 = vset.pattern.permute.xlu0 5
    %3204 = vperm.xlu0 %3203, %v120
    %v3205 = vpop.permute.xlu0 %3204
    %3207 = vset.pattern.permute.xlu0 5
    %3208 = vperm.xlu0 %3207, %v121
    %v3209 = vpop.permute.xlu0 %3208
    %3211 = vset.pattern.permute.xlu0 5
    %3212 = vperm.xlu0 %3211, %v122
    %v3213 = vpop.permute.xlu0 %3212
    %3215 = vset.pattern.permute.xlu0 5
    %3216 = vperm.xlu0 %3215, %v123
    %v3217 = vpop.permute.xlu0 %3216
    %3219 = vset.pattern.permute.xlu0 5
    %3220 = vperm.xlu0 %3219, %v124
    %v3221 = vpop.permute.xlu0 %3220
    %3223 = vset.pattern.permute.xlu0 5
    %3224 = vperm.xlu0 %3223, %v125
    %v3225 = vpop.permute.xlu0 %3224
    %3227 = vset.pattern.permute.xlu0 5
    %3228 = vperm.xlu0 %3227, %v126
    %v3229 = vpop.permute.xlu0 %3228
    %3231 = vset.pattern.permute.xlu0 5
    %3232 = vperm.xlu0 %3231, %v127
    %v3233 = vpop.permute.xlu0 %3232
    %3235 = vset.pattern.permute.xlu0 5
    %3236 = vperm.xlu0 %3235, %v128
    %v3237 = vpop.permute.xlu0 %3236
    %3239 = vset.pattern.permute.xlu0 5
    %3240 = vperm.xlu0 %3239, %v129
    %v3241 = vpop.permute.xlu0 %3240
    %3243 = vset.pattern.permute.xlu0 5
    %3244 = vperm.xlu0 %3243, %v130
    %v3245 = vpop.permute.xlu0 %3244
    %3247 = vset.pattern.permute.xlu0 5
    %3248 = vperm.xlu0 %3247, %v131
    %v3249 = vpop.permute.xlu0 %3248
    %3251 = vset.pattern.permute.xlu0 5
    %3252 = vperm.xlu0 %3251, %v132
    %v3253 = vpop.permute.xlu0 %3252
    %3255 = vset.pattern.permute.xlu0 5
    %3256 = vperm.xlu0 %3255, %v133
    %v3257 = vpop.permute.xlu0 %3256
    %3259 = vset.pattern.permute.xlu0 5
    %3260 = vperm.xlu0 %3259, %v134
    %v3261 = vpop.permute.xlu0 %3260
    %3263 = vset.pattern.permute.xlu0 5
    %3264 = vperm.xlu0 %3263, %v135
    %v3265 = vpop.permute.xlu0 %3264
    %3267 = vset.pattern.permute.xlu0 5
    %3268 = vperm.xlu0 %3267, %v136
    %v3269 = vpop.permute.xlu0 %3268
    %3271 = vset.pattern.permute.xlu0 5
    %3272 = vperm.xlu0 %3271, %v137
    %v3273 = vpop.permute.xlu0 %3272
    %3275 = vset.pattern.permute.xlu0 5
    %3276 = vperm.xlu0 %3275, %v138
    %v3277 = vpop.permute.xlu0 %3276
    %3279 = vset.pattern.permute.xlu0 5
    %3280 = vperm.xlu0 %3279, %v139
    %v3281 = vpop.permute.xlu0 %3280
    %3283 = vset.pattern.permute.xlu0 5
    %3284 = vperm.xlu0 %3283, %v140
    %v3285 = vpop.permute.xlu0 %3284
    %3287 = vset.pattern.permute.xlu0 5
    %3288 = vperm.xlu0 %3287, %v141
    %v3289 = vpop.permute.xlu0 %3288
    %3291 = vset.pattern.permute.xlu0 5
    %3292 = vperm.xlu0 %3291, %v142
    %v3293 = vpop.permute.xlu0 %3292
    %3295 = vset.pattern.permute.xlu0 5
    %3296 = vperm.xlu0 %3295, %v143
    %v3297 = vpop.permute.xlu0 %3296
    %3299 = vset.pattern.permute.xlu0 5
    %3300 = vperm.xlu0 %3299, %v144
    %v3301 = vpop.permute.xlu0 %3300
    %3303 = vset.pattern.permute.xlu0 5
    %3304 = vperm.xlu0 %3303, %v145
    %v3305 = vpop.permute.xlu0 %3304
    %3307 = vset.pattern.permute.xlu0 5
    %3308 = vperm.xlu0 %3307, %v146
    %v3309 = vpop.permute.xlu0 %3308
    %3311 = vset.pattern.permute.xlu0 5
    %3312 = vperm.xlu0 %3311, %v147
    %v3313 = vpop.permute.xlu0 %3312
    %3315 = vset.pattern.permute.xlu0 5
    %3316 = vperm.xlu0 %3315, %v148
    %v3317 = vpop.permute.xlu0 %3316
    %3319 = vset.pattern.permute.xlu0 5
    %3320 = vperm.xlu0 %3319, %v149
    %v3321 = vpop.permute.xlu0 %3320
    %3323 = vset.pattern.permute.xlu0 5
    %3324 = vperm.xlu0 %3323, %v150
    %v3325 = vpop.permute.xlu0 %3324
    %3327 = vset.pattern.permute.xlu0 5
    %3328 = vperm.xlu0 %3327, %v151
    %v3329 = vpop.permute.xlu0 %3328
    %3331 = vset.pattern.permute.xlu0 5
    %3332 = vperm.xlu0 %3331, %v152
    %v3333 = vpop.permute.xlu0 %3332
    %3335 = vset.pattern.permute.xlu0 5
    %3336 = vperm.xlu0 %3335, %v153
    %v3337 = vpop.permute.xlu0 %3336
    %3339 = vset.pattern.permute.xlu0 5
    %3340 = vperm.xlu0 %3339, %v154
    %v3341 = vpop.permute.xlu0 %3340
    %3343 = vset.pattern.permute.xlu0 5
    %3344 = vperm.xlu0 %3343, %v155
    %v3345 = vpop.permute.xlu0 %3344
    %3347 = vset.pattern.permute.xlu0 5
    %3348 = vperm.xlu0 %3347, %v156
    %v3349 = vpop.permute.xlu0 %3348
    %3351 = vset.pattern.permute.xlu0 5
    %3352 = vperm.xlu0 %3351, %v157
    %v3353 = vpop.permute.xlu0 %3352
    %3355 = vset.pattern.permute.xlu0 5
    %3356 = vperm.xlu0 %3355, %v158
    %v3357 = vpop.permute.xlu0 %3356
    %3359 = vset.pattern.permute.xlu0 5
    %3360 = vperm.xlu0 %3359, %v159
    %v3361 = vpop.permute.xlu0 %3360
    %3363 = vset.pattern.permute.xlu0 5
    %3364 = vperm.xlu0 %3363, %v160
    %v3365 = vpop.permute.xlu0 %3364
    %3367 = vset.pattern.permute.xlu0 5
    %3368 = vperm.xlu0 %3367, %v161
    %v3369 = vpop.permute.xlu0 %3368
    %v3371 = vmul.f32 %v1510, %v3117
    %v3372 = vmul.f32 %v1509, %v3121
    %v3373 = vmul.f32 %v1508, %v3125
    %v3374 = vmul.f32 %v1507, %v3129
    %v3375 = vmul.f32 %v1506, %v3133
    %v3376 = vmul.f32 %v1505, %v3137
    %v3377 = vmul.f32 %v1504, %v3141
    %v3378 = vmul.f32 %v1503, %v3145
    %v3379 = vmul.f32 %v1502, %v3149
    %v3380 = vmul.f32 %v1501, %v3153
    %v3381 = vmul.f32 %v1500, %v3157
    %v3382 = vmul.f32 %v1499, %v3161
    %v3383 = vmul.f32 %v1498, %v3165
    %v3384 = vmul.f32 %v1497, %v3169
    %v3385 = vmul.f32 %v1496, %v3173
    %v3386 = vmul.f32 %v1495, %v3177
    %v3387 = vmul.f32 %v1494, %v3181
    %v3388 = vmul.f32 %v1493, %v3185
    %v3389 = vmul.f32 %v1492, %v3189
    %v3390 = vmul.f32 %v1491, %v3193
    %v3391 = vmul.f32 %v1490, %v3197
    %v3392 = vmul.f32 %v1489, %v3201
    %v3393 = vmul.f32 %v1488, %v3205
    %v3394 = vmul.f32 %v1487, %v3209
    %v3395 = vmul.f32 %v1486, %v3213
    %v3396 = vmul.f32 %v1485, %v3217
    %v3397 = vmul.f32 %v1484, %v3221
    %v3398 = vmul.f32 %v1483, %v3225
    %v3399 = vmul.f32 %v1482, %v3229
    %v3400 = vmul.f32 %v1481, %v3233
    %v3401 = vmul.f32 %v1480, %v3237
    %v3402 = vmul.f32 %v1479, %v3241
    %v3403 = vmul.f32 %v1478, %v3245
    %v3404 = vmul.f32 %v1477, %v3249
    %v3405 = vmul.f32 %v1476, %v3253
    %v3406 = vmul.f32 %v1475, %v3257
    %v3407 = vmul.f32 %v1474, %v3261
    %v3408 = vmul.f32 %v1473, %v3265
    %v3409 = vmul.f32 %v1472, %v3269
    %v3410 = vmul.f32 %v1471, %v3273
    %v3411 = vmul.f32 %v1470, %v3277
    %v3412 = vmul.f32 %v1469, %v3281
    %v3413 = vmul.f32 %v1468, %v3285
    %v3414 = vmul.f32 %v1467, %v3289
    %v3415 = vmul.f32 %v1466, %v3293
    %v3416 = vmul.f32 %v1465, %v3297
    %v3417 = vmul.f32 %v1464, %v3301
    %v3418 = vmul.f32 %v1463, %v3305
    %v3419 = vmul.f32 %v1462, %v3309
    %v3420 = vmul.f32 %v1461, %v3313
    %v3421 = vmul.f32 %v1460, %v3317
    %v3422 = vmul.f32 %v1459, %v3321
    %v3423 = vmul.f32 %v1458, %v3325
    %v3424 = vmul.f32 %v1457, %v3329
    %v3425 = vmul.f32 %v1456, %v3333
    %v3426 = vmul.f32 %v1455, %v3337
    %v3427 = vmul.f32 %v1454, %v3341
    %v3428 = vmul.f32 %v1453, %v3345
    %v3429 = vmul.f32 %v1452, %v3349
    %v3430 = vmul.f32 %v1451, %v3353
    %v3431 = vmul.f32 %v1450, %v3357
    %v3432 = vmul.f32 %v1449, %v3361
    %v3433 = vmul.f32 %v1448, %v3365
    %v3434 = vmul.f32 %v1511, %v3369
    %3499 = vrot.lane.b32.xlu0 %v3371, 15
    %v3500 = vpop.permute.xlu0 %3499
    %3501 = vrot.lane.b32.xlu0 %v3372, 15
    %v3502 = vpop.permute.xlu0 %3501
    %3503 = vrot.lane.b32.xlu0 %v3373, 15
    %v3504 = vpop.permute.xlu0 %3503
    %3505 = vrot.lane.b32.xlu0 %v3374, 15
    %v3506 = vpop.permute.xlu0 %3505
    %3507 = vrot.lane.b32.xlu0 %v3375, 15
    %v3508 = vpop.permute.xlu0 %3507
    %3509 = vrot.lane.b32.xlu0 %v3376, 15
    %v3510 = vpop.permute.xlu0 %3509
    %3511 = vrot.lane.b32.xlu0 %v3377, 15
    %v3512 = vpop.permute.xlu0 %3511
    %3513 = vrot.lane.b32.xlu0 %v3378, 15
    %v3514 = vpop.permute.xlu0 %3513
    %3515 = vrot.lane.b32.xlu0 %v3379, 15
    %v3516 = vpop.permute.xlu0 %3515
    %3517 = vrot.lane.b32.xlu0 %v3380, 15
    %v3518 = vpop.permute.xlu0 %3517
    %3519 = vrot.lane.b32.xlu0 %v3381, 15
    %v3520 = vpop.permute.xlu0 %3519
    %3521 = vrot.lane.b32.xlu0 %v3382, 15
    %v3522 = vpop.permute.xlu0 %3521
    %3523 = vrot.lane.b32.xlu0 %v3383, 15
    %v3524 = vpop.permute.xlu0 %3523
    %3525 = vrot.lane.b32.xlu0 %v3384, 15
    %v3526 = vpop.permute.xlu0 %3525
    %3527 = vrot.lane.b32.xlu0 %v3385, 15
    %v3528 = vpop.permute.xlu0 %3527
    %3529 = vrot.lane.b32.xlu0 %v3386, 15
    %v3530 = vpop.permute.xlu0 %3529
    %3531 = vrot.lane.b32.xlu0 %v3387, 15
    %v3532 = vpop.permute.xlu0 %3531
    %3533 = vrot.lane.b32.xlu0 %v3388, 15
    %v3534 = vpop.permute.xlu0 %3533
    %3535 = vrot.lane.b32.xlu0 %v3389, 15
    %v3536 = vpop.permute.xlu0 %3535
    %3537 = vrot.lane.b32.xlu0 %v3390, 15
    %v3538 = vpop.permute.xlu0 %3537
    %3539 = vrot.lane.b32.xlu0 %v3391, 15
    %v3540 = vpop.permute.xlu0 %3539
    %3541 = vrot.lane.b32.xlu0 %v3392, 15
    %v3542 = vpop.permute.xlu0 %3541
    %3543 = vrot.lane.b32.xlu0 %v3393, 15
    %v3544 = vpop.permute.xlu0 %3543
    %3545 = vrot.lane.b32.xlu0 %v3394, 15
    %v3546 = vpop.permute.xlu0 %3545
    %3547 = vrot.lane.b32.xlu0 %v3395, 15
    %v3548 = vpop.permute.xlu0 %3547
    %3549 = vrot.lane.b32.xlu0 %v3396, 15
    %v3550 = vpop.permute.xlu0 %3549
    %3551 = vrot.lane.b32.xlu0 %v3397, 15
    %v3552 = vpop.permute.xlu0 %3551
    %3553 = vrot.lane.b32.xlu0 %v3398, 15
    %v3554 = vpop.permute.xlu0 %3553
    %3555 = vrot.lane.b32.xlu0 %v3399, 15
    %v3556 = vpop.permute.xlu0 %3555
    %3557 = vrot.lane.b32.xlu0 %v3400, 15
    %v3558 = vpop.permute.xlu0 %3557
    %3559 = vrot.lane.b32.xlu0 %v3401, 15
    %v3560 = vpop.permute.xlu0 %3559
    %3561 = vrot.lane.b32.xlu0 %v3402, 15
    %v3562 = vpop.permute.xlu0 %3561
    %3563 = vrot.lane.b32.xlu0 %v3403, 15
    %v3564 = vpop.permute.xlu0 %3563
    %3565 = vrot.lane.b32.xlu0 %v3404, 15
    %v3566 = vpop.permute.xlu0 %3565
    %3567 = vrot.lane.b32.xlu0 %v3405, 15
    %v3568 = vpop.permute.xlu0 %3567
    %3569 = vrot.lane.b32.xlu0 %v3406, 15
    %v3570 = vpop.permute.xlu0 %3569
    %3571 = vrot.lane.b32.xlu0 %v3407, 15
    %v3572 = vpop.permute.xlu0 %3571
    %3573 = vrot.lane.b32.xlu0 %v3408, 15
    %v3574 = vpop.permute.xlu0 %3573
    %3575 = vrot.lane.b32.xlu0 %v3409, 15
    %v3576 = vpop.permute.xlu0 %3575
    %3577 = vrot.lane.b32.xlu0 %v3410, 15
    %v3578 = vpop.permute.xlu0 %3577
    %3579 = vrot.lane.b32.xlu0 %v3411, 15
    %v3580 = vpop.permute.xlu0 %3579
    %3581 = vrot.lane.b32.xlu0 %v3412, 15
    %v3582 = vpop.permute.xlu0 %3581
    %3583 = vrot.lane.b32.xlu0 %v3413, 15
    %v3584 = vpop.permute.xlu0 %3583
    %3585 = vrot.lane.b32.xlu0 %v3414, 15
    %v3586 = vpop.permute.xlu0 %3585
    %3587 = vrot.lane.b32.xlu0 %v3415, 15
    %v3588 = vpop.permute.xlu0 %3587
    %3589 = vrot.lane.b32.xlu0 %v3416, 15
    %v3590 = vpop.permute.xlu0 %3589
    %3591 = vrot.lane.b32.xlu0 %v3417, 15
    %v3592 = vpop.permute.xlu0 %3591
    %3593 = vrot.lane.b32.xlu0 %v3418, 15
    %v3594 = vpop.permute.xlu0 %3593
    %3595 = vrot.lane.b32.xlu0 %v3419, 15
    %v3596 = vpop.permute.xlu0 %3595
    %3597 = vrot.lane.b32.xlu0 %v3420, 15
    %v3598 = vpop.permute.xlu0 %3597
    %3599 = vrot.lane.b32.xlu0 %v3421, 15
    %v3600 = vpop.permute.xlu0 %3599
    %3601 = vrot.lane.b32.xlu0 %v3422, 15
    %v3602 = vpop.permute.xlu0 %3601
    %3603 = vrot.lane.b32.xlu0 %v3423, 15
    %v3604 = vpop.permute.xlu0 %3603
    %3605 = vrot.lane.b32.xlu0 %v3424, 15
    %v3606 = vpop.permute.xlu0 %3605
    %3607 = vrot.lane.b32.xlu0 %v3425, 15
    %v3608 = vpop.permute.xlu0 %3607
    %3609 = vrot.lane.b32.xlu0 %v3426, 15
    %v3610 = vpop.permute.xlu0 %3609
    %3611 = vrot.lane.b32.xlu0 %v3427, 15
    %v3612 = vpop.permute.xlu0 %3611
    %3613 = vrot.lane.b32.xlu0 %v3428, 15
    %v3614 = vpop.permute.xlu0 %3613
    %3615 = vrot.lane.b32.xlu0 %v3429, 15
    %v3616 = vpop.permute.xlu0 %3615
    %3617 = vrot.lane.b32.xlu0 %v3430, 15
    %v3618 = vpop.permute.xlu0 %3617
    %3619 = vrot.lane.b32.xlu0 %v3431, 15
    %v3620 = vpop.permute.xlu0 %3619
    %3621 = vrot.lane.b32.xlu0 %v3432, 15
    %v3622 = vpop.permute.xlu0 %3621
    %3623 = vrot.lane.b32.xlu0 %v3433, 15
    %v3624 = vpop.permute.xlu0 %3623
    %3625 = vrot.lane.b32.xlu0 %v3434, 15
    %v3626 = vpop.permute.xlu0 %3625
    %vm3691 = vcmask 146552
    %3692 = vst.msk [vmem:[#allocation2] sm:$0xff] %vm3691, %v3500
    %3693 = vst.msk [vmem:[#allocation2 + $0x8] sm:$0xff] %vm3691, %v3502
    %3694 = vst.msk [vmem:[#allocation2 + $0x10] sm:$0xff] %vm3691, %v3504
    %3695 = vst.msk [vmem:[#allocation2 + $0x18] sm:$0xff] %vm3691, %v3506
    %3696 = vst.msk [vmem:[#allocation2 + $0x20] sm:$0xff] %vm3691, %v3508
    %3697 = vst.msk [vmem:[#allocation2 + $0x28] sm:$0xff] %vm3691, %v3510
    %3698 = vst.msk [vmem:[#allocation2 + $0x30] sm:$0xff] %vm3691, %v3512
    %3699 = vst.msk [vmem:[#allocation2 + $0x38] sm:$0xff] %vm3691, %v3514
    %3700 = vst.msk [vmem:[#allocation2 + $0x40] sm:$0xff] %vm3691, %v3516
    %3701 = vst.msk [vmem:[#allocation2 + $0x48] sm:$0xff] %vm3691, %v3518
    %3702 = vst.msk [vmem:[#allocation2 + $0x50] sm:$0xff] %vm3691, %v3520
    %3703 = vst.msk [vmem:[#allocation2 + $0x58] sm:$0xff] %vm3691, %v3522
    %3704 = vst.msk [vmem:[#allocation2 + $0x60] sm:$0xff] %vm3691, %v3524
    %3705 = vst.msk [vmem:[#allocation2 + $0x68] sm:$0xff] %vm3691, %v3526
    %3706 = vst.msk [vmem:[#allocation2 + $0x70] sm:$0xff] %vm3691, %v3528
    %3707 = vst.msk [vmem:[#allocation2 + $0x78] sm:$0xff] %vm3691, %v3530
    %3708 = vst.msk [vmem:[#allocation2 + $0x80] sm:$0xff] %vm3691, %v3532
    %3709 = vst.msk [vmem:[#allocation2 + $0x88] sm:$0xff] %vm3691, %v3534
    %3710 = vst.msk [vmem:[#allocation2 + $0x90] sm:$0xff] %vm3691, %v3536
    %3711 = vst.msk [vmem:[#allocation2 + $0x98] sm:$0xff] %vm3691, %v3538
    %3712 = vst.msk [vmem:[#allocation2 + $0xa0] sm:$0xff] %vm3691, %v3540
    %3713 = vst.msk [vmem:[#allocation2 + $0xa8] sm:$0xff] %vm3691, %v3542
    %3714 = vst.msk [vmem:[#allocation2 + $0xb0] sm:$0xff] %vm3691, %v3544
    %3715 = vst.msk [vmem:[#allocation2 + $0xb8] sm:$0xff] %vm3691, %v3546
    %3716 = vst.msk [vmem:[#allocation2 + $0xc0] sm:$0xff] %vm3691, %v3548
    %3717 = vst.msk [vmem:[#allocation2 + $0xc8] sm:$0xff] %vm3691, %v3550
    %3718 = vst.msk [vmem:[#allocation2 + $0xd0] sm:$0xff] %vm3691, %v3552
    %3719 = vst.msk [vmem:[#allocation2 + $0xd8] sm:$0xff] %vm3691, %v3554
    %3720 = vst.msk [vmem:[#allocation2 + $0xe0] sm:$0xff] %vm3691, %v3556
    %3721 = vst.msk [vmem:[#allocation2 + $0xe8] sm:$0xff] %vm3691, %v3558
    %3722 = vst.msk [vmem:[#allocation2 + $0xf0] sm:$0xff] %vm3691, %v3560
    %3723 = vst.msk [vmem:[#allocation2 + $0xf8] sm:$0xff] %vm3691, %v3562
    %3724 = vst.msk [vmem:[#allocation2 + $0x100] sm:$0xff] %vm3691, %v3564
    %3725 = vst.msk [vmem:[#allocation2 + $0x108] sm:$0xff] %vm3691, %v3566
    %3726 = vst.msk [vmem:[#allocation2 + $0x110] sm:$0xff] %vm3691, %v3568
    %3727 = vst.msk [vmem:[#allocation2 + $0x118] sm:$0xff] %vm3691, %v3570
    %3728 = vst.msk [vmem:[#allocation2 + $0x120] sm:$0xff] %vm3691, %v3572
    %3729 = vst.msk [vmem:[#allocation2 + $0x128] sm:$0xff] %vm3691, %v3574
    %3730 = vst.msk [vmem:[#allocation2 + $0x130] sm:$0xff] %vm3691, %v3576
    %3731 = vst.msk [vmem:[#allocation2 + $0x138] sm:$0xff] %vm3691, %v3578
    %3732 = vst.msk [vmem:[#allocation2 + $0x140] sm:$0xff] %vm3691, %v3580
    %3733 = vst.msk [vmem:[#allocation2 + $0x148] sm:$0xff] %vm3691, %v3582
    %3734 = vst.msk [vmem:[#allocation2 + $0x150] sm:$0xff] %vm3691, %v3584
    %3735 = vst.msk [vmem:[#allocation2 + $0x158] sm:$0xff] %vm3691, %v3586
    %3736 = vst.msk [vmem:[#allocation2 + $0x160] sm:$0xff] %vm3691, %v3588
    %3737 = vst.msk [vmem:[#allocation2 + $0x168] sm:$0xff] %vm3691, %v3590
    %3738 = vst.msk [vmem:[#allocation2 + $0x170] sm:$0xff] %vm3691, %v3592
    %3739 = vst.msk [vmem:[#allocation2 + $0x178] sm:$0xff] %vm3691, %v3594
    %3740 = vst.msk [vmem:[#allocation2 + $0x180] sm:$0xff] %vm3691, %v3596
    %3741 = vst.msk [vmem:[#allocation2 + $0x188] sm:$0xff] %vm3691, %v3598
    %3742 = vst.msk [vmem:[#allocation2 + $0x190] sm:$0xff] %vm3691, %v3600
    %3743 = vst.msk [vmem:[#allocation2 + $0x198] sm:$0xff] %vm3691, %v3602
    %3744 = vst.msk [vmem:[#allocation2 + $0x1a0] sm:$0xff] %vm3691, %v3604
    %3745 = vst.msk [vmem:[#allocation2 + $0x1a8] sm:$0xff] %vm3691, %v3606
    %3746 = vst.msk [vmem:[#allocation2 + $0x1b0] sm:$0xff] %vm3691, %v3608
    %3747 = vst.msk [vmem:[#allocation2 + $0x1b8] sm:$0xff] %vm3691, %v3610
    %3748 = vst.msk [vmem:[#allocation2 + $0x1c0] sm:$0xff] %vm3691, %v3612
    %3749 = vst.msk [vmem:[#allocation2 + $0x1c8] sm:$0xff] %vm3691, %v3614
    %3750 = vst.msk [vmem:[#allocation2 + $0x1d0] sm:$0xff] %vm3691, %v3616
    %3751 = vst.msk [vmem:[#allocation2 + $0x1d8] sm:$0xff] %vm3691, %v3618
    %3752 = vst.msk [vmem:[#allocation2 + $0x1e0] sm:$0xff] %vm3691, %v3620
    %3753 = vst.msk [vmem:[#allocation2 + $0x1e8] sm:$0xff] %vm3691, %v3622
    %3754 = vst.msk [vmem:[#allocation2 + $0x1f0] sm:$0xff] %vm3691, %v3624
    %3755 = vst.msk [vmem:[#allocation2 + $0x1f8] sm:$0xff] %vm3691, %v3626
    %3756 = vset.pattern.permute.xlu0 6
    %3757 = vperm.xlu0 %3756, %v98
    %v3758 = vpop.permute.xlu0 %3757
    %3760 = vset.pattern.permute.xlu0 6
    %3761 = vperm.xlu0 %3760, %v99
    %v3762 = vpop.permute.xlu0 %3761
    %3764 = vset.pattern.permute.xlu0 6
    %3765 = vperm.xlu0 %3764, %v100
    %v3766 = vpop.permute.xlu0 %3765
    %3768 = vset.pattern.permute.xlu0 6
    %3769 = vperm.xlu0 %3768, %v101
    %v3770 = vpop.permute.xlu0 %3769
    %3772 = vset.pattern.permute.xlu0 6
    %3773 = vperm.xlu0 %3772, %v102
    %v3774 = vpop.permute.xlu0 %3773
    %3776 = vset.pattern.permute.xlu0 6
    %3777 = vperm.xlu0 %3776, %v103
    %v3778 = vpop.permute.xlu0 %3777
    %3780 = vset.pattern.permute.xlu0 6
    %3781 = vperm.xlu0 %3780, %v104
    %v3782 = vpop.permute.xlu0 %3781
    %3784 = vset.pattern.permute.xlu0 6
    %3785 = vperm.xlu0 %3784, %v105
    %v3786 = vpop.permute.xlu0 %3785
    %3788 = vset.pattern.permute.xlu0 6
    %3789 = vperm.xlu0 %3788, %v106
    %v3790 = vpop.permute.xlu0 %3789
    %3792 = vset.pattern.permute.xlu0 6
    %3793 = vperm.xlu0 %3792, %v107
    %v3794 = vpop.permute.xlu0 %3793
    %3796 = vset.pattern.permute.xlu0 6
    %3797 = vperm.xlu0 %3796, %v108
    %v3798 = vpop.permute.xlu0 %3797
    %3800 = vset.pattern.permute.xlu0 6
    %3801 = vperm.xlu0 %3800, %v109
    %v3802 = vpop.permute.xlu0 %3801
    %3804 = vset.pattern.permute.xlu0 6
    %3805 = vperm.xlu0 %3804, %v110
    %v3806 = vpop.permute.xlu0 %3805
    %3808 = vset.pattern.permute.xlu0 6
    %3809 = vperm.xlu0 %3808, %v111
    %v3810 = vpop.permute.xlu0 %3809
    %3812 = vset.pattern.permute.xlu0 6
    %3813 = vperm.xlu0 %3812, %v112
    %v3814 = vpop.permute.xlu0 %3813
    %3816 = vset.pattern.permute.xlu0 6
    %3817 = vperm.xlu0 %3816, %v113
    %v3818 = vpop.permute.xlu0 %3817
    %3820 = vset.pattern.permute.xlu0 6
    %3821 = vperm.xlu0 %3820, %v114
    %v3822 = vpop.permute.xlu0 %3821
    %3824 = vset.pattern.permute.xlu0 6
    %3825 = vperm.xlu0 %3824, %v115
    %v3826 = vpop.permute.xlu0 %3825
    %3828 = vset.pattern.permute.xlu0 6
    %3829 = vperm.xlu0 %3828, %v116
    %v3830 = vpop.permute.xlu0 %3829
    %3832 = vset.pattern.permute.xlu0 6
    %3833 = vperm.xlu0 %3832, %v117
    %v3834 = vpop.permute.xlu0 %3833
    %3836 = vset.pattern.permute.xlu0 6
    %3837 = vperm.xlu0 %3836, %v118
    %v3838 = vpop.permute.xlu0 %3837
    %3840 = vset.pattern.permute.xlu0 6
    %3841 = vperm.xlu0 %3840, %v119
    %v3842 = vpop.permute.xlu0 %3841
    %3844 = vset.pattern.permute.xlu0 6
    %3845 = vperm.xlu0 %3844, %v120
    %v3846 = vpop.permute.xlu0 %3845
    %3848 = vset.pattern.permute.xlu0 6
    %3849 = vperm.xlu0 %3848, %v121
    %v3850 = vpop.permute.xlu0 %3849
    %3852 = vset.pattern.permute.xlu0 6
    %3853 = vperm.xlu0 %3852, %v122
    %v3854 = vpop.permute.xlu0 %3853
    %3856 = vset.pattern.permute.xlu0 6
    %3857 = vperm.xlu0 %3856, %v123
    %v3858 = vpop.permute.xlu0 %3857
    %3860 = vset.pattern.permute.xlu0 6
    %3861 = vperm.xlu0 %3860, %v124
    %v3862 = vpop.permute.xlu0 %3861
    %3864 = vset.pattern.permute.xlu0 6
    %3865 = vperm.xlu0 %3864, %v125
    %v3866 = vpop.permute.xlu0 %3865
    %3868 = vset.pattern.permute.xlu0 6
    %3869 = vperm.xlu0 %3868, %v126
    %v3870 = vpop.permute.xlu0 %3869
    %3872 = vset.pattern.permute.xlu0 6
    %3873 = vperm.xlu0 %3872, %v127
    %v3874 = vpop.permute.xlu0 %3873
    %3876 = vset.pattern.permute.xlu0 6
    %3877 = vperm.xlu0 %3876, %v128
    %v3878 = vpop.permute.xlu0 %3877
    %3880 = vset.pattern.permute.xlu0 6
    %3881 = vperm.xlu0 %3880, %v129
    %v3882 = vpop.permute.xlu0 %3881
    %3884 = vset.pattern.permute.xlu0 6
    %3885 = vperm.xlu0 %3884, %v130
    %v3886 = vpop.permute.xlu0 %3885
    %3888 = vset.pattern.permute.xlu0 6
    %3889 = vperm.xlu0 %3888, %v131
    %v3890 = vpop.permute.xlu0 %3889
    %3892 = vset.pattern.permute.xlu0 6
    %3893 = vperm.xlu0 %3892, %v132
    %v3894 = vpop.permute.xlu0 %3893
    %3896 = vset.pattern.permute.xlu0 6
    %3897 = vperm.xlu0 %3896, %v133
    %v3898 = vpop.permute.xlu0 %3897
    %3900 = vset.pattern.permute.xlu0 6
    %3901 = vperm.xlu0 %3900, %v134
    %v3902 = vpop.permute.xlu0 %3901
    %3904 = vset.pattern.permute.xlu0 6
    %3905 = vperm.xlu0 %3904, %v135
    %v3906 = vpop.permute.xlu0 %3905
    %3908 = vset.pattern.permute.xlu0 6
    %3909 = vperm.xlu0 %3908, %v136
    %v3910 = vpop.permute.xlu0 %3909
    %3912 = vset.pattern.permute.xlu0 6
    %3913 = vperm.xlu0 %3912, %v137
    %v3914 = vpop.permute.xlu0 %3913
    %3916 = vset.pattern.permute.xlu0 6
    %3917 = vperm.xlu0 %3916, %v138
    %v3918 = vpop.permute.xlu0 %3917
    %3920 = vset.pattern.permute.xlu0 6
    %3921 = vperm.xlu0 %3920, %v139
    %v3922 = vpop.permute.xlu0 %3921
    %3924 = vset.pattern.permute.xlu0 6
    %3925 = vperm.xlu0 %3924, %v140
    %v3926 = vpop.permute.xlu0 %3925
    %3928 = vset.pattern.permute.xlu0 6
    %3929 = vperm.xlu0 %3928, %v141
    %v3930 = vpop.permute.xlu0 %3929
    %3932 = vset.pattern.permute.xlu0 6
    %3933 = vperm.xlu0 %3932, %v142
    %v3934 = vpop.permute.xlu0 %3933
    %3936 = vset.pattern.permute.xlu0 6
    %3937 = vperm.xlu0 %3936, %v143
    %v3938 = vpop.permute.xlu0 %3937
    %3940 = vset.pattern.permute.xlu0 6
    %3941 = vperm.xlu0 %3940, %v144
    %v3942 = vpop.permute.xlu0 %3941
    %3944 = vset.pattern.permute.xlu0 6
    %3945 = vperm.xlu0 %3944, %v145
    %v3946 = vpop.permute.xlu0 %3945
    %3948 = vset.pattern.permute.xlu0 6
    %3949 = vperm.xlu0 %3948, %v146
    %v3950 = vpop.permute.xlu0 %3949
    %3952 = vset.pattern.permute.xlu0 6
    %3953 = vperm.xlu0 %3952, %v147
    %v3954 = vpop.permute.xlu0 %3953
    %3956 = vset.pattern.permute.xlu0 6
    %3957 = vperm.xlu0 %3956, %v148
    %v3958 = vpop.permute.xlu0 %3957
    %3960 = vset.pattern.permute.xlu0 6
    %3961 = vperm.xlu0 %3960, %v149
    %v3962 = vpop.permute.xlu0 %3961
    %3964 = vset.pattern.permute.xlu0 6
    %3965 = vperm.xlu0 %3964, %v150
    %v3966 = vpop.permute.xlu0 %3965
    %3968 = vset.pattern.permute.xlu0 6
    %3969 = vperm.xlu0 %3968, %v151
    %v3970 = vpop.permute.xlu0 %3969
    %3972 = vset.pattern.permute.xlu0 6
    %3973 = vperm.xlu0 %3972, %v152
    %v3974 = vpop.permute.xlu0 %3973
    %3976 = vset.pattern.permute.xlu0 6
    %3977 = vperm.xlu0 %3976, %v153
    %v3978 = vpop.permute.xlu0 %3977
    %3980 = vset.pattern.permute.xlu0 6
    %3981 = vperm.xlu0 %3980, %v154
    %v3982 = vpop.permute.xlu0 %3981
    %3984 = vset.pattern.permute.xlu0 6
    %3985 = vperm.xlu0 %3984, %v155
    %v3986 = vpop.permute.xlu0 %3985
    %3988 = vset.pattern.permute.xlu0 6
    %3989 = vperm.xlu0 %3988, %v156
    %v3990 = vpop.permute.xlu0 %3989
    %3992 = vset.pattern.permute.xlu0 6
    %3993 = vperm.xlu0 %3992, %v157
    %v3994 = vpop.permute.xlu0 %3993
    %3996 = vset.pattern.permute.xlu0 6
    %3997 = vperm.xlu0 %3996, %v158
    %v3998 = vpop.permute.xlu0 %3997
    %4000 = vset.pattern.permute.xlu0 6
    %4001 = vperm.xlu0 %4000, %v159
    %v4002 = vpop.permute.xlu0 %4001
    %4004 = vset.pattern.permute.xlu0 6
    %4005 = vperm.xlu0 %4004, %v160
    %v4006 = vpop.permute.xlu0 %4005
    %4008 = vset.pattern.permute.xlu0 6
    %4009 = vperm.xlu0 %4008, %v161
    %v4010 = vpop.permute.xlu0 %4009
    %v4012 = vmul.f32 %v290, %v3758
    %v4013 = vmul.f32 %v289, %v3762
    %v4014 = vmul.f32 %v288, %v3766
    %v4015 = vmul.f32 %v287, %v3770
    %v4016 = vmul.f32 %v286, %v3774
    %v4017 = vmul.f32 %v285, %v3778
    %v4018 = vmul.f32 %v284, %v3782
    %v4019 = vmul.f32 %v283, %v3786
    %v4020 = vmul.f32 %v282, %v3790
    %v4021 = vmul.f32 %v281, %v3794
    %v4022 = vmul.f32 %v280, %v3798
    %v4023 = vmul.f32 %v279, %v3802
    %v4024 = vmul.f32 %v278, %v3806
    %v4025 = vmul.f32 %v277, %v3810
    %v4026 = vmul.f32 %v276, %v3814
    %v4027 = vmul.f32 %v275, %v3818
    %v4028 = vmul.f32 %v274, %v3822
    %v4029 = vmul.f32 %v273, %v3826
    %v4030 = vmul.f32 %v272, %v3830
    %v4031 = vmul.f32 %v271, %v3834
    %v4032 = vmul.f32 %v270, %v3838
    %v4033 = vmul.f32 %v269, %v3842
    %v4034 = vmul.f32 %v268, %v3846
    %v4035 = vmul.f32 %v267, %v3850
    %v4036 = vmul.f32 %v266, %v3854
    %v4037 = vmul.f32 %v265, %v3858
    %v4038 = vmul.f32 %v264, %v3862
    %v4039 = vmul.f32 %v263, %v3866
    %v4040 = vmul.f32 %v262, %v3870
    %v4041 = vmul.f32 %v261, %v3874
    %v4042 = vmul.f32 %v260, %v3878
    %v4043 = vmul.f32 %v259, %v3882
    %v4044 = vmul.f32 %v258, %v3886
    %v4045 = vmul.f32 %v257, %v3890
    %v4046 = vmul.f32 %v256, %v3894
    %v4047 = vmul.f32 %v255, %v3898
    %v4048 = vmul.f32 %v254, %v3902
    %v4049 = vmul.f32 %v253, %v3906
    %v4050 = vmul.f32 %v252, %v3910
    %v4051 = vmul.f32 %v251, %v3914
    %v4052 = vmul.f32 %v250, %v3918
    %v4053 = vmul.f32 %v249, %v3922
    %v4054 = vmul.f32 %v248, %v3926
    %v4055 = vmul.f32 %v247, %v3930
    %v4056 = vmul.f32 %v246, %v3934
    %v4057 = vmul.f32 %v245, %v3938
    %v4058 = vmul.f32 %v244, %v3942
    %v4059 = vmul.f32 %v243, %v3946
    %v4060 = vmul.f32 %v242, %v3950
    %v4061 = vmul.f32 %v241, %v3954
    %v4062 = vmul.f32 %v240, %v3958
    %v4063 = vmul.f32 %v239, %v3962
    %v4064 = vmul.f32 %v238, %v3966
    %v4065 = vmul.f32 %v237, %v3970
    %v4066 = vmul.f32 %v236, %v3974
    %v4067 = vmul.f32 %v235, %v3978
    %v4068 = vmul.f32 %v234, %v3982
    %v4069 = vmul.f32 %v233, %v3986
    %v4070 = vmul.f32 %v232, %v3990
    %v4071 = vmul.f32 %v231, %v3994
    %v4072 = vmul.f32 %v230, %v3998
    %v4073 = vmul.f32 %v229, %v4002
    %v4074 = vmul.f32 %v292, %v4006
    %v4075 = vmul.f32 %v291, %v4010
    %4140 = vrot.lane.b32.xlu0 %v4012, 18
    %v4141 = vpop.permute.xlu0 %4140
    %4142 = vrot.lane.b32.xlu0 %v4013, 18
    %v4143 = vpop.permute.xlu0 %4142
    %4144 = vrot.lane.b32.xlu0 %v4014, 18
    %v4145 = vpop.permute.xlu0 %4144
    %4146 = vrot.lane.b32.xlu0 %v4015, 18
    %v4147 = vpop.permute.xlu0 %4146
    %4148 = vrot.lane.b32.xlu0 %v4016, 18
    %v4149 = vpop.permute.xlu0 %4148
    %4150 = vrot.lane.b32.xlu0 %v4017, 18
    %v4151 = vpop.permute.xlu0 %4150
    %4152 = vrot.lane.b32.xlu0 %v4018, 18
    %v4153 = vpop.permute.xlu0 %4152
    %4154 = vrot.lane.b32.xlu0 %v4019, 18
    %v4155 = vpop.permute.xlu0 %4154
    %4156 = vrot.lane.b32.xlu0 %v4020, 18
    %v4157 = vpop.permute.xlu0 %4156
    %4158 = vrot.lane.b32.xlu0 %v4021, 18
    %v4159 = vpop.permute.xlu0 %4158
    %4160 = vrot.lane.b32.xlu0 %v4022, 18
    %v4161 = vpop.permute.xlu0 %4160
    %4162 = vrot.lane.b32.xlu0 %v4023, 18
    %v4163 = vpop.permute.xlu0 %4162
    %4164 = vrot.lane.b32.xlu0 %v4024, 18
    %v4165 = vpop.permute.xlu0 %4164
    %4166 = vrot.lane.b32.xlu0 %v4025, 18
    %v4167 = vpop.permute.xlu0 %4166
    %4168 = vrot.lane.b32.xlu0 %v4026, 18
    %v4169 = vpop.permute.xlu0 %4168
    %4170 = vrot.lane.b32.xlu0 %v4027, 18
    %v4171 = vpop.permute.xlu0 %4170
    %4172 = vrot.lane.b32.xlu0 %v4028, 18
    %v4173 = vpop.permute.xlu0 %4172
    %4174 = vrot.lane.b32.xlu0 %v4029, 18
    %v4175 = vpop.permute.xlu0 %4174
    %4176 = vrot.lane.b32.xlu0 %v4030, 18
    %v4177 = vpop.permute.xlu0 %4176
    %4178 = vrot.lane.b32.xlu0 %v4031, 18
    %v4179 = vpop.permute.xlu0 %4178
    %4180 = vrot.lane.b32.xlu0 %v4032, 18
    %v4181 = vpop.permute.xlu0 %4180
    %4182 = vrot.lane.b32.xlu0 %v4033, 18
    %v4183 = vpop.permute.xlu0 %4182
    %4184 = vrot.lane.b32.xlu0 %v4034, 18
    %v4185 = vpop.permute.xlu0 %4184
    %4186 = vrot.lane.b32.xlu0 %v4035, 18
    %v4187 = vpop.permute.xlu0 %4186
    %4188 = vrot.lane.b32.xlu0 %v4036, 18
    %v4189 = vpop.permute.xlu0 %4188
    %4190 = vrot.lane.b32.xlu0 %v4037, 18
    %v4191 = vpop.permute.xlu0 %4190
    %4192 = vrot.lane.b32.xlu0 %v4038, 18
    %v4193 = vpop.permute.xlu0 %4192
    %4194 = vrot.lane.b32.xlu0 %v4039, 18
    %v4195 = vpop.permute.xlu0 %4194
    %4196 = vrot.lane.b32.xlu0 %v4040, 18
    %v4197 = vpop.permute.xlu0 %4196
    %4198 = vrot.lane.b32.xlu0 %v4041, 18
    %v4199 = vpop.permute.xlu0 %4198
    %4200 = vrot.lane.b32.xlu0 %v4042, 18
    %v4201 = vpop.permute.xlu0 %4200
    %4202 = vrot.lane.b32.xlu0 %v4043, 18
    %v4203 = vpop.permute.xlu0 %4202
    %4204 = vrot.lane.b32.xlu0 %v4044, 18
    %v4205 = vpop.permute.xlu0 %4204
    %4206 = vrot.lane.b32.xlu0 %v4045, 18
    %v4207 = vpop.permute.xlu0 %4206
    %4208 = vrot.lane.b32.xlu0 %v4046, 18
    %v4209 = vpop.permute.xlu0 %4208
    %4210 = vrot.lane.b32.xlu0 %v4047, 18
    %v4211 = vpop.permute.xlu0 %4210
    %4212 = vrot.lane.b32.xlu0 %v4048, 18
    %v4213 = vpop.permute.xlu0 %4212
    %4214 = vrot.lane.b32.xlu0 %v4049, 18
    %v4215 = vpop.permute.xlu0 %4214
    %4216 = vrot.lane.b32.xlu0 %v4050, 18
    %v4217 = vpop.permute.xlu0 %4216
    %4218 = vrot.lane.b32.xlu0 %v4051, 18
    %v4219 = vpop.permute.xlu0 %4218
    %4220 = vrot.lane.b32.xlu0 %v4052, 18
    %v4221 = vpop.permute.xlu0 %4220
    %4222 = vrot.lane.b32.xlu0 %v4053, 18
    %v4223 = vpop.permute.xlu0 %4222
    %4224 = vrot.lane.b32.xlu0 %v4054, 18
    %v4225 = vpop.permute.xlu0 %4224
    %4226 = vrot.lane.b32.xlu0 %v4055, 18
    %v4227 = vpop.permute.xlu0 %4226
    %4228 = vrot.lane.b32.xlu0 %v4056, 18
    %v4229 = vpop.permute.xlu0 %4228
    %4230 = vrot.lane.b32.xlu0 %v4057, 18
    %v4231 = vpop.permute.xlu0 %4230
    %4232 = vrot.lane.b32.xlu0 %v4058, 18
    %v4233 = vpop.permute.xlu0 %4232
    %4234 = vrot.lane.b32.xlu0 %v4059, 18
    %v4235 = vpop.permute.xlu0 %4234
    %4236 = vrot.lane.b32.xlu0 %v4060, 18
    %v4237 = vpop.permute.xlu0 %4236
    %4238 = vrot.lane.b32.xlu0 %v4061, 18
    %v4239 = vpop.permute.xlu0 %4238
    %4240 = vrot.lane.b32.xlu0 %v4062, 18
    %v4241 = vpop.permute.xlu0 %4240
    %4242 = vrot.lane.b32.xlu0 %v4063, 18
    %v4243 = vpop.permute.xlu0 %4242
    %4244 = vrot.lane.b32.xlu0 %v4064, 18
    %v4245 = vpop.permute.xlu0 %4244
    %4246 = vrot.lane.b32.xlu0 %v4065, 18
    %v4247 = vpop.permute.xlu0 %4246
    %4248 = vrot.lane.b32.xlu0 %v4066, 18
    %v4249 = vpop.permute.xlu0 %4248
    %4250 = vrot.lane.b32.xlu0 %v4067, 18
    %v4251 = vpop.permute.xlu0 %4250
    %4252 = vrot.lane.b32.xlu0 %v4068, 18
    %v4253 = vpop.permute.xlu0 %4252
    %4254 = vrot.lane.b32.xlu0 %v4069, 18
    %v4255 = vpop.permute.xlu0 %4254
    %4256 = vrot.lane.b32.xlu0 %v4070, 18
    %v4257 = vpop.permute.xlu0 %4256
    %4258 = vrot.lane.b32.xlu0 %v4071, 18
    %v4259 = vpop.permute.xlu0 %4258
    %4260 = vrot.lane.b32.xlu0 %v4072, 18
    %v4261 = vpop.permute.xlu0 %4260
    %4262 = vrot.lane.b32.xlu0 %v4073, 18
    %v4263 = vpop.permute.xlu0 %4262
    %4264 = vrot.lane.b32.xlu0 %v4074, 18
    %v4265 = vpop.permute.xlu0 %4264
    %4266 = vrot.lane.b32.xlu0 %v4075, 18
    %v4267 = vpop.permute.xlu0 %4266
    %vm4332 = vcmask 171152
    %4333 = vst.msk [vmem:[#allocation2] sm:$0xff] %vm4332, %v4141
    %4334 = vst.msk [vmem:[#allocation2 + $0x8] sm:$0xff] %vm4332, %v4143
    %4335 = vst.msk [vmem:[#allocation2 + $0x10] sm:$0xff] %vm4332, %v4145
    %4336 = vst.msk [vmem:[#allocation2 + $0x18] sm:$0xff] %vm4332, %v4147
    %4337 = vst.msk [vmem:[#allocation2 + $0x20] sm:$0xff] %vm4332, %v4149
    %4338 = vst.msk [vmem:[#allocation2 + $0x28] sm:$0xff] %vm4332, %v4151
    %4339 = vst.msk [vmem:[#allocation2 + $0x30] sm:$0xff] %vm4332, %v4153
    %4340 = vst.msk [vmem:[#allocation2 + $0x38] sm:$0xff] %vm4332, %v4155
    %4341 = vst.msk [vmem:[#allocation2 + $0x40] sm:$0xff] %vm4332, %v4157
    %4342 = vst.msk [vmem:[#allocation2 + $0x48] sm:$0xff] %vm4332, %v4159
    %4343 = vst.msk [vmem:[#allocation2 + $0x50] sm:$0xff] %vm4332, %v4161
    %4344 = vst.msk [vmem:[#allocation2 + $0x58] sm:$0xff] %vm4332, %v4163
    %4345 = vst.msk [vmem:[#allocation2 + $0x60] sm:$0xff] %vm4332, %v4165
    %4346 = vst.msk [vmem:[#allocation2 + $0x68] sm:$0xff] %vm4332, %v4167
    %4347 = vst.msk [vmem:[#allocation2 + $0x70] sm:$0xff] %vm4332, %v4169
    %4348 = vst.msk [vmem:[#allocation2 + $0x78] sm:$0xff] %vm4332, %v4171
    %4349 = vst.msk [vmem:[#allocation2 + $0x80] sm:$0xff] %vm4332, %v4173
    %4350 = vst.msk [vmem:[#allocation2 + $0x88] sm:$0xff] %vm4332, %v4175
    %4351 = vst.msk [vmem:[#allocation2 + $0x90] sm:$0xff] %vm4332, %v4177
    %4352 = vst.msk [vmem:[#allocation2 + $0x98] sm:$0xff] %vm4332, %v4179
    %4353 = vst.msk [vmem:[#allocation2 + $0xa0] sm:$0xff] %vm4332, %v4181
    %4354 = vst.msk [vmem:[#allocation2 + $0xa8] sm:$0xff] %vm4332, %v4183
    %4355 = vst.msk [vmem:[#allocation2 + $0xb0] sm:$0xff] %vm4332, %v4185
    %4356 = vst.msk [vmem:[#allocation2 + $0xb8] sm:$0xff] %vm4332, %v4187
    %4357 = vst.msk [vmem:[#allocation2 + $0xc0] sm:$0xff] %vm4332, %v4189
    %4358 = vst.msk [vmem:[#allocation2 + $0xc8] sm:$0xff] %vm4332, %v4191
    %4359 = vst.msk [vmem:[#allocation2 + $0xd0] sm:$0xff] %vm4332, %v4193
    %4360 = vst.msk [vmem:[#allocation2 + $0xd8] sm:$0xff] %vm4332, %v4195
    %4361 = vst.msk [vmem:[#allocation2 + $0xe0] sm:$0xff] %vm4332, %v4197
    %4362 = vst.msk [vmem:[#allocation2 + $0xe8] sm:$0xff] %vm4332, %v4199
    %4363 = vst.msk [vmem:[#allocation2 + $0xf0] sm:$0xff] %vm4332, %v4201
    %4364 = vst.msk [vmem:[#allocation2 + $0xf8] sm:$0xff] %vm4332, %v4203
    %4365 = vst.msk [vmem:[#allocation2 + $0x100] sm:$0xff] %vm4332, %v4205
    %4366 = vst.msk [vmem:[#allocation2 + $0x108] sm:$0xff] %vm4332, %v4207
    %4367 = vst.msk [vmem:[#allocation2 + $0x110] sm:$0xff] %vm4332, %v4209
    %4368 = vst.msk [vmem:[#allocation2 + $0x118] sm:$0xff] %vm4332, %v4211
    %4369 = vst.msk [vmem:[#allocation2 + $0x120] sm:$0xff] %vm4332, %v4213
    %4370 = vst.msk [vmem:[#allocation2 + $0x128] sm:$0xff] %vm4332, %v4215
    %4371 = vst.msk [vmem:[#allocation2 + $0x130] sm:$0xff] %vm4332, %v4217
    %4372 = vst.msk [vmem:[#allocation2 + $0x138] sm:$0xff] %vm4332, %v4219
    %4373 = vst.msk [vmem:[#allocation2 + $0x140] sm:$0xff] %vm4332, %v4221
    %4374 = vst.msk [vmem:[#allocation2 + $0x148] sm:$0xff] %vm4332, %v4223
    %4375 = vst.msk [vmem:[#allocation2 + $0x150] sm:$0xff] %vm4332, %v4225
    %4376 = vst.msk [vmem:[#allocation2 + $0x158] sm:$0xff] %vm4332, %v4227
    %4377 = vst.msk [vmem:[#allocation2 + $0x160] sm:$0xff] %vm4332, %v4229
    %4378 = vst.msk [vmem:[#allocation2 + $0x168] sm:$0xff] %vm4332, %v4231
    %4379 = vst.msk [vmem:[#allocation2 + $0x170] sm:$0xff] %vm4332, %v4233
    %4380 = vst.msk [vmem:[#allocation2 + $0x178] sm:$0xff] %vm4332, %v4235
    %4381 = vst.msk [vmem:[#allocation2 + $0x180] sm:$0xff] %vm4332, %v4237
    %4382 = vst.msk [vmem:[#allocation2 + $0x188] sm:$0xff] %vm4332, %v4239
    %4383 = vst.msk [vmem:[#allocation2 + $0x190] sm:$0xff] %vm4332, %v4241
    %4384 = vst.msk [vmem:[#allocation2 + $0x198] sm:$0xff] %vm4332, %v4243
    %4385 = vst.msk [vmem:[#allocation2 + $0x1a0] sm:$0xff] %vm4332, %v4245
    %4386 = vst.msk [vmem:[#allocation2 + $0x1a8] sm:$0xff] %vm4332, %v4247
    %4387 = vst.msk [vmem:[#allocation2 + $0x1b0] sm:$0xff] %vm4332, %v4249
    %4388 = vst.msk [vmem:[#allocation2 + $0x1b8] sm:$0xff] %vm4332, %v4251
    %4389 = vst.msk [vmem:[#allocation2 + $0x1c0] sm:$0xff] %vm4332, %v4253
    %4390 = vst.msk [vmem:[#allocation2 + $0x1c8] sm:$0xff] %vm4332, %v4255
    %4391 = vst.msk [vmem:[#allocation2 + $0x1d0] sm:$0xff] %vm4332, %v4257
    %4392 = vst.msk [vmem:[#allocation2 + $0x1d8] sm:$0xff] %vm4332, %v4259
    %4393 = vst.msk [vmem:[#allocation2 + $0x1e0] sm:$0xff] %vm4332, %v4261
    %4394 = vst.msk [vmem:[#allocation2 + $0x1e8] sm:$0xff] %vm4332, %v4263
    %4395 = vst.msk [vmem:[#allocation2 + $0x1f0] sm:$0xff] %vm4332, %v4265
    %4396 = vst.msk [vmem:[#allocation2 + $0x1f8] sm:$0xff] %vm4332, %v4267
    %4397 = vset.pattern.permute.xlu0 7
    %4398 = vperm.xlu0 %4397, %v98
    %v4399 = vpop.permute.xlu0 %4398
    %4401 = vset.pattern.permute.xlu0 7
    %4402 = vperm.xlu0 %4401, %v99
    %v4403 = vpop.permute.xlu0 %4402
    %4405 = vset.pattern.permute.xlu0 7
    %4406 = vperm.xlu0 %4405, %v100
    %v4407 = vpop.permute.xlu0 %4406
    %4409 = vset.pattern.permute.xlu0 7
    %4410 = vperm.xlu0 %4409, %v101
    %v4411 = vpop.permute.xlu0 %4410
    %4413 = vset.pattern.permute.xlu0 7
    %4414 = vperm.xlu0 %4413, %v102
    %v4415 = vpop.permute.xlu0 %4414
    %4417 = vset.pattern.permute.xlu0 7
    %4418 = vperm.xlu0 %4417, %v103
    %v4419 = vpop.permute.xlu0 %4418
    %4421 = vset.pattern.permute.xlu0 7
    %4422 = vperm.xlu0 %4421, %v104
    %v4423 = vpop.permute.xlu0 %4422
    %4425 = vset.pattern.permute.xlu0 7
    %4426 = vperm.xlu0 %4425, %v105
    %v4427 = vpop.permute.xlu0 %4426
    %4429 = vset.pattern.permute.xlu0 7
    %4430 = vperm.xlu0 %4429, %v106
    %v4431 = vpop.permute.xlu0 %4430
    %4433 = vset.pattern.permute.xlu0 7
    %4434 = vperm.xlu0 %4433, %v107
    %v4435 = vpop.permute.xlu0 %4434
    %4437 = vset.pattern.permute.xlu0 7
    %4438 = vperm.xlu0 %4437, %v108
    %v4439 = vpop.permute.xlu0 %4438
    %4441 = vset.pattern.permute.xlu0 7
    %4442 = vperm.xlu0 %4441, %v109
    %v4443 = vpop.permute.xlu0 %4442
    %4445 = vset.pattern.permute.xlu0 7
    %4446 = vperm.xlu0 %4445, %v110
    %v4447 = vpop.permute.xlu0 %4446
    %4449 = vset.pattern.permute.xlu0 7
    %4450 = vperm.xlu0 %4449, %v111
    %v4451 = vpop.permute.xlu0 %4450
    %4453 = vset.pattern.permute.xlu0 7
    %4454 = vperm.xlu0 %4453, %v112
    %v4455 = vpop.permute.xlu0 %4454
    %4457 = vset.pattern.permute.xlu0 7
    %4458 = vperm.xlu0 %4457, %v113
    %v4459 = vpop.permute.xlu0 %4458
    %4461 = vset.pattern.permute.xlu0 7
    %4462 = vperm.xlu0 %4461, %v114
    %v4463 = vpop.permute.xlu0 %4462
    %4465 = vset.pattern.permute.xlu0 7
    %4466 = vperm.xlu0 %4465, %v115
    %v4467 = vpop.permute.xlu0 %4466
    %4469 = vset.pattern.permute.xlu0 7
    %4470 = vperm.xlu0 %4469, %v116
    %v4471 = vpop.permute.xlu0 %4470
    %4473 = vset.pattern.permute.xlu0 7
    %4474 = vperm.xlu0 %4473, %v117
    %v4475 = vpop.permute.xlu0 %4474
    %4477 = vset.pattern.permute.xlu0 7
    %4478 = vperm.xlu0 %4477, %v118
    %v4479 = vpop.permute.xlu0 %4478
    %4481 = vset.pattern.permute.xlu0 7
    %4482 = vperm.xlu0 %4481, %v119
    %v4483 = vpop.permute.xlu0 %4482
    %4485 = vset.pattern.permute.xlu0 7
    %4486 = vperm.xlu0 %4485, %v120
    %v4487 = vpop.permute.xlu0 %4486
    %4489 = vset.pattern.permute.xlu0 7
    %4490 = vperm.xlu0 %4489, %v121
    %v4491 = vpop.permute.xlu0 %4490
    %4493 = vset.pattern.permute.xlu0 7
    %4494 = vperm.xlu0 %4493, %v122
    %v4495 = vpop.permute.xlu0 %4494
    %4497 = vset.pattern.permute.xlu0 7
    %4498 = vperm.xlu0 %4497, %v123
    %v4499 = vpop.permute.xlu0 %4498
    %4501 = vset.pattern.permute.xlu0 7
    %4502 = vperm.xlu0 %4501, %v124
    %v4503 = vpop.permute.xlu0 %4502
    %4505 = vset.pattern.permute.xlu0 7
    %4506 = vperm.xlu0 %4505, %v125
    %v4507 = vpop.permute.xlu0 %4506
    %4509 = vset.pattern.permute.xlu0 7
    %4510 = vperm.xlu0 %4509, %v126
    %v4511 = vpop.permute.xlu0 %4510
    %4513 = vset.pattern.permute.xlu0 7
    %4514 = vperm.xlu0 %4513, %v127
    %v4515 = vpop.permute.xlu0 %4514
    %4517 = vset.pattern.permute.xlu0 7
    %4518 = vperm.xlu0 %4517, %v128
    %v4519 = vpop.permute.xlu0 %4518
    %4521 = vset.pattern.permute.xlu0 7
    %4522 = vperm.xlu0 %4521, %v129
    %v4523 = vpop.permute.xlu0 %4522
    %4525 = vset.pattern.permute.xlu0 7
    %4526 = vperm.xlu0 %4525, %v130
    %v4527 = vpop.permute.xlu0 %4526
    %4529 = vset.pattern.permute.xlu0 7
    %4530 = vperm.xlu0 %4529, %v131
    %v4531 = vpop.permute.xlu0 %4530
    %4533 = vset.pattern.permute.xlu0 7
    %4534 = vperm.xlu0 %4533, %v132
    %v4535 = vpop.permute.xlu0 %4534
    %4537 = vset.pattern.permute.xlu0 7
    %4538 = vperm.xlu0 %4537, %v133
    %v4539 = vpop.permute.xlu0 %4538
    %4541 = vset.pattern.permute.xlu0 7
    %4542 = vperm.xlu0 %4541, %v134
    %v4543 = vpop.permute.xlu0 %4542
    %4545 = vset.pattern.permute.xlu0 7
    %4546 = vperm.xlu0 %4545, %v135
    %v4547 = vpop.permute.xlu0 %4546
    %4549 = vset.pattern.permute.xlu0 7
    %4550 = vperm.xlu0 %4549, %v136
    %v4551 = vpop.permute.xlu0 %4550
    %4553 = vset.pattern.permute.xlu0 7
    %4554 = vperm.xlu0 %4553, %v137
    %v4555 = vpop.permute.xlu0 %4554
    %4557 = vset.pattern.permute.xlu0 7
    %4558 = vperm.xlu0 %4557, %v138
    %v4559 = vpop.permute.xlu0 %4558
    %4561 = vset.pattern.permute.xlu0 7
    %4562 = vperm.xlu0 %4561, %v139
    %v4563 = vpop.permute.xlu0 %4562
    %4565 = vset.pattern.permute.xlu0 7
    %4566 = vperm.xlu0 %4565, %v140
    %v4567 = vpop.permute.xlu0 %4566
    %4569 = vset.pattern.permute.xlu0 7
    %4570 = vperm.xlu0 %4569, %v141
    %v4571 = vpop.permute.xlu0 %4570
    %4573 = vset.pattern.permute.xlu0 7
    %4574 = vperm.xlu0 %4573, %v142
    %v4575 = vpop.permute.xlu0 %4574
    %4577 = vset.pattern.permute.xlu0 7
    %4578 = vperm.xlu0 %4577, %v143
    %v4579 = vpop.permute.xlu0 %4578
    %4581 = vset.pattern.permute.xlu0 7
    %4582 = vperm.xlu0 %4581, %v144
    %v4583 = vpop.permute.xlu0 %4582
    %4585 = vset.pattern.permute.xlu0 7
    %4586 = vperm.xlu0 %4585, %v145
    %v4587 = vpop.permute.xlu0 %4586
    %4589 = vset.pattern.permute.xlu0 7
    %4590 = vperm.xlu0 %4589, %v146
    %v4591 = vpop.permute.xlu0 %4590
    %4593 = vset.pattern.permute.xlu0 7
    %4594 = vperm.xlu0 %4593, %v147
    %v4595 = vpop.permute.xlu0 %4594
    %4597 = vset.pattern.permute.xlu0 7
    %4598 = vperm.xlu0 %4597, %v148
    %v4599 = vpop.permute.xlu0 %4598
    %4601 = vset.pattern.permute.xlu0 7
    %4602 = vperm.xlu0 %4601, %v149
    %v4603 = vpop.permute.xlu0 %4602
    %4605 = vset.pattern.permute.xlu0 7
    %4606 = vperm.xlu0 %4605, %v150
    %v4607 = vpop.permute.xlu0 %4606
    %4609 = vset.pattern.permute.xlu0 7
    %4610 = vperm.xlu0 %4609, %v151
    %v4611 = vpop.permute.xlu0 %4610
    %4613 = vset.pattern.permute.xlu0 7
    %4614 = vperm.xlu0 %4613, %v152
    %v4615 = vpop.permute.xlu0 %4614
    %4617 = vset.pattern.permute.xlu0 7
    %4618 = vperm.xlu0 %4617, %v153
    %v4619 = vpop.permute.xlu0 %4618
    %4621 = vset.pattern.permute.xlu0 7
    %4622 = vperm.xlu0 %4621, %v154
    %v4623 = vpop.permute.xlu0 %4622
    %4625 = vset.pattern.permute.xlu0 7
    %4626 = vperm.xlu0 %4625, %v155
    %v4627 = vpop.permute.xlu0 %4626
    %4629 = vset.pattern.permute.xlu0 7
    %4630 = vperm.xlu0 %4629, %v156
    %v4631 = vpop.permute.xlu0 %4630
    %4633 = vset.pattern.permute.xlu0 7
    %4634 = vperm.xlu0 %4633, %v157
    %v4635 = vpop.permute.xlu0 %4634
    %4637 = vset.pattern.permute.xlu0 7
    %4638 = vperm.xlu0 %4637, %v158
    %v4639 = vpop.permute.xlu0 %4638
    %4641 = vset.pattern.permute.xlu0 7
    %4642 = vperm.xlu0 %4641, %v159
    %v4643 = vpop.permute.xlu0 %4642
    %4645 = vset.pattern.permute.xlu0 7
    %4646 = vperm.xlu0 %4645, %v160
    %v4647 = vpop.permute.xlu0 %4646
    %4649 = vset.pattern.permute.xlu0 7
    %4650 = vperm.xlu0 %4649, %v161
    %v4651 = vpop.permute.xlu0 %4650
    %v4653 = vmul.f32 %v36, %v4399
    %v4654 = vmul.f32 %v37, %v4403
    %v4655 = vmul.f32 %v38, %v4407
    %v4656 = vmul.f32 %v39, %v4411
    %v4657 = vmul.f32 %v40, %v4415
    %v4658 = vmul.f32 %v41, %v4419
    %v4659 = vmul.f32 %v42, %v4423
    %v4660 = vmul.f32 %v43, %v4427
    %v4661 = vmul.f32 %v44, %v4431
    %v4662 = vmul.f32 %v45, %v4435
    %v4663 = vmul.f32 %v46, %v4439
    %v4664 = vmul.f32 %v47, %v4443
    %v4665 = vmul.f32 %v48, %v4447
    %v4666 = vmul.f32 %v49, %v4451
    %v4667 = vmul.f32 %v50, %v4455
    %v4668 = vmul.f32 %v51, %v4459
    %v4669 = vmul.f32 %v52, %v4463
    %v4670 = vmul.f32 %v53, %v4467
    %v4671 = vmul.f32 %v54, %v4471
    %v4672 = vmul.f32 %v55, %v4475
    %v4673 = vmul.f32 %v56, %v4479
    %v4674 = vmul.f32 %v57, %v4483
    %v4675 = vmul.f32 %v58, %v4487
    %v4676 = vmul.f32 %v59, %v4491
    %v4677 = vmul.f32 %v60, %v4495
    %v4678 = vmul.f32 %v61, %v4499
    %v4679 = vmul.f32 %v62, %v4503
    %v4680 = vmul.f32 %v63, %v4507
    %v4681 = vmul.f32 %v64, %v4511
    %v4682 = vmul.f32 %v65, %v4515
    %v4683 = vmul.f32 %v66, %v4519
    %v4684 = vmul.f32 %v67, %v4523
    %v4685 = vmul.f32 %v68, %v4527
    %v4686 = vmul.f32 %v69, %v4531
    %v4687 = vmul.f32 %v70, %v4535
    %v4688 = vmul.f32 %v71, %v4539
    %v4689 = vmul.f32 %v72, %v4543
    %v4690 = vmul.f32 %v73, %v4547
    %v4691 = vmul.f32 %v74, %v4551
    %v4692 = vmul.f32 %v75, %v4555
    %v4693 = vmul.f32 %v76, %v4559
    %v4694 = vmul.f32 %v77, %v4563
    %v4695 = vmul.f32 %v78, %v4567
    %v4696 = vmul.f32 %v79, %v4571
    %v4697 = vmul.f32 %v80, %v4575
    %v4698 = vmul.f32 %v81, %v4579
    %v4699 = vmul.f32 %v82, %v4583
    %v4700 = vmul.f32 %v83, %v4587
    %v4701 = vmul.f32 %v84, %v4591
    %v4702 = vmul.f32 %v85, %v4595
    %v4703 = vmul.f32 %v86, %v4599
    %v4704 = vmul.f32 %v87, %v4603
    %v4705 = vmul.f32 %v88, %v4607
    %v4706 = vmul.f32 %v89, %v4611
    %v4707 = vmul.f32 %v90, %v4615
    %v4708 = vmul.f32 %v91, %v4619
    %v4709 = vmul.f32 %v92, %v4623
    %v4710 = vmul.f32 %v93, %v4627
    %v4711 = vmul.f32 %v94, %v4631
    %v4712 = vmul.f32 %v95, %v4635
    %v4713 = vmul.f32 %v96, %v4639
    %v4714 = vmul.f32 %v97, %v4643
    %v4715 = vmul.f32 %v34, %v4647
    %v4716 = vmul.f32 %v35, %v4651
    %4781 = vrot.lane.b32.xlu0 %v4653, 21
    %v4782 = vpop.permute.xlu0 %4781
    %4783 = vrot.lane.b32.xlu0 %v4654, 21
    %v4784 = vpop.permute.xlu0 %4783
    %4785 = vrot.lane.b32.xlu0 %v4655, 21
    %v4786 = vpop.permute.xlu0 %4785
    %4787 = vrot.lane.b32.xlu0 %v4656, 21
    %v4788 = vpop.permute.xlu0 %4787
    %4789 = vrot.lane.b32.xlu0 %v4657, 21
    %v4790 = vpop.permute.xlu0 %4789
    %4791 = vrot.lane.b32.xlu0 %v4658, 21
    %v4792 = vpop.permute.xlu0 %4791
    %4793 = vrot.lane.b32.xlu0 %v4659, 21
    %v4794 = vpop.permute.xlu0 %4793
    %4795 = vrot.lane.b32.xlu0 %v4660, 21
    %v4796 = vpop.permute.xlu0 %4795
    %4797 = vrot.lane.b32.xlu0 %v4661, 21
    %v4798 = vpop.permute.xlu0 %4797
    %4799 = vrot.lane.b32.xlu0 %v4662, 21
    %v4800 = vpop.permute.xlu0 %4799
    %4801 = vrot.lane.b32.xlu0 %v4663, 21
    %v4802 = vpop.permute.xlu0 %4801
    %4803 = vrot.lane.b32.xlu0 %v4664, 21
    %v4804 = vpop.permute.xlu0 %4803
    %4805 = vrot.lane.b32.xlu0 %v4665, 21
    %v4806 = vpop.permute.xlu0 %4805
    %4807 = vrot.lane.b32.xlu0 %v4666, 21
    %v4808 = vpop.permute.xlu0 %4807
    %4809 = vrot.lane.b32.xlu0 %v4667, 21
    %v4810 = vpop.permute.xlu0 %4809
    %4811 = vrot.lane.b32.xlu0 %v4668, 21
    %v4812 = vpop.permute.xlu0 %4811
    %4813 = vrot.lane.b32.xlu0 %v4669, 21
    %v4814 = vpop.permute.xlu0 %4813
    %4815 = vrot.lane.b32.xlu0 %v4670, 21
    %v4816 = vpop.permute.xlu0 %4815
    %4817 = vrot.lane.b32.xlu0 %v4671, 21
    %v4818 = vpop.permute.xlu0 %4817
    %4819 = vrot.lane.b32.xlu0 %v4672, 21
    %v4820 = vpop.permute.xlu0 %4819
    %4821 = vrot.lane.b32.xlu0 %v4673, 21
    %v4822 = vpop.permute.xlu0 %4821
    %4823 = vrot.lane.b32.xlu0 %v4674, 21
    %v4824 = vpop.permute.xlu0 %4823
    %4825 = vrot.lane.b32.xlu0 %v4675, 21
    %v4826 = vpop.permute.xlu0 %4825
    %4827 = vrot.lane.b32.xlu0 %v4676, 21
    %v4828 = vpop.permute.xlu0 %4827
    %4829 = vrot.lane.b32.xlu0 %v4677, 21
    %v4830 = vpop.permute.xlu0 %4829
    %4831 = vrot.lane.b32.xlu0 %v4678, 21
    %v4832 = vpop.permute.xlu0 %4831
    %4833 = vrot.lane.b32.xlu0 %v4679, 21
    %v4834 = vpop.permute.xlu0 %4833
    %4835 = vrot.lane.b32.xlu0 %v4680, 21
    %v4836 = vpop.permute.xlu0 %4835
    %4837 = vrot.lane.b32.xlu0 %v4681, 21
    %v4838 = vpop.permute.xlu0 %4837
    %4839 = vrot.lane.b32.xlu0 %v4682, 21
    %v4840 = vpop.permute.xlu0 %4839
    %4841 = vrot.lane.b32.xlu0 %v4683, 21
    %v4842 = vpop.permute.xlu0 %4841
    %4843 = vrot.lane.b32.xlu0 %v4684, 21
    %v4844 = vpop.permute.xlu0 %4843
    %4845 = vrot.lane.b32.xlu0 %v4685, 21
    %v4846 = vpop.permute.xlu0 %4845
    %4847 = vrot.lane.b32.xlu0 %v4686, 21
    %v4848 = vpop.permute.xlu0 %4847
    %4849 = vrot.lane.b32.xlu0 %v4687, 21
    %v4850 = vpop.permute.xlu0 %4849
    %4851 = vrot.lane.b32.xlu0 %v4688, 21
    %v4852 = vpop.permute.xlu0 %4851
    %4853 = vrot.lane.b32.xlu0 %v4689, 21
    %v4854 = vpop.permute.xlu0 %4853
    %4855 = vrot.lane.b32.xlu0 %v4690, 21
    %v4856 = vpop.permute.xlu0 %4855
    %4857 = vrot.lane.b32.xlu0 %v4691, 21
    %v4858 = vpop.permute.xlu0 %4857
    %4859 = vrot.lane.b32.xlu0 %v4692, 21
    %v4860 = vpop.permute.xlu0 %4859
    %4861 = vrot.lane.b32.xlu0 %v4693, 21
    %v4862 = vpop.permute.xlu0 %4861
    %4863 = vrot.lane.b32.xlu0 %v4694, 21
    %v4864 = vpop.permute.xlu0 %4863
    %4865 = vrot.lane.b32.xlu0 %v4695, 21
    %v4866 = vpop.permute.xlu0 %4865
    %4867 = vrot.lane.b32.xlu0 %v4696, 21
    %v4868 = vpop.permute.xlu0 %4867
    %4869 = vrot.lane.b32.xlu0 %v4697, 21
    %v4870 = vpop.permute.xlu0 %4869
    %4871 = vrot.lane.b32.xlu0 %v4698, 21
    %v4872 = vpop.permute.xlu0 %4871
    %4873 = vrot.lane.b32.xlu0 %v4699, 21
    %v4874 = vpop.permute.xlu0 %4873
    %4875 = vrot.lane.b32.xlu0 %v4700, 21
    %v4876 = vpop.permute.xlu0 %4875
    %4877 = vrot.lane.b32.xlu0 %v4701, 21
    %v4878 = vpop.permute.xlu0 %4877
    %4879 = vrot.lane.b32.xlu0 %v4702, 21
    %v4880 = vpop.permute.xlu0 %4879
    %4881 = vrot.lane.b32.xlu0 %v4703, 21
    %v4882 = vpop.permute.xlu0 %4881
    %4883 = vrot.lane.b32.xlu0 %v4704, 21
    %v4884 = vpop.permute.xlu0 %4883
    %4885 = vrot.lane.b32.xlu0 %v4705, 21
    %v4886 = vpop.permute.xlu0 %4885
    %4887 = vrot.lane.b32.xlu0 %v4706, 21
    %v4888 = vpop.permute.xlu0 %4887
    %4889 = vrot.lane.b32.xlu0 %v4707, 21
    %v4890 = vpop.permute.xlu0 %4889
    %4891 = vrot.lane.b32.xlu0 %v4708, 21
    %v4892 = vpop.permute.xlu0 %4891
    %4893 = vrot.lane.b32.xlu0 %v4709, 21
    %v4894 = vpop.permute.xlu0 %4893
    %4895 = vrot.lane.b32.xlu0 %v4710, 21
    %v4896 = vpop.permute.xlu0 %4895
    %4897 = vrot.lane.b32.xlu0 %v4711, 21
    %v4898 = vpop.permute.xlu0 %4897
    %4899 = vrot.lane.b32.xlu0 %v4712, 21
    %v4900 = vpop.permute.xlu0 %4899
    %4901 = vrot.lane.b32.xlu0 %v4713, 21
    %v4902 = vpop.permute.xlu0 %4901
    %4903 = vrot.lane.b32.xlu0 %v4714, 21
    %v4904 = vpop.permute.xlu0 %4903
    %4905 = vrot.lane.b32.xlu0 %v4715, 21
    %v4906 = vpop.permute.xlu0 %4905
    %4907 = vrot.lane.b32.xlu0 %v4716, 21
    %v4908 = vpop.permute.xlu0 %4907
    %vm4973 = vcmask 195752
    %4974 = vst.msk [vmem:[#allocation2] sm:$0xff] %vm4973, %v4782
    %4975 = vst.msk [vmem:[#allocation2 + $0x8] sm:$0xff] %vm4973, %v4784
    %4976 = vst.msk [vmem:[#allocation2 + $0x10] sm:$0xff] %vm4973, %v4786
    %4977 = vst.msk [vmem:[#allocation2 + $0x18] sm:$0xff] %vm4973, %v4788
    %4978 = vst.msk [vmem:[#allocation2 + $0x20] sm:$0xff] %vm4973, %v4790
    %4979 = vst.msk [vmem:[#allocation2 + $0x28] sm:$0xff] %vm4973, %v4792
    %4980 = vst.msk [vmem:[#allocation2 + $0x30] sm:$0xff] %vm4973, %v4794
    %4981 = vst.msk [vmem:[#allocation2 + $0x38] sm:$0xff] %vm4973, %v4796
    %4982 = vst.msk [vmem:[#allocation2 + $0x40] sm:$0xff] %vm4973, %v4798
    %4983 = vst.msk [vmem:[#allocation2 + $0x48] sm:$0xff] %vm4973, %v4800
    %4984 = vst.msk [vmem:[#allocation2 + $0x50] sm:$0xff] %vm4973, %v4802
    %4985 = vst.msk [vmem:[#allocation2 + $0x58] sm:$0xff] %vm4973, %v4804
    %4986 = vst.msk [vmem:[#allocation2 + $0x60] sm:$0xff] %vm4973, %v4806
    %4987 = vst.msk [vmem:[#allocation2 + $0x68] sm:$0xff] %vm4973, %v4808
    %4988 = vst.msk [vmem:[#allocation2 + $0x70] sm:$0xff] %vm4973, %v4810
    %4989 = vst.msk [vmem:[#allocation2 + $0x78] sm:$0xff] %vm4973, %v4812
    %4990 = vst.msk [vmem:[#allocation2 + $0x80] sm:$0xff] %vm4973, %v4814
    %4991 = vst.msk [vmem:[#allocation2 + $0x88] sm:$0xff] %vm4973, %v4816
    %4992 = vst.msk [vmem:[#allocation2 + $0x90] sm:$0xff] %vm4973, %v4818
    %4993 = vst.msk [vmem:[#allocation2 + $0x98] sm:$0xff] %vm4973, %v4820
    %4994 = vst.msk [vmem:[#allocation2 + $0xa0] sm:$0xff] %vm4973, %v4822
    %4995 = vst.msk [vmem:[#allocation2 + $0xa8] sm:$0xff] %vm4973, %v4824
    %4996 = vst.msk [vmem:[#allocation2 + $0xb0] sm:$0xff] %vm4973, %v4826
    %4997 = vst.msk [vmem:[#allocation2 + $0xb8] sm:$0xff] %vm4973, %v4828
    %4998 = vst.msk [vmem:[#allocation2 + $0xc0] sm:$0xff] %vm4973, %v4830
    %4999 = vst.msk [vmem:[#allocation2 + $0xc8] sm:$0xff] %vm4973, %v4832
    %5000 = vst.msk [vmem:[#allocation2 + $0xd0] sm:$0xff] %vm4973, %v4834
    %5001 = vst.msk [vmem:[#allocation2 + $0xd8] sm:$0xff] %vm4973, %v4836
    %5002 = vst.msk [vmem:[#allocation2 + $0xe0] sm:$0xff] %vm4973, %v4838
    %5003 = vst.msk [vmem:[#allocation2 + $0xe8] sm:$0xff] %vm4973, %v4840
    %5004 = vst.msk [vmem:[#allocation2 + $0xf0] sm:$0xff] %vm4973, %v4842
    %5005 = vst.msk [vmem:[#allocation2 + $0xf8] sm:$0xff] %vm4973, %v4844
    %5006 = vst.msk [vmem:[#allocation2 + $0x100] sm:$0xff] %vm4973, %v4846
    %5007 = vst.msk [vmem:[#allocation2 + $0x108] sm:$0xff] %vm4973, %v4848
    %5008 = vst.msk [vmem:[#allocation2 + $0x110] sm:$0xff] %vm4973, %v4850
    %5009 = vst.msk [vmem:[#allocation2 + $0x118] sm:$0xff] %vm4973, %v4852
    %5010 = vst.msk [vmem:[#allocation2 + $0x120] sm:$0xff] %vm4973, %v4854
    %5011 = vst.msk [vmem:[#allocation2 + $0x128] sm:$0xff] %vm4973, %v4856
    %5012 = vst.msk [vmem:[#allocation2 + $0x130] sm:$0xff] %vm4973, %v4858
    %5013 = vst.msk [vmem:[#allocation2 + $0x138] sm:$0xff] %vm4973, %v4860
    %5014 = vst.msk [vmem:[#allocation2 + $0x140] sm:$0xff] %vm4973, %v4862
    %5015 = vst.msk [vmem:[#allocation2 + $0x148] sm:$0xff] %vm4973, %v4864
    %5016 = vst.msk [vmem:[#allocation2 + $0x150] sm:$0xff] %vm4973, %v4866
    %5017 = vst.msk [vmem:[#allocation2 + $0x158] sm:$0xff] %vm4973, %v4868
    %5018 = vst.msk [vmem:[#allocation2 + $0x160] sm:$0xff] %vm4973, %v4870
    %5019 = vst.msk [vmem:[#allocation2 + $0x168] sm:$0xff] %vm4973, %v4872
    %5020 = vst.msk [vmem:[#allocation2 + $0x170] sm:$0xff] %vm4973, %v4874
    %5021 = vst.msk [vmem:[#allocation2 + $0x178] sm:$0xff] %vm4973, %v4876
    %5022 = vst.msk [vmem:[#allocation2 + $0x180] sm:$0xff] %vm4973, %v4878
    %5023 = vst.msk [vmem:[#allocation2 + $0x188] sm:$0xff] %vm4973, %v4880
    %5024 = vst.msk [vmem:[#allocation2 + $0x190] sm:$0xff] %vm4973, %v4882
    %5025 = vst.msk [vmem:[#allocation2 + $0x198] sm:$0xff] %vm4973, %v4884
    %5026 = vst.msk [vmem:[#allocation2 + $0x1a0] sm:$0xff] %vm4973, %v4886
    %5027 = vst.msk [vmem:[#allocation2 + $0x1a8] sm:$0xff] %vm4973, %v4888
    %5028 = vst.msk [vmem:[#allocation2 + $0x1b0] sm:$0xff] %vm4973, %v4890
    %5029 = vst.msk [vmem:[#allocation2 + $0x1b8] sm:$0xff] %vm4973, %v4892
    %5030 = vst.msk [vmem:[#allocation2 + $0x1c0] sm:$0xff] %vm4973, %v4894
    %5031 = vst.msk [vmem:[#allocation2 + $0x1c8] sm:$0xff] %vm4973, %v4896
    %5032 = vst.msk [vmem:[#allocation2 + $0x1d0] sm:$0xff] %vm4973, %v4898
    %5033 = vst.msk [vmem:[#allocation2 + $0x1d8] sm:$0xff] %vm4973, %v4900
    %5034 = vst.msk [vmem:[#allocation2 + $0x1e0] sm:$0xff] %vm4973, %v4902
    %5035 = vst.msk [vmem:[#allocation2 + $0x1e8] sm:$0xff] %vm4973, %v4904
    %5036 = vst.msk [vmem:[#allocation2 + $0x1f0] sm:$0xff] %vm4973, %v4906
    %5037 = vst.msk [vmem:[#allocation2 + $0x1f8] sm:$0xff] %vm4973, %v4908
    %5038 = vset.pattern.permute.xlu0 8
    %5039 = vperm.xlu0 %5038, %v98
    %v5040 = vpop.permute.xlu0 %5039
    %5042 = vset.pattern.permute.xlu0 8
    %5043 = vperm.xlu0 %5042, %v99
    %v5044 = vpop.permute.xlu0 %5043
    %5046 = vset.pattern.permute.xlu0 8
    %5047 = vperm.xlu0 %5046, %v100
    %v5048 = vpop.permute.xlu0 %5047
    %5050 = vset.pattern.permute.xlu0 8
    %5051 = vperm.xlu0 %5050, %v101
    %v5052 = vpop.permute.xlu0 %5051
    %5054 = vset.pattern.permute.xlu0 8
    %5055 = vperm.xlu0 %5054, %v102
    %v5056 = vpop.permute.xlu0 %5055
    %5058 = vset.pattern.permute.xlu0 8
    %5059 = vperm.xlu0 %5058, %v103
    %v5060 = vpop.permute.xlu0 %5059
    %5062 = vset.pattern.permute.xlu0 8
    %5063 = vperm.xlu0 %5062, %v104
    %v5064 = vpop.permute.xlu0 %5063
    %5066 = vset.pattern.permute.xlu0 8
    %5067 = vperm.xlu0 %5066, %v105
    %v5068 = vpop.permute.xlu0 %5067
    %5070 = vset.pattern.permute.xlu0 8
    %5071 = vperm.xlu0 %5070, %v106
    %v5072 = vpop.permute.xlu0 %5071
    %5074 = vset.pattern.permute.xlu0 8
    %5075 = vperm.xlu0 %5074, %v107
    %v5076 = vpop.permute.xlu0 %5075
    %5078 = vset.pattern.permute.xlu0 8
    %5079 = vperm.xlu0 %5078, %v108
    %v5080 = vpop.permute.xlu0 %5079
    %5082 = vset.pattern.permute.xlu0 8
    %5083 = vperm.xlu0 %5082, %v109
    %v5084 = vpop.permute.xlu0 %5083
    %5086 = vset.pattern.permute.xlu0 8
    %5087 = vperm.xlu0 %5086, %v110
    %v5088 = vpop.permute.xlu0 %5087
    %5090 = vset.pattern.permute.xlu0 8
    %5091 = vperm.xlu0 %5090, %v111
    %v5092 = vpop.permute.xlu0 %5091
    %5094 = vset.pattern.permute.xlu0 8
    %5095 = vperm.xlu0 %5094, %v112
    %v5096 = vpop.permute.xlu0 %5095
    %5098 = vset.pattern.permute.xlu0 8
    %5099 = vperm.xlu0 %5098, %v113
    %v5100 = vpop.permute.xlu0 %5099
    %5102 = vset.pattern.permute.xlu0 8
    %5103 = vperm.xlu0 %5102, %v114
    %v5104 = vpop.permute.xlu0 %5103
    %5106 = vset.pattern.permute.xlu0 8
    %5107 = vperm.xlu0 %5106, %v115
    %v5108 = vpop.permute.xlu0 %5107
    %5110 = vset.pattern.permute.xlu0 8
    %5111 = vperm.xlu0 %5110, %v116
    %v5112 = vpop.permute.xlu0 %5111
    %5114 = vset.pattern.permute.xlu0 8
    %5115 = vperm.xlu0 %5114, %v117
    %v5116 = vpop.permute.xlu0 %5115
    %5118 = vset.pattern.permute.xlu0 8
    %5119 = vperm.xlu0 %5118, %v118
    %v5120 = vpop.permute.xlu0 %5119
    %5122 = vset.pattern.permute.xlu0 8
    %5123 = vperm.xlu0 %5122, %v119
    %v5124 = vpop.permute.xlu0 %5123
    %5126 = vset.pattern.permute.xlu0 8
    %5127 = vperm.xlu0 %5126, %v120
    %v5128 = vpop.permute.xlu0 %5127
    %5130 = vset.pattern.permute.xlu0 8
    %5131 = vperm.xlu0 %5130, %v121
    %v5132 = vpop.permute.xlu0 %5131
    %5134 = vset.pattern.permute.xlu0 8
    %5135 = vperm.xlu0 %5134, %v122
    %v5136 = vpop.permute.xlu0 %5135
    %5138 = vset.pattern.permute.xlu0 8
    %5139 = vperm.xlu0 %5138, %v123
    %v5140 = vpop.permute.xlu0 %5139
    %5142 = vset.pattern.permute.xlu0 8
    %5143 = vperm.xlu0 %5142, %v124
    %v5144 = vpop.permute.xlu0 %5143
    %5146 = vset.pattern.permute.xlu0 8
    %5147 = vperm.xlu0 %5146, %v125
    %v5148 = vpop.permute.xlu0 %5147
    %5150 = vset.pattern.permute.xlu0 8
    %5151 = vperm.xlu0 %5150, %v126
    %v5152 = vpop.permute.xlu0 %5151
    %5154 = vset.pattern.permute.xlu0 8
    %5155 = vperm.xlu0 %5154, %v127
    %v5156 = vpop.permute.xlu0 %5155
    %5158 = vset.pattern.permute.xlu0 8
    %5159 = vperm.xlu0 %5158, %v128
    %v5160 = vpop.permute.xlu0 %5159
    %5162 = vset.pattern.permute.xlu0 8
    %5163 = vperm.xlu0 %5162, %v129
    %v5164 = vpop.permute.xlu0 %5163
    %5166 = vset.pattern.permute.xlu0 8
    %5167 = vperm.xlu0 %5166, %v130
    %v5168 = vpop.permute.xlu0 %5167
    %5170 = vset.pattern.permute.xlu0 8
    %5171 = vperm.xlu0 %5170, %v131
    %v5172 = vpop.permute.xlu0 %5171
    %5174 = vset.pattern.permute.xlu0 8
    %5175 = vperm.xlu0 %5174, %v132
    %v5176 = vpop.permute.xlu0 %5175
    %5178 = vset.pattern.permute.xlu0 8
    %5179 = vperm.xlu0 %5178, %v133
    %v5180 = vpop.permute.xlu0 %5179
    %5182 = vset.pattern.permute.xlu0 8
    %5183 = vperm.xlu0 %5182, %v134
    %v5184 = vpop.permute.xlu0 %5183
    %5186 = vset.pattern.permute.xlu0 8
    %5187 = vperm.xlu0 %5186, %v135
    %v5188 = vpop.permute.xlu0 %5187
    %5190 = vset.pattern.permute.xlu0 8
    %5191 = vperm.xlu0 %5190, %v136
    %v5192 = vpop.permute.xlu0 %5191
    %5194 = vset.pattern.permute.xlu0 8
    %5195 = vperm.xlu0 %5194, %v137
    %v5196 = vpop.permute.xlu0 %5195
    %5198 = vset.pattern.permute.xlu0 8
    %5199 = vperm.xlu0 %5198, %v138
    %v5200 = vpop.permute.xlu0 %5199
    %5202 = vset.pattern.permute.xlu0 8
    %5203 = vperm.xlu0 %5202, %v139
    %v5204 = vpop.permute.xlu0 %5203
    %5206 = vset.pattern.permute.xlu0 8
    %5207 = vperm.xlu0 %5206, %v140
    %v5208 = vpop.permute.xlu0 %5207
    %5210 = vset.pattern.permute.xlu0 8
    %5211 = vperm.xlu0 %5210, %v141
    %v5212 = vpop.permute.xlu0 %5211
    %5214 = vset.pattern.permute.xlu0 8
    %5215 = vperm.xlu0 %5214, %v142
    %v5216 = vpop.permute.xlu0 %5215
    %5218 = vset.pattern.permute.xlu0 8
    %5219 = vperm.xlu0 %5218, %v143
    %v5220 = vpop.permute.xlu0 %5219
    %5222 = vset.pattern.permute.xlu0 8
    %5223 = vperm.xlu0 %5222, %v144
    %v5224 = vpop.permute.xlu0 %5223
    %5226 = vset.pattern.permute.xlu0 8
    %5227 = vperm.xlu0 %5226, %v145
    %v5228 = vpop.permute.xlu0 %5227
    %5230 = vset.pattern.permute.xlu0 8
    %5231 = vperm.xlu0 %5230, %v146
    %v5232 = vpop.permute.xlu0 %5231
    %5234 = vset.pattern.permute.xlu0 8
    %5235 = vperm.xlu0 %5234, %v147
    %v5236 = vpop.permute.xlu0 %5235
    %5238 = vset.pattern.permute.xlu0 8
    %5239 = vperm.xlu0 %5238, %v148
    %v5240 = vpop.permute.xlu0 %5239
    %5242 = vset.pattern.permute.xlu0 8
    %5243 = vperm.xlu0 %5242, %v149
    %v5244 = vpop.permute.xlu0 %5243
    %5246 = vset.pattern.permute.xlu0 8
    %5247 = vperm.xlu0 %5246, %v150
    %v5248 = vpop.permute.xlu0 %5247
    %5250 = vset.pattern.permute.xlu0 8
    %5251 = vperm.xlu0 %5250, %v151
    %v5252 = vpop.permute.xlu0 %5251
    %5254 = vset.pattern.permute.xlu0 8
    %5255 = vperm.xlu0 %5254, %v152
    %v5256 = vpop.permute.xlu0 %5255
    %5258 = vset.pattern.permute.xlu0 8
    %5259 = vperm.xlu0 %5258, %v153
    %v5260 = vpop.permute.xlu0 %5259
    %5262 = vset.pattern.permute.xlu0 8
    %5263 = vperm.xlu0 %5262, %v154
    %v5264 = vpop.permute.xlu0 %5263
    %5266 = vset.pattern.permute.xlu0 8
    %5267 = vperm.xlu0 %5266, %v155
    %v5268 = vpop.permute.xlu0 %5267
    %5270 = vset.pattern.permute.xlu0 8
    %5271 = vperm.xlu0 %5270, %v156
    %v5272 = vpop.permute.xlu0 %5271
    %5274 = vset.pattern.permute.xlu0 8
    %5275 = vperm.xlu0 %5274, %v157
    %v5276 = vpop.permute.xlu0 %5275
    %5278 = vset.pattern.permute.xlu0 8
    %5279 = vperm.xlu0 %5278, %v158
    %v5280 = vpop.permute.xlu0 %5279
    %5282 = vset.pattern.permute.xlu0 8
    %5283 = vperm.xlu0 %5282, %v159
    %v5284 = vpop.permute.xlu0 %5283
    %5286 = vset.pattern.permute.xlu0 8
    %5287 = vperm.xlu0 %5286, %v160
    %v5288 = vpop.permute.xlu0 %5287
    %5290 = vset.pattern.permute.xlu0 8
    %5291 = vperm.xlu0 %5290, %v161
    %v5292 = vpop.permute.xlu0 %5291
    %v5294 = vmul.f32 %v1508, %v5040
    %v5295 = vmul.f32 %v1507, %v5044
    %v5296 = vmul.f32 %v1506, %v5048
    %v5297 = vmul.f32 %v1505, %v5052
    %v5298 = vmul.f32 %v1504, %v5056
    %v5299 = vmul.f32 %v1503, %v5060
    %v5300 = vmul.f32 %v1502, %v5064
    %v5301 = vmul.f32 %v1501, %v5068
    %v5302 = vmul.f32 %v1500, %v5072
    %v5303 = vmul.f32 %v1499, %v5076
    %v5304 = vmul.f32 %v1498, %v5080
    %v5305 = vmul.f32 %v1497, %v5084
    %v5306 = vmul.f32 %v1496, %v5088
    %v5307 = vmul.f32 %v1495, %v5092
    %v5308 = vmul.f32 %v1494, %v5096
    %v5309 = vmul.f32 %v1493, %v5100
    %v5310 = vmul.f32 %v1492, %v5104
    %v5311 = vmul.f32 %v1491, %v5108
    %v5312 = vmul.f32 %v1490, %v5112
    %v5313 = vmul.f32 %v1489, %v5116
    %v5314 = vmul.f32 %v1488, %v5120
    %v5315 = vmul.f32 %v1487, %v5124
    %v5316 = vmul.f32 %v1486, %v5128
    %v5317 = vmul.f32 %v1485, %v5132
    %v5318 = vmul.f32 %v1484, %v5136
    %v5319 = vmul.f32 %v1483, %v5140
    %v5320 = vmul.f32 %v1482, %v5144
    %v5321 = vmul.f32 %v1481, %v5148
    %v5322 = vmul.f32 %v1480, %v5152
    %v5323 = vmul.f32 %v1479, %v5156
    %v5324 = vmul.f32 %v1478, %v5160
    %v5325 = vmul.f32 %v1477, %v5164
    %v5326 = vmul.f32 %v1476, %v5168
    %v5327 = vmul.f32 %v1475, %v5172
    %v5328 = vmul.f32 %v1474, %v5176
    %v5329 = vmul.f32 %v1473, %v5180
    %v5330 = vmul.f32 %v1472, %v5184
    %v5331 = vmul.f32 %v1471, %v5188
    %v5332 = vmul.f32 %v1470, %v5192
    %v5333 = vmul.f32 %v1469, %v5196
    %v5334 = vmul.f32 %v1468, %v5200
    %v5335 = vmul.f32 %v1467, %v5204
    %v5336 = vmul.f32 %v1466, %v5208
    %v5337 = vmul.f32 %v1465, %v5212
    %v5338 = vmul.f32 %v1464, %v5216
    %v5339 = vmul.f32 %v1463, %v5220
    %v5340 = vmul.f32 %v1462, %v5224
    %v5341 = vmul.f32 %v1461, %v5228
    %v5342 = vmul.f32 %v1460, %v5232
    %v5343 = vmul.f32 %v1459, %v5236
    %v5344 = vmul.f32 %v1458, %v5240
    %v5345 = vmul.f32 %v1457, %v5244
    %v5346 = vmul.f32 %v1456, %v5248
    %v5347 = vmul.f32 %v1455, %v5252
    %v5348 = vmul.f32 %v1454, %v5256
    %v5349 = vmul.f32 %v1453, %v5260
    %v5350 = vmul.f32 %v1452, %v5264
    %v5351 = vmul.f32 %v1451, %v5268
    %v5352 = vmul.f32 %v1450, %v5272
    %v5353 = vmul.f32 %v1449, %v5276
    %v5354 = vmul.f32 %v1448, %v5280
    %v5355 = vmul.f32 %v1511, %v5284
    %v5356 = vmul.f32 %v1510, %v5288
    %v5357 = vmul.f32 %v1509, %v5292
    %5422 = vrot.lane.b32.xlu0 %v5294, 24
    %v5423 = vpop.permute.xlu0 %5422
    %5424 = vrot.lane.b32.xlu0 %v5295, 24
    %v5425 = vpop.permute.xlu0 %5424
    %5426 = vrot.lane.b32.xlu0 %v5296, 24
    %v5427 = vpop.permute.xlu0 %5426
    %5428 = vrot.lane.b32.xlu0 %v5297, 24
    %v5429 = vpop.permute.xlu0 %5428
    %5430 = vrot.lane.b32.xlu0 %v5298, 24
    %v5431 = vpop.permute.xlu0 %5430
    %5432 = vrot.lane.b32.xlu0 %v5299, 24
    %v5433 = vpop.permute.xlu0 %5432
    %5434 = vrot.lane.b32.xlu0 %v5300, 24
    %v5435 = vpop.permute.xlu0 %5434
    %5436 = vrot.lane.b32.xlu0 %v5301, 24
    %v5437 = vpop.permute.xlu0 %5436
    %5438 = vrot.lane.b32.xlu0 %v5302, 24
    %v5439 = vpop.permute.xlu0 %5438
    %5440 = vrot.lane.b32.xlu0 %v5303, 24
    %v5441 = vpop.permute.xlu0 %5440
    %5442 = vrot.lane.b32.xlu0 %v5304, 24
    %v5443 = vpop.permute.xlu0 %5442
    %5444 = vrot.lane.b32.xlu0 %v5305, 24
    %v5445 = vpop.permute.xlu0 %5444
    %5446 = vrot.lane.b32.xlu0 %v5306, 24
    %v5447 = vpop.permute.xlu0 %5446
    %5448 = vrot.lane.b32.xlu0 %v5307, 24
    %v5449 = vpop.permute.xlu0 %5448
    %5450 = vrot.lane.b32.xlu0 %v5308, 24
    %v5451 = vpop.permute.xlu0 %5450
    %5452 = vrot.lane.b32.xlu0 %v5309, 24
    %v5453 = vpop.permute.xlu0 %5452
    %5454 = vrot.lane.b32.xlu0 %v5310, 24
    %v5455 = vpop.permute.xlu0 %5454
    %5456 = vrot.lane.b32.xlu0 %v5311, 24
    %v5457 = vpop.permute.xlu0 %5456
    %5458 = vrot.lane.b32.xlu0 %v5312, 24
    %v5459 = vpop.permute.xlu0 %5458
    %5460 = vrot.lane.b32.xlu0 %v5313, 24
    %v5461 = vpop.permute.xlu0 %5460
    %5462 = vrot.lane.b32.xlu0 %v5314, 24
    %v5463 = vpop.permute.xlu0 %5462
    %5464 = vrot.lane.b32.xlu0 %v5315, 24
    %v5465 = vpop.permute.xlu0 %5464
    %5466 = vrot.lane.b32.xlu0 %v5316, 24
    %v5467 = vpop.permute.xlu0 %5466
    %5468 = vrot.lane.b32.xlu0 %v5317, 24
    %v5469 = vpop.permute.xlu0 %5468
    %5470 = vrot.lane.b32.xlu0 %v5318, 24
    %v5471 = vpop.permute.xlu0 %5470
    %5472 = vrot.lane.b32.xlu0 %v5319, 24
    %v5473 = vpop.permute.xlu0 %5472
    %5474 = vrot.lane.b32.xlu0 %v5320, 24
    %v5475 = vpop.permute.xlu0 %5474
    %5476 = vrot.lane.b32.xlu0 %v5321, 24
    %v5477 = vpop.permute.xlu0 %5476
    %5478 = vrot.lane.b32.xlu0 %v5322, 24
    %v5479 = vpop.permute.xlu0 %5478
    %5480 = vrot.lane.b32.xlu0 %v5323, 24
    %v5481 = vpop.permute.xlu0 %5480
    %5482 = vrot.lane.b32.xlu0 %v5324, 24
    %v5483 = vpop.permute.xlu0 %5482
    %5484 = vrot.lane.b32.xlu0 %v5325, 24
    %v5485 = vpop.permute.xlu0 %5484
    %5486 = vrot.lane.b32.xlu0 %v5326, 24
    %v5487 = vpop.permute.xlu0 %5486
    %5488 = vrot.lane.b32.xlu0 %v5327, 24
    %v5489 = vpop.permute.xlu0 %5488
    %5490 = vrot.lane.b32.xlu0 %v5328, 24
    %v5491 = vpop.permute.xlu0 %5490
    %5492 = vrot.lane.b32.xlu0 %v5329, 24
    %v5493 = vpop.permute.xlu0 %5492
    %5494 = vrot.lane.b32.xlu0 %v5330, 24
    %v5495 = vpop.permute.xlu0 %5494
    %5496 = vrot.lane.b32.xlu0 %v5331, 24
    %v5497 = vpop.permute.xlu0 %5496
    %5498 = vrot.lane.b32.xlu0 %v5332, 24
    %v5499 = vpop.permute.xlu0 %5498
    %5500 = vrot.lane.b32.xlu0 %v5333, 24
    %v5501 = vpop.permute.xlu0 %5500
    %5502 = vrot.lane.b32.xlu0 %v5334, 24
    %v5503 = vpop.permute.xlu0 %5502
    %5504 = vrot.lane.b32.xlu0 %v5335, 24
    %v5505 = vpop.permute.xlu0 %5504
    %5506 = vrot.lane.b32.xlu0 %v5336, 24
    %v5507 = vpop.permute.xlu0 %5506
    %5508 = vrot.lane.b32.xlu0 %v5337, 24
    %v5509 = vpop.permute.xlu0 %5508
    %5510 = vrot.lane.b32.xlu0 %v5338, 24
    %v5511 = vpop.permute.xlu0 %5510
    %5512 = vrot.lane.b32.xlu0 %v5339, 24
    %v5513 = vpop.permute.xlu0 %5512
    %5514 = vrot.lane.b32.xlu0 %v5340, 24
    %v5515 = vpop.permute.xlu0 %5514
    %5516 = vrot.lane.b32.xlu0 %v5341, 24
    %v5517 = vpop.permute.xlu0 %5516
    %5518 = vrot.lane.b32.xlu0 %v5342, 24
    %v5519 = vpop.permute.xlu0 %5518
    %5520 = vrot.lane.b32.xlu0 %v5343, 24
    %v5521 = vpop.permute.xlu0 %5520
    %5522 = vrot.lane.b32.xlu0 %v5344, 24
    %v5523 = vpop.permute.xlu0 %5522
    %5524 = vrot.lane.b32.xlu0 %v5345, 24
    %v5525 = vpop.permute.xlu0 %5524
    %5526 = vrot.lane.b32.xlu0 %v5346, 24
    %v5527 = vpop.permute.xlu0 %5526
    %5528 = vrot.lane.b32.xlu0 %v5347, 24
    %v5529 = vpop.permute.xlu0 %5528
    %5530 = vrot.lane.b32.xlu0 %v5348, 24
    %v5531 = vpop.permute.xlu0 %5530
    %5532 = vrot.lane.b32.xlu0 %v5349, 24
    %v5533 = vpop.permute.xlu0 %5532
    %5534 = vrot.lane.b32.xlu0 %v5350, 24
    %v5535 = vpop.permute.xlu0 %5534
    %5536 = vrot.lane.b32.xlu0 %v5351, 24
    %v5537 = vpop.permute.xlu0 %5536
    %5538 = vrot.lane.b32.xlu0 %v5352, 24
    %v5539 = vpop.permute.xlu0 %5538
    %5540 = vrot.lane.b32.xlu0 %v5353, 24
    %v5541 = vpop.permute.xlu0 %5540
    %5542 = vrot.lane.b32.xlu0 %v5354, 24
    %v5543 = vpop.permute.xlu0 %5542
    %5544 = vrot.lane.b32.xlu0 %v5355, 24
    %v5545 = vpop.permute.xlu0 %5544
    %5546 = vrot.lane.b32.xlu0 %v5356, 24
    %v5547 = vpop.permute.xlu0 %5546
    %5548 = vrot.lane.b32.xlu0 %v5357, 24
    %v5549 = vpop.permute.xlu0 %5548
    %vm5614 = vcmask 220352
    %5615 = vst.msk [vmem:[#allocation2] sm:$0xff] %vm5614, %v5423
    %5616 = vst.msk [vmem:[#allocation2 + $0x8] sm:$0xff] %vm5614, %v5425
    %5617 = vst.msk [vmem:[#allocation2 + $0x10] sm:$0xff] %vm5614, %v5427
    %5618 = vst.msk [vmem:[#allocation2 + $0x18] sm:$0xff] %vm5614, %v5429
    %5619 = vst.msk [vmem:[#allocation2 + $0x20] sm:$0xff] %vm5614, %v5431
    %5620 = vst.msk [vmem:[#allocation2 + $0x28] sm:$0xff] %vm5614, %v5433
    %5621 = vst.msk [vmem:[#allocation2 + $0x30] sm:$0xff] %vm5614, %v5435
    %5622 = vst.msk [vmem:[#allocation2 + $0x38] sm:$0xff] %vm5614, %v5437
    %5623 = vst.msk [vmem:[#allocation2 + $0x40] sm:$0xff] %vm5614, %v5439
    %5624 = vst.msk [vmem:[#allocation2 + $0x48] sm:$0xff] %vm5614, %v5441
    %5625 = vst.msk [vmem:[#allocation2 + $0x50] sm:$0xff] %vm5614, %v5443
    %5626 = vst.msk [vmem:[#allocation2 + $0x58] sm:$0xff] %vm5614, %v5445
    %5627 = vst.msk [vmem:[#allocation2 + $0x60] sm:$0xff] %vm5614, %v5447
    %5628 = vst.msk [vmem:[#allocation2 + $0x68] sm:$0xff] %vm5614, %v5449
    %5629 = vst.msk [vmem:[#allocation2 + $0x70] sm:$0xff] %vm5614, %v5451
    %5630 = vst.msk [vmem:[#allocation2 + $0x78] sm:$0xff] %vm5614, %v5453
    %5631 = vst.msk [vmem:[#allocation2 + $0x80] sm:$0xff] %vm5614, %v5455
    %5632 = vst.msk [vmem:[#allocation2 + $0x88] sm:$0xff] %vm5614, %v5457
    %5633 = vst.msk [vmem:[#allocation2 + $0x90] sm:$0xff] %vm5614, %v5459
    %5634 = vst.msk [vmem:[#allocation2 + $0x98] sm:$0xff] %vm5614, %v5461
    %5635 = vst.msk [vmem:[#allocation2 + $0xa0] sm:$0xff] %vm5614, %v5463
    %5636 = vst.msk [vmem:[#allocation2 + $0xa8] sm:$0xff] %vm5614, %v5465
    %5637 = vst.msk [vmem:[#allocation2 + $0xb0] sm:$0xff] %vm5614, %v5467
    %5638 = vst.msk [vmem:[#allocation2 + $0xb8] sm:$0xff] %vm5614, %v5469
    %5639 = vst.msk [vmem:[#allocation2 + $0xc0] sm:$0xff] %vm5614, %v5471
    %5640 = vst.msk [vmem:[#allocation2 + $0xc8] sm:$0xff] %vm5614, %v5473
    %5641 = vst.msk [vmem:[#allocation2 + $0xd0] sm:$0xff] %vm5614, %v5475
    %5642 = vst.msk [vmem:[#allocation2 + $0xd8] sm:$0xff] %vm5614, %v5477
    %5643 = vst.msk [vmem:[#allocation2 + $0xe0] sm:$0xff] %vm5614, %v5479
    %5644 = vst.msk [vmem:[#allocation2 + $0xe8] sm:$0xff] %vm5614, %v5481
    %5645 = vst.msk [vmem:[#allocation2 + $0xf0] sm:$0xff] %vm5614, %v5483
    %5646 = vst.msk [vmem:[#allocation2 + $0xf8] sm:$0xff] %vm5614, %v5485
    %5647 = vst.msk [vmem:[#allocation2 + $0x100] sm:$0xff] %vm5614, %v5487
    %5648 = vst.msk [vmem:[#allocation2 + $0x108] sm:$0xff] %vm5614, %v5489
    %5649 = vst.msk [vmem:[#allocation2 + $0x110] sm:$0xff] %vm5614, %v5491
    %5650 = vst.msk [vmem:[#allocation2 + $0x118] sm:$0xff] %vm5614, %v5493
    %5651 = vst.msk [vmem:[#allocation2 + $0x120] sm:$0xff] %vm5614, %v5495
    %5652 = vst.msk [vmem:[#allocation2 + $0x128] sm:$0xff] %vm5614, %v5497
    %5653 = vst.msk [vmem:[#allocation2 + $0x130] sm:$0xff] %vm5614, %v5499
    %5654 = vst.msk [vmem:[#allocation2 + $0x138] sm:$0xff] %vm5614, %v5501
    %5655 = vst.msk [vmem:[#allocation2 + $0x140] sm:$0xff] %vm5614, %v5503
    %5656 = vst.msk [vmem:[#allocation2 + $0x148] sm:$0xff] %vm5614, %v5505
    %5657 = vst.msk [vmem:[#allocation2 + $0x150] sm:$0xff] %vm5614, %v5507
    %5658 = vst.msk [vmem:[#allocation2 + $0x158] sm:$0xff] %vm5614, %v5509
    %5659 = vst.msk [vmem:[#allocation2 + $0x160] sm:$0xff] %vm5614, %v5511
    %5660 = vst.msk [vmem:[#allocation2 + $0x168] sm:$0xff] %vm5614, %v5513
    %5661 = vst.msk [vmem:[#allocation2 + $0x170] sm:$0xff] %vm5614, %v5515
    %5662 = vst.msk [vmem:[#allocation2 + $0x178] sm:$0xff] %vm5614, %v5517
    %5663 = vst.msk [vmem:[#allocation2 + $0x180] sm:$0xff] %vm5614, %v5519
    %5664 = vst.msk [vmem:[#allocation2 + $0x188] sm:$0xff] %vm5614, %v5521
    %5665 = vst.msk [vmem:[#allocation2 + $0x190] sm:$0xff] %vm5614, %v5523
    %5666 = vst.msk [vmem:[#allocation2 + $0x198] sm:$0xff] %vm5614, %v5525
    %5667 = vst.msk [vmem:[#allocation2 + $0x1a0] sm:$0xff] %vm5614, %v5527
    %5668 = vst.msk [vmem:[#allocation2 + $0x1a8] sm:$0xff] %vm5614, %v5529
    %5669 = vst.msk [vmem:[#allocation2 + $0x1b0] sm:$0xff] %vm5614, %v5531
    %5670 = vst.msk [vmem:[#allocation2 + $0x1b8] sm:$0xff] %vm5614, %v5533
    %5671 = vst.msk [vmem:[#allocation2 + $0x1c0] sm:$0xff] %vm5614, %v5535
    %5672 = vst.msk [vmem:[#allocation2 + $0x1c8] sm:$0xff] %vm5614, %v5537
    %5673 = vst.msk [vmem:[#allocation2 + $0x1d0] sm:$0xff] %vm5614, %v5539
    %5674 = vst.msk [vmem:[#allocation2 + $0x1d8] sm:$0xff] %vm5614, %v5541
    %5675 = vst.msk [vmem:[#allocation2 + $0x1e0] sm:$0xff] %vm5614, %v5543
    %5676 = vst.msk [vmem:[#allocation2 + $0x1e8] sm:$0xff] %vm5614, %v5545
    %5677 = vst.msk [vmem:[#allocation2 + $0x1f0] sm:$0xff] %vm5614, %v5547
    %5678 = vst.msk [vmem:[#allocation2 + $0x1f8] sm:$0xff] %vm5614, %v5549
    %v5679 = vld [vmem:[#allocation2] sm:$0xff]
    %v5680 = vld [vmem:[#allocation2 + $0x8] sm:$0xff]
    %v5681 = vld [vmem:[#allocation2 + $0x10] sm:$0xff]
    %v5682 = vld [vmem:[#allocation2 + $0x18] sm:$0xff]
    %v5683 = vld [vmem:[#allocation2 + $0x20] sm:$0xff]
    %v5684 = vld [vmem:[#allocation2 + $0x28] sm:$0xff]
    %v5685 = vld [vmem:[#allocation2 + $0x30] sm:$0xff]
    %v5686 = vld [vmem:[#allocation2 + $0x38] sm:$0xff]
    %v5687 = vld [vmem:[#allocation2 + $0x40] sm:$0xff]
    %v5688 = vld [vmem:[#allocation2 + $0x48] sm:$0xff]
    %v5689 = vld [vmem:[#allocation2 + $0x50] sm:$0xff]
    %v5690 = vld [vmem:[#allocation2 + $0x58] sm:$0xff]
    %v5691 = vld [vmem:[#allocation2 + $0x60] sm:$0xff]
    %v5692 = vld [vmem:[#allocation2 + $0x68] sm:$0xff]
    %v5693 = vld [vmem:[#allocation2 + $0x70] sm:$0xff]
    %v5694 = vld [vmem:[#allocation2 + $0x78] sm:$0xff]
    %v5695 = vld [vmem:[#allocation2 + $0x80] sm:$0xff]
    %v5696 = vld [vmem:[#allocation2 + $0x88] sm:$0xff]
    %v5697 = vld [vmem:[#allocation2 + $0x90] sm:$0xff]
    %v5698 = vld [vmem:[#allocation2 + $0x98] sm:$0xff]
    %v5699 = vld [vmem:[#allocation2 + $0xa0] sm:$0xff]
    %v5700 = vld [vmem:[#allocation2 + $0xa8] sm:$0xff]
    %v5701 = vld [vmem:[#allocation2 + $0xb0] sm:$0xff]
    %v5702 = vld [vmem:[#allocation2 + $0xb8] sm:$0xff]
    %v5703 = vld [vmem:[#allocation2 + $0xc0] sm:$0xff]
    %v5704 = vld [vmem:[#allocation2 + $0xc8] sm:$0xff]
    %v5705 = vld [vmem:[#allocation2 + $0xd0] sm:$0xff]
    %v5706 = vld [vmem:[#allocation2 + $0xd8] sm:$0xff]
    %v5707 = vld [vmem:[#allocation2 + $0xe0] sm:$0xff]
    %v5708 = vld [vmem:[#allocation2 + $0xe8] sm:$0xff]
    %v5709 = vld [vmem:[#allocation2 + $0xf0] sm:$0xff]
    %v5710 = vld [vmem:[#allocation2 + $0xf8] sm:$0xff]
    %v5711 = vld [vmem:[#allocation2 + $0x100] sm:$0xff]
    %v5712 = vld [vmem:[#allocation2 + $0x108] sm:$0xff]
    %v5713 = vld [vmem:[#allocation2 + $0x110] sm:$0xff]
    %v5714 = vld [vmem:[#allocation2 + $0x118] sm:$0xff]
    %v5715 = vld [vmem:[#allocation2 + $0x120] sm:$0xff]
    %v5716 = vld [vmem:[#allocation2 + $0x128] sm:$0xff]
    %v5717 = vld [vmem:[#allocation2 + $0x130] sm:$0xff]
    %v5718 = vld [vmem:[#allocation2 + $0x138] sm:$0xff]
    %v5719 = vld [vmem:[#allocation2 + $0x140] sm:$0xff]
    %v5720 = vld [vmem:[#allocation2 + $0x148] sm:$0xff]
    %v5721 = vld [vmem:[#allocation2 + $0x150] sm:$0xff]
    %v5722 = vld [vmem:[#allocation2 + $0x158] sm:$0xff]
    %v5723 = vld [vmem:[#allocation2 + $0x160] sm:$0xff]
    %v5724 = vld [vmem:[#allocation2 + $0x168] sm:$0xff]
    %v5725 = vld [vmem:[#allocation2 + $0x170] sm:$0xff]
    %v5726 = vld [vmem:[#allocation2 + $0x178] sm:$0xff]
    %v5727 = vld [vmem:[#allocation2 + $0x180] sm:$0xff]
    %v5728 = vld [vmem:[#allocation2 + $0x188] sm:$0xff]
    %v5729 = vld [vmem:[#allocation2 + $0x190] sm:$0xff]
    %v5730 = vld [vmem:[#allocation2 + $0x198] sm:$0xff]
    %v5731 = vld [vmem:[#allocation2 + $0x1a0] sm:$0xff]
    %v5732 = vld [vmem:[#allocation2 + $0x1a8] sm:$0xff]
    %v5733 = vld [vmem:[#allocation2 + $0x1b0] sm:$0xff]
    %v5734 = vld [vmem:[#allocation2 + $0x1b8] sm:$0xff]
    %v5735 = vld [vmem:[#allocation2 + $0x1c0] sm:$0xff]
    %v5736 = vld [vmem:[#allocation2 + $0x1c8] sm:$0xff]
    %v5737 = vld [vmem:[#allocation2 + $0x1d0] sm:$0xff]
    %v5738 = vld [vmem:[#allocation2 + $0x1d8] sm:$0xff]
    %v5739 = vld [vmem:[#allocation2 + $0x1e0] sm:$0xff]
    %v5740 = vld [vmem:[#allocation2 + $0x1e8] sm:$0xff]
    %v5741 = vld [vmem:[#allocation2 + $0x1f0] sm:$0xff]
    %v5742 = vld [vmem:[#allocation2 + $0x1f8] sm:$0xff]
    %v5743 = vld [vmem:[%s1] sm:$0xff]
    %v5744 = vld [vmem:[%s1 + $0x8] sm:$0xff]
    %v5745 = vld [vmem:[%s1 + $0x10] sm:$0xff]
    %v5746 = vld [vmem:[%s1 + $0x18] sm:$0x7]
    %v5748 = vlaneseq
    %v5749 = vshrl.u32 %v5748, 7
    %v5750 = vsub.s32 0, %v5749
    %v5751 = vrot.slane %v30, %v5750
    %vm5753 = vcmask 220160
    %v5755 = vsel %vm5753, %v5679, 0
    %v5758 = vsel %vm5753, %v5680, 0
    %v5761 = vsel %vm5753, %v5681, 0
    %v5764 = vsel %vm5753, %v5682, 0
    %v5767 = vsel %vm5753, %v5683, 0
    %v5770 = vsel %vm5753, %v5684, 0
    %v5773 = vsel %vm5753, %v5685, 0
    %v5776 = vsel %vm5753, %v5686, 0
    %v5779 = vsel %vm5753, %v5687, 0
    %v5782 = vsel %vm5753, %v5688, 0
    %v5785 = vsel %vm5753, %v5689, 0
    %v5788 = vsel %vm5753, %v5690, 0
    %v5791 = vsel %vm5753, %v5691, 0
    %v5794 = vsel %vm5753, %v5692, 0
    %v5797 = vsel %vm5753, %v5693, 0
    %v5800 = vsel %vm5753, %v5694, 0
    %v5803 = vsel %vm5753, %v5695, 0
    %v5806 = vsel %vm5753, %v5696, 0
    %v5809 = vsel %vm5753, %v5697, 0
    %v5812 = vsel %vm5753, %v5698, 0
    %v5815 = vsel %vm5753, %v5699, 0
    %v5818 = vsel %vm5753, %v5700, 0
    %v5821 = vsel %vm5753, %v5701, 0
    %v5824 = vsel %vm5753, %v5702, 0
    %v5827 = vsel %vm5753, %v5703, 0
    %v5830 = vsel %vm5753, %v5704, 0
    %v5833 = vsel %vm5753, %v5705, 0
    %v5836 = vsel %vm5753, %v5706, 0
    %v5839 = vsel %vm5753, %v5707, 0
    %v5842 = vsel %vm5753, %v5708, 0
    %v5845 = vsel %vm5753, %v5709, 0
    %v5848 = vsel %vm5753, %v5710, 0
    %v5851 = vsel %vm5753, %v5711, 0
    %v5854 = vsel %vm5753, %v5712, 0
    %v5857 = vsel %vm5753, %v5713, 0
    %v5860 = vsel %vm5753, %v5714, 0
    %v5863 = vsel %vm5753, %v5715, 0
    %v5866 = vsel %vm5753, %v5716, 0
    %v5869 = vsel %vm5753, %v5717, 0
    %v5872 = vsel %vm5753, %v5718, 0
    %v5875 = vsel %vm5753, %v5719, 0
    %v5878 = vsel %vm5753, %v5720, 0
    %v5881 = vsel %vm5753, %v5721, 0
    %v5884 = vsel %vm5753, %v5722, 0
    %v5887 = vsel %vm5753, %v5723, 0
    %v5890 = vsel %vm5753, %v5724, 0
    %v5893 = vsel %vm5753, %v5725, 0
    %v5896 = vsel %vm5753, %v5726, 0
    %v5899 = vsel %vm5753, %v5727, 0
    %v5902 = vsel %vm5753, %v5728, 0
    %v5905 = vsel %vm5753, %v5729, 0
    %v5908 = vsel %vm5753, %v5730, 0
    %v5911 = vsel %vm5753, %v5731, 0
    %v5914 = vsel %vm5753, %v5732, 0
    %v5917 = vsel %vm5753, %v5733, 0
    %v5920 = vsel %vm5753, %v5734, 0
    %v5923 = vsel %vm5753, %v5735, 0
    %v5926 = vsel %vm5753, %v5736, 0
    %v5929 = vsel %vm5753, %v5737, 0
    %v5932 = vsel %vm5753, %v5738, 0
    %v5935 = vsel %vm5753, %v5739, 0
    %v5938 = vsel %vm5753, %v5740, 0
    %v5941 = vsel %vm5753, %v5741, 0
    %v5944 = vsel %vm5753, %v5742, 0
    %vm5946 = vcmask 1042432
    %v5948 = vsel %vm5946, %v5746, 0
    %5950 = vmatprep.subr.mxu0 0.0
    %5951 = vmatpush1.msra.mxu0 %v5743
    %5952 = vmatprep.subr.mxu0 0.0
    %5953 = vmatpush1.msra.mxu0 %v5744
    %5954 = vmatprep.subr.mxu0 0.0
    %5955 = vmatpush1.msra.mxu0 %v5745
    %5956 = vmatprep.subr.mxu0 0.0
    %5957 = vmatpush1.msra.mxu0 %v5948
    %5958 = vmatprep.subr.mxu0 0.0
    %5959 = vmatpush1.msra.mxu0 0.0
    %5960 = vmatprep.subr.mxu0 0.0
    %5961 = vmatpush1.msra.mxu0 0.0
    %5962 = vmatprep.subr.mxu0 0.0
    %5963 = vmatpush1.msra.mxu0 0.0
    %5964 = vmatprep.subr.mxu0 0.0
    %5965 = vmatpush1.msra.mxu0 0.0
    %5966 = vmatprep.subr.mxu0 0.0
    %5967 = vmatpush1.msra.mxu0 0.0
    %5968 = vmatprep.subr.mxu0 0.0
    %5969 = vmatpush1.msra.mxu0 0.0
    %5970 = vmatprep.subr.mxu0 0.0
    %5971 = vmatpush1.msra.mxu0 0.0
    %5972 = vmatprep.subr.mxu0 0.0
    %5973 = vmatpush1.msra.mxu0 0.0
    %5974 = vmatprep.subr.mxu0 0.0
    %5975 = vmatpush1.msra.mxu0 0.0
    %5976 = vmatprep.subr.mxu0 0.0
    %5977 = vmatpush1.msra.mxu0 0.0
    %5978 = vmatprep.subr.mxu0 0.0
    %5979 = vmatpush1.msra.mxu0 0.0
    %5980 = vmatprep.subr.mxu0 0.0
    %5981 = vmatpush1.msra.mxu0 0.0
    %5982 = vmatprep.subr.mxu0 0.0
    %5983 = vmatpush1.msra.mxu0 0.0
    %5984 = vmatprep.subr.mxu0 0.0
    %5985 = vmatpush1.msra.mxu0 0.0
    %5986 = vmatprep.subr.mxu0 0.0
    %5987 = vmatpush1.msra.mxu0 0.0
    %5988 = vmatprep.subr.mxu0 0.0
    %5989 = vmatpush1.msra.mxu0 0.0
    %5990 = vmatprep.subr.mxu0 0.0
    %5991 = vmatpush1.msra.mxu0 0.0
    %5992 = vmatprep.subr.mxu0 0.0
    %5993 = vmatpush1.msra.mxu0 0.0
    %5994 = vmatprep.subr.mxu0 0.0
    %5995 = vmatpush1.msra.mxu0 0.0
    %5996 = vmatprep.subr.mxu0 0.0
    %5997 = vmatpush1.msra.mxu0 0.0
    %5998 = vmatprep.subr.mxu0 0.0
    %5999 = vmatpush1.msra.mxu0 0.0
    %6000 = vmatprep.subr.mxu0 0.0
    %6001 = vmatpush1.msra.mxu0 0.0
    %6002 = vmatprep.subr.mxu0 0.0
    %6003 = vmatpush1.msra.mxu0 0.0
    %6004 = vmatprep.subr.mxu0 0.0
    %6005 = vmatpush1.msra.mxu0 0.0
    %6006 = vmatprep.subr.mxu0 0.0
    %6007 = vmatpush1.msra.mxu0 0.0
    %6008 = vmatprep.subr.mxu0 0.0
    %6009 = vmatpush1.msra.mxu0 0.0
    %6010 = vmatprep.subr.mxu0 0.0
    %6011 = vmatpush1.msra.mxu0 0.0
    %6012 = vmatprep.subr.mxu0 0.0
    %6013 = vmatpush1.msra.mxu0 0.0
    %6014 = vmatprep.mubr.f32.mxu0 0.0
    %6015 = vmatmul.mubr.f32.gmra.mrb[0].mxu0 %v5755
    %v6016 = vpop.f32.mrb[0].mxu0
    %v6017 = vadd.f32 %v5751, %v6016
    %v6018 = vpop.f32.mrb[0].mxu0
    %6019 = vmatprep.mubr.f32.mxu0 0.0
    %6020 = vmatmul.mubr.f32.gmra.mrb[0].mxu0 %v5758
    %v6021 = vpop.f32.mrb[0].mxu0
    %v6022 = vadd.f32 %v5751, %v6021
    %v6023 = vpop.f32.mrb[0].mxu0
    %6024 = vmatprep.mubr.f32.mxu0 0.0
    %6025 = vmatmul.mubr.f32.gmra.mrb[0].mxu0 %v5761
    %v6026 = vpop.f32.mrb[0].mxu0
    %v6027 = vadd.f32 %v5751, %v6026
    %v6028 = vpop.f32.mrb[0].mxu0
    %6029 = vmatprep.mubr.f32.mxu0 0.0
    %6030 = vmatmul.mubr.f32.gmra.mrb[0].mxu0 %v5764
    %v6031 = vpop.f32.mrb[0].mxu0
    %v6032 = vadd.f32 %v5751, %v6031
    %v6033 = vpop.f32.mrb[0].mxu0
    %6034 = vmatprep.mubr.f32.mxu0 0.0
    %6035 = vmatmul.mubr.f32.gmra.mrb[0].mxu0 %v5767
    %v6036 = vpop.f32.mrb[0].mxu0
    %v6037 = vadd.f32 %v5751, %v6036
    %v6038 = vpop.f32.mrb[0].mxu0
    %6039 = vmatprep.mubr.f32.mxu0 0.0
    %6040 = vmatmul.mubr.f32.gmra.mrb[0].mxu0 %v5770
    %v6041 = vpop.f32.mrb[0].mxu0
    %v6042 = vadd.f32 %v5751, %v6041
    %v6043 = vpop.f32.mrb[0].mxu0
    %6044 = vmatprep.mubr.f32.mxu0 0.0
    %6045 = vmatmul.mubr.f32.gmra.mrb[0].mxu0 %v5773
    %v6046 = vpop.f32.mrb[0].mxu0
    %v6047 = vadd.f32 %v5751, %v6046
    %v6048 = vpop.f32.mrb[0].mxu0
    %6049 = vmatprep.mubr.f32.mxu0 0.0
    %6050 = vmatmul.mubr.f32.gmra.mrb[0].mxu0 %v5776
    %v6051 = vpop.f32.mrb[0].mxu0
    %v6052 = vadd.f32 %v5751, %v6051
    %v6053 = vpop.f32.mrb[0].mxu0
    %6054 = vmatprep.mubr.f32.mxu0 0.0
    %6055 = vmatmul.mubr.f32.gmra.mrb[0].mxu0 %v5779
    %v6056 = vpop.f32.mrb[0].mxu0
    %v6057 = vadd.f32 %v5751, %v6056
    %v6058 = vpop.f32.mrb[0].mxu0
    %6059 = vmatprep.mubr.f32.mxu0 0.0
    %6060 = vmatmul.mubr.f32.gmra.mrb[0].mxu0 %v5782
    %v6061 = vpop.f32.mrb[0].mxu0
    %v6062 = vadd.f32 %v5751, %v6061
    %v6063 = vpop.f32.mrb[0].mxu0
    %6064 = vmatprep.mubr.f32.mxu0 0.0
    %6065 = vmatmul.mubr.f32.gmra.mrb[0].mxu0 %v5785
    %v6066 = vpop.f32.mrb[0].mxu0
    %v6067 = vadd.f32 %v5751, %v6066
    %v6068 = vpop.f32.mrb[0].mxu0
    %6069 = vmatprep.mubr.f32.mxu0 0.0
    %6070 = vmatmul.mubr.f32.gmra.mrb[0].mxu0 %v5788
    %v6071 = vpop.f32.mrb[0].mxu0
    %v6072 = vadd.f32 %v5751, %v6071
    %v6073 = vpop.f32.mrb[0].mxu0
    %6074 = vmatprep.mubr.f32.mxu0 0.0
    %6075 = vmatmul.mubr.f32.gmra.mrb[0].mxu0 %v5791
    %v6076 = vpop.f32.mrb[0].mxu0
    %v6077 = vadd.f32 %v5751, %v6076
    %v6078 = vpop.f32.mrb[0].mxu0
    %6079 = vmatprep.mubr.f32.mxu0 0.0
    %6080 = vmatmul.mubr.f32.gmra.mrb[0].mxu0 %v5794
    %v6081 = vpop.f32.mrb[0].mxu0
    %v6082 = vadd.f32 %v5751, %v6081
    %v6083 = vpop.f32.mrb[0].mxu0
    %6084 = vmatprep.mubr.f32.mxu0 0.0
    %6085 = vmatmul.mubr.f32.gmra.mrb[0].mxu0 %v5797
    %v6086 = vpop.f32.mrb[0].mxu0
    %v6087 = vadd.f32 %v5751, %v6086
    %v6088 = vpop.f32.mrb[0].mxu0
    %6089 = vmatprep.mubr.f32.mxu0 0.0
    %6090 = vmatmul.mubr.f32.gmra.mrb[0].mxu0 %v5800
    %v6091 = vpop.f32.mrb[0].mxu0
    %v6092 = vadd.f32 %v5751, %v6091
    %v6093 = vpop.f32.mrb[0].mxu0
    %6094 = vmatprep.mubr.f32.mxu0 0.0
    %6095 = vmatmul.mubr.f32.gmra.mrb[0].mxu0 %v5803
    %v6096 = vpop.f32.mrb[0].mxu0
    %v6097 = vadd.f32 %v5751, %v6096
    %v6098 = vpop.f32.mrb[0].mxu0
    %6099 = vmatprep.mubr.f32.mxu0 0.0
    %6100 = vmatmul.mubr.f32.gmra.mrb[0].mxu0 %v5806
    %v6101 = vpop.f32.mrb[0].mxu0
    %v6102 = vadd.f32 %v5751, %v6101
    %v6103 = vpop.f32.mrb[0].mxu0
    %6104 = vmatprep.mubr.f32.mxu0 0.0
    %6105 = vmatmul.mubr.f32.gmra.mrb[0].mxu0 %v5809
    %v6106 = vpop.f32.mrb[0].mxu0
    %v6107 = vadd.f32 %v5751, %v6106
    %v6108 = vpop.f32.mrb[0].mxu0
    %6109 = vmatprep.mubr.f32.mxu0 0.0
    %6110 = vmatmul.mubr.f32.gmra.mrb[0].mxu0 %v5812
    %v6111 = vpop.f32.mrb[0].mxu0
    %v6112 = vadd.f32 %v5751, %v6111
    %v6113 = vpop.f32.mrb[0].mxu0
    %6114 = vmatprep.mubr.f32.mxu0 0.0
    %6115 = vmatmul.mubr.f32.gmra.mrb[0].mxu0 %v5815
    %v6116 = vpop.f32.mrb[0].mxu0
    %v6117 = vadd.f32 %v5751, %v6116
    %v6118 = vpop.f32.mrb[0].mxu0
    %6119 = vmatprep.mubr.f32.mxu0 0.0
    %6120 = vmatmul.mubr.f32.gmra.mrb[0].mxu0 %v5818
    %v6121 = vpop.f32.mrb[0].mxu0
    %v6122 = vadd.f32 %v5751, %v6121
    %v6123 = vpop.f32.mrb[0].mxu0
    %6124 = vmatprep.mubr.f32.mxu0 0.0
    %6125 = vmatmul.mubr.f32.gmra.mrb[0].mxu0 %v5821
    %v6126 = vpop.f32.mrb[0].mxu0
    %v6127 = vadd.f32 %v5751, %v6126
    %v6128 = vpop.f32.mrb[0].mxu0
    %6129 = vmatprep.mubr.f32.mxu0 0.0
    %6130 = vmatmul.mubr.f32.gmra.mrb[0].mxu0 %v5824
    %v6131 = vpop.f32.mrb[0].mxu0
    %v6132 = vadd.f32 %v5751, %v6131
    %v6133 = vpop.f32.mrb[0].mxu0
    %6134 = vmatprep.mubr.f32.mxu0 0.0
    %6135 = vmatmul.mubr.f32.gmra.mrb[0].mxu0 %v5827
    %v6136 = vpop.f32.mrb[0].mxu0
    %v6137 = vadd.f32 %v5751, %v6136
    %v6138 = vpop.f32.mrb[0].mxu0
    %6139 = vmatprep.mubr.f32.mxu0 0.0
    %6140 = vmatmul.mubr.f32.gmra.mrb[0].mxu0 %v5830
    %v6141 = vpop.f32.mrb[0].mxu0
    %v6142 = vadd.f32 %v5751, %v6141
    %v6143 = vpop.f32.mrb[0].mxu0
    %6144 = vmatprep.mubr.f32.mxu0 0.0
    %6145 = vmatmul.mubr.f32.gmra.mrb[0].mxu0 %v5833
    %v6146 = vpop.f32.mrb[0].mxu0
    %v6147 = vadd.f32 %v5751, %v6146
    %v6148 = vpop.f32.mrb[0].mxu0
    %6149 = vmatprep.mubr.f32.mxu0 0.0
    %6150 = vmatmul.mubr.f32.gmra.mrb[0].mxu0 %v5836
    %v6151 = vpop.f32.mrb[0].mxu0
    %v6152 = vadd.f32 %v5751, %v6151
    %v6153 = vpop.f32.mrb[0].mxu0
    %6154 = vmatprep.mubr.f32.mxu0 0.0
    %6155 = vmatmul.mubr.f32.gmra.mrb[0].mxu0 %v5839
    %v6156 = vpop.f32.mrb[0].mxu0
    %v6157 = vadd.f32 %v5751, %v6156
    %v6158 = vpop.f32.mrb[0].mxu0
    %6159 = vmatprep.mubr.f32.mxu0 0.0
    %6160 = vmatmul.mubr.f32.gmra.mrb[0].mxu0 %v5842
    %v6161 = vpop.f32.mrb[0].mxu0
    %v6162 = vadd.f32 %v5751, %v6161
    %v6163 = vpop.f32.mrb[0].mxu0
    %6164 = vmatprep.mubr.f32.mxu0 0.0
    %6165 = vmatmul.mubr.f32.gmra.mrb[0].mxu0 %v5845
    %v6166 = vpop.f32.mrb[0].mxu0
    %v6167 = vadd.f32 %v5751, %v6166
    %v6168 = vpop.f32.mrb[0].mxu0
    %6169 = vmatprep.mubr.f32.mxu0 0.0
    %6170 = vmatmul.mubr.f32.gmra.mrb[0].mxu0 %v5848
    %v6171 = vpop.f32.mrb[0].mxu0
    %v6172 = vadd.f32 %v5751, %v6171
    %v6173 = vpop.f32.mrb[0].mxu0
    %6174 = vmatprep.mubr.f32.mxu0 0.0
    %6175 = vmatmul.mubr.f32.gmra.mrb[0].mxu0 %v5851
    %v6176 = vpop.f32.mrb[0].mxu0
    %v6177 = vadd.f32 %v5751, %v6176
    %v6178 = vpop.f32.mrb[0].mxu0
    %6179 = vmatprep.mubr.f32.mxu0 0.0
    %6180 = vmatmul.mubr.f32.gmra.mrb[0].mxu0 %v5854
    %v6181 = vpop.f32.mrb[0].mxu0
    %v6182 = vadd.f32 %v5751, %v6181
    %v6183 = vpop.f32.mrb[0].mxu0
    %6184 = vmatprep.mubr.f32.mxu0 0.0
    %6185 = vmatmul.mubr.f32.gmra.mrb[0].mxu0 %v5857
    %v6186 = vpop.f32.mrb[0].mxu0
    %v6187 = vadd.f32 %v5751, %v6186
    %v6188 = vpop.f32.mrb[0].mxu0
    %6189 = vmatprep.mubr.f32.mxu0 0.0
    %6190 = vmatmul.mubr.f32.gmra.mrb[0].mxu0 %v5860
    %v6191 = vpop.f32.mrb[0].mxu0
    %v6192 = vadd.f32 %v5751, %v6191
    %v6193 = vpop.f32.mrb[0].mxu0
    %6194 = vmatprep.mubr.f32.mxu0 0.0
    %6195 = vmatmul.mubr.f32.gmra.mrb[0].mxu0 %v5863
    %v6196 = vpop.f32.mrb[0].mxu0
    %v6197 = vadd.f32 %v5751, %v6196
    %v6198 = vpop.f32.mrb[0].mxu0
    %6199 = vmatprep.mubr.f32.mxu0 0.0
    %6200 = vmatmul.mubr.f32.gmra.mrb[0].mxu0 %v5866
    %v6201 = vpop.f32.mrb[0].mxu0
    %v6202 = vadd.f32 %v5751, %v6201
    %v6203 = vpop.f32.mrb[0].mxu0
    %6204 = vmatprep.mubr.f32.mxu0 0.0
    %6205 = vmatmul.mubr.f32.gmra.mrb[0].mxu0 %v5869
    %v6206 = vpop.f32.mrb[0].mxu0
    %v6207 = vadd.f32 %v5751, %v6206
    %v6208 = vpop.f32.mrb[0].mxu0
    %6209 = vmatprep.mubr.f32.mxu0 0.0
    %6210 = vmatmul.mubr.f32.gmra.mrb[0].mxu0 %v5872
    %v6211 = vpop.f32.mrb[0].mxu0
    %v6212 = vadd.f32 %v5751, %v6211
    %v6213 = vpop.f32.mrb[0].mxu0
    %6214 = vmatprep.mubr.f32.mxu0 0.0
    %6215 = vmatmul.mubr.f32.gmra.mrb[0].mxu0 %v5875
    %v6216 = vpop.f32.mrb[0].mxu0
    %v6217 = vadd.f32 %v5751, %v6216
    %v6218 = vpop.f32.mrb[0].mxu0
    %6219 = vmatprep.mubr.f32.mxu0 0.0
    %6220 = vmatmul.mubr.f32.gmra.mrb[0].mxu0 %v5878
    %v6221 = vpop.f32.mrb[0].mxu0
    %v6222 = vadd.f32 %v5751, %v6221
    %v6223 = vpop.f32.mrb[0].mxu0
    %6224 = vmatprep.mubr.f32.mxu0 0.0
    %6225 = vmatmul.mubr.f32.gmra.mrb[0].mxu0 %v5881
    %v6226 = vpop.f32.mrb[0].mxu0
    %v6227 = vadd.f32 %v5751, %v6226
    %v6228 = vpop.f32.mrb[0].mxu0
    %6229 = vmatprep.mubr.f32.mxu0 0.0
    %6230 = vmatmul.mubr.f32.gmra.mrb[0].mxu0 %v5884
    %v6231 = vpop.f32.mrb[0].mxu0
    %v6232 = vadd.f32 %v5751, %v6231
    %v6233 = vpop.f32.mrb[0].mxu0
    %6234 = vmatprep.mubr.f32.mxu0 0.0
    %6235 = vmatmul.mubr.f32.gmra.mrb[0].mxu0 %v5887
    %v6236 = vpop.f32.mrb[0].mxu0
    %v6237 = vadd.f32 %v5751, %v6236
    %v6238 = vpop.f32.mrb[0].mxu0
    %6239 = vmatprep.mubr.f32.mxu0 0.0
    %6240 = vmatmul.mubr.f32.gmra.mrb[0].mxu0 %v5890
    %v6241 = vpop.f32.mrb[0].mxu0
    %v6242 = vadd.f32 %v5751, %v6241
    %v6243 = vpop.f32.mrb[0].mxu0
    %6244 = vmatprep.mubr.f32.mxu0 0.0
    %6245 = vmatmul.mubr.f32.gmra.mrb[0].mxu0 %v5893
    %v6246 = vpop.f32.mrb[0].mxu0
    %v6247 = vadd.f32 %v5751, %v6246
    %v6248 = vpop.f32.mrb[0].mxu0
    %6249 = vmatprep.mubr.f32.mxu0 0.0
    %6250 = vmatmul.mubr.f32.gmra.mrb[0].mxu0 %v5896
    %v6251 = vpop.f32.mrb[0].mxu0
    %v6252 = vadd.f32 %v5751, %v6251
    %v6253 = vpop.f32.mrb[0].mxu0
    %6254 = vmatprep.mubr.f32.mxu0 0.0
    %6255 = vmatmul.mubr.f32.gmra.mrb[0].mxu0 %v5899
    %v6256 = vpop.f32.mrb[0].mxu0
    %v6257 = vadd.f32 %v5751, %v6256
    %v6258 = vpop.f32.mrb[0].mxu0
    %6259 = vmatprep.mubr.f32.mxu0 0.0
    %6260 = vmatmul.mubr.f32.gmra.mrb[0].mxu0 %v5902
    %v6261 = vpop.f32.mrb[0].mxu0
    %v6262 = vadd.f32 %v5751, %v6261
    %v6263 = vpop.f32.mrb[0].mxu0
    %6264 = vmatprep.mubr.f32.mxu0 0.0
    %6265 = vmatmul.mubr.f32.gmra.mrb[0].mxu0 %v5905
    %v6266 = vpop.f32.mrb[0].mxu0
    %v6267 = vadd.f32 %v5751, %v6266
    %v6268 = vpop.f32.mrb[0].mxu0
    %6269 = vmatprep.mubr.f32.mxu0 0.0
    %6270 = vmatmul.mubr.f32.gmra.mrb[0].mxu0 %v5908
    %v6271 = vpop.f32.mrb[0].mxu0
    %v6272 = vadd.f32 %v5751, %v6271
    %v6273 = vpop.f32.mrb[0].mxu0
    %6274 = vmatprep.mubr.f32.mxu0 0.0
    %6275 = vmatmul.mubr.f32.gmra.mrb[0].mxu0 %v5911
    %v6276 = vpop.f32.mrb[0].mxu0
    %v6277 = vadd.f32 %v5751, %v6276
    %v6278 = vpop.f32.mrb[0].mxu0
    %6279 = vmatprep.mubr.f32.mxu0 0.0
    %6280 = vmatmul.mubr.f32.gmra.mrb[0].mxu0 %v5914
    %v6281 = vpop.f32.mrb[0].mxu0
    %v6282 = vadd.f32 %v5751, %v6281
    %v6283 = vpop.f32.mrb[0].mxu0
    %6284 = vmatprep.mubr.f32.mxu0 0.0
    %6285 = vmatmul.mubr.f32.gmra.mrb[0].mxu0 %v5917
    %v6286 = vpop.f32.mrb[0].mxu0
    %v6287 = vadd.f32 %v5751, %v6286
    %v6288 = vpop.f32.mrb[0].mxu0
    %6289 = vmatprep.mubr.f32.mxu0 0.0
    %6290 = vmatmul.mubr.f32.gmra.mrb[0].mxu0 %v5920
    %v6291 = vpop.f32.mrb[0].mxu0
    %v6292 = vadd.f32 %v5751, %v6291
    %v6293 = vpop.f32.mrb[0].mxu0
    %6294 = vmatprep.mubr.f32.mxu0 0.0
    %6295 = vmatmul.mubr.f32.gmra.mrb[0].mxu0 %v5923
    %v6296 = vpop.f32.mrb[0].mxu0
    %v6297 = vadd.f32 %v5751, %v6296
    %v6298 = vpop.f32.mrb[0].mxu0
    %6299 = vmatprep.mubr.f32.mxu0 0.0
    %6300 = vmatmul.mubr.f32.gmra.mrb[0].mxu0 %v5926
    %v6301 = vpop.f32.mrb[0].mxu0
    %v6302 = vadd.f32 %v5751, %v6301
    %v6303 = vpop.f32.mrb[0].mxu0
    %6304 = vmatprep.mubr.f32.mxu0 0.0
    %6305 = vmatmul.mubr.f32.gmra.mrb[0].mxu0 %v5929
    %v6306 = vpop.f32.mrb[0].mxu0
    %v6307 = vadd.f32 %v5751, %v6306
    %v6308 = vpop.f32.mrb[0].mxu0
    %6309 = vmatprep.mubr.f32.mxu0 0.0
    %6310 = vmatmul.mubr.f32.gmra.mrb[0].mxu0 %v5932
    %v6311 = vpop.f32.mrb[0].mxu0
    %v6312 = vadd.f32 %v5751, %v6311
    %v6313 = vpop.f32.mrb[0].mxu0
    %6314 = vmatprep.mubr.f32.mxu0 0.0
    %6315 = vmatmul.mubr.f32.gmra.mrb[0].mxu0 %v5935
    %v6316 = vpop.f32.mrb[0].mxu0
    %v6317 = vadd.f32 %v5751, %v6316
    %v6318 = vpop.f32.mrb[0].mxu0
    %6319 = vmatprep.mubr.f32.mxu0 0.0
    %6320 = vmatmul.mubr.f32.gmra.mrb[0].mxu0 %v5938
    %v6321 = vpop.f32.mrb[0].mxu0
    %v6322 = vadd.f32 %v5751, %v6321
    %v6323 = vpop.f32.mrb[0].mxu0
    %6324 = vmatprep.mubr.f32.mxu0 0.0
    %6325 = vmatmul.mubr.f32.gmra.mrb[0].mxu0 %v5941
    %v6326 = vpop.f32.mrb[0].mxu0
    %v6327 = vadd.f32 %v5751, %v6326
    %v6328 = vpop.f32.mrb[0].mxu0
    %6329 = vmatprep.mubr.f32.mxu0 0.0
    %6330 = vmatmul.mubr.f32.gmra.mrb[0].mxu0 %v5944
    %v6331 = vpop.f32.mrb[0].mxu0
    %v6332 = vadd.f32 %v5751, %v6331
    %v6333 = vpop.f32.mrb[0].mxu0
    %6334 = vdwg.mxu0
    %v6335 = vmax.f32 %v6017, 0.0
    %v6336 = vmax.f32 %v6022, 0.0
    %v6337 = vmax.f32 %v6027, 0.0
    %v6338 = vmax.f32 %v6032, 0.0
    %v6339 = vmax.f32 %v6037, 0.0
    %v6340 = vmax.f32 %v6042, 0.0
    %v6341 = vmax.f32 %v6047, 0.0
    %v6342 = vmax.f32 %v6052, 0.0
    %v6343 = vmax.f32 %v6057, 0.0
    %v6344 = vmax.f32 %v6062, 0.0
    %v6345 = vmax.f32 %v6067, 0.0
    %v6346 = vmax.f32 %v6072, 0.0
    %v6347 = vmax.f32 %v6077, 0.0
    %v6348 = vmax.f32 %v6082, 0.0
    %v6349 = vmax.f32 %v6087, 0.0
    %v6350 = vmax.f32 %v6092, 0.0
    %v6351 = vmax.f32 %v6097, 0.0
    %v6352 = vmax.f32 %v6102, 0.0
    %v6353 = vmax.f32 %v6107, 0.0
    %v6354 = vmax.f32 %v6112, 0.0
    %v6355 = vmax.f32 %v6117, 0.0
    %v6356 = vmax.f32 %v6122, 0.0
    %v6357 = vmax.f32 %v6127, 0.0
    %v6358 = vmax.f32 %v6132, 0.0
    %v6359 = vmax.f32 %v6137, 0.0
    %v6360 = vmax.f32 %v6142, 0.0
    %v6361 = vmax.f32 %v6147, 0.0
    %v6362 = vmax.f32 %v6152, 0.0
    %v6363 = vmax.f32 %v6157, 0.0
    %v6364 = vmax.f32 %v6162, 0.0
    %v6365 = vmax.f32 %v6167, 0.0
    %v6366 = vmax.f32 %v6172, 0.0
    %v6367 = vmax.f32 %v6177, 0.0
    %v6368 = vmax.f32 %v6182, 0.0
    %v6369 = vmax.f32 %v6187, 0.0
    %v6370 = vmax.f32 %v6192, 0.0
    %v6371 = vmax.f32 %v6197, 0.0
    %v6372 = vmax.f32 %v6202, 0.0
    %v6373 = vmax.f32 %v6207, 0.0
    %v6374 = vmax.f32 %v6212, 0.0
    %v6375 = vmax.f32 %v6217, 0.0
    %v6376 = vmax.f32 %v6222, 0.0
    %v6377 = vmax.f32 %v6227, 0.0
    %v6378 = vmax.f32 %v6232, 0.0
    %v6379 = vmax.f32 %v6237, 0.0
    %v6380 = vmax.f32 %v6242, 0.0
    %v6381 = vmax.f32 %v6247, 0.0
    %v6382 = vmax.f32 %v6252, 0.0
    %v6383 = vmax.f32 %v6257, 0.0
    %v6384 = vmax.f32 %v6262, 0.0
    %v6385 = vmax.f32 %v6267, 0.0
    %v6386 = vmax.f32 %v6272, 0.0
    %v6387 = vmax.f32 %v6277, 0.0
    %v6388 = vmax.f32 %v6282, 0.0
    %v6389 = vmax.f32 %v6287, 0.0
    %v6390 = vmax.f32 %v6292, 0.0
    %v6391 = vmax.f32 %v6297, 0.0
    %v6392 = vmax.f32 %v6302, 0.0
    %v6393 = vmax.f32 %v6307, 0.0
    %v6394 = vmax.f32 %v6312, 0.0
    %v6395 = vmax.f32 %v6317, 0.0
    %v6396 = vmax.f32 %v6322, 0.0
    %v6397 = vmax.f32 %v6327, 0.0
    %v6398 = vmax.f32 %v6332, 0.0
    %v6399 = vld [vmem:[%s7] sm:$0xff]
    %v6400 = vld [vmem:[%s7 + $0x8] sm:$0xff]
    %v6401 = vld [vmem:[%s7 + $0x10] sm:$0xff]
    %v6402 = vld [vmem:[%s7 + $0x18] sm:$0xff]
    %v6403 = vld [vmem:[%s7 + $0x20] sm:$0xff]
    %v6404 = vld [vmem:[%s7 + $0x28] sm:$0xff]
    %v6405 = vld [vmem:[%s7 + $0x30] sm:$0xff]
    %v6406 = vld [vmem:[%s7 + $0x38] sm:$0xff]
    %v6407 = vld [vmem:[%s7 + $0x40] sm:$0xff]
    %v6408 = vld [vmem:[%s7 + $0x48] sm:$0xff]
    %v6409 = vld [vmem:[%s7 + $0x50] sm:$0xff]
    %v6410 = vld [vmem:[%s7 + $0x58] sm:$0xff]
    %v6411 = vld [vmem:[%s7 + $0x60] sm:$0xff]
    %v6412 = vld [vmem:[%s7 + $0x68] sm:$0xff]
    %v6413 = vld [vmem:[%s7 + $0x70] sm:$0xff]
    %v6414 = vld [vmem:[%s7 + $0x78] sm:$0xff]
    %v6415 = vld [vmem:[%s7 + $0x80] sm:$0xff]
    %v6416 = vld [vmem:[%s7 + $0x88] sm:$0xff]
    %v6417 = vld [vmem:[%s7 + $0x90] sm:$0xff]
    %v6418 = vld [vmem:[%s7 + $0x98] sm:$0xff]
    %v6419 = vld [vmem:[%s7 + $0xa0] sm:$0xff]
    %v6420 = vld [vmem:[%s7 + $0xa8] sm:$0xff]
    %v6421 = vld [vmem:[%s7 + $0xb0] sm:$0xff]
    %v6422 = vld [vmem:[%s7 + $0xb8] sm:$0xff]
    %v6423 = vld [vmem:[%s7 + $0xc0] sm:$0xff]
    %v6424 = vld [vmem:[%s7 + $0xc8] sm:$0xff]
    %v6425 = vld [vmem:[%s7 + $0xd0] sm:$0xff]
    %v6426 = vld [vmem:[%s7 + $0xd8] sm:$0xff]
    %v6427 = vld [vmem:[%s7 + $0xe0] sm:$0xff]
    %v6428 = vld [vmem:[%s7 + $0xe8] sm:$0xff]
    %v6429 = vld [vmem:[%s7 + $0xf0] sm:$0xff]
    %v6430 = vld [vmem:[%s7 + $0xf8] sm:$0xff]
    %v6431 = vld [vmem:[%s7 + $0x100] sm:$0xff]
    %v6432 = vld [vmem:[%s7 + $0x108] sm:$0xff]
    %v6433 = vld [vmem:[%s7 + $0x110] sm:$0xff]
    %v6434 = vld [vmem:[%s7 + $0x118] sm:$0xff]
    %v6435 = vld [vmem:[%s7 + $0x120] sm:$0xff]
    %v6436 = vld [vmem:[%s7 + $0x128] sm:$0xff]
    %v6437 = vld [vmem:[%s7 + $0x130] sm:$0xff]
    %v6438 = vld [vmem:[%s7 + $0x138] sm:$0xff]
    %v6439 = vld [vmem:[%s7 + $0x140] sm:$0xff]
    %v6440 = vld [vmem:[%s7 + $0x148] sm:$0xff]
    %v6441 = vld [vmem:[%s7 + $0x150] sm:$0xff]
    %v6442 = vld [vmem:[%s7 + $0x158] sm:$0xff]
    %v6443 = vld [vmem:[%s7 + $0x160] sm:$0xff]
    %v6444 = vld [vmem:[%s7 + $0x168] sm:$0xff]
    %v6445 = vld [vmem:[%s7 + $0x170] sm:$0xff]
    %v6446 = vld [vmem:[%s7 + $0x178] sm:$0xff]
    %v6447 = vld [vmem:[%s7 + $0x180] sm:$0xff]
    %v6448 = vld [vmem:[%s7 + $0x188] sm:$0xff]
    %v6449 = vld [vmem:[%s7 + $0x190] sm:$0xff]
    %v6450 = vld [vmem:[%s7 + $0x198] sm:$0xff]
    %v6451 = vld [vmem:[%s7 + $0x1a0] sm:$0xff]
    %v6452 = vld [vmem:[%s7 + $0x1a8] sm:$0xff]
    %v6453 = vld [vmem:[%s7 + $0x1b0] sm:$0xff]
    %v6454 = vld [vmem:[%s7 + $0x1b8] sm:$0xff]
    %v6455 = vld [vmem:[%s7 + $0x1c0] sm:$0xff]
    %v6456 = vld [vmem:[%s7 + $0x1c8] sm:$0xff]
    %v6457 = vld [vmem:[%s7 + $0x1d0] sm:$0xff]
    %v6458 = vld [vmem:[%s7 + $0x1d8] sm:$0xff]
    %v6459 = vld [vmem:[%s7 + $0x1e0] sm:$0xff]
    %v6460 = vld [vmem:[%s7 + $0x1e8] sm:$0xff]
    %v6461 = vld [vmem:[%s7 + $0x1f0] sm:$0xff]
    %v6462 = vld [vmem:[%s7 + $0x1f8] sm:$0xff]
    %v6463 = vrot.slane %v6335, 1
    %v6464 = vrot.slane %v6336, 1
    %v6465 = vrot.slane %v6337, 1
    %v6466 = vrot.slane %v6338, 1
    %v6467 = vrot.slane %v6339, 1
    %v6468 = vrot.slane %v6340, 1
    %v6469 = vrot.slane %v6341, 1
    %v6470 = vrot.slane %v6342, 1
    %v6471 = vrot.slane %v6343, 1
    %v6472 = vrot.slane %v6344, 1
    %v6473 = vrot.slane %v6345, 1
    %v6474 = vrot.slane %v6346, 1
    %v6475 = vrot.slane %v6347, 1
    %v6476 = vrot.slane %v6348, 1
    %v6477 = vrot.slane %v6349, 1
    %v6478 = vrot.slane %v6350, 1
    %v6479 = vrot.slane %v6351, 1
    %v6480 = vrot.slane %v6352, 1
    %v6481 = vrot.slane %v6353, 1
    %v6482 = vrot.slane %v6354, 1
    %v6483 = vrot.slane %v6355, 1
    %v6484 = vrot.slane %v6356, 1
    %v6485 = vrot.slane %v6357, 1
    %v6486 = vrot.slane %v6358, 1
    %v6487 = vrot.slane %v6359, 1
    %v6488 = vrot.slane %v6360, 1
    %v6489 = vrot.slane %v6361, 1
    %v6490 = vrot.slane %v6362, 1
    %v6491 = vrot.slane %v6363, 1
    %v6492 = vrot.slane %v6364, 1
    %v6493 = vrot.slane %v6365, 1
    %v6494 = vrot.slane %v6366, 1
    %v6495 = vrot.slane %v6367, 1
    %v6496 = vrot.slane %v6368, 1
    %v6497 = vrot.slane %v6369, 1
    %v6498 = vrot.slane %v6370, 1
    %v6499 = vrot.slane %v6371, 1
    %v6500 = vrot.slane %v6372, 1
    %v6501 = vrot.slane %v6373, 1
    %v6502 = vrot.slane %v6374, 1
    %v6503 = vrot.slane %v6375, 1
    %v6504 = vrot.slane %v6376, 1
    %v6505 = vrot.slane %v6377, 1
    %v6506 = vrot.slane %v6378, 1
    %v6507 = vrot.slane %v6379, 1
    %v6508 = vrot.slane %v6380, 1
    %v6509 = vrot.slane %v6381, 1
    %v6510 = vrot.slane %v6382, 1
    %v6511 = vrot.slane %v6383, 1
    %v6512 = vrot.slane %v6384, 1
    %v6513 = vrot.slane %v6385, 1
    %v6514 = vrot.slane %v6386, 1
    %v6515 = vrot.slane %v6387, 1
    %v6516 = vrot.slane %v6388, 1
    %v6517 = vrot.slane %v6389, 1
    %v6518 = vrot.slane %v6390, 1
    %v6519 = vrot.slane %v6391, 1
    %v6520 = vrot.slane %v6392, 1
    %v6521 = vrot.slane %v6393, 1
    %v6522 = vrot.slane %v6394, 1
    %v6523 = vrot.slane %v6395, 1
    %v6524 = vrot.slane %v6396, 1
    %v6525 = vrot.slane %v6397, 1
    %v6526 = vrot.slane %v6398, 1
    %v6527 = vsel %vm1447, %v6525, %v6526
    %v6528 = vsel %vm1447, %v6524, %v6525
    %v6529 = vsel %vm1447, %v6523, %v6524
    %v6530 = vsel %vm1447, %v6522, %v6523
    %v6531 = vsel %vm1447, %v6521, %v6522
    %v6532 = vsel %vm1447, %v6520, %v6521
    %v6533 = vsel %vm1447, %v6519, %v6520
    %v6534 = vsel %vm1447, %v6518, %v6519
    %v6535 = vsel %vm1447, %v6517, %v6518
    %v6536 = vsel %vm1447, %v6516, %v6517
    %v6537 = vsel %vm1447, %v6515, %v6516
    %v6538 = vsel %vm1447, %v6514, %v6515
    %v6539 = vsel %vm1447, %v6513, %v6514
    %v6540 = vsel %vm1447, %v6512, %v6513
    %v6541 = vsel %vm1447, %v6511, %v6512
    %v6542 = vsel %vm1447, %v6510, %v6511
    %v6543 = vsel %vm1447, %v6509, %v6510
    %v6544 = vsel %vm1447, %v6508, %v6509
    %v6545 = vsel %vm1447, %v6507, %v6508
    %v6546 = vsel %vm1447, %v6506, %v6507
    %v6547 = vsel %vm1447, %v6505, %v6506
    %v6548 = vsel %vm1447, %v6504, %v6505
    %v6549 = vsel %vm1447, %v6503, %v6504
    %v6550 = vsel %vm1447, %v6502, %v6503
    %v6551 = vsel %vm1447, %v6501, %v6502
    %v6552 = vsel %vm1447, %v6500, %v6501
    %v6553 = vsel %vm1447, %v6499, %v6500
    %v6554 = vsel %vm1447, %v6498, %v6499
    %v6555 = vsel %vm1447, %v6497, %v6498
    %v6556 = vsel %vm1447, %v6496, %v6497
    %v6557 = vsel %vm1447, %v6495, %v6496
    %v6558 = vsel %vm1447, %v6494, %v6495
    %v6559 = vsel %vm1447, %v6493, %v6494
    %v6560 = vsel %vm1447, %v6492, %v6493
    %v6561 = vsel %vm1447, %v6491, %v6492
    %v6562 = vsel %vm1447, %v6490, %v6491
    %v6563 = vsel %vm1447, %v6489, %v6490
    %v6564 = vsel %vm1447, %v6488, %v6489
    %v6565 = vsel %vm1447, %v6487, %v6488
    %v6566 = vsel %vm1447, %v6486, %v6487
    %v6567 = vsel %vm1447, %v6485, %v6486
    %v6568 = vsel %vm1447, %v6484, %v6485
    %v6569 = vsel %vm1447, %v6483, %v6484
    %v6570 = vsel %vm1447, %v6482, %v6483
    %v6571 = vsel %vm1447, %v6481, %v6482
    %v6572 = vsel %vm1447, %v6480, %v6481
    %v6573 = vsel %vm1447, %v6479, %v6480
    %v6574 = vsel %vm1447, %v6478, %v6479
    %v6575 = vsel %vm1447, %v6477, %v6478
    %v6576 = vsel %vm1447, %v6476, %v6477
    %v6577 = vsel %vm1447, %v6475, %v6476
    %v6578 = vsel %vm1447, %v6474, %v6475
    %v6579 = vsel %vm1447, %v6473, %v6474
    %v6580 = vsel %vm1447, %v6472, %v6473
    %v6581 = vsel %vm1447, %v6471, %v6472
    %v6582 = vsel %vm1447, %v6470, %v6471
    %v6583 = vsel %vm1447, %v6469, %v6470
    %v6584 = vsel %vm1447, %v6468, %v6469
    %v6585 = vsel %vm1447, %v6467, %v6468
    %v6586 = vsel %vm1447, %v6466, %v6467
    %v6587 = vsel %vm1447, %v6465, %v6466
    %v6588 = vsel %vm1447, %v6464, %v6465
    %v6589 = vsel %vm1447, %v6463, %v6464
    %v6590 = vsel %vm1447, %v6526, %v6463
    %v6591 = vmax.f32 %v6335, %v6589
    %v6592 = vmax.f32 %v6336, %v6588
    %v6593 = vmax.f32 %v6337, %v6587
    %v6594 = vmax.f32 %v6338, %v6586
    %v6595 = vmax.f32 %v6339, %v6585
    %v6596 = vmax.f32 %v6340, %v6584
    %v6597 = vmax.f32 %v6341, %v6583
    %v6598 = vmax.f32 %v6342, %v6582
    %v6599 = vmax.f32 %v6343, %v6581
    %v6600 = vmax.f32 %v6344, %v6580
    %v6601 = vmax.f32 %v6345, %v6579
    %v6602 = vmax.f32 %v6346, %v6578
    %v6603 = vmax.f32 %v6347, %v6577
    %v6604 = vmax.f32 %v6348, %v6576
    %v6605 = vmax.f32 %v6349, %v6575
    %v6606 = vmax.f32 %v6350, %v6574
    %v6607 = vmax.f32 %v6351, %v6573
    %v6608 = vmax.f32 %v6352, %v6572
    %v6609 = vmax.f32 %v6353, %v6571
    %v6610 = vmax.f32 %v6354, %v6570
    %v6611 = vmax.f32 %v6355, %v6569
    %v6612 = vmax.f32 %v6356, %v6568
    %v6613 = vmax.f32 %v6357, %v6567
    %v6614 = vmax.f32 %v6358, %v6566
    %v6615 = vmax.f32 %v6359, %v6565
    %v6616 = vmax.f32 %v6360, %v6564
    %v6617 = vmax.f32 %v6361, %v6563
    %v6618 = vmax.f32 %v6362, %v6562
    %v6619 = vmax.f32 %v6363, %v6561
    %v6620 = vmax.f32 %v6364, %v6560
    %v6621 = vmax.f32 %v6365, %v6559
    %v6622 = vmax.f32 %v6366, %v6558
    %v6623 = vmax.f32 %v6367, %v6557
    %v6624 = vmax.f32 %v6368, %v6556
    %v6625 = vmax.f32 %v6369, %v6555
    %v6626 = vmax.f32 %v6370, %v6554
    %v6627 = vmax.f32 %v6371, %v6553
    %v6628 = vmax.f32 %v6372, %v6552
    %v6629 = vmax.f32 %v6373, %v6551
    %v6630 = vmax.f32 %v6374, %v6550
    %v6631 = vmax.f32 %v6375, %v6549
    %v6632 = vmax.f32 %v6376, %v6548
    %v6633 = vmax.f32 %v6377, %v6547
    %v6634 = vmax.f32 %v6378, %v6546
    %v6635 = vmax.f32 %v6379, %v6545
    %v6636 = vmax.f32 %v6380, %v6544
    %v6637 = vmax.f32 %v6381, %v6543
    %v6638 = vmax.f32 %v6382, %v6542
    %v6639 = vmax.f32 %v6383, %v6541
    %v6640 = vmax.f32 %v6384, %v6540
    %v6641 = vmax.f32 %v6385, %v6539
    %v6642 = vmax.f32 %v6386, %v6538
    %v6643 = vmax.f32 %v6387, %v6537
    %v6644 = vmax.f32 %v6388, %v6536
    %v6645 = vmax.f32 %v6389, %v6535
    %v6646 = vmax.f32 %v6390, %v6534
    %v6647 = vmax.f32 %v6391, %v6533
    %v6648 = vmax.f32 %v6392, %v6532
    %v6649 = vmax.f32 %v6393, %v6531
    %v6650 = vmax.f32 %v6394, %v6530
    %v6651 = vmax.f32 %v6395, %v6529
    %v6652 = vmax.f32 %v6396, %v6528
    %v6653 = vmax.f32 %v6397, %v6527
    %v6654 = vmax.f32 %v6398, %v6590
    %v6655 = vmax.f32 %v6591, %v6593
    %v6656 = vmax.f32 %v6592, %v6594
    %v6657 = vmax.f32 %v6593, %v6595
    %v6658 = vmax.f32 %v6594, %v6596
    %v6659 = vmax.f32 %v6595, %v6597
    %v6660 = vmax.f32 %v6596, %v6598
    %v6661 = vmax.f32 %v6597, %v6599
    %v6662 = vmax.f32 %v6598, %v6600
    %v6663 = vmax.f32 %v6599, %v6601
    %v6664 = vmax.f32 %v6600, %v6602
    %v6665 = vmax.f32 %v6601, %v6603
    %v6666 = vmax.f32 %v6602, %v6604
    %v6667 = vmax.f32 %v6603, %v6605
    %v6668 = vmax.f32 %v6604, %v6606
    %v6669 = vmax.f32 %v6605, %v6607
    %v6670 = vmax.f32 %v6606, %v6608
    %v6671 = vmax.f32 %v6607, %v6609
    %v6672 = vmax.f32 %v6608, %v6610
    %v6673 = vmax.f32 %v6609, %v6611
    %v6674 = vmax.f32 %v6610, %v6612
    %v6675 = vmax.f32 %v6611, %v6613
    %v6676 = vmax.f32 %v6612, %v6614
    %v6677 = vmax.f32 %v6613, %v6615
    %v6678 = vmax.f32 %v6614, %v6616
    %v6679 = vmax.f32 %v6615, %v6617
    %v6680 = vmax.f32 %v6616, %v6618
    %v6681 = vmax.f32 %v6617, %v6619
    %v6682 = vmax.f32 %v6618, %v6620
    %v6683 = vmax.f32 %v6619, %v6621
    %v6684 = vmax.f32 %v6620, %v6622
    %v6685 = vmax.f32 %v6621, %v6623
    %v6686 = vmax.f32 %v6622, %v6624
    %v6687 = vmax.f32 %v6623, %v6625
    %v6688 = vmax.f32 %v6624, %v6626
    %v6689 = vmax.f32 %v6625, %v6627
    %v6690 = vmax.f32 %v6626, %v6628
    %v6691 = vmax.f32 %v6627, %v6629
    %v6692 = vmax.f32 %v6628, %v6630
    %v6693 = vmax.f32 %v6629, %v6631
    %v6694 = vmax.f32 %v6630, %v6632
    %v6695 = vmax.f32 %v6631, %v6633
    %v6696 = vmax.f32 %v6632, %v6634
    %v6697 = vmax.f32 %v6633, %v6635
    %v6698 = vmax.f32 %v6634, %v6636
    %v6699 = vmax.f32 %v6635, %v6637
    %v6700 = vmax.f32 %v6636, %v6638
    %v6701 = vmax.f32 %v6637, %v6639
    %v6702 = vmax.f32 %v6638, %v6640
    %v6703 = vmax.f32 %v6639, %v6641
    %v6704 = vmax.f32 %v6640, %v6642
    %v6705 = vmax.f32 %v6641, %v6643
    %v6706 = vmax.f32 %v6642, %v6644
    %v6707 = vmax.f32 %v6643, %v6645
    %v6708 = vmax.f32 %v6644, %v6646
    %v6709 = vmax.f32 %v6645, %v6647
    %v6710 = vmax.f32 %v6646, %v6648
    %v6711 = vmax.f32 %v6647, %v6649
    %v6712 = vmax.f32 %v6648, %v6650
    %v6713 = vmax.f32 %v6649, %v6651
    %v6714 = vmax.f32 %v6650, %v6652
    %v6715 = vmax.f32 %v6651, %v6653
    %v6716 = vmax.f32 %v6652, %v6654
    %v6717 = vmax.f32 %v6653, %v6591
    %v6718 = vmax.f32 %v6654, %v6592
    %6719 = vrot.lane.b32.xlu0 %v5751, 96
    %v6720 = vpop.permute.xlu0 %6719
    %6722 = vmatprep.subr.mxu0 0.0
    %6723 = vmatpush1.msra.mxu0 %v6655
    %6724 = vmatprep.subr.mxu0 0.0
    %6725 = vmatpush1.msra.mxu0 %v6656
    %6726 = vmatprep.subr.mxu0 0.0
    %6727 = vmatpush1.msra.mxu0 %v6657
    %6728 = vmatprep.subr.mxu0 0.0
    %6729 = vmatpush1.msra.mxu0 %v6658
    %6730 = vmatprep.subr.mxu0 0.0
    %6731 = vmatpush1.msra.mxu0 %v6659
    %6732 = vmatprep.subr.mxu0 0.0
    %6733 = vmatpush1.msra.mxu0 %v6660
    %6734 = vmatprep.subr.mxu0 0.0
    %6735 = vmatpush1.msra.mxu0 %v6661
    %6736 = vmatprep.subr.mxu0 0.0
    %6737 = vmatpush1.msra.mxu0 %v6662
    %6738 = vmatprep.subr.mxu0 0.0
    %6739 = vmatpush1.msra.mxu0 %v6663
    %6740 = vmatprep.subr.mxu0 0.0
    %6741 = vmatpush1.msra.mxu0 %v6664
    %6742 = vmatprep.subr.mxu0 0.0
    %6743 = vmatpush1.msra.mxu0 %v6665
    %6744 = vmatprep.subr.mxu0 0.0
    %6745 = vmatpush1.msra.mxu0 %v6666
    %6746 = vmatprep.subr.mxu0 0.0
    %6747 = vmatpush1.msra.mxu0 %v6667
    %6748 = vmatprep.subr.mxu0 0.0
    %6749 = vmatpush1.msra.mxu0 %v6668
    %6750 = vmatprep.subr.mxu0 0.0
    %6751 = vmatpush1.msra.mxu0 %v6669
    %6752 = vmatprep.subr.mxu0 0.0
    %6753 = vmatpush1.msra.mxu0 %v6670
    %6754 = vmatprep.subr.mxu0 0.0
    %6755 = vmatpush1.msra.mxu0 %v6671
    %6756 = vmatprep.subr.mxu0 0.0
    %6757 = vmatpush1.msra.mxu0 %v6672
    %6758 = vmatprep.subr.mxu0 0.0
    %6759 = vmatpush1.msra.mxu0 %v6673
    %6760 = vmatprep.subr.mxu0 0.0
    %6761 = vmatpush1.msra.mxu0 %v6674
    %6762 = vmatprep.subr.mxu0 0.0
    %6763 = vmatpush1.msra.mxu0 %v6675
    %6764 = vmatprep.subr.mxu0 0.0
    %6765 = vmatpush1.msra.mxu0 %v6676
    %6766 = vmatprep.subr.mxu0 0.0
    %6767 = vmatpush1.msra.mxu0 %v6677
    %6768 = vmatprep.subr.mxu0 0.0
    %6769 = vmatpush1.msra.mxu0 %v6678
    %6770 = vmatprep.subr.mxu0 0.0
    %6771 = vmatpush1.msra.mxu0 %v6679
    %6772 = vmatprep.subr.mxu0 0.0
    %6773 = vmatpush1.msra.mxu0 %v6680
    %6774 = vmatprep.subr.mxu0 0.0
    %6775 = vmatpush1.msra.mxu0 %v6681
    %6776 = vmatprep.subr.mxu0 0.0
    %6777 = vmatpush1.msra.mxu0 %v6682
    %6778 = vmatprep.subr.mxu0 0.0
    %6779 = vmatpush1.msra.mxu0 %v6683
    %6780 = vmatprep.subr.mxu0 0.0
    %6781 = vmatpush1.msra.mxu0 %v6684
    %6782 = vmatprep.subr.mxu0 0.0
    %6783 = vmatpush1.msra.mxu0 %v6685
    %6784 = vmatprep.subr.mxu0 0.0
    %6785 = vmatpush1.msra.mxu0 %v6686
    %6786 = vmatprep.mubr.f32.mxu0 %v6400
    %6787 = vmatmul.mubr.f32.gmra.mrb[0].mxu0 %v6399
    %v6788 = vpop.f32.mrb[0].mxu0
    %v6789 = vadd.f32 %v6720, %v6788
    %v6790 = vpop.f32.mrb[0].mxu0
    %6791 = vmatprep.mubr.f32.mxu0 %v6404
    %6792 = vmatmul.mubr.f32.gmra.mrb[0].mxu0 %v6403
    %v6793 = vpop.f32.mrb[0].mxu0
    %v6794 = vadd.f32 %v6720, %v6793
    %v6795 = vpop.f32.mrb[0].mxu0
    %6796 = vmatprep.mubr.f32.mxu0 %v6408
    %6797 = vmatmul.mubr.f32.gmra.mrb[0].mxu0 %v6407
    %v6798 = vpop.f32.mrb[0].mxu0
    %v6799 = vadd.f32 %v6720, %v6798
    %v6800 = vpop.f32.mrb[0].mxu0
    %6801 = vmatprep.mubr.f32.mxu0 %v6412
    %6802 = vmatmul.mubr.f32.gmra.mrb[0].mxu0 %v6411
    %v6803 = vpop.f32.mrb[0].mxu0
    %v6804 = vadd.f32 %v6720, %v6803
    %v6805 = vpop.f32.mrb[0].mxu0
    %6806 = vmatprep.mubr.f32.mxu0 %v6416
    %6807 = vmatmul.mubr.f32.gmra.mrb[0].mxu0 %v6415
    %v6808 = vpop.f32.mrb[0].mxu0
    %v6809 = vadd.f32 %v6720, %v6808
    %v6810 = vpop.f32.mrb[0].mxu0
    %6811 = vmatprep.mubr.f32.mxu0 %v6420
    %6812 = vmatmul.mubr.f32.gmra.mrb[0].mxu0 %v6419
    %v6813 = vpop.f32.mrb[0].mxu0
    %v6814 = vadd.f32 %v6720, %v6813
    %v6815 = vpop.f32.mrb[0].mxu0
    %6816 = vmatprep.mubr.f32.mxu0 %v6424
    %6817 = vmatmul.mubr.f32.gmra.mrb[0].mxu0 %v6423
    %v6818 = vpop.f32.mrb[0].mxu0
    %v6819 = vadd.f32 %v6720, %v6818
    %v6820 = vpop.f32.mrb[0].mxu0
    %6821 = vmatprep.mubr.f32.mxu0 %v6428
    %6822 = vmatmul.mubr.f32.gmra.mrb[0].mxu0 %v6427
    %v6823 = vpop.f32.mrb[0].mxu0
    %v6824 = vadd.f32 %v6720, %v6823
    %v6825 = vpop.f32.mrb[0].mxu0
    %6826 = vmatprep.mubr.f32.mxu0 %v6432
    %6827 = vmatmul.mubr.f32.gmra.mrb[0].mxu0 %v6431
    %v6828 = vpop.f32.mrb[0].mxu0
    %v6829 = vadd.f32 %v6720, %v6828
    %v6830 = vpop.f32.mrb[0].mxu0
    %6831 = vmatprep.mubr.f32.mxu0 %v6436
    %6832 = vmatmul.mubr.f32.gmra.mrb[0].mxu0 %v6435
    %v6833 = vpop.f32.mrb[0].mxu0
    %v6834 = vadd.f32 %v6720, %v6833
    %v6835 = vpop.f32.mrb[0].mxu0
    %6836 = vmatprep.mubr.f32.mxu0 %v6440
    %6837 = vmatmul.mubr.f32.gmra.mrb[0].mxu0 %v6439
    %v6838 = vpop.f32.mrb[0].mxu0
    %v6839 = vadd.f32 %v6720, %v6838
    %v6840 = vpop.f32.mrb[0].mxu0
    %6841 = vmatprep.mubr.f32.mxu0 %v6444
    %6842 = vmatmul.mubr.f32.gmra.mrb[0].mxu0 %v6443
    %v6843 = vpop.f32.mrb[0].mxu0
    %v6844 = vadd.f32 %v6720, %v6843
    %v6845 = vpop.f32.mrb[0].mxu0
    %6846 = vmatprep.mubr.f32.mxu0 %v6448
    %6847 = vmatmul.mubr.f32.gmra.mrb[0].mxu0 %v6447
    %v6848 = vpop.f32.mrb[0].mxu0
    %v6849 = vadd.f32 %v6720, %v6848
    %v6850 = vpop.f32.mrb[0].mxu0
    %6851 = vmatprep.mubr.f32.mxu0 %v6452
    %6852 = vmatmul.mubr.f32.gmra.mrb[0].mxu0 %v6451
    %v6853 = vpop.f32.mrb[0].mxu0
    %v6854 = vadd.f32 %v6720, %v6853
    %v6855 = vpop.f32.mrb[0].mxu0
    %6856 = vmatprep.mubr.f32.mxu0 %v6456
    %6857 = vmatmul.mubr.f32.gmra.mrb[0].mxu0 %v6455
    %v6858 = vpop.f32.mrb[0].mxu0
    %v6859 = vadd.f32 %v6720, %v6858
    %v6860 = vpop.f32.mrb[0].mxu0
    %6861 = vmatprep.mubr.f32.mxu0 %v6460
    %6862 = vmatmul.mubr.f32.gmra.mrb[0].mxu0 %v6459
    %v6863 = vpop.f32.mrb[0].mxu0
    %v6864 = vadd.f32 %v6720, %v6863
    %v6865 = vpop.f32.mrb[0].mxu0
    %6866 = vdwg.mxu0
    %6867 = vmatprep.subr.mxu0 0.0
    %6868 = vmatpush1.msra.mxu0 %v6687
    %6869 = vmatprep.subr.mxu0 0.0
    %6870 = vmatpush1.msra.mxu0 %v6688
    %6871 = vmatprep.subr.mxu0 0.0
    %6872 = vmatpush1.msra.mxu0 %v6689
    %6873 = vmatprep.subr.mxu0 0.0
    %6874 = vmatpush1.msra.mxu0 %v6690
    %6875 = vmatprep.subr.mxu0 0.0
    %6876 = vmatpush1.msra.mxu0 %v6691
    %6877 = vmatprep.subr.mxu0 0.0
    %6878 = vmatpush1.msra.mxu0 %v6692
    %6879 = vmatprep.subr.mxu0 0.0
    %6880 = vmatpush1.msra.mxu0 %v6693
    %6881 = vmatprep.subr.mxu0 0.0
    %6882 = vmatpush1.msra.mxu0 %v6694
    %6883 = vmatprep.subr.mxu0 0.0
    %6884 = vmatpush1.msra.mxu0 %v6695
    %6885 = vmatprep.subr.mxu0 0.0
    %6886 = vmatpush1.msra.mxu0 %v6696
    %6887 = vmatprep.subr.mxu0 0.0
    %6888 = vmatpush1.msra.mxu0 %v6697
    %6889 = vmatprep.subr.mxu0 0.0
    %6890 = vmatpush1.msra.mxu0 %v6698
    %6891 = vmatprep.subr.mxu0 0.0
    %6892 = vmatpush1.msra.mxu0 %v6699
    %6893 = vmatprep.subr.mxu0 0.0
    %6894 = vmatpush1.msra.mxu0 %v6700
    %6895 = vmatprep.subr.mxu0 0.0
    %6896 = vmatpush1.msra.mxu0 %v6701
    %6897 = vmatprep.subr.mxu0 0.0
    %6898 = vmatpush1.msra.mxu0 %v6702
    %6899 = vmatprep.subr.mxu0 0.0
    %6900 = vmatpush1.msra.mxu0 %v6703
    %6901 = vmatprep.subr.mxu0 0.0
    %6902 = vmatpush1.msra.mxu0 %v6704
    %6903 = vmatprep.subr.mxu0 0.0
    %6904 = vmatpush1.msra.mxu0 %v6705
    %6905 = vmatprep.subr.mxu0 0.0
    %6906 = vmatpush1.msra.mxu0 %v6706
    %6907 = vmatprep.subr.mxu0 0.0
    %6908 = vmatpush1.msra.mxu0 %v6707
    %6909 = vmatprep.subr.mxu0 0.0
    %6910 = vmatpush1.msra.mxu0 %v6708
    %6911 = vmatprep.subr.mxu0 0.0
    %6912 = vmatpush1.msra.mxu0 %v6709
    %6913 = vmatprep.subr.mxu0 0.0
    %6914 = vmatpush1.msra.mxu0 %v6710
    %6915 = vmatprep.subr.mxu0 0.0
    %6916 = vmatpush1.msra.mxu0 %v6711
    %6917 = vmatprep.subr.mxu0 0.0
    %6918 = vmatpush1.msra.mxu0 %v6712
    %6919 = vmatprep.subr.mxu0 0.0
    %6920 = vmatpush1.msra.mxu0 %v6713
    %6921 = vmatprep.subr.mxu0 0.0
    %6922 = vmatpush1.msra.mxu0 %v6714
    %6923 = vmatprep.subr.mxu0 0.0
    %6924 = vmatpush1.msra.mxu0 %v6715
    %6925 = vmatprep.subr.mxu0 0.0
    %6926 = vmatpush1.msra.mxu0 %v6716
    %6927 = vmatprep.subr.mxu0 0.0
    %6928 = vmatpush1.msra.mxu0 %v6717
    %6929 = vmatprep.subr.mxu0 0.0
    %6930 = vmatpush1.msra.mxu0 %v6718
    %6931 = vmatprep.mubr.f32.mxu0 %v6402
    %6932 = vmatmul.mubr.f32.gmra.mrb[0].mxu0 %v6401
    %v6933 = vpop.f32.mrb[0].mxu0
    %v6934 = vadd.f32 %v6789, %v6933
    %v6935 = vpop.f32.mrb[0].mxu0
    %6936 = vmatprep.mubr.f32.mxu0 %v6406
    %6937 = vmatmul.mubr.f32.gmra.mrb[0].mxu0 %v6405
    %v6938 = vpop.f32.mrb[0].mxu0
    %v6939 = vadd.f32 %v6794, %v6938
    %v6940 = vpop.f32.mrb[0].mxu0
    %6941 = vmatprep.mubr.f32.mxu0 %v6410
    %6942 = vmatmul.mubr.f32.gmra.mrb[0].mxu0 %v6409
    %v6943 = vpop.f32.mrb[0].mxu0
    %v6944 = vadd.f32 %v6799, %v6943
    %v6945 = vpop.f32.mrb[0].mxu0
    %6946 = vmatprep.mubr.f32.mxu0 %v6414
    %6947 = vmatmul.mubr.f32.gmra.mrb[0].mxu0 %v6413
    %v6948 = vpop.f32.mrb[0].mxu0
    %v6949 = vadd.f32 %v6804, %v6948
    %v6950 = vpop.f32.mrb[0].mxu0
    %6951 = vmatprep.mubr.f32.mxu0 %v6418
    %6952 = vmatmul.mubr.f32.gmra.mrb[0].mxu0 %v6417
    %v6953 = vpop.f32.mrb[0].mxu0
    %v6954 = vadd.f32 %v6809, %v6953
    %v6955 = vpop.f32.mrb[0].mxu0
    %6956 = vmatprep.mubr.f32.mxu0 %v6422
    %6957 = vmatmul.mubr.f32.gmra.mrb[0].mxu0 %v6421
    %v6958 = vpop.f32.mrb[0].mxu0
    %v6959 = vadd.f32 %v6814, %v6958
    %v6960 = vpop.f32.mrb[0].mxu0
    %6961 = vmatprep.mubr.f32.mxu0 %v6426
    %6962 = vmatmul.mubr.f32.gmra.mrb[0].mxu0 %v6425
    %v6963 = vpop.f32.mrb[0].mxu0
    %v6964 = vadd.f32 %v6819, %v6963
    %v6965 = vpop.f32.mrb[0].mxu0
    %6966 = vmatprep.mubr.f32.mxu0 %v6430
    %6967 = vmatmul.mubr.f32.gmra.mrb[0].mxu0 %v6429
    %v6968 = vpop.f32.mrb[0].mxu0
    %v6969 = vadd.f32 %v6824, %v6968
    %v6970 = vpop.f32.mrb[0].mxu0
    %6971 = vmatprep.mubr.f32.mxu0 %v6434
    %6972 = vmatmul.mubr.f32.gmra.mrb[0].mxu0 %v6433
    %v6973 = vpop.f32.mrb[0].mxu0
    %v6974 = vadd.f32 %v6829, %v6973
    %v6975 = vpop.f32.mrb[0].mxu0
    %6976 = vmatprep.mubr.f32.mxu0 %v6438
    %6977 = vmatmul.mubr.f32.gmra.mrb[0].mxu0 %v6437
    %v6978 = vpop.f32.mrb[0].mxu0
    %v6979 = vadd.f32 %v6834, %v6978
    %v6980 = vpop.f32.mrb[0].mxu0
    %6981 = vmatprep.mubr.f32.mxu0 %v6442
    %6982 = vmatmul.mubr.f32.gmra.mrb[0].mxu0 %v6441
    %v6983 = vpop.f32.mrb[0].mxu0
    %v6984 = vadd.f32 %v6839, %v6983
    %v6985 = vpop.f32.mrb[0].mxu0
    %6986 = vmatprep.mubr.f32.mxu0 %v6446
    %6987 = vmatmul.mubr.f32.gmra.mrb[0].mxu0 %v6445
    %v6988 = vpop.f32.mrb[0].mxu0
    %v6989 = vadd.f32 %v6844, %v6988
    %v6990 = vpop.f32.mrb[0].mxu0
    %6991 = vmatprep.mubr.f32.mxu0 %v6450
    %6992 = vmatmul.mubr.f32.gmra.mrb[0].mxu0 %v6449
    %v6993 = vpop.f32.mrb[0].mxu0
    %v6994 = vadd.f32 %v6849, %v6993
    %v6995 = vpop.f32.mrb[0].mxu0
    %6996 = vmatprep.mubr.f32.mxu0 %v6454
    %6997 = vmatmul.mubr.f32.gmra.mrb[0].mxu0 %v6453
    %v6998 = vpop.f32.mrb[0].mxu0
    %v6999 = vadd.f32 %v6854, %v6998
    %v7000 = vpop.f32.mrb[0].mxu0
    %7001 = vmatprep.mubr.f32.mxu0 %v6458
    %7002 = vmatmul.mubr.f32.gmra.mrb[0].mxu0 %v6457
    %v7003 = vpop.f32.mrb[0].mxu0
    %v7004 = vadd.f32 %v6859, %v7003
    %v7005 = vpop.f32.mrb[0].mxu0
    %7006 = vmatprep.mubr.f32.mxu0 %v6462
    %7007 = vmatmul.mubr.f32.gmra.mrb[0].mxu0 %v6461
    %v7008 = vpop.f32.mrb[0].mxu0
    %v7009 = vadd.f32 %v6864, %v7008
    %v7010 = vpop.f32.mrb[0].mxu0
    %7011 = vdwg.mxu0
    %v7012 = vld [vmem:[%s6 + $0x200] sm:$0xff]
    %v7013 = vld [vmem:[%s6 + $0x208] sm:$0xff]
    %v7014 = vld [vmem:[%s6 + $0x210] sm:$0xff]
    %v7015 = vld [vmem:[%s6 + $0x218] sm:$0xff]
    %v7016 = vld [vmem:[%s6 + $0x220] sm:$0xff]
    %v7017 = vld [vmem:[%s6 + $0x228] sm:$0xff]
    %v7018 = vld [vmem:[%s6 + $0x230] sm:$0xff]
    %v7019 = vld [vmem:[%s6 + $0x238] sm:$0xff]
    %v7020 = vld [vmem:[%s6 + $0x240] sm:$0xff]
    %v7021 = vld [vmem:[%s6 + $0x248] sm:$0xff]
    %v7022 = vld [vmem:[%s6 + $0x250] sm:$0xff]
    %v7023 = vld [vmem:[%s6 + $0x258] sm:$0xff]
    %v7024 = vld [vmem:[%s6 + $0x260] sm:$0xff]
    %v7025 = vld [vmem:[%s6 + $0x268] sm:$0xff]
    %v7026 = vld [vmem:[%s6 + $0x270] sm:$0xff]
    %v7027 = vld [vmem:[%s6 + $0x278] sm:$0xff]
    %v7028 = vrot.slane %v6934, 7
    %v7029 = vrot.slane %v6939, 7
    %v7030 = vrot.slane %v6944, 7
    %v7031 = vrot.slane %v6949, 7
    %v7032 = vrot.slane %v6954, 7
    %v7033 = vrot.slane %v6959, 7
    %v7034 = vrot.slane %v6964, 7
    %v7035 = vrot.slane %v6969, 7
    %v7036 = vrot.slane %v6974, 7
    %v7037 = vrot.slane %v6979, 7
    %v7038 = vrot.slane %v6984, 7
    %v7039 = vrot.slane %v6989, 7
    %v7040 = vrot.slane %v6994, 7
    %v7041 = vrot.slane %v6999, 7
    %v7042 = vrot.slane %v7004, 7
    %v7043 = vrot.slane %v7009, 7
    %v7044 = vsel %vm228, %v7042, %v7043
    %v7045 = vsel %vm228, %v7041, %v7042
    %v7046 = vsel %vm228, %v7040, %v7041
    %v7047 = vsel %vm228, %v7039, %v7040
    %v7048 = vsel %vm228, %v7038, %v7039
    %v7049 = vsel %vm228, %v7037, %v7038
    %v7050 = vsel %vm228, %v7036, %v7037
    %v7051 = vsel %vm228, %v7035, %v7036
    %v7052 = vsel %vm228, %v7034, %v7035
    %v7053 = vsel %vm228, %v7033, %v7034
    %v7054 = vsel %vm228, %v7032, %v7033
    %v7055 = vsel %vm228, %v7031, %v7032
    %v7056 = vsel %vm228, %v7030, %v7031
    %v7057 = vsel %vm228, %v7029, %v7030
    %v7058 = vsel %vm228, %v7028, %v7029
    %v7059 = vsel %vm228, %v7043, %v7028
    %7061 = vset.pattern.permute.xlu0 0
    %7062 = vperm.xlu0 %7061, %v7012
    %v7063 = vpop.permute.xlu0 %7062
    %7066 = vset.pattern.permute.xlu0 0
    %7067 = vperm.xlu0 %7066, %v7013
    %v7068 = vpop.permute.xlu0 %7067
    %7071 = vset.pattern.permute.xlu0 0
    %7072 = vperm.xlu0 %7071, %v7014
    %v7073 = vpop.permute.xlu0 %7072
    %7076 = vset.pattern.permute.xlu0 0
    %7077 = vperm.xlu0 %7076, %v7015
    %v7078 = vpop.permute.xlu0 %7077
    %7081 = vset.pattern.permute.xlu0 0
    %7082 = vperm.xlu0 %7081, %v7016
    %v7083 = vpop.permute.xlu0 %7082
    %7086 = vset.pattern.permute.xlu0 0
    %7087 = vperm.xlu0 %7086, %v7017
    %v7088 = vpop.permute.xlu0 %7087
    %7091 = vset.pattern.permute.xlu0 0
    %7092 = vperm.xlu0 %7091, %v7018
    %v7093 = vpop.permute.xlu0 %7092
    %7096 = vset.pattern.permute.xlu0 0
    %7097 = vperm.xlu0 %7096, %v7019
    %v7098 = vpop.permute.xlu0 %7097
    %7101 = vset.pattern.permute.xlu0 0
    %7102 = vperm.xlu0 %7101, %v7020
    %v7103 = vpop.permute.xlu0 %7102
    %7106 = vset.pattern.permute.xlu0 0
    %7107 = vperm.xlu0 %7106, %v7021
    %v7108 = vpop.permute.xlu0 %7107
    %7111 = vset.pattern.permute.xlu0 0
    %7112 = vperm.xlu0 %7111, %v7022
    %v7113 = vpop.permute.xlu0 %7112
    %7116 = vset.pattern.permute.xlu0 0
    %7117 = vperm.xlu0 %7116, %v7023
    %v7118 = vpop.permute.xlu0 %7117
    %7121 = vset.pattern.permute.xlu0 0
    %7122 = vperm.xlu0 %7121, %v7024
    %v7123 = vpop.permute.xlu0 %7122
    %7126 = vset.pattern.permute.xlu0 0
    %7127 = vperm.xlu0 %7126, %v7025
    %v7128 = vpop.permute.xlu0 %7127
    %7131 = vset.pattern.permute.xlu0 0
    %7132 = vperm.xlu0 %7131, %v7026
    %v7133 = vpop.permute.xlu0 %7132
    %7136 = vset.pattern.permute.xlu0 0
    %7137 = vperm.xlu0 %7136, %v7027
    %v7138 = vpop.permute.xlu0 %7137
    %v7140 = vmul.f32 %v7044, %v7063
    %v7141 = vmul.f32 %v7059, %v7068
    %v7142 = vmul.f32 %v7058, %v7073
    %v7143 = vmul.f32 %v7057, %v7078
    %v7144 = vmul.f32 %v7056, %v7083
    %v7145 = vmul.f32 %v7055, %v7088
    %v7146 = vmul.f32 %v7054, %v7093
    %v7147 = vmul.f32 %v7053, %v7098
    %v7148 = vmul.f32 %v7052, %v7103
    %v7149 = vmul.f32 %v7051, %v7108
    %v7150 = vmul.f32 %v7050, %v7113
    %v7151 = vmul.f32 %v7049, %v7118
    %v7152 = vmul.f32 %v7048, %v7123
    %v7153 = vmul.f32 %v7047, %v7128
    %v7154 = vmul.f32 %v7046, %v7133
    %v7155 = vmul.f32 %v7045, %v7138
    %vm7156 = vcmask 261120
    %7157 = vst.msk [vmem:[#allocation3] sm:$0xff] %vm7156, %v7140
    %7158 = vst.msk [vmem:[#allocation3 + $0x18] sm:$0xff] %vm7156, %v7141
    %7159 = vst.msk [vmem:[#allocation3 + $0x30] sm:$0xff] %vm7156, %v7142
    %7160 = vst.msk [vmem:[#allocation3 + $0x48] sm:$0xff] %vm7156, %v7143
    %7161 = vst.msk [vmem:[#allocation3 + $0x60] sm:$0xff] %vm7156, %v7144
    %7162 = vst.msk [vmem:[#allocation3 + $0x78] sm:$0xff] %vm7156, %v7145
    %7163 = vst.msk [vmem:[#allocation3 + $0x90] sm:$0xff] %vm7156, %v7146
    %7164 = vst.msk [vmem:[#allocation3 + $0xa8] sm:$0xff] %vm7156, %v7147
    %7165 = vst.msk [vmem:[#allocation3 + $0xc0] sm:$0xff] %vm7156, %v7148
    %7166 = vst.msk [vmem:[#allocation3 + $0xd8] sm:$0xff] %vm7156, %v7149
    %7167 = vst.msk [vmem:[#allocation3 + $0xf0] sm:$0xff] %vm7156, %v7150
    %7168 = vst.msk [vmem:[#allocation3 + $0x108] sm:$0xff] %vm7156, %v7151
    %7169 = vst.msk [vmem:[#allocation3 + $0x120] sm:$0xff] %vm7156, %v7152
    %7170 = vst.msk [vmem:[#allocation3 + $0x138] sm:$0xff] %vm7156, %v7153
    %7171 = vst.msk [vmem:[#allocation3 + $0x150] sm:$0xff] %vm7156, %v7154
    %7172 = vst.msk [vmem:[#allocation3 + $0x168] sm:$0xff] %vm7156, %v7155
    %7173 = vset.pattern.permute.xlu0 1
    %7174 = vperm.xlu0 %7173, %v7012
    %v7175 = vpop.permute.xlu0 %7174
    %7177 = vset.pattern.permute.xlu0 1
    %7178 = vperm.xlu0 %7177, %v7013
    %v7179 = vpop.permute.xlu0 %7178
    %7181 = vset.pattern.permute.xlu0 1
    %7182 = vperm.xlu0 %7181, %v7014
    %v7183 = vpop.permute.xlu0 %7182
    %7185 = vset.pattern.permute.xlu0 1
    %7186 = vperm.xlu0 %7185, %v7015
    %v7187 = vpop.permute.xlu0 %7186
    %7189 = vset.pattern.permute.xlu0 1
    %7190 = vperm.xlu0 %7189, %v7016
    %v7191 = vpop.permute.xlu0 %7190
    %7193 = vset.pattern.permute.xlu0 1
    %7194 = vperm.xlu0 %7193, %v7017
    %v7195 = vpop.permute.xlu0 %7194
    %7197 = vset.pattern.permute.xlu0 1
    %7198 = vperm.xlu0 %7197, %v7018
    %v7199 = vpop.permute.xlu0 %7198
    %7201 = vset.pattern.permute.xlu0 1
    %7202 = vperm.xlu0 %7201, %v7019
    %v7203 = vpop.permute.xlu0 %7202
    %7205 = vset.pattern.permute.xlu0 1
    %7206 = vperm.xlu0 %7205, %v7020
    %v7207 = vpop.permute.xlu0 %7206
    %7209 = vset.pattern.permute.xlu0 1
    %7210 = vperm.xlu0 %7209, %v7021
    %v7211 = vpop.permute.xlu0 %7210
    %7213 = vset.pattern.permute.xlu0 1
    %7214 = vperm.xlu0 %7213, %v7022
    %v7215 = vpop.permute.xlu0 %7214
    %7217 = vset.pattern.permute.xlu0 1
    %7218 = vperm.xlu0 %7217, %v7023
    %v7219 = vpop.permute.xlu0 %7218
    %7221 = vset.pattern.permute.xlu0 1
    %7222 = vperm.xlu0 %7221, %v7024
    %v7223 = vpop.permute.xlu0 %7222
    %7225 = vset.pattern.permute.xlu0 1
    %7226 = vperm.xlu0 %7225, %v7025
    %v7227 = vpop.permute.xlu0 %7226
    %7229 = vset.pattern.permute.xlu0 1
    %7230 = vperm.xlu0 %7229, %v7026
    %v7231 = vpop.permute.xlu0 %7230
    %7233 = vset.pattern.permute.xlu0 1
    %7234 = vperm.xlu0 %7233, %v7027
    %v7235 = vpop.permute.xlu0 %7234
    %v7237 = vmul.f32 %v7009, %v7175
    %v7238 = vmul.f32 %v6934, %v7179
    %v7239 = vmul.f32 %v6939, %v7183
    %v7240 = vmul.f32 %v6944, %v7187
    %v7241 = vmul.f32 %v6949, %v7191
    %v7242 = vmul.f32 %v6954, %v7195
    %v7243 = vmul.f32 %v6959, %v7199
    %v7244 = vmul.f32 %v6964, %v7203
    %v7245 = vmul.f32 %v6969, %v7207
    %v7246 = vmul.f32 %v6974, %v7211
    %v7247 = vmul.f32 %v6979, %v7215
    %v7248 = vmul.f32 %v6984, %v7219
    %v7249 = vmul.f32 %v6989, %v7223
    %v7250 = vmul.f32 %v6994, %v7227
    %v7251 = vmul.f32 %v6999, %v7231
    %v7252 = vmul.f32 %v7004, %v7235
    %7269 = vrot.lane.b32.xlu0 %v7237, 32
    %v7270 = vpop.permute.xlu0 %7269
    %7271 = vrot.lane.b32.xlu0 %v7238, 32
    %v7272 = vpop.permute.xlu0 %7271
    %7273 = vrot.lane.b32.xlu0 %v7239, 32
    %v7274 = vpop.permute.xlu0 %7273
    %7275 = vrot.lane.b32.xlu0 %v7240, 32
    %v7276 = vpop.permute.xlu0 %7275
    %7277 = vrot.lane.b32.xlu0 %v7241, 32
    %v7278 = vpop.permute.xlu0 %7277
    %7279 = vrot.lane.b32.xlu0 %v7242, 32
    %v7280 = vpop.permute.xlu0 %7279
    %7281 = vrot.lane.b32.xlu0 %v7243, 32
    %v7282 = vpop.permute.xlu0 %7281
    %7283 = vrot.lane.b32.xlu0 %v7244, 32
    %v7284 = vpop.permute.xlu0 %7283
    %7285 = vrot.lane.b32.xlu0 %v7245, 32
    %v7286 = vpop.permute.xlu0 %7285
    %7287 = vrot.lane.b32.xlu0 %v7246, 32
    %v7288 = vpop.permute.xlu0 %7287
    %7289 = vrot.lane.b32.xlu0 %v7247, 32
    %v7290 = vpop.permute.xlu0 %7289
    %7291 = vrot.lane.b32.xlu0 %v7248, 32
    %v7292 = vpop.permute.xlu0 %7291
    %7293 = vrot.lane.b32.xlu0 %v7249, 32
    %v7294 = vpop.permute.xlu0 %7293
    %7295 = vrot.lane.b32.xlu0 %v7250, 32
    %v7296 = vpop.permute.xlu0 %7295
    %7297 = vrot.lane.b32.xlu0 %v7251, 32
    %v7298 = vpop.permute.xlu0 %7297
    %7299 = vrot.lane.b32.xlu0 %v7252, 32
    %v7300 = vpop.permute.xlu0 %7299
    %vm7317 = vcmask 523520
    %7318 = vst.msk [vmem:[#allocation3] sm:$0xff] %vm7317, %v7270
    %7319 = vst.msk [vmem:[#allocation3 + $0x18] sm:$0xff] %vm7317, %v7272
    %7320 = vst.msk [vmem:[#allocation3 + $0x30] sm:$0xff] %vm7317, %v7274
    %7321 = vst.msk [vmem:[#allocation3 + $0x48] sm:$0xff] %vm7317, %v7276
    %7322 = vst.msk [vmem:[#allocation3 + $0x60] sm:$0xff] %vm7317, %v7278
    %7323 = vst.msk [vmem:[#allocation3 + $0x78] sm:$0xff] %vm7317, %v7280
    %7324 = vst.msk [vmem:[#allocation3 + $0x90] sm:$0xff] %vm7317, %v7282
    %7325 = vst.msk [vmem:[#allocation3 + $0xa8] sm:$0xff] %vm7317, %v7284
    %7326 = vst.msk [vmem:[#allocation3 + $0xc0] sm:$0xff] %vm7317, %v7286
    %7327 = vst.msk [vmem:[#allocation3 + $0xd8] sm:$0xff] %vm7317, %v7288
    %7328 = vst.msk [vmem:[#allocation3 + $0xf0] sm:$0xff] %vm7317, %v7290
    %7329 = vst.msk [vmem:[#allocation3 + $0x108] sm:$0xff] %vm7317, %v7292
    %7330 = vst.msk [vmem:[#allocation3 + $0x120] sm:$0xff] %vm7317, %v7294
    %7331 = vst.msk [vmem:[#allocation3 + $0x138] sm:$0xff] %vm7317, %v7296
    %7332 = vst.msk [vmem:[#allocation3 + $0x150] sm:$0xff] %vm7317, %v7298
    %7333 = vst.msk [vmem:[#allocation3 + $0x168] sm:$0xff] %vm7317, %v7300
    %v7334 = vrot.slane %v6934, 1
    %v7335 = vrot.slane %v6939, 1
    %v7336 = vrot.slane %v6944, 1
    %v7337 = vrot.slane %v6949, 1
    %v7338 = vrot.slane %v6954, 1
    %v7339 = vrot.slane %v6959, 1
    %v7340 = vrot.slane %v6964, 1
    %v7341 = vrot.slane %v6969, 1
    %v7342 = vrot.slane %v6974, 1
    %v7343 = vrot.slane %v6979, 1
    %v7344 = vrot.slane %v6984, 1
    %v7345 = vrot.slane %v6989, 1
    %v7346 = vrot.slane %v6994, 1
    %v7347 = vrot.slane %v6999, 1
    %v7348 = vrot.slane %v7004, 1
    %v7349 = vrot.slane %v7009, 1
    %v7350 = vsel %vm1447, %v7348, %v7349
    %v7351 = vsel %vm1447, %v7347, %v7348
    %v7352 = vsel %vm1447, %v7346, %v7347
    %v7353 = vsel %vm1447, %v7345, %v7346
    %v7354 = vsel %vm1447, %v7344, %v7345
    %v7355 = vsel %vm1447, %v7343, %v7344
    %v7356 = vsel %vm1447, %v7342, %v7343
    %v7357 = vsel %vm1447, %v7341, %v7342
    %v7358 = vsel %vm1447, %v7340, %v7341
    %v7359 = vsel %vm1447, %v7339, %v7340
    %v7360 = vsel %vm1447, %v7338, %v7339
    %v7361 = vsel %vm1447, %v7337, %v7338
    %v7362 = vsel %vm1447, %v7336, %v7337
    %v7363 = vsel %vm1447, %v7335, %v7336
    %v7364 = vsel %vm1447, %v7334, %v7335
    %v7365 = vsel %vm1447, %v7349, %v7334
    %7366 = vset.pattern.permute.xlu0 2
    %7367 = vperm.xlu0 %7366, %v7012
    %v7368 = vpop.permute.xlu0 %7367
    %7370 = vset.pattern.permute.xlu0 2
    %7371 = vperm.xlu0 %7370, %v7013
    %v7372 = vpop.permute.xlu0 %7371
    %7374 = vset.pattern.permute.xlu0 2
    %7375 = vperm.xlu0 %7374, %v7014
    %v7376 = vpop.permute.xlu0 %7375
    %7378 = vset.pattern.permute.xlu0 2
    %7379 = vperm.xlu0 %7378, %v7015
    %v7380 = vpop.permute.xlu0 %7379
    %7382 = vset.pattern.permute.xlu0 2
    %7383 = vperm.xlu0 %7382, %v7016
    %v7384 = vpop.permute.xlu0 %7383
    %7386 = vset.pattern.permute.xlu0 2
    %7387 = vperm.xlu0 %7386, %v7017
    %v7388 = vpop.permute.xlu0 %7387
    %7390 = vset.pattern.permute.xlu0 2
    %7391 = vperm.xlu0 %7390, %v7018
    %v7392 = vpop.permute.xlu0 %7391
    %7394 = vset.pattern.permute.xlu0 2
    %7395 = vperm.xlu0 %7394, %v7019
    %v7396 = vpop.permute.xlu0 %7395
    %7398 = vset.pattern.permute.xlu0 2
    %7399 = vperm.xlu0 %7398, %v7020
    %v7400 = vpop.permute.xlu0 %7399
    %7402 = vset.pattern.permute.xlu0 2
    %7403 = vperm.xlu0 %7402, %v7021
    %v7404 = vpop.permute.xlu0 %7403
    %7406 = vset.pattern.permute.xlu0 2
    %7407 = vperm.xlu0 %7406, %v7022
    %v7408 = vpop.permute.xlu0 %7407
    %7410 = vset.pattern.permute.xlu0 2
    %7411 = vperm.xlu0 %7410, %v7023
    %v7412 = vpop.permute.xlu0 %7411
    %7414 = vset.pattern.permute.xlu0 2
    %7415 = vperm.xlu0 %7414, %v7024
    %v7416 = vpop.permute.xlu0 %7415
    %7418 = vset.pattern.permute.xlu0 2
    %7419 = vperm.xlu0 %7418, %v7025
    %v7420 = vpop.permute.xlu0 %7419
    %7422 = vset.pattern.permute.xlu0 2
    %7423 = vperm.xlu0 %7422, %v7026
    %v7424 = vpop.permute.xlu0 %7423
    %7426 = vset.pattern.permute.xlu0 2
    %7427 = vperm.xlu0 %7426, %v7027
    %v7428 = vpop.permute.xlu0 %7427
    %v7430 = vmul.f32 %v7365, %v7368
    %v7431 = vmul.f32 %v7364, %v7372
    %v7432 = vmul.f32 %v7363, %v7376
    %v7433 = vmul.f32 %v7362, %v7380
    %v7434 = vmul.f32 %v7361, %v7384
    %v7435 = vmul.f32 %v7360, %v7388
    %v7436 = vmul.f32 %v7359, %v7392
    %v7437 = vmul.f32 %v7358, %v7396
    %v7438 = vmul.f32 %v7357, %v7400
    %v7439 = vmul.f32 %v7356, %v7404
    %v7440 = vmul.f32 %v7355, %v7408
    %v7441 = vmul.f32 %v7354, %v7412
    %v7442 = vmul.f32 %v7353, %v7416
    %v7443 = vmul.f32 %v7352, %v7420
    %v7444 = vmul.f32 %v7351, %v7424
    %v7445 = vmul.f32 %v7350, %v7428
    %7462 = vrot.lane.b32.xlu0 %v7430, 64
    %v7463 = vpop.permute.xlu0 %7462
    %7464 = vrot.lane.b32.xlu0 %v7431, 64
    %v7465 = vpop.permute.xlu0 %7464
    %7466 = vrot.lane.b32.xlu0 %v7432, 64
    %v7467 = vpop.permute.xlu0 %7466
    %7468 = vrot.lane.b32.xlu0 %v7433, 64
    %v7469 = vpop.permute.xlu0 %7468
    %7470 = vrot.lane.b32.xlu0 %v7434, 64
    %v7471 = vpop.permute.xlu0 %7470
    %7472 = vrot.lane.b32.xlu0 %v7435, 64
    %v7473 = vpop.permute.xlu0 %7472
    %7474 = vrot.lane.b32.xlu0 %v7436, 64
    %v7475 = vpop.permute.xlu0 %7474
    %7476 = vrot.lane.b32.xlu0 %v7437, 64
    %v7477 = vpop.permute.xlu0 %7476
    %7478 = vrot.lane.b32.xlu0 %v7438, 64
    %v7479 = vpop.permute.xlu0 %7478
    %7480 = vrot.lane.b32.xlu0 %v7439, 64
    %v7481 = vpop.permute.xlu0 %7480
    %7482 = vrot.lane.b32.xlu0 %v7440, 64
    %v7483 = vpop.permute.xlu0 %7482
    %7484 = vrot.lane.b32.xlu0 %v7441, 64
    %v7485 = vpop.permute.xlu0 %7484
    %7486 = vrot.lane.b32.xlu0 %v7442, 64
    %v7487 = vpop.permute.xlu0 %7486
    %7488 = vrot.lane.b32.xlu0 %v7443, 64
    %v7489 = vpop.permute.xlu0 %7488
    %7490 = vrot.lane.b32.xlu0 %v7444, 64
    %v7491 = vpop.permute.xlu0 %7490
    %7492 = vrot.lane.b32.xlu0 %v7445, 64
    %v7493 = vpop.permute.xlu0 %7492
    %vm7510 = vcmask 785920
    %7511 = vst.msk [vmem:[#allocation3] sm:$0xff] %vm7510, %v7463
    %7512 = vst.msk [vmem:[#allocation3 + $0x18] sm:$0xff] %vm7510, %v7465
    %7513 = vst.msk [vmem:[#allocation3 + $0x30] sm:$0xff] %vm7510, %v7467
    %7514 = vst.msk [vmem:[#allocation3 + $0x48] sm:$0xff] %vm7510, %v7469
    %7515 = vst.msk [vmem:[#allocation3 + $0x60] sm:$0xff] %vm7510, %v7471
    %7516 = vst.msk [vmem:[#allocation3 + $0x78] sm:$0xff] %vm7510, %v7473
    %7517 = vst.msk [vmem:[#allocation3 + $0x90] sm:$0xff] %vm7510, %v7475
    %7518 = vst.msk [vmem:[#allocation3 + $0xa8] sm:$0xff] %vm7510, %v7477
    %7519 = vst.msk [vmem:[#allocation3 + $0xc0] sm:$0xff] %vm7510, %v7479
    %7520 = vst.msk [vmem:[#allocation3 + $0xd8] sm:$0xff] %vm7510, %v7481
    %7521 = vst.msk [vmem:[#allocation3 + $0xf0] sm:$0xff] %vm7510, %v7483
    %7522 = vst.msk [vmem:[#allocation3 + $0x108] sm:$0xff] %vm7510, %v7485
    %7523 = vst.msk [vmem:[#allocation3 + $0x120] sm:$0xff] %vm7510, %v7487
    %7524 = vst.msk [vmem:[#allocation3 + $0x138] sm:$0xff] %vm7510, %v7489
    %7525 = vst.msk [vmem:[#allocation3 + $0x150] sm:$0xff] %vm7510, %v7491
    %7526 = vst.msk [vmem:[#allocation3 + $0x168] sm:$0xff] %vm7510, %v7493
    %7527 = vset.pattern.permute.xlu0 3
    %7528 = vperm.xlu0 %7527, %v7012
    %v7529 = vpop.permute.xlu0 %7528
    %7531 = vset.pattern.permute.xlu0 3
    %7532 = vperm.xlu0 %7531, %v7013
    %v7533 = vpop.permute.xlu0 %7532
    %7535 = vset.pattern.permute.xlu0 3
    %7536 = vperm.xlu0 %7535, %v7014
    %v7537 = vpop.permute.xlu0 %7536
    %7539 = vset.pattern.permute.xlu0 3
    %7540 = vperm.xlu0 %7539, %v7015
    %v7541 = vpop.permute.xlu0 %7540
    %7543 = vset.pattern.permute.xlu0 3
    %7544 = vperm.xlu0 %7543, %v7016
    %v7545 = vpop.permute.xlu0 %7544
    %7547 = vset.pattern.permute.xlu0 3
    %7548 = vperm.xlu0 %7547, %v7017
    %v7549 = vpop.permute.xlu0 %7548
    %7551 = vset.pattern.permute.xlu0 3
    %7552 = vperm.xlu0 %7551, %v7018
    %v7553 = vpop.permute.xlu0 %7552
    %7555 = vset.pattern.permute.xlu0 3
    %7556 = vperm.xlu0 %7555, %v7019
    %v7557 = vpop.permute.xlu0 %7556
    %7559 = vset.pattern.permute.xlu0 3
    %7560 = vperm.xlu0 %7559, %v7020
    %v7561 = vpop.permute.xlu0 %7560
    %7563 = vset.pattern.permute.xlu0 3
    %7564 = vperm.xlu0 %7563, %v7021
    %v7565 = vpop.permute.xlu0 %7564
    %7567 = vset.pattern.permute.xlu0 3
    %7568 = vperm.xlu0 %7567, %v7022
    %v7569 = vpop.permute.xlu0 %7568
    %7571 = vset.pattern.permute.xlu0 3
    %7572 = vperm.xlu0 %7571, %v7023
    %v7573 = vpop.permute.xlu0 %7572
    %7575 = vset.pattern.permute.xlu0 3
    %7576 = vperm.xlu0 %7575, %v7024
    %v7577 = vpop.permute.xlu0 %7576
    %7579 = vset.pattern.permute.xlu0 3
    %7580 = vperm.xlu0 %7579, %v7025
    %v7581 = vpop.permute.xlu0 %7580
    %7583 = vset.pattern.permute.xlu0 3
    %7584 = vperm.xlu0 %7583, %v7026
    %v7585 = vpop.permute.xlu0 %7584
    %7587 = vset.pattern.permute.xlu0 3
    %7588 = vperm.xlu0 %7587, %v7027
    %v7589 = vpop.permute.xlu0 %7588
    %v7591 = vmul.f32 %v7059, %v7529
    %v7592 = vmul.f32 %v7058, %v7533
    %v7593 = vmul.f32 %v7057, %v7537
    %v7594 = vmul.f32 %v7056, %v7541
    %v7595 = vmul.f32 %v7055, %v7545
    %v7596 = vmul.f32 %v7054, %v7549
    %v7597 = vmul.f32 %v7053, %v7553
    %v7598 = vmul.f32 %v7052, %v7557
    %v7599 = vmul.f32 %v7051, %v7561
    %v7600 = vmul.f32 %v7050, %v7565
    %v7601 = vmul.f32 %v7049, %v7569
    %v7602 = vmul.f32 %v7048, %v7573
    %v7603 = vmul.f32 %v7047, %v7577
    %v7604 = vmul.f32 %v7046, %v7581
    %v7605 = vmul.f32 %v7045, %v7585
    %v7606 = vmul.f32 %v7044, %v7589
    %7623 = vrot.lane.b32.xlu0 %v7591, 96
    %v7624 = vpop.permute.xlu0 %7623
    %7625 = vrot.lane.b32.xlu0 %v7592, 96
    %v7626 = vpop.permute.xlu0 %7625
    %7627 = vrot.lane.b32.xlu0 %v7593, 96
    %v7628 = vpop.permute.xlu0 %7627
    %7629 = vrot.lane.b32.xlu0 %v7594, 96
    %v7630 = vpop.permute.xlu0 %7629
    %7631 = vrot.lane.b32.xlu0 %v7595, 96
    %v7632 = vpop.permute.xlu0 %7631
    %7633 = vrot.lane.b32.xlu0 %v7596, 96
    %v7634 = vpop.permute.xlu0 %7633
    %7635 = vrot.lane.b32.xlu0 %v7597, 96
    %v7636 = vpop.permute.xlu0 %7635
    %7637 = vrot.lane.b32.xlu0 %v7598, 96
    %v7638 = vpop.permute.xlu0 %7637
    %7639 = vrot.lane.b32.xlu0 %v7599, 96
    %v7640 = vpop.permute.xlu0 %7639
    %7641 = vrot.lane.b32.xlu0 %v7600, 96
    %v7642 = vpop.permute.xlu0 %7641
    %7643 = vrot.lane.b32.xlu0 %v7601, 96
    %v7644 = vpop.permute.xlu0 %7643
    %7645 = vrot.lane.b32.xlu0 %v7602, 96
    %v7646 = vpop.permute.xlu0 %7645
    %7647 = vrot.lane.b32.xlu0 %v7603, 96
    %v7648 = vpop.permute.xlu0 %7647
    %7649 = vrot.lane.b32.xlu0 %v7604, 96
    %v7650 = vpop.permute.xlu0 %7649
    %7651 = vrot.lane.b32.xlu0 %v7605, 96
    %v7652 = vpop.permute.xlu0 %7651
    %7653 = vrot.lane.b32.xlu0 %v7606, 96
    %v7654 = vpop.permute.xlu0 %7653
    %vm7671 = vcmask 1048320
    %7672 = vst.msk [vmem:[#allocation3] sm:$0xff] %vm7671, %v7624
    %7673 = vst.msk [vmem:[#allocation3 + $0x18] sm:$0xff] %vm7671, %v7626
    %7674 = vst.msk [vmem:[#allocation3 + $0x30] sm:$0xff] %vm7671, %v7628
    %7675 = vst.msk [vmem:[#allocation3 + $0x48] sm:$0xff] %vm7671, %v7630
    %7676 = vst.msk [vmem:[#allocation3 + $0x60] sm:$0xff] %vm7671, %v7632
    %7677 = vst.msk [vmem:[#allocation3 + $0x78] sm:$0xff] %vm7671, %v7634
    %7678 = vst.msk [vmem:[#allocation3 + $0x90] sm:$0xff] %vm7671, %v7636
    %7679 = vst.msk [vmem:[#allocation3 + $0xa8] sm:$0xff] %vm7671, %v7638
    %7680 = vst.msk [vmem:[#allocation3 + $0xc0] sm:$0xff] %vm7671, %v7640
    %7681 = vst.msk [vmem:[#allocation3 + $0xd8] sm:$0xff] %vm7671, %v7642
    %7682 = vst.msk [vmem:[#allocation3 + $0xf0] sm:$0xff] %vm7671, %v7644
    %7683 = vst.msk [vmem:[#allocation3 + $0x108] sm:$0xff] %vm7671, %v7646
    %7684 = vst.msk [vmem:[#allocation3 + $0x120] sm:$0xff] %vm7671, %v7648
    %7685 = vst.msk [vmem:[#allocation3 + $0x138] sm:$0xff] %vm7671, %v7650
    %7686 = vst.msk [vmem:[#allocation3 + $0x150] sm:$0xff] %vm7671, %v7652
    %7687 = vst.msk [vmem:[#allocation3 + $0x168] sm:$0xff] %vm7671, %v7654
    %7688 = vst.msk [vmem:[#allocation3 + $0x8] sm:$0xff] %vm7156, %v6934
    %7689 = vst.msk [vmem:[#allocation3 + $0x20] sm:$0xff] %vm7156, %v6939
    %7690 = vst.msk [vmem:[#allocation3 + $0x38] sm:$0xff] %vm7156, %v6944
    %7691 = vst.msk [vmem:[#allocation3 + $0x50] sm:$0xff] %vm7156, %v6949
    %7692 = vst.msk [vmem:[#allocation3 + $0x68] sm:$0xff] %vm7156, %v6954
    %7693 = vst.msk [vmem:[#allocation3 + $0x80] sm:$0xff] %vm7156, %v6959
    %7694 = vst.msk [vmem:[#allocation3 + $0x98] sm:$0xff] %vm7156, %v6964
    %7695 = vst.msk [vmem:[#allocation3 + $0xb0] sm:$0xff] %vm7156, %v6969
    %7696 = vst.msk [vmem:[#allocation3 + $0xc8] sm:$0xff] %vm7156, %v6974
    %7697 = vst.msk [vmem:[#allocation3 + $0xe0] sm:$0xff] %vm7156, %v6979
    %7698 = vst.msk [vmem:[#allocation3 + $0xf8] sm:$0xff] %vm7156, %v6984
    %7699 = vst.msk [vmem:[#allocation3 + $0x110] sm:$0xff] %vm7156, %v6989
    %7700 = vst.msk [vmem:[#allocation3 + $0x128] sm:$0xff] %vm7156, %v6994
    %7701 = vst.msk [vmem:[#allocation3 + $0x140] sm:$0xff] %vm7156, %v6999
    %7702 = vst.msk [vmem:[#allocation3 + $0x158] sm:$0xff] %vm7156, %v7004
    %7703 = vst.msk [vmem:[#allocation3 + $0x170] sm:$0xff] %vm7156, %v7009
    %7704 = vset.pattern.permute.xlu0 5
    %7705 = vperm.xlu0 %7704, %v7012
    %v7706 = vpop.permute.xlu0 %7705
    %7708 = vset.pattern.permute.xlu0 5
    %7709 = vperm.xlu0 %7708, %v7013
    %v7710 = vpop.permute.xlu0 %7709
    %7712 = vset.pattern.permute.xlu0 5
    %7713 = vperm.xlu0 %7712, %v7014
    %v7714 = vpop.permute.xlu0 %7713
    %7716 = vset.pattern.permute.xlu0 5
    %7717 = vperm.xlu0 %7716, %v7015
    %v7718 = vpop.permute.xlu0 %7717
    %7720 = vset.pattern.permute.xlu0 5
    %7721 = vperm.xlu0 %7720, %v7016
    %v7722 = vpop.permute.xlu0 %7721
    %7724 = vset.pattern.permute.xlu0 5
    %7725 = vperm.xlu0 %7724, %v7017
    %v7726 = vpop.permute.xlu0 %7725
    %7728 = vset.pattern.permute.xlu0 5
    %7729 = vperm.xlu0 %7728, %v7018
    %v7730 = vpop.permute.xlu0 %7729
    %7732 = vset.pattern.permute.xlu0 5
    %7733 = vperm.xlu0 %7732, %v7019
    %v7734 = vpop.permute.xlu0 %7733
    %7736 = vset.pattern.permute.xlu0 5
    %7737 = vperm.xlu0 %7736, %v7020
    %v7738 = vpop.permute.xlu0 %7737
    %7740 = vset.pattern.permute.xlu0 5
    %7741 = vperm.xlu0 %7740, %v7021
    %v7742 = vpop.permute.xlu0 %7741
    %7744 = vset.pattern.permute.xlu0 5
    %7745 = vperm.xlu0 %7744, %v7022
    %v7746 = vpop.permute.xlu0 %7745
    %7748 = vset.pattern.permute.xlu0 5
    %7749 = vperm.xlu0 %7748, %v7023
    %v7750 = vpop.permute.xlu0 %7749
    %7752 = vset.pattern.permute.xlu0 5
    %7753 = vperm.xlu0 %7752, %v7024
    %v7754 = vpop.permute.xlu0 %7753
    %7756 = vset.pattern.permute.xlu0 5
    %7757 = vperm.xlu0 %7756, %v7025
    %v7758 = vpop.permute.xlu0 %7757
    %7760 = vset.pattern.permute.xlu0 5
    %7761 = vperm.xlu0 %7760, %v7026
    %v7762 = vpop.permute.xlu0 %7761
    %7764 = vset.pattern.permute.xlu0 5
    %7765 = vperm.xlu0 %7764, %v7027
    %v7766 = vpop.permute.xlu0 %7765
    %v7768 = vmul.f32 %v7364, %v7706
    %v7769 = vmul.f32 %v7363, %v7710
    %v7770 = vmul.f32 %v7362, %v7714
    %v7771 = vmul.f32 %v7361, %v7718
    %v7772 = vmul.f32 %v7360, %v7722
    %v7773 = vmul.f32 %v7359, %v7726
    %v7774 = vmul.f32 %v7358, %v7730
    %v7775 = vmul.f32 %v7357, %v7734
    %v7776 = vmul.f32 %v7356, %v7738
    %v7777 = vmul.f32 %v7355, %v7742
    %v7778 = vmul.f32 %v7354, %v7746
    %v7779 = vmul.f32 %v7353, %v7750
    %v7780 = vmul.f32 %v7352, %v7754
    %v7781 = vmul.f32 %v7351, %v7758
    %v7782 = vmul.f32 %v7350, %v7762
    %v7783 = vmul.f32 %v7365, %v7766
    %7800 = vrot.lane.b32.xlu0 %v7768, 32
    %v7801 = vpop.permute.xlu0 %7800
    %7802 = vrot.lane.b32.xlu0 %v7769, 32
    %v7803 = vpop.permute.xlu0 %7802
    %7804 = vrot.lane.b32.xlu0 %v7770, 32
    %v7805 = vpop.permute.xlu0 %7804
    %7806 = vrot.lane.b32.xlu0 %v7771, 32
    %v7807 = vpop.permute.xlu0 %7806
    %7808 = vrot.lane.b32.xlu0 %v7772, 32
    %v7809 = vpop.permute.xlu0 %7808
    %7810 = vrot.lane.b32.xlu0 %v7773, 32
    %v7811 = vpop.permute.xlu0 %7810
    %7812 = vrot.lane.b32.xlu0 %v7774, 32
    %v7813 = vpop.permute.xlu0 %7812
    %7814 = vrot.lane.b32.xlu0 %v7775, 32
    %v7815 = vpop.permute.xlu0 %7814
    %7816 = vrot.lane.b32.xlu0 %v7776, 32
    %v7817 = vpop.permute.xlu0 %7816
    %7818 = vrot.lane.b32.xlu0 %v7777, 32
    %v7819 = vpop.permute.xlu0 %7818
    %7820 = vrot.lane.b32.xlu0 %v7778, 32
    %v7821 = vpop.permute.xlu0 %7820
    %7822 = vrot.lane.b32.xlu0 %v7779, 32
    %v7823 = vpop.permute.xlu0 %7822
    %7824 = vrot.lane.b32.xlu0 %v7780, 32
    %v7825 = vpop.permute.xlu0 %7824
    %7826 = vrot.lane.b32.xlu0 %v7781, 32
    %v7827 = vpop.permute.xlu0 %7826
    %7828 = vrot.lane.b32.xlu0 %v7782, 32
    %v7829 = vpop.permute.xlu0 %7828
    %7830 = vrot.lane.b32.xlu0 %v7783, 32
    %v7831 = vpop.permute.xlu0 %7830
    %7848 = vst.msk [vmem:[#allocation3 + $0x8] sm:$0xff] %vm7317, %v7801
    %7849 = vst.msk [vmem:[#allocation3 + $0x20] sm:$0xff] %vm7317, %v7803
    %7850 = vst.msk [vmem:[#allocation3 + $0x38] sm:$0xff] %vm7317, %v7805
    %7851 = vst.msk [vmem:[#allocation3 + $0x50] sm:$0xff] %vm7317, %v7807
    %7852 = vst.msk [vmem:[#allocation3 + $0x68] sm:$0xff] %vm7317, %v7809
    %7853 = vst.msk [vmem:[#allocation3 + $0x80] sm:$0xff] %vm7317, %v7811
    %7854 = vst.msk [vmem:[#allocation3 + $0x98] sm:$0xff] %vm7317, %v7813
    %7855 = vst.msk [vmem:[#allocation3 + $0xb0] sm:$0xff] %vm7317, %v7815
    %7856 = vst.msk [vmem:[#allocation3 + $0xc8] sm:$0xff] %vm7317, %v7817
    %7857 = vst.msk [vmem:[#allocation3 + $0xe0] sm:$0xff] %vm7317, %v7819
    %7858 = vst.msk [vmem:[#allocation3 + $0xf8] sm:$0xff] %vm7317, %v7821
    %7859 = vst.msk [vmem:[#allocation3 + $0x110] sm:$0xff] %vm7317, %v7823
    %7860 = vst.msk [vmem:[#allocation3 + $0x128] sm:$0xff] %vm7317, %v7825
    %7861 = vst.msk [vmem:[#allocation3 + $0x140] sm:$0xff] %vm7317, %v7827
    %7862 = vst.msk [vmem:[#allocation3 + $0x158] sm:$0xff] %vm7317, %v7829
    %7863 = vst.msk [vmem:[#allocation3 + $0x170] sm:$0xff] %vm7317, %v7831
    %7864 = vset.pattern.permute.xlu0 6
    %7865 = vperm.xlu0 %7864, %v7012
    %v7866 = vpop.permute.xlu0 %7865
    %7868 = vset.pattern.permute.xlu0 6
    %7869 = vperm.xlu0 %7868, %v7013
    %v7870 = vpop.permute.xlu0 %7869
    %7872 = vset.pattern.permute.xlu0 6
    %7873 = vperm.xlu0 %7872, %v7014
    %v7874 = vpop.permute.xlu0 %7873
    %7876 = vset.pattern.permute.xlu0 6
    %7877 = vperm.xlu0 %7876, %v7015
    %v7878 = vpop.permute.xlu0 %7877
    %7880 = vset.pattern.permute.xlu0 6
    %7881 = vperm.xlu0 %7880, %v7016
    %v7882 = vpop.permute.xlu0 %7881
    %7884 = vset.pattern.permute.xlu0 6
    %7885 = vperm.xlu0 %7884, %v7017
    %v7886 = vpop.permute.xlu0 %7885
    %7888 = vset.pattern.permute.xlu0 6
    %7889 = vperm.xlu0 %7888, %v7018
    %v7890 = vpop.permute.xlu0 %7889
    %7892 = vset.pattern.permute.xlu0 6
    %7893 = vperm.xlu0 %7892, %v7019
    %v7894 = vpop.permute.xlu0 %7893
    %7896 = vset.pattern.permute.xlu0 6
    %7897 = vperm.xlu0 %7896, %v7020
    %v7898 = vpop.permute.xlu0 %7897
    %7900 = vset.pattern.permute.xlu0 6
    %7901 = vperm.xlu0 %7900, %v7021
    %v7902 = vpop.permute.xlu0 %7901
    %7904 = vset.pattern.permute.xlu0 6
    %7905 = vperm.xlu0 %7904, %v7022
    %v7906 = vpop.permute.xlu0 %7905
    %7908 = vset.pattern.permute.xlu0 6
    %7909 = vperm.xlu0 %7908, %v7023
    %v7910 = vpop.permute.xlu0 %7909
    %7912 = vset.pattern.permute.xlu0 6
    %7913 = vperm.xlu0 %7912, %v7024
    %v7914 = vpop.permute.xlu0 %7913
    %7916 = vset.pattern.permute.xlu0 6
    %7917 = vperm.xlu0 %7916, %v7025
    %v7918 = vpop.permute.xlu0 %7917
    %7920 = vset.pattern.permute.xlu0 6
    %7921 = vperm.xlu0 %7920, %v7026
    %v7922 = vpop.permute.xlu0 %7921
    %7924 = vset.pattern.permute.xlu0 6
    %7925 = vperm.xlu0 %7924, %v7027
    %v7926 = vpop.permute.xlu0 %7925
    %v7928 = vmul.f32 %v7058, %v7866
    %v7929 = vmul.f32 %v7057, %v7870
    %v7930 = vmul.f32 %v7056, %v7874
    %v7931 = vmul.f32 %v7055, %v7878
    %v7932 = vmul.f32 %v7054, %v7882
    %v7933 = vmul.f32 %v7053, %v7886
    %v7934 = vmul.f32 %v7052, %v7890
    %v7935 = vmul.f32 %v7051, %v7894
    %v7936 = vmul.f32 %v7050, %v7898
    %v7937 = vmul.f32 %v7049, %v7902
    %v7938 = vmul.f32 %v7048, %v7906
    %v7939 = vmul.f32 %v7047, %v7910
    %v7940 = vmul.f32 %v7046, %v7914
    %v7941 = vmul.f32 %v7045, %v7918
    %v7942 = vmul.f32 %v7044, %v7922
    %v7943 = vmul.f32 %v7059, %v7926
    %7960 = vrot.lane.b32.xlu0 %v7928, 64
    %v7961 = vpop.permute.xlu0 %7960
    %7962 = vrot.lane.b32.xlu0 %v7929, 64
    %v7963 = vpop.permute.xlu0 %7962
    %7964 = vrot.lane.b32.xlu0 %v7930, 64
    %v7965 = vpop.permute.xlu0 %7964
    %7966 = vrot.lane.b32.xlu0 %v7931, 64
    %v7967 = vpop.permute.xlu0 %7966
    %7968 = vrot.lane.b32.xlu0 %v7932, 64
    %v7969 = vpop.permute.xlu0 %7968
    %7970 = vrot.lane.b32.xlu0 %v7933, 64
    %v7971 = vpop.permute.xlu0 %7970
    %7972 = vrot.lane.b32.xlu0 %v7934, 64
    %v7973 = vpop.permute.xlu0 %7972
    %7974 = vrot.lane.b32.xlu0 %v7935, 64
    %v7975 = vpop.permute.xlu0 %7974
    %7976 = vrot.lane.b32.xlu0 %v7936, 64
    %v7977 = vpop.permute.xlu0 %7976
    %7978 = vrot.lane.b32.xlu0 %v7937, 64
    %v7979 = vpop.permute.xlu0 %7978
    %7980 = vrot.lane.b32.xlu0 %v7938, 64
    %v7981 = vpop.permute.xlu0 %7980
    %7982 = vrot.lane.b32.xlu0 %v7939, 64
    %v7983 = vpop.permute.xlu0 %7982
    %7984 = vrot.lane.b32.xlu0 %v7940, 64
    %v7985 = vpop.permute.xlu0 %7984
    %7986 = vrot.lane.b32.xlu0 %v7941, 64
    %v7987 = vpop.permute.xlu0 %7986
    %7988 = vrot.lane.b32.xlu0 %v7942, 64
    %v7989 = vpop.permute.xlu0 %7988
    %7990 = vrot.lane.b32.xlu0 %v7943, 64
    %v7991 = vpop.permute.xlu0 %7990
    %8008 = vst.msk [vmem:[#allocation3 + $0x8] sm:$0xff] %vm7510, %v7961
    %8009 = vst.msk [vmem:[#allocation3 + $0x20] sm:$0xff] %vm7510, %v7963
    %8010 = vst.msk [vmem:[#allocation3 + $0x38] sm:$0xff] %vm7510, %v7965
    %8011 = vst.msk [vmem:[#allocation3 + $0x50] sm:$0xff] %vm7510, %v7967
    %8012 = vst.msk [vmem:[#allocation3 + $0x68] sm:$0xff] %vm7510, %v7969
    %8013 = vst.msk [vmem:[#allocation3 + $0x80] sm:$0xff] %vm7510, %v7971
    %8014 = vst.msk [vmem:[#allocation3 + $0x98] sm:$0xff] %vm7510, %v7973
    %8015 = vst.msk [vmem:[#allocation3 + $0xb0] sm:$0xff] %vm7510, %v7975
    %8016 = vst.msk [vmem:[#allocation3 + $0xc8] sm:$0xff] %vm7510, %v7977
    %8017 = vst.msk [vmem:[#allocation3 + $0xe0] sm:$0xff] %vm7510, %v7979
    %8018 = vst.msk [vmem:[#allocation3 + $0xf8] sm:$0xff] %vm7510, %v7981
    %8019 = vst.msk [vmem:[#allocation3 + $0x110] sm:$0xff] %vm7510, %v7983
    %8020 = vst.msk [vmem:[#allocation3 + $0x128] sm:$0xff] %vm7510, %v7985
    %8021 = vst.msk [vmem:[#allocation3 + $0x140] sm:$0xff] %vm7510, %v7987
    %8022 = vst.msk [vmem:[#allocation3 + $0x158] sm:$0xff] %vm7510, %v7989
    %8023 = vst.msk [vmem:[#allocation3 + $0x170] sm:$0xff] %vm7510, %v7991
    %8024 = vset.pattern.permute.xlu0 7
    %8025 = vperm.xlu0 %8024, %v7012
    %v8026 = vpop.permute.xlu0 %8025
    %8028 = vset.pattern.permute.xlu0 7
    %8029 = vperm.xlu0 %8028, %v7013
    %v8030 = vpop.permute.xlu0 %8029
    %8032 = vset.pattern.permute.xlu0 7
    %8033 = vperm.xlu0 %8032, %v7014
    %v8034 = vpop.permute.xlu0 %8033
    %8036 = vset.pattern.permute.xlu0 7
    %8037 = vperm.xlu0 %8036, %v7015
    %v8038 = vpop.permute.xlu0 %8037
    %8040 = vset.pattern.permute.xlu0 7
    %8041 = vperm.xlu0 %8040, %v7016
    %v8042 = vpop.permute.xlu0 %8041
    %8044 = vset.pattern.permute.xlu0 7
    %8045 = vperm.xlu0 %8044, %v7017
    %v8046 = vpop.permute.xlu0 %8045
    %8048 = vset.pattern.permute.xlu0 7
    %8049 = vperm.xlu0 %8048, %v7018
    %v8050 = vpop.permute.xlu0 %8049
    %8052 = vset.pattern.permute.xlu0 7
    %8053 = vperm.xlu0 %8052, %v7019
    %v8054 = vpop.permute.xlu0 %8053
    %8056 = vset.pattern.permute.xlu0 7
    %8057 = vperm.xlu0 %8056, %v7020
    %v8058 = vpop.permute.xlu0 %8057
    %8060 = vset.pattern.permute.xlu0 7
    %8061 = vperm.xlu0 %8060, %v7021
    %v8062 = vpop.permute.xlu0 %8061
    %8064 = vset.pattern.permute.xlu0 7
    %8065 = vperm.xlu0 %8064, %v7022
    %v8066 = vpop.permute.xlu0 %8065
    %8068 = vset.pattern.permute.xlu0 7
    %8069 = vperm.xlu0 %8068, %v7023
    %v8070 = vpop.permute.xlu0 %8069
    %8072 = vset.pattern.permute.xlu0 7
    %8073 = vperm.xlu0 %8072, %v7024
    %v8074 = vpop.permute.xlu0 %8073
    %8076 = vset.pattern.permute.xlu0 7
    %8077 = vperm.xlu0 %8076, %v7025
    %v8078 = vpop.permute.xlu0 %8077
    %8080 = vset.pattern.permute.xlu0 7
    %8081 = vperm.xlu0 %8080, %v7026
    %v8082 = vpop.permute.xlu0 %8081
    %8084 = vset.pattern.permute.xlu0 7
    %8085 = vperm.xlu0 %8084, %v7027
    %v8086 = vpop.permute.xlu0 %8085
    %v8088 = vmul.f32 %v6939, %v8026
    %v8089 = vmul.f32 %v6944, %v8030
    %v8090 = vmul.f32 %v6949, %v8034
    %v8091 = vmul.f32 %v6954, %v8038
    %v8092 = vmul.f32 %v6959, %v8042
    %v8093 = vmul.f32 %v6964, %v8046
    %v8094 = vmul.f32 %v6969, %v8050
    %v8095 = vmul.f32 %v6974, %v8054
    %v8096 = vmul.f32 %v6979, %v8058
    %v8097 = vmul.f32 %v6984, %v8062
    %v8098 = vmul.f32 %v6989, %v8066
    %v8099 = vmul.f32 %v6994, %v8070
    %v8100 = vmul.f32 %v6999, %v8074
    %v8101 = vmul.f32 %v7004, %v8078
    %v8102 = vmul.f32 %v7009, %v8082
    %v8103 = vmul.f32 %v6934, %v8086
    %8120 = vrot.lane.b32.xlu0 %v8088, 96
    %v8121 = vpop.permute.xlu0 %8120
    %8122 = vrot.lane.b32.xlu0 %v8089, 96
    %v8123 = vpop.permute.xlu0 %8122
    %8124 = vrot.lane.b32.xlu0 %v8090, 96
    %v8125 = vpop.permute.xlu0 %8124
    %8126 = vrot.lane.b32.xlu0 %v8091, 96
    %v8127 = vpop.permute.xlu0 %8126
    %8128 = vrot.lane.b32.xlu0 %v8092, 96
    %v8129 = vpop.permute.xlu0 %8128
    %8130 = vrot.lane.b32.xlu0 %v8093, 96
    %v8131 = vpop.permute.xlu0 %8130
    %8132 = vrot.lane.b32.xlu0 %v8094, 96
    %v8133 = vpop.permute.xlu0 %8132
    %8134 = vrot.lane.b32.xlu0 %v8095, 96
    %v8135 = vpop.permute.xlu0 %8134
    %8136 = vrot.lane.b32.xlu0 %v8096, 96
    %v8137 = vpop.permute.xlu0 %8136
    %8138 = vrot.lane.b32.xlu0 %v8097, 96
    %v8139 = vpop.permute.xlu0 %8138
    %8140 = vrot.lane.b32.xlu0 %v8098, 96
    %v8141 = vpop.permute.xlu0 %8140
    %8142 = vrot.lane.b32.xlu0 %v8099, 96
    %v8143 = vpop.permute.xlu0 %8142
    %8144 = vrot.lane.b32.xlu0 %v8100, 96
    %v8145 = vpop.permute.xlu0 %8144
    %8146 = vrot.lane.b32.xlu0 %v8101, 96
    %v8147 = vpop.permute.xlu0 %8146
    %8148 = vrot.lane.b32.xlu0 %v8102, 96
    %v8149 = vpop.permute.xlu0 %8148
    %8150 = vrot.lane.b32.xlu0 %v8103, 96
    %v8151 = vpop.permute.xlu0 %8150
    %8168 = vst.msk [vmem:[#allocation3 + $0x8] sm:$0xff] %vm7671, %v8121
    %8169 = vst.msk [vmem:[#allocation3 + $0x20] sm:$0xff] %vm7671, %v8123
    %8170 = vst.msk [vmem:[#allocation3 + $0x38] sm:$0xff] %vm7671, %v8125
    %8171 = vst.msk [vmem:[#allocation3 + $0x50] sm:$0xff] %vm7671, %v8127
    %8172 = vst.msk [vmem:[#allocation3 + $0x68] sm:$0xff] %vm7671, %v8129
    %8173 = vst.msk [vmem:[#allocation3 + $0x80] sm:$0xff] %vm7671, %v8131
    %8174 = vst.msk [vmem:[#allocation3 + $0x98] sm:$0xff] %vm7671, %v8133
    %8175 = vst.msk [vmem:[#allocation3 + $0xb0] sm:$0xff] %vm7671, %v8135
    %8176 = vst.msk [vmem:[#allocation3 + $0xc8] sm:$0xff] %vm7671, %v8137
    %8177 = vst.msk [vmem:[#allocation3 + $0xe0] sm:$0xff] %vm7671, %v8139
    %8178 = vst.msk [vmem:[#allocation3 + $0xf8] sm:$0xff] %vm7671, %v8141
    %8179 = vst.msk [vmem:[#allocation3 + $0x110] sm:$0xff] %vm7671, %v8143
    %8180 = vst.msk [vmem:[#allocation3 + $0x128] sm:$0xff] %vm7671, %v8145
    %8181 = vst.msk [vmem:[#allocation3 + $0x140] sm:$0xff] %vm7671, %v8147
    %8182 = vst.msk [vmem:[#allocation3 + $0x158] sm:$0xff] %vm7671, %v8149
    %8183 = vst.msk [vmem:[#allocation3 + $0x170] sm:$0xff] %vm7671, %v8151
    %8184 = vset.pattern.permute.xlu0 8
    %8185 = vperm.xlu0 %8184, %v7012
    %v8186 = vpop.permute.xlu0 %8185
    %8188 = vset.pattern.permute.xlu0 8
    %8189 = vperm.xlu0 %8188, %v7013
    %v8190 = vpop.permute.xlu0 %8189
    %8192 = vset.pattern.permute.xlu0 8
    %8193 = vperm.xlu0 %8192, %v7014
    %v8194 = vpop.permute.xlu0 %8193
    %8196 = vset.pattern.permute.xlu0 8
    %8197 = vperm.xlu0 %8196, %v7015
    %v8198 = vpop.permute.xlu0 %8197
    %8200 = vset.pattern.permute.xlu0 8
    %8201 = vperm.xlu0 %8200, %v7016
    %v8202 = vpop.permute.xlu0 %8201
    %8204 = vset.pattern.permute.xlu0 8
    %8205 = vperm.xlu0 %8204, %v7017
    %v8206 = vpop.permute.xlu0 %8205
    %8208 = vset.pattern.permute.xlu0 8
    %8209 = vperm.xlu0 %8208, %v7018
    %v8210 = vpop.permute.xlu0 %8209
    %8212 = vset.pattern.permute.xlu0 8
    %8213 = vperm.xlu0 %8212, %v7019
    %v8214 = vpop.permute.xlu0 %8213
    %8216 = vset.pattern.permute.xlu0 8
    %8217 = vperm.xlu0 %8216, %v7020
    %v8218 = vpop.permute.xlu0 %8217
    %8220 = vset.pattern.permute.xlu0 8
    %8221 = vperm.xlu0 %8220, %v7021
    %v8222 = vpop.permute.xlu0 %8221
    %8224 = vset.pattern.permute.xlu0 8
    %8225 = vperm.xlu0 %8224, %v7022
    %v8226 = vpop.permute.xlu0 %8225
    %8228 = vset.pattern.permute.xlu0 8
    %8229 = vperm.xlu0 %8228, %v7023
    %v8230 = vpop.permute.xlu0 %8229
    %8232 = vset.pattern.permute.xlu0 8
    %8233 = vperm.xlu0 %8232, %v7024
    %v8234 = vpop.permute.xlu0 %8233
    %8236 = vset.pattern.permute.xlu0 8
    %8237 = vperm.xlu0 %8236, %v7025
    %v8238 = vpop.permute.xlu0 %8237
    %8240 = vset.pattern.permute.xlu0 8
    %8241 = vperm.xlu0 %8240, %v7026
    %v8242 = vpop.permute.xlu0 %8241
    %8244 = vset.pattern.permute.xlu0 8
    %8245 = vperm.xlu0 %8244, %v7027
    %v8246 = vpop.permute.xlu0 %8245
    %v8248 = vmul.f32 %v7363, %v8186
    %v8249 = vmul.f32 %v7362, %v8190
    %v8250 = vmul.f32 %v7361, %v8194
    %v8251 = vmul.f32 %v7360, %v8198
    %v8252 = vmul.f32 %v7359, %v8202
    %v8253 = vmul.f32 %v7358, %v8206
    %v8254 = vmul.f32 %v7357, %v8210
    %v8255 = vmul.f32 %v7356, %v8214
    %v8256 = vmul.f32 %v7355, %v8218
    %v8257 = vmul.f32 %v7354, %v8222
    %v8258 = vmul.f32 %v7353, %v8226
    %v8259 = vmul.f32 %v7352, %v8230
    %v8260 = vmul.f32 %v7351, %v8234
    %v8261 = vmul.f32 %v7350, %v8238
    %v8262 = vmul.f32 %v7365, %v8242
    %v8263 = vmul.f32 %v7364, %v8246
    %8264 = vst.msk [vmem:[#allocation3 + $0x10] sm:$0xff] %vm7156, %v8248
    %8265 = vst.msk [vmem:[#allocation3 + $0x28] sm:$0xff] %vm7156, %v8249
    %8266 = vst.msk [vmem:[#allocation3 + $0x40] sm:$0xff] %vm7156, %v8250
    %8267 = vst.msk [vmem:[#allocation3 + $0x58] sm:$0xff] %vm7156, %v8251
    %8268 = vst.msk [vmem:[#allocation3 + $0x70] sm:$0xff] %vm7156, %v8252
    %8269 = vst.msk [vmem:[#allocation3 + $0x88] sm:$0xff] %vm7156, %v8253
    %8270 = vst.msk [vmem:[#allocation3 + $0xa0] sm:$0xff] %vm7156, %v8254
    %8271 = vst.msk [vmem:[#allocation3 + $0xb8] sm:$0xff] %vm7156, %v8255
    %8272 = vst.msk [vmem:[#allocation3 + $0xd0] sm:$0xff] %vm7156, %v8256
    %8273 = vst.msk [vmem:[#allocation3 + $0xe8] sm:$0xff] %vm7156, %v8257
    %8274 = vst.msk [vmem:[#allocation3 + $0x100] sm:$0xff] %vm7156, %v8258
    %8275 = vst.msk [vmem:[#allocation3 + $0x118] sm:$0xff] %vm7156, %v8259
    %8276 = vst.msk [vmem:[#allocation3 + $0x130] sm:$0xff] %vm7156, %v8260
    %8277 = vst.msk [vmem:[#allocation3 + $0x148] sm:$0xff] %vm7156, %v8261
    %8278 = vst.msk [vmem:[#allocation3 + $0x160] sm:$0xff] %vm7156, %v8262
    %8279 = vst.msk [vmem:[#allocation3 + $0x178] sm:$0xff] %vm7156, %v8263
    %v8280 = vld [vmem:[#allocation3] sm:$0xff]
    %v8281 = vld [vmem:[#allocation3 + $0x8] sm:$0xff]
    %v8282 = vld [vmem:[#allocation3 + $0x10] sm:$0xff]
    %v8283 = vld [vmem:[#allocation3 + $0x18] sm:$0xff]
    %v8284 = vld [vmem:[#allocation3 + $0x20] sm:$0xff]
    %v8285 = vld [vmem:[#allocation3 + $0x28] sm:$0xff]
    %v8286 = vld [vmem:[#allocation3 + $0x30] sm:$0xff]
    %v8287 = vld [vmem:[#allocation3 + $0x38] sm:$0xff]
    %v8288 = vld [vmem:[#allocation3 + $0x40] sm:$0xff]
    %v8289 = vld [vmem:[#allocation3 + $0x48] sm:$0xff]
    %v8290 = vld [vmem:[#allocation3 + $0x50] sm:$0xff]
    %v8291 = vld [vmem:[#allocation3 + $0x58] sm:$0xff]
    %v8292 = vld [vmem:[#allocation3 + $0x60] sm:$0xff]
    %v8293 = vld [vmem:[#allocation3 + $0x68] sm:$0xff]
    %v8294 = vld [vmem:[#allocation3 + $0x70] sm:$0xff]
    %v8295 = vld [vmem:[#allocation3 + $0x78] sm:$0xff]
    %v8296 = vld [vmem:[#allocation3 + $0x80] sm:$0xff]
    %v8297 = vld [vmem:[#allocation3 + $0x88] sm:$0xff]
    %v8298 = vld [vmem:[#allocation3 + $0x90] sm:$0xff]
    %v8299 = vld [vmem:[#allocation3 + $0x98] sm:$0xff]
    %v8300 = vld [vmem:[#allocation3 + $0xa0] sm:$0xff]
    %v8301 = vld [vmem:[#allocation3 + $0xa8] sm:$0xff]
    %v8302 = vld [vmem:[#allocation3 + $0xb0] sm:$0xff]
    %v8303 = vld [vmem:[#allocation3 + $0xb8] sm:$0xff]
    %v8304 = vld [vmem:[#allocation3 + $0xc0] sm:$0xff]
    %v8305 = vld [vmem:[#allocation3 + $0xc8] sm:$0xff]
    %v8306 = vld [vmem:[#allocation3 + $0xd0] sm:$0xff]
    %v8307 = vld [vmem:[#allocation3 + $0xd8] sm:$0xff]
    %v8308 = vld [vmem:[#allocation3 + $0xe0] sm:$0xff]
    %v8309 = vld [vmem:[#allocation3 + $0xe8] sm:$0xff]
    %v8310 = vld [vmem:[#allocation3 + $0xf0] sm:$0xff]
    %v8311 = vld [vmem:[#allocation3 + $0xf8] sm:$0xff]
    %v8312 = vld [vmem:[#allocation3 + $0x100] sm:$0xff]
    %v8313 = vld [vmem:[#allocation3 + $0x108] sm:$0xff]
    %v8314 = vld [vmem:[#allocation3 + $0x110] sm:$0xff]
    %v8315 = vld [vmem:[#allocation3 + $0x118] sm:$0xff]
    %v8316 = vld [vmem:[#allocation3 + $0x120] sm:$0xff]
    %v8317 = vld [vmem:[#allocation3 + $0x128] sm:$0xff]
    %v8318 = vld [vmem:[#allocation3 + $0x130] sm:$0xff]
    %v8319 = vld [vmem:[#allocation3 + $0x138] sm:$0xff]
    %v8320 = vld [vmem:[#allocation3 + $0x140] sm:$0xff]
    %v8321 = vld [vmem:[#allocation3 + $0x148] sm:$0xff]
    %v8322 = vld [vmem:[#allocation3 + $0x150] sm:$0xff]
    %v8323 = vld [vmem:[#allocation3 + $0x158] sm:$0xff]
    %v8324 = vld [vmem:[#allocation3 + $0x160] sm:$0xff]
    %v8325 = vld [vmem:[#allocation3 + $0x168] sm:$0xff]
    %v8326 = vld [vmem:[#allocation3 + $0x170] sm:$0xff]
    %v8327 = vld [vmem:[#allocation3 + $0x178] sm:$0xff]
    %v8328 = vld [vmem:[%s2] sm:$0xff]
    %v8329 = vld [vmem:[%s2 + $0x8] sm:$0xff]
    %v8330 = vld [vmem:[%s2 + $0x10] sm:$0xff]
    %v8331 = vld [vmem:[%s2 + $0x18] sm:$0xff]
    %v8332 = vld [vmem:[%s2 + $0x20] sm:$0xff]
    %v8333 = vld [vmem:[%s2 + $0x28] sm:$0xff]
    %v8334 = vld [vmem:[%s2 + $0x30] sm:$0xff]
    %v8335 = vld [vmem:[%s2 + $0x38] sm:$0xff]
    %v8336 = vld [vmem:[%s2 + $0x40] sm:$0xff]
    %v8337 = vld [vmem:[%s2 + $0x48] sm:$0xff]
    %v8338 = vld [vmem:[%s2 + $0x50] sm:$0xff]
    %v8339 = vld [vmem:[%s2 + $0x58] sm:$0xff]
    %v8340 = vld [vmem:[%s2 + $0x60] sm:$0xff]
    %v8341 = vld [vmem:[%s2 + $0x68] sm:$0xff]
    %v8342 = vld [vmem:[%s2 + $0x70] sm:$0xff]
    %v8343 = vld [vmem:[%s2 + $0x78] sm:$0xff]
    %v8344 = vld [vmem:[%s2 + $0x80] sm:$0xff]
    %v8345 = vld [vmem:[%s2 + $0x88] sm:$0xff]
    %v8346 = vld [vmem:[%s2 + $0x90] sm:$0xff]
    %v8347 = vld [vmem:[%s2 + $0x98] sm:$0xff]
    %v8348 = vld [vmem:[%s2 + $0xa0] sm:$0xff]
    %v8349 = vld [vmem:[%s2 + $0xa8] sm:$0xff]
    %v8350 = vld [vmem:[%s2 + $0xb0] sm:$0xff]
    %v8351 = vld [vmem:[%s2 + $0xb8] sm:$0xff]
    %v8352 = vld [vmem:[%s2 + $0xc0] sm:$0xff]
    %v8353 = vld [vmem:[%s2 + $0xc8] sm:$0xff]
    %v8354 = vld [vmem:[%s2 + $0xd0] sm:$0xff]
    %v8355 = vld [vmem:[%s2 + $0xd8] sm:$0xff]
    %v8356 = vld [vmem:[%s2 + $0xe0] sm:$0xff]
    %v8357 = vld [vmem:[%s2 + $0xe8] sm:$0xff]
    %v8358 = vld [vmem:[%s2 + $0xf0] sm:$0xff]
    %v8359 = vld [vmem:[%s2 + $0xf8] sm:$0xff]
    %v8360 = vld [vmem:[%s2 + $0x100] sm:$0xff]
    %v8361 = vld [vmem:[%s2 + $0x108] sm:$0xff]
    %v8362 = vld [vmem:[%s2 + $0x110] sm:$0xff]
    %v8363 = vld [vmem:[%s2 + $0x118] sm:$0xff]
    %8364 = vrot.lane.b32.xlu0 %v5751, 64
    %v8365 = vpop.permute.xlu0 %8364
    %v8368 = vsel %vm7156, %v8282, 0
    %v8371 = vsel %vm7156, %v8285, 0
    %v8374 = vsel %vm7156, %v8288, 0
    %v8377 = vsel %vm7156, %v8291, 0
    %v8380 = vsel %vm7156, %v8294, 0
    %v8383 = vsel %vm7156, %v8297, 0
    %v8386 = vsel %vm7156, %v8300, 0
    %v8389 = vsel %vm7156, %v8303, 0
    %v8392 = vsel %vm7156, %v8306, 0
    %v8395 = vsel %vm7156, %v8309, 0
    %v8398 = vsel %vm7156, %v8312, 0
    %v8401 = vsel %vm7156, %v8315, 0
    %v8404 = vsel %vm7156, %v8318, 0
    %v8407 = vsel %vm7156, %v8321, 0
    %v8410 = vsel %vm7156, %v8324, 0
    %v8413 = vsel %vm7156, %v8327, 0
    %8415 = vmatprep.subr.mxu0 0.0
    %8416 = vmatpush1.msra.mxu0 %v8328
    %8417 = vmatprep.subr.mxu0 0.0
    %8418 = vmatpush1.msra.mxu0 %v8329
    %8419 = vmatprep.subr.mxu0 0.0
    %8420 = vmatpush1.msra.mxu0 %v8330
    %8421 = vmatprep.subr.mxu0 0.0
    %8422 = vmatpush1.msra.mxu0 %v8331
    %8423 = vmatprep.subr.mxu0 0.0
    %8424 = vmatpush1.msra.mxu0 %v8332
    %8425 = vmatprep.subr.mxu0 0.0
    %8426 = vmatpush1.msra.mxu0 %v8333
    %8427 = vmatprep.subr.mxu0 0.0
    %8428 = vmatpush1.msra.mxu0 %v8334
    %8429 = vmatprep.subr.mxu0 0.0
    %8430 = vmatpush1.msra.mxu0 %v8335
    %8431 = vmatprep.subr.mxu0 0.0
    %8432 = vmatpush1.msra.mxu0 %v8336
    %8433 = vmatprep.subr.mxu0 0.0
    %8434 = vmatpush1.msra.mxu0 %v8337
    %8435 = vmatprep.subr.mxu0 0.0
    %8436 = vmatpush1.msra.mxu0 %v8338
    %8437 = vmatprep.subr.mxu0 0.0
    %8438 = vmatpush1.msra.mxu0 %v8339
    %8439 = vmatprep.subr.mxu0 0.0
    %8440 = vmatpush1.msra.mxu0 %v8340
    %8441 = vmatprep.subr.mxu0 0.0
    %8442 = vmatpush1.msra.mxu0 %v8341
    %8443 = vmatprep.subr.mxu0 0.0
    %8444 = vmatpush1.msra.mxu0 %v8342
    %8445 = vmatprep.subr.mxu0 0.0
    %8446 = vmatpush1.msra.mxu0 %v8343
    %8447 = vmatprep.subr.mxu0 0.0
    %8448 = vmatpush1.msra.mxu0 %v8344
    %8449 = vmatprep.subr.mxu0 0.0
    %8450 = vmatpush1.msra.mxu0 %v8345
    %8451 = vmatprep.subr.mxu0 0.0
    %8452 = vmatpush1.msra.mxu0 %v8346
    %8453 = vmatprep.subr.mxu0 0.0
    %8454 = vmatpush1.msra.mxu0 %v8347
    %8455 = vmatprep.subr.mxu0 0.0
    %8456 = vmatpush1.msra.mxu0 %v8348
    %8457 = vmatprep.subr.mxu0 0.0
    %8458 = vmatpush1.msra.mxu0 %v8349
    %8459 = vmatprep.subr.mxu0 0.0
    %8460 = vmatpush1.msra.mxu0 %v8350
    %8461 = vmatprep.subr.mxu0 0.0
    %8462 = vmatpush1.msra.mxu0 %v8351
    %8463 = vmatprep.subr.mxu0 0.0
    %8464 = vmatpush1.msra.mxu0 %v8352
    %8465 = vmatprep.subr.mxu0 0.0
    %8466 = vmatpush1.msra.mxu0 %v8353
    %8467 = vmatprep.subr.mxu0 0.0
    %8468 = vmatpush1.msra.mxu0 %v8354
    %8469 = vmatprep.subr.mxu0 0.0
    %8470 = vmatpush1.msra.mxu0 %v8355
    %8471 = vmatprep.subr.mxu0 0.0
    %8472 = vmatpush1.msra.mxu0 %v8356
    %8473 = vmatprep.subr.mxu0 0.0
    %8474 = vmatpush1.msra.mxu0 %v8357
    %8475 = vmatprep.subr.mxu0 0.0
    %8476 = vmatpush1.msra.mxu0 %v8358
    %8477 = vmatprep.subr.mxu0 0.0
    %8478 = vmatpush1.msra.mxu0 %v8359
    %8479 = vmatprep.mubr.f32.mxu0 %v8281
    %8480 = vmatmul.mubr.f32.gmra.mrb[0].mxu0 %v8280
    %v8481 = vpop.f32.mrb[0].mxu0
    %v8482 = vadd.f32 %v8365, %v8481
    %v8483 = vpop.f32.mrb[0].mxu0
    %8484 = vmatprep.mubr.f32.mxu0 %v8284
    %8485 = vmatmul.mubr.f32.gmra.mrb[0].mxu0 %v8283
    %v8486 = vpop.f32.mrb[0].mxu0
    %v8487 = vadd.f32 %v8365, %v8486
    %v8488 = vpop.f32.mrb[0].mxu0
    %8489 = vmatprep.mubr.f32.mxu0 %v8287
    %8490 = vmatmul.mubr.f32.gmra.mrb[0].mxu0 %v8286
    %v8491 = vpop.f32.mrb[0].mxu0
    %v8492 = vadd.f32 %v8365, %v8491
    %v8493 = vpop.f32.mrb[0].mxu0
    %8494 = vmatprep.mubr.f32.mxu0 %v8290
    %8495 = vmatmul.mubr.f32.gmra.mrb[0].mxu0 %v8289
    %v8496 = vpop.f32.mrb[0].mxu0
    %v8497 = vadd.f32 %v8365, %v8496
    %v8498 = vpop.f32.mrb[0].mxu0
    %8499 = vmatprep.mubr.f32.mxu0 %v8293
    %8500 = vmatmul.mubr.f32.gmra.mrb[0].mxu0 %v8292
    %v8501 = vpop.f32.mrb[0].mxu0
    %v8502 = vadd.f32 %v8365, %v8501
    %v8503 = vpop.f32.mrb[0].mxu0
    %8504 = vmatprep.mubr.f32.mxu0 %v8296
    %8505 = vmatmul.mubr.f32.gmra.mrb[0].mxu0 %v8295
    %v8506 = vpop.f32.mrb[0].mxu0
    %v8507 = vadd.f32 %v8365, %v8506
    %v8508 = vpop.f32.mrb[0].mxu0
    %8509 = vmatprep.mubr.f32.mxu0 %v8299
    %8510 = vmatmul.mubr.f32.gmra.mrb[0].mxu0 %v8298
    %v8511 = vpop.f32.mrb[0].mxu0
    %v8512 = vadd.f32 %v8365, %v8511
    %v8513 = vpop.f32.mrb[0].mxu0
    %8514 = vmatprep.mubr.f32.mxu0 %v8302
    %8515 = vmatmul.mubr.f32.gmra.mrb[0].mxu0 %v8301
    %v8516 = vpop.f32.mrb[0].mxu0
    %v8517 = vadd.f32 %v8365, %v8516
    %v8518 = vpop.f32.mrb[0].mxu0
    %8519 = vmatprep.mubr.f32.mxu0 %v8305
    %8520 = vmatmul.mubr.f32.gmra.mrb[0].mxu0 %v8304
    %v8521 = vpop.f32.mrb[0].mxu0
    %v8522 = vadd.f32 %v8365, %v8521
    %v8523 = vpop.f32.mrb[0].mxu0
    %8524 = vmatprep.mubr.f32.mxu0 %v8308
    %8525 = vmatmul.mubr.f32.gmra.mrb[0].mxu0 %v8307
    %v8526 = vpop.f32.mrb[0].mxu0
    %v8527 = vadd.f32 %v8365, %v8526
    %v8528 = vpop.f32.mrb[0].mxu0
    %8529 = vmatprep.mubr.f32.mxu0 %v8311
    %8530 = vmatmul.mubr.f32.gmra.mrb[0].mxu0 %v8310
    %v8531 = vpop.f32.mrb[0].mxu0
    %v8532 = vadd.f32 %v8365, %v8531
    %v8533 = vpop.f32.mrb[0].mxu0
    %8534 = vmatprep.mubr.f32.mxu0 %v8314
    %8535 = vmatmul.mubr.f32.gmra.mrb[0].mxu0 %v8313
    %v8536 = vpop.f32.mrb[0].mxu0
    %v8537 = vadd.f32 %v8365, %v8536
    %v8538 = vpop.f32.mrb[0].mxu0
    %8539 = vmatprep.mubr.f32.mxu0 %v8317
    %8540 = vmatmul.mubr.f32.gmra.mrb[0].mxu0 %v8316
    %v8541 = vpop.f32.mrb[0].mxu0
    %v8542 = vadd.f32 %v8365, %v8541
    %v8543 = vpop.f32.mrb[0].mxu0
    %8544 = vmatprep.mubr.f32.mxu0 %v8320
    %8545 = vmatmul.mubr.f32.gmra.mrb[0].mxu0 %v8319
    %v8546 = vpop.f32.mrb[0].mxu0
    %v8547 = vadd.f32 %v8365, %v8546
    %v8548 = vpop.f32.mrb[0].mxu0
    %8549 = vmatprep.mubr.f32.mxu0 %v8323
    %8550 = vmatmul.mubr.f32.gmra.mrb[0].mxu0 %v8322
    %v8551 = vpop.f32.mrb[0].mxu0
    %v8552 = vadd.f32 %v8365, %v8551
    %v8553 = vpop.f32.mrb[0].mxu0
    %8554 = vmatprep.mubr.f32.mxu0 %v8326
    %8555 = vmatmul.mubr.f32.gmra.mrb[0].mxu0 %v8325
    %v8556 = vpop.f32.mrb[0].mxu0
    %v8557 = vadd.f32 %v8365, %v8556
    %v8558 = vpop.f32.mrb[0].mxu0
    %8559 = vdwg.mxu0
    %8560 = vmatprep.subr.mxu0 0.0
    %8561 = vmatpush1.msra.mxu0 %v8360
    %8562 = vmatprep.subr.mxu0 0.0
    %8563 = vmatpush1.msra.mxu0 %v8361
    %8564 = vmatprep.subr.mxu0 0.0
    %8565 = vmatpush1.msra.mxu0 %v8362
    %8566 = vmatprep.subr.mxu0 0.0
    %8567 = vmatpush1.msra.mxu0 %v8363
    %8568 = vmatprep.subr.mxu0 0.0
    %8569 = vmatpush1.msra.mxu0 0.0
    %8570 = vmatprep.subr.mxu0 0.0
    %8571 = vmatpush1.msra.mxu0 0.0
    %8572 = vmatprep.subr.mxu0 0.0
    %8573 = vmatpush1.msra.mxu0 0.0
    %8574 = vmatprep.subr.mxu0 0.0
    %8575 = vmatpush1.msra.mxu0 0.0
    %8576 = vmatprep.subr.mxu0 0.0
    %8577 = vmatpush1.msra.mxu0 0.0
    %8578 = vmatprep.subr.mxu0 0.0
    %8579 = vmatpush1.msra.mxu0 0.0
    %8580 = vmatprep.subr.mxu0 0.0
    %8581 = vmatpush1.msra.mxu0 0.0
    %8582 = vmatprep.subr.mxu0 0.0
    %8583 = vmatpush1.msra.mxu0 0.0
    %8584 = vmatprep.subr.mxu0 0.0
    %8585 = vmatpush1.msra.mxu0 0.0
    %8586 = vmatprep.subr.mxu0 0.0
    %8587 = vmatpush1.msra.mxu0 0.0
    %8588 = vmatprep.subr.mxu0 0.0
    %8589 = vmatpush1.msra.mxu0 0.0
    %8590 = vmatprep.subr.mxu0 0.0
    %8591 = vmatpush1.msra.mxu0 0.0
    %8592 = vmatprep.subr.mxu0 0.0
    %8593 = vmatpush1.msra.mxu0 0.0
    %8594 = vmatprep.subr.mxu0 0.0
    %8595 = vmatpush1.msra.mxu0 0.0
    %8596 = vmatprep.subr.mxu0 0.0
    %8597 = vmatpush1.msra.mxu0 0.0
    %8598 = vmatprep.subr.mxu0 0.0
    %8599 = vmatpush1.msra.mxu0 0.0
    %8600 = vmatprep.subr.mxu0 0.0
    %8601 = vmatpush1.msra.mxu0 0.0
    %8602 = vmatprep.subr.mxu0 0.0
    %8603 = vmatpush1.msra.mxu0 0.0
    %8604 = vmatprep.subr.mxu0 0.0
    %8605 = vmatpush1.msra.mxu0 0.0
    %8606 = vmatprep.subr.mxu0 0.0
    %8607 = vmatpush1.msra.mxu0 0.0
    %8608 = vmatprep.subr.mxu0 0.0
    %8609 = vmatpush1.msra.mxu0 0.0
    %8610 = vmatprep.subr.mxu0 0.0
    %8611 = vmatpush1.msra.mxu0 0.0
    %8612 = vmatprep.subr.mxu0 0.0
    %8613 = vmatpush1.msra.mxu0 0.0
    %8614 = vmatprep.subr.mxu0 0.0
    %8615 = vmatpush1.msra.mxu0 0.0
    %8616 = vmatprep.subr.mxu0 0.0
    %8617 = vmatpush1.msra.mxu0 0.0
    %8618 = vmatprep.subr.mxu0 0.0
    %8619 = vmatpush1.msra.mxu0 0.0
    %8620 = vmatprep.subr.mxu0 0.0
    %8621 = vmatpush1.msra.mxu0 0.0
    %8622 = vmatprep.subr.mxu0 0.0
    %8623 = vmatpush1.msra.mxu0 0.0
    %8624 = vmatprep.mubr.f32.mxu0 0.0
    %8625 = vmatmul.mubr.f32.gmra.mrb[0].mxu0 %v8368
    %v8626 = vpop.f32.mrb[0].mxu0
    %v8627 = vadd.f32 %v8482, %v8626
    %v8628 = vpop.f32.mrb[0].mxu0
    %8629 = vmatprep.mubr.f32.mxu0 0.0
    %8630 = vmatmul.mubr.f32.gmra.mrb[0].mxu0 %v8371
    %v8631 = vpop.f32.mrb[0].mxu0
    %v8632 = vadd.f32 %v8487, %v8631
    %v8633 = vpop.f32.mrb[0].mxu0
    %8634 = vmatprep.mubr.f32.mxu0 0.0
    %8635 = vmatmul.mubr.f32.gmra.mrb[0].mxu0 %v8374
    %v8636 = vpop.f32.mrb[0].mxu0
    %v8637 = vadd.f32 %v8492, %v8636
    %v8638 = vpop.f32.mrb[0].mxu0
    %8639 = vmatprep.mubr.f32.mxu0 0.0
    %8640 = vmatmul.mubr.f32.gmra.mrb[0].mxu0 %v8377
    %v8641 = vpop.f32.mrb[0].mxu0
    %v8642 = vadd.f32 %v8497, %v8641
    %v8643 = vpop.f32.mrb[0].mxu0
    %8644 = vmatprep.mubr.f32.mxu0 0.0
    %8645 = vmatmul.mubr.f32.gmra.mrb[0].mxu0 %v8380
    %v8646 = vpop.f32.mrb[0].mxu0
    %v8647 = vadd.f32 %v8502, %v8646
    %v8648 = vpop.f32.mrb[0].mxu0
    %8649 = vmatprep.mubr.f32.mxu0 0.0
    %8650 = vmatmul.mubr.f32.gmra.mrb[0].mxu0 %v8383
    %v8651 = vpop.f32.mrb[0].mxu0
    %v8652 = vadd.f32 %v8507, %v8651
    %v8653 = vpop.f32.mrb[0].mxu0
    %8654 = vmatprep.mubr.f32.mxu0 0.0
    %8655 = vmatmul.mubr.f32.gmra.mrb[0].mxu0 %v8386
    %v8656 = vpop.f32.mrb[0].mxu0
    %v8657 = vadd.f32 %v8512, %v8656
    %v8658 = vpop.f32.mrb[0].mxu0
    %8659 = vmatprep.mubr.f32.mxu0 0.0
    %8660 = vmatmul.mubr.f32.gmra.mrb[0].mxu0 %v8389
    %v8661 = vpop.f32.mrb[0].mxu0
    %v8662 = vadd.f32 %v8517, %v8661
    %v8663 = vpop.f32.mrb[0].mxu0
    %8664 = vmatprep.mubr.f32.mxu0 0.0
    %8665 = vmatmul.mubr.f32.gmra.mrb[0].mxu0 %v8392
    %v8666 = vpop.f32.mrb[0].mxu0
    %v8667 = vadd.f32 %v8522, %v8666
    %v8668 = vpop.f32.mrb[0].mxu0
    %8669 = vmatprep.mubr.f32.mxu0 0.0
    %8670 = vmatmul.mubr.f32.gmra.mrb[0].mxu0 %v8395
    %v8671 = vpop.f32.mrb[0].mxu0
    %v8672 = vadd.f32 %v8527, %v8671
    %v8673 = vpop.f32.mrb[0].mxu0
    %8674 = vmatprep.mubr.f32.mxu0 0.0
    %8675 = vmatmul.mubr.f32.gmra.mrb[0].mxu0 %v8398
    %v8676 = vpop.f32.mrb[0].mxu0
    %v8677 = vadd.f32 %v8532, %v8676
    %v8678 = vpop.f32.mrb[0].mxu0
    %8679 = vmatprep.mubr.f32.mxu0 0.0
    %8680 = vmatmul.mubr.f32.gmra.mrb[0].mxu0 %v8401
    %v8681 = vpop.f32.mrb[0].mxu0
    %v8682 = vadd.f32 %v8537, %v8681
    %v8683 = vpop.f32.mrb[0].mxu0
    %8684 = vmatprep.mubr.f32.mxu0 0.0
    %8685 = vmatmul.mubr.f32.gmra.mrb[0].mxu0 %v8404
    %v8686 = vpop.f32.mrb[0].mxu0
    %v8687 = vadd.f32 %v8542, %v8686
    %v8688 = vpop.f32.mrb[0].mxu0
    %8689 = vmatprep.mubr.f32.mxu0 0.0
    %8690 = vmatmul.mubr.f32.gmra.mrb[0].mxu0 %v8407
    %v8691 = vpop.f32.mrb[0].mxu0
    %v8692 = vadd.f32 %v8547, %v8691
    %v8693 = vpop.f32.mrb[0].mxu0
    %8694 = vmatprep.mubr.f32.mxu0 0.0
    %8695 = vmatmul.mubr.f32.gmra.mrb[0].mxu0 %v8410
    %v8696 = vpop.f32.mrb[0].mxu0
    %v8697 = vadd.f32 %v8552, %v8696
    %v8698 = vpop.f32.mrb[0].mxu0
    %8699 = vmatprep.mubr.f32.mxu0 0.0
    %8700 = vmatmul.mubr.f32.gmra.mrb[0].mxu0 %v8413
    %v8701 = vpop.f32.mrb[0].mxu0
    %v8702 = vadd.f32 %v8557, %v8701
    %v8703 = vpop.f32.mrb[0].mxu0
    %8704 = vdwg.mxu0
    %v8705 = vmax.f32 %v8627, 0.0
    %v8706 = vmax.f32 %v8632, 0.0
    %v8707 = vmax.f32 %v8637, 0.0
    %v8708 = vmax.f32 %v8642, 0.0
    %v8709 = vmax.f32 %v8647, 0.0
    %v8710 = vmax.f32 %v8652, 0.0
    %v8711 = vmax.f32 %v8657, 0.0
    %v8712 = vmax.f32 %v8662, 0.0
    %v8713 = vmax.f32 %v8667, 0.0
    %v8714 = vmax.f32 %v8672, 0.0
    %v8715 = vmax.f32 %v8677, 0.0
    %v8716 = vmax.f32 %v8682, 0.0
    %v8717 = vmax.f32 %v8687, 0.0
    %v8718 = vmax.f32 %v8692, 0.0
    %v8719 = vmax.f32 %v8697, 0.0
    %v8720 = vmax.f32 %v8702, 0.0
    %v8721 = vld [vmem:[%s7 + $0x200] sm:$0xff]
    %v8722 = vld [vmem:[%s7 + $0x220] sm:$0xff]
    %v8723 = vld [vmem:[%s7 + $0x240] sm:$0xff]
    %v8724 = vld [vmem:[%s7 + $0x260] sm:$0xff]
    %v8725 = vrot.slane %v8705, 1
    %v8726 = vrot.slane %v8706, 1
    %v8727 = vrot.slane %v8707, 1
    %v8728 = vrot.slane %v8708, 1
    %v8729 = vrot.slane %v8709, 1
    %v8730 = vrot.slane %v8710, 1
    %v8731 = vrot.slane %v8711, 1
    %v8732 = vrot.slane %v8712, 1
    %v8733 = vrot.slane %v8713, 1
    %v8734 = vrot.slane %v8714, 1
    %v8735 = vrot.slane %v8715, 1
    %v8736 = vrot.slane %v8716, 1
    %v8737 = vrot.slane %v8717, 1
    %v8738 = vrot.slane %v8718, 1
    %v8739 = vrot.slane %v8719, 1
    %v8740 = vrot.slane %v8720, 1
    %v8741 = vsel %vm1447, %v8739, %v8740
    %v8742 = vsel %vm1447, %v8738, %v8739
    %v8743 = vsel %vm1447, %v8737, %v8738
    %v8744 = vsel %vm1447, %v8736, %v8737
    %v8745 = vsel %vm1447, %v8735, %v8736
    %v8746 = vsel %vm1447, %v8734, %v8735
    %v8747 = vsel %vm1447, %v8733, %v8734
    %v8748 = vsel %vm1447, %v8732, %v8733
    %v8749 = vsel %vm1447, %v8731, %v8732
    %v8750 = vsel %vm1447, %v8730, %v8731
    %v8751 = vsel %vm1447, %v8729, %v8730
    %v8752 = vsel %vm1447, %v8728, %v8729
    %v8753 = vsel %vm1447, %v8727, %v8728
    %v8754 = vsel %vm1447, %v8726, %v8727
    %v8755 = vsel %vm1447, %v8725, %v8726
    %v8756 = vsel %vm1447, %v8740, %v8725
    %v8757 = vmax.f32 %v8705, %v8755
    %v8758 = vmax.f32 %v8706, %v8754
    %v8759 = vmax.f32 %v8707, %v8753
    %v8760 = vmax.f32 %v8708, %v8752
    %v8761 = vmax.f32 %v8709, %v8751
    %v8762 = vmax.f32 %v8710, %v8750
    %v8763 = vmax.f32 %v8711, %v8749
    %v8764 = vmax.f32 %v8712, %v8748
    %v8765 = vmax.f32 %v8713, %v8747
    %v8766 = vmax.f32 %v8714, %v8746
    %v8767 = vmax.f32 %v8715, %v8745
    %v8768 = vmax.f32 %v8716, %v8744
    %v8769 = vmax.f32 %v8717, %v8743
    %v8770 = vmax.f32 %v8718, %v8742
    %v8771 = vmax.f32 %v8719, %v8741
    %v8772 = vmax.f32 %v8720, %v8756
    %v8773 = vmax.f32 %v8757, %v8758
    %v8774 = vmax.f32 %v8758, %v8759
    %v8775 = vmax.f32 %v8759, %v8760
    %v8776 = vmax.f32 %v8760, %v8761
    %v8777 = vmax.f32 %v8761, %v8762
    %v8778 = vmax.f32 %v8762, %v8763
    %v8779 = vmax.f32 %v8763, %v8764
    %v8780 = vmax.f32 %v8764, %v8765
    %v8781 = vmax.f32 %v8765, %v8766
    %v8782 = vmax.f32 %v8766, %v8767
    %v8783 = vmax.f32 %v8767, %v8768
    %v8784 = vmax.f32 %v8768, %v8769
    %v8785 = vmax.f32 %v8769, %v8770
    %v8786 = vmax.f32 %v8770, %v8771
    %v8787 = vmax.f32 %v8771, %v8772
    %v8788 = vmax.f32 %v8772, %v8757
    %v8790 = vlaneseq
    %v8791 = vshrl.u32 %v8790, 7
    %v8792 = vsub.s32 0, %v8791
    %v8793 = vrot.slane %v31, %v8792
    %8795 = vmatprep.subr.mxu0 0.0
    %8796 = vmatpush1.msra.mxu0 %v8773
    %8797 = vmatprep.subr.mxu0 0.0
    %8798 = vmatpush1.msra.mxu0 %v8774
    %8799 = vmatprep.subr.mxu0 0.0
    %8800 = vmatpush1.msra.mxu0 %v8775
    %8801 = vmatprep.subr.mxu0 0.0
    %8802 = vmatpush1.msra.mxu0 %v8776
    %8803 = vmatprep.subr.mxu0 0.0
    %8804 = vmatpush1.msra.mxu0 %v8777
    %8805 = vmatprep.subr.mxu0 0.0
    %8806 = vmatpush1.msra.mxu0 %v8778
    %8807 = vmatprep.subr.mxu0 0.0
    %8808 = vmatpush1.msra.mxu0 %v8779
    %8809 = vmatprep.subr.mxu0 0.0
    %8810 = vmatpush1.msra.mxu0 %v8780
    %8811 = vmatprep.subr.mxu0 0.0
    %8812 = vmatpush1.msra.mxu0 %v8781
    %8813 = vmatprep.subr.mxu0 0.0
    %8814 = vmatpush1.msra.mxu0 %v8782
    %8815 = vmatprep.subr.mxu0 0.0
    %8816 = vmatpush1.msra.mxu0 %v8783
    %8817 = vmatprep.subr.mxu0 0.0
    %8818 = vmatpush1.msra.mxu0 %v8784
    %8819 = vmatprep.subr.mxu0 0.0
    %8820 = vmatpush1.msra.mxu0 %v8785
    %8821 = vmatprep.subr.mxu0 0.0
    %8822 = vmatpush1.msra.mxu0 %v8786
    %8823 = vmatprep.subr.mxu0 0.0
    %8824 = vmatpush1.msra.mxu0 %v8787
    %8825 = vmatprep.subr.mxu0 0.0
    %8826 = vmatpush1.msra.mxu0 %v8788
    %8827 = vmatprep.subr.mxu0 0.0
    %8828 = vmatpush1.msra.mxu0 0.0
    %8829 = vmatprep.subr.mxu0 0.0
    %8830 = vmatpush1.msra.mxu0 0.0
    %8831 = vmatprep.subr.mxu0 0.0
    %8832 = vmatpush1.msra.mxu0 0.0
    %8833 = vmatprep.subr.mxu0 0.0
    %8834 = vmatpush1.msra.mxu0 0.0
    %8835 = vmatprep.subr.mxu0 0.0
    %8836 = vmatpush1.msra.mxu0 0.0
    %8837 = vmatprep.subr.mxu0 0.0
    %8838 = vmatpush1.msra.mxu0 0.0
    %8839 = vmatprep.subr.mxu0 0.0
    %8840 = vmatpush1.msra.mxu0 0.0
    %8841 = vmatprep.subr.mxu0 0.0
    %8842 = vmatpush1.msra.mxu0 0.0
    %8843 = vmatprep.subr.mxu0 0.0
    %8844 = vmatpush1.msra.mxu0 0.0
    %8845 = vmatprep.subr.mxu0 0.0
    %8846 = vmatpush1.msra.mxu0 0.0
    %8847 = vmatprep.subr.mxu0 0.0
    %8848 = vmatpush1.msra.mxu0 0.0
    %8849 = vmatprep.subr.mxu0 0.0
    %8850 = vmatpush1.msra.mxu0 0.0
    %8851 = vmatprep.subr.mxu0 0.0
    %8852 = vmatpush1.msra.mxu0 0.0
    %8853 = vmatprep.subr.mxu0 0.0
    %8854 = vmatpush1.msra.mxu0 0.0
    %8855 = vmatprep.subr.mxu0 0.0
    %8856 = vmatpush1.msra.mxu0 0.0
    %8857 = vmatprep.subr.mxu0 0.0
    %8858 = vmatpush1.msra.mxu0 0.0
    %8859 = vmatprep.mubr.f32.mxu0 0.0
    %8860 = vmatmul.mubr.f32.gmra.mrb[0].mxu0 %v8721
    %v8861 = vpop.f32.mrb[0].mxu0
    %v8862 = vadd.f32 %v8793, %v8861
    %v8863 = vpop.f32.mrb[0].mxu0
    %8864 = vmatprep.mubr.f32.mxu0 0.0
    %8865 = vmatmul.mubr.f32.gmra.mrb[0].mxu0 %v8722
    %v8866 = vpop.f32.mrb[0].mxu0
    %v8867 = vadd.f32 %v8793, %v8866
    %v8868 = vpop.f32.mrb[0].mxu0
    %8869 = vmatprep.mubr.f32.mxu0 0.0
    %8870 = vmatmul.mubr.f32.gmra.mrb[0].mxu0 %v8723
    %v8871 = vpop.f32.mrb[0].mxu0
    %v8872 = vadd.f32 %v8793, %v8871
    %v8873 = vpop.f32.mrb[0].mxu0
    %8874 = vmatprep.mubr.f32.mxu0 0.0
    %8875 = vmatmul.mubr.f32.gmra.mrb[0].mxu0 %v8724
    %v8876 = vpop.f32.mrb[0].mxu0
    %v8877 = vadd.f32 %v8793, %v8876
    %v8878 = vpop.f32.mrb[0].mxu0
    %8879 = vdwg.mxu0
    %v8880 = vld [vmem:[%s6 + $0x280] sm:$0xff]
    %v8881 = vld [vmem:[%s6 + $0x288] sm:$0xff]
    %v8882 = vld [vmem:[%s6 + $0x290] sm:$0xff]
    %v8883 = vld [vmem:[%s6 + $0x298] sm:$0xff]
    %v8884 = vrot.slane %v8862, 3
    %v8885 = vrot.slane %v8867, 3
    %v8886 = vrot.slane %v8872, 3
    %v8887 = vrot.slane %v8877, 3
    %vm8888 = vcmp.lt.s32.totalorder %v227, 5
    %v8889 = vsel %vm8888, %v8886, %v8887
    %v8890 = vsel %vm8888, %v8885, %v8886
    %v8891 = vsel %vm8888, %v8884, %v8885
    %v8892 = vsel %vm8888, %v8887, %v8884
    %8894 = vset.pattern.permute.xlu0 0
    %8895 = vperm.xlu0 %8894, %v8880
    %v8896 = vpop.permute.xlu0 %8895
    %8899 = vset.pattern.permute.xlu0 0
    %8900 = vperm.xlu0 %8899, %v8881
    %v8901 = vpop.permute.xlu0 %8900
    %8904 = vset.pattern.permute.xlu0 0
    %8905 = vperm.xlu0 %8904, %v8882
    %v8906 = vpop.permute.xlu0 %8905
    %8909 = vset.pattern.permute.xlu0 0
    %8910 = vperm.xlu0 %8909, %v8883
    %v8911 = vpop.permute.xlu0 %8910
    %v8913 = vmul.f32 %v8892, %v8896
    %v8914 = vmul.f32 %v8891, %v8901
    %v8915 = vmul.f32 %v8890, %v8906
    %v8916 = vmul.f32 %v8889, %v8911
    %vm8917 = vcmask 523264
    %8918 = vst.msk [vmem:[#allocation4] sm:$0xff] %vm8917, %v8913
    %8919 = vst.msk [vmem:[#allocation4 + $0x28] sm:$0xff] %vm8917, %v8914
    %8920 = vst.msk [vmem:[#allocation4 + $0x50] sm:$0xff] %vm8917, %v8915
    %8921 = vst.msk [vmem:[#allocation4 + $0x78] sm:$0xff] %vm8917, %v8916
    %v8922 = vrot.slane %v8862, 4
    %v8923 = vrot.slane %v8867, 4
    %v8924 = vrot.slane %v8872, 4
    %v8925 = vrot.slane %v8877, 4
    %vm8926 = vcmp.lt.s32.totalorder %v227, 4
    %v8927 = vsel %vm8926, %v8924, %v8925
    %v8928 = vsel %vm8926, %v8923, %v8924
    %v8929 = vsel %vm8926, %v8922, %v8923
    %v8930 = vsel %vm8926, %v8925, %v8922
    %8931 = vset.pattern.permute.xlu0 1
    %8932 = vperm.xlu0 %8931, %v8880
    %v8933 = vpop.permute.xlu0 %8932
    %8935 = vset.pattern.permute.xlu0 1
    %8936 = vperm.xlu0 %8935, %v8881
    %v8937 = vpop.permute.xlu0 %8936
    %8939 = vset.pattern.permute.xlu0 1
    %8940 = vperm.xlu0 %8939, %v8882
    %v8941 = vpop.permute.xlu0 %8940
    %8943 = vset.pattern.permute.xlu0 1
    %8944 = vperm.xlu0 %8943, %v8883
    %v8945 = vpop.permute.xlu0 %8944
    %v8947 = vmul.f32 %v8930, %v8933
    %v8948 = vmul.f32 %v8929, %v8937
    %v8949 = vmul.f32 %v8928, %v8941
    %v8950 = vmul.f32 %v8927, %v8945
    %8955 = vrot.lane.b32.xlu0 %v8947, 64
    %v8956 = vpop.permute.xlu0 %8955
    %8957 = vrot.lane.b32.xlu0 %v8948, 64
    %v8958 = vpop.permute.xlu0 %8957
    %8959 = vrot.lane.b32.xlu0 %v8949, 64
    %v8960 = vpop.permute.xlu0 %8959
    %8961 = vrot.lane.b32.xlu0 %v8950, 64
    %v8962 = vpop.permute.xlu0 %8961
    %vm8967 = vcmask 1048064
    %8968 = vst.msk [vmem:[#allocation4] sm:$0xff] %vm8967, %v8956
    %8969 = vst.msk [vmem:[#allocation4 + $0x28] sm:$0xff] %vm8967, %v8958
    %8970 = vst.msk [vmem:[#allocation4 + $0x50] sm:$0xff] %vm8967, %v8960
    %8971 = vst.msk [vmem:[#allocation4 + $0x78] sm:$0xff] %vm8967, %v8962
    %v8972 = vrot.slane %v8862, 5
    %v8973 = vrot.slane %v8867, 5
    %v8974 = vrot.slane %v8872, 5
    %v8975 = vrot.slane %v8877, 5
    %vm8976 = vcmp.lt.s32.totalorder %v227, 3
    %v8977 = vsel %vm8976, %v8974, %v8975
    %v8978 = vsel %vm8976, %v8973, %v8974
    %v8979 = vsel %vm8976, %v8972, %v8973
    %v8980 = vsel %vm8976, %v8975, %v8972
    %8981 = vset.pattern.permute.xlu0 2
    %8982 = vperm.xlu0 %8981, %v8880
    %v8983 = vpop.permute.xlu0 %8982
    %8985 = vset.pattern.permute.xlu0 2
    %8986 = vperm.xlu0 %8985, %v8881
    %v8987 = vpop.permute.xlu0 %8986
    %8989 = vset.pattern.permute.xlu0 2
    %8990 = vperm.xlu0 %8989, %v8882
    %v8991 = vpop.permute.xlu0 %8990
    %8993 = vset.pattern.permute.xlu0 2
    %8994 = vperm.xlu0 %8993, %v8883
    %v8995 = vpop.permute.xlu0 %8994
    %v8997 = vmul.f32 %v8980, %v8983
    %v8998 = vmul.f32 %v8979, %v8987
    %v8999 = vmul.f32 %v8978, %v8991
    %v9000 = vmul.f32 %v8977, %v8995
    %9001 = vst.msk [vmem:[#allocation4 + $0x8] sm:$0xff] %vm8917, %v8997
    %9002 = vst.msk [vmem:[#allocation4 + $0x30] sm:$0xff] %vm8917, %v8998
    %9003 = vst.msk [vmem:[#allocation4 + $0x58] sm:$0xff] %vm8917, %v8999
    %9004 = vst.msk [vmem:[#allocation4 + $0x80] sm:$0xff] %vm8917, %v9000
    %v9005 = vrot.slane %v8862, 7
    %v9006 = vrot.slane %v8867, 7
    %v9007 = vrot.slane %v8872, 7
    %v9008 = vrot.slane %v8877, 7
    %v9009 = vsel %vm228, %v9007, %v9008
    %v9010 = vsel %vm228, %v9006, %v9007
    %v9011 = vsel %vm228, %v9005, %v9006
    %v9012 = vsel %vm228, %v9008, %v9005
    %9013 = vset.pattern.permute.xlu0 3
    %9014 = vperm.xlu0 %9013, %v8880
    %v9015 = vpop.permute.xlu0 %9014
    %9017 = vset.pattern.permute.xlu0 3
    %9018 = vperm.xlu0 %9017, %v8881
    %v9019 = vpop.permute.xlu0 %9018
    %9021 = vset.pattern.permute.xlu0 3
    %9022 = vperm.xlu0 %9021, %v8882
    %v9023 = vpop.permute.xlu0 %9022
    %9025 = vset.pattern.permute.xlu0 3
    %9026 = vperm.xlu0 %9025, %v8883
    %v9027 = vpop.permute.xlu0 %9026
    %v9029 = vmul.f32 %v9012, %v9015
    %v9030 = vmul.f32 %v9011, %v9019
    %v9031 = vmul.f32 %v9010, %v9023
    %v9032 = vmul.f32 %v9009, %v9027
    %9037 = vrot.lane.b32.xlu0 %v9029, 64
    %v9038 = vpop.permute.xlu0 %9037
    %9039 = vrot.lane.b32.xlu0 %v9030, 64
    %v9040 = vpop.permute.xlu0 %9039
    %9041 = vrot.lane.b32.xlu0 %v9031, 64
    %v9042 = vpop.permute.xlu0 %9041
    %9043 = vrot.lane.b32.xlu0 %v9032, 64
    %v9044 = vpop.permute.xlu0 %9043
    %9049 = vst.msk [vmem:[#allocation4 + $0x8] sm:$0xff] %vm8967, %v9038
    %9050 = vst.msk [vmem:[#allocation4 + $0x30] sm:$0xff] %vm8967, %v9040
    %9051 = vst.msk [vmem:[#allocation4 + $0x58] sm:$0xff] %vm8967, %v9042
    %9052 = vst.msk [vmem:[#allocation4 + $0x80] sm:$0xff] %vm8967, %v9044
    %9053 = vst.msk [vmem:[#allocation4 + $0x10] sm:$0xff] %vm8917, %v8862
    %9054 = vst.msk [vmem:[#allocation4 + $0x38] sm:$0xff] %vm8917, %v8867
    %9055 = vst.msk [vmem:[#allocation4 + $0x60] sm:$0xff] %vm8917, %v8872
    %9056 = vst.msk [vmem:[#allocation4 + $0x88] sm:$0xff] %vm8917, %v8877
    %v9057 = vrot.slane %v8862, 1
    %v9058 = vrot.slane %v8867, 1
    %v9059 = vrot.slane %v8872, 1
    %v9060 = vrot.slane %v8877, 1
    %v9061 = vsel %vm1447, %v9059, %v9060
    %v9062 = vsel %vm1447, %v9058, %v9059
    %v9063 = vsel %vm1447, %v9057, %v9058
    %v9064 = vsel %vm1447, %v9060, %v9057
    %9065 = vset.pattern.permute.xlu0 5
    %9066 = vperm.xlu0 %9065, %v8880
    %v9067 = vpop.permute.xlu0 %9066
    %9069 = vset.pattern.permute.xlu0 5
    %9070 = vperm.xlu0 %9069, %v8881
    %v9071 = vpop.permute.xlu0 %9070
    %9073 = vset.pattern.permute.xlu0 5
    %9074 = vperm.xlu0 %9073, %v8882
    %v9075 = vpop.permute.xlu0 %9074
    %9077 = vset.pattern.permute.xlu0 5
    %9078 = vperm.xlu0 %9077, %v8883
    %v9079 = vpop.permute.xlu0 %9078
    %v9081 = vmul.f32 %v9063, %v9067
    %v9082 = vmul.f32 %v9062, %v9071
    %v9083 = vmul.f32 %v9061, %v9075
    %v9084 = vmul.f32 %v9064, %v9079
    %9089 = vrot.lane.b32.xlu0 %v9081, 64
    %v9090 = vpop.permute.xlu0 %9089
    %9091 = vrot.lane.b32.xlu0 %v9082, 64
    %v9092 = vpop.permute.xlu0 %9091
    %9093 = vrot.lane.b32.xlu0 %v9083, 64
    %v9094 = vpop.permute.xlu0 %9093
    %9095 = vrot.lane.b32.xlu0 %v9084, 64
    %v9096 = vpop.permute.xlu0 %9095
    %9101 = vst.msk [vmem:[#allocation4 + $0x10] sm:$0xff] %vm8967, %v9090
    %9102 = vst.msk [vmem:[#allocation4 + $0x38] sm:$0xff] %vm8967, %v9092
    %9103 = vst.msk [vmem:[#allocation4 + $0x60] sm:$0xff] %vm8967, %v9094
    %9104 = vst.msk [vmem:[#allocation4 + $0x88] sm:$0xff] %vm8967, %v9096
    %9105 = vset.pattern.permute.xlu0 6
    %9106 = vperm.xlu0 %9105, %v8880
    %v9107 = vpop.permute.xlu0 %9106
    %9109 = vset.pattern.permute.xlu0 6
    %9110 = vperm.xlu0 %9109, %v8881
    %v9111 = vpop.permute.xlu0 %9110
    %9113 = vset.pattern.permute.xlu0 6
    %9114 = vperm.xlu0 %9113, %v8882
    %v9115 = vpop.permute.xlu0 %9114
    %9117 = vset.pattern.permute.xlu0 6
    %9118 = vperm.xlu0 %9117, %v8883
    %v9119 = vpop.permute.xlu0 %9118
    %v9121 = vmul.f32 %v8891, %v9107
    %v9122 = vmul.f32 %v8890, %v9111
    %v9123 = vmul.f32 %v8889, %v9115
    %v9124 = vmul.f32 %v8892, %v9119
    %9125 = vst.msk [vmem:[#allocation4 + $0x18] sm:$0xff] %vm8917, %v9121
    %9126 = vst.msk [vmem:[#allocation4 + $0x40] sm:$0xff] %vm8917, %v9122
    %9127 = vst.msk [vmem:[#allocation4 + $0x68] sm:$0xff] %vm8917, %v9123
    %9128 = vst.msk [vmem:[#allocation4 + $0x90] sm:$0xff] %vm8917, %v9124
    %9129 = vset.pattern.permute.xlu0 7
    %9130 = vperm.xlu0 %9129, %v8880
    %v9131 = vpop.permute.xlu0 %9130
    %9133 = vset.pattern.permute.xlu0 7
    %9134 = vperm.xlu0 %9133, %v8881
    %v9135 = vpop.permute.xlu0 %9134
    %9137 = vset.pattern.permute.xlu0 7
    %9138 = vperm.xlu0 %9137, %v8882
    %v9139 = vpop.permute.xlu0 %9138
    %9141 = vset.pattern.permute.xlu0 7
    %9142 = vperm.xlu0 %9141, %v8883
    %v9143 = vpop.permute.xlu0 %9142
    %v9145 = vmul.f32 %v8929, %v9131
    %v9146 = vmul.f32 %v8928, %v9135
    %v9147 = vmul.f32 %v8927, %v9139
    %v9148 = vmul.f32 %v8930, %v9143
    %9153 = vrot.lane.b32.xlu0 %v9145, 64
    %v9154 = vpop.permute.xlu0 %9153
    %9155 = vrot.lane.b32.xlu0 %v9146, 64
    %v9156 = vpop.permute.xlu0 %9155
    %9157 = vrot.lane.b32.xlu0 %v9147, 64
    %v9158 = vpop.permute.xlu0 %9157
    %9159 = vrot.lane.b32.xlu0 %v9148, 64
    %v9160 = vpop.permute.xlu0 %9159
    %9165 = vst.msk [vmem:[#allocation4 + $0x18] sm:$0xff] %vm8967, %v9154
    %9166 = vst.msk [vmem:[#allocation4 + $0x40] sm:$0xff] %vm8967, %v9156
    %9167 = vst.msk [vmem:[#allocation4 + $0x68] sm:$0xff] %vm8967, %v9158
    %9168 = vst.msk [vmem:[#allocation4 + $0x90] sm:$0xff] %vm8967, %v9160
    %9169 = vset.pattern.permute.xlu0 8
    %9170 = vperm.xlu0 %9169, %v8880
    %v9171 = vpop.permute.xlu0 %9170
    %9173 = vset.pattern.permute.xlu0 8
    %9174 = vperm.xlu0 %9173, %v8881
    %v9175 = vpop.permute.xlu0 %9174
    %9177 = vset.pattern.permute.xlu0 8
    %9178 = vperm.xlu0 %9177, %v8882
    %v9179 = vpop.permute.xlu0 %9178
    %9181 = vset.pattern.permute.xlu0 8
    %9182 = vperm.xlu0 %9181, %v8883
    %v9183 = vpop.permute.xlu0 %9182
    %v9185 = vmul.f32 %v8979, %v9171
    %v9186 = vmul.f32 %v8978, %v9175
    %v9187 = vmul.f32 %v8977, %v9179
    %v9188 = vmul.f32 %v8980, %v9183
    %9189 = vst.msk [vmem:[#allocation4 + $0x20] sm:$0xff] %vm8917, %v9185
    %9190 = vst.msk [vmem:[#allocation4 + $0x48] sm:$0xff] %vm8917, %v9186
    %9191 = vst.msk [vmem:[#allocation4 + $0x70] sm:$0xff] %vm8917, %v9187
    %9192 = vst.msk [vmem:[#allocation4 + $0x98] sm:$0xff] %vm8917, %v9188
    %v9193 = vld [vmem:[#allocation4] sm:$0xff]
    %v9194 = vld [vmem:[#allocation4 + $0x8] sm:$0xff]
    %v9195 = vld [vmem:[#allocation4 + $0x10] sm:$0xff]
    %v9196 = vld [vmem:[#allocation4 + $0x18] sm:$0xff]
    %v9197 = vld [vmem:[#allocation4 + $0x20] sm:$0xff]
    %v9198 = vld [vmem:[#allocation4 + $0x28] sm:$0xff]
    %v9199 = vld [vmem:[#allocation4 + $0x30] sm:$0xff]
    %v9200 = vld [vmem:[#allocation4 + $0x38] sm:$0xff]
    %v9201 = vld [vmem:[#allocation4 + $0x40] sm:$0xff]
    %v9202 = vld [vmem:[#allocation4 + $0x48] sm:$0xff]
    %v9203 = vld [vmem:[#allocation4 + $0x50] sm:$0xff]
    %v9204 = vld [vmem:[#allocation4 + $0x58] sm:$0xff]
    %v9205 = vld [vmem:[#allocation4 + $0x60] sm:$0xff]
    %v9206 = vld [vmem:[#allocation4 + $0x68] sm:$0xff]
    %v9207 = vld [vmem:[#allocation4 + $0x70] sm:$0xff]
    %v9208 = vld [vmem:[#allocation4 + $0x78] sm:$0xff]
    %v9209 = vld [vmem:[#allocation4 + $0x80] sm:$0xff]
    %v9210 = vld [vmem:[#allocation4 + $0x88] sm:$0xff]
    %v9211 = vld [vmem:[#allocation4 + $0x90] sm:$0xff]
    %v9212 = vld [vmem:[#allocation4 + $0x98] sm:$0xff]
    %v9213 = vld [vmem:[%s3] sm:$0xff]
    %v9214 = vld [vmem:[%s3 + $0x8] sm:$0xff]
    %v9215 = vld [vmem:[%s3 + $0x10] sm:$0xff]
    %v9216 = vld [vmem:[%s3 + $0x18] sm:$0xff]
    %v9217 = vld [vmem:[%s3 + $0x20] sm:$0xff]
    %v9218 = vld [vmem:[%s3 + $0x28] sm:$0xff]
    %v9219 = vld [vmem:[%s3 + $0x30] sm:$0xff]
    %v9220 = vld [vmem:[%s3 + $0x38] sm:$0xff]
    %v9221 = vld [vmem:[%s3 + $0x40] sm:$0xff]
    %v9222 = vld [vmem:[%s3 + $0x48] sm:$0xff]
    %v9223 = vld [vmem:[%s3 + $0x50] sm:$0xff]
    %v9224 = vld [vmem:[%s3 + $0x58] sm:$0xff]
    %v9225 = vld [vmem:[%s3 + $0x60] sm:$0xff]
    %v9226 = vld [vmem:[%s3 + $0x68] sm:$0xff]
    %v9227 = vld [vmem:[%s3 + $0x70] sm:$0xff]
    %v9228 = vld [vmem:[%s3 + $0x78] sm:$0xff]
    %v9229 = vld [vmem:[%s3 + $0x80] sm:$0xff]
    %v9230 = vld [vmem:[%s3 + $0x88] sm:$0xff]
    %v9231 = vld [vmem:[%s3 + $0x90] sm:$0xff]
    %v9232 = vld [vmem:[%s3 + $0x98] sm:$0xff]
    %v9233 = vld [vmem:[%s3 + $0xa0] sm:$0xff]
    %v9234 = vld [vmem:[%s3 + $0xa8] sm:$0xff]
    %v9235 = vld [vmem:[%s3 + $0xb0] sm:$0xff]
    %v9236 = vld [vmem:[%s3 + $0xb8] sm:$0xff]
    %v9237 = vld [vmem:[%s3 + $0xc0] sm:$0xff]
    %v9238 = vld [vmem:[%s3 + $0xc8] sm:$0xff]
    %v9239 = vld [vmem:[%s3 + $0xd0] sm:$0xff]
    %v9240 = vld [vmem:[%s3 + $0xd8] sm:$0xff]
    %v9241 = vld [vmem:[%s3 + $0xe0] sm:$0xff]
    %v9242 = vld [vmem:[%s3 + $0xe8] sm:$0xff]
    %v9243 = vld [vmem:[%s3 + $0xf0] sm:$0xff]
    %v9244 = vld [vmem:[%s3 + $0xf8] sm:$0xff]
    %v9245 = vld [vmem:[%s3 + $0x100] sm:$0xff]
    %v9246 = vld [vmem:[%s3 + $0x108] sm:$0xff]
    %v9247 = vld [vmem:[%s3 + $0x110] sm:$0xff]
    %v9248 = vld [vmem:[%s3 + $0x118] sm:$0xff]
    %v9249 = vld [vmem:[%s3 + $0x120] sm:$0xff]
    %v9250 = vld [vmem:[%s3 + $0x128] sm:$0xff]
    %v9251 = vld [vmem:[%s3 + $0x130] sm:$0xff]
    %v9252 = vld [vmem:[%s3 + $0x138] sm:$0xff]
    %v9253 = vld [vmem:[%s3 + $0x140] sm:$0xff]
    %v9254 = vld [vmem:[%s3 + $0x148] sm:$0xff]
    %v9255 = vld [vmem:[%s3 + $0x150] sm:$0xff]
    %v9256 = vld [vmem:[%s3 + $0x158] sm:$0xff]
    %v9257 = vld [vmem:[%s3 + $0x160] sm:$0xff]
    %v9258 = vld [vmem:[%s3 + $0x168] sm:$0xff]
    %v9259 = vld [vmem:[%s3 + $0x170] sm:$0xff]
    %v9260 = vld [vmem:[%s3 + $0x178] sm:$0xff]
    %v9261 = vld [vmem:[%s3 + $0x180] sm:$0xff]
    %v9262 = vld [vmem:[%s3 + $0x188] sm:$0xff]
    %v9263 = vld [vmem:[%s3 + $0x190] sm:$0xff]
    %v9264 = vld [vmem:[%s3 + $0x198] sm:$0xff]
    %v9265 = vld [vmem:[%s3 + $0x1a0] sm:$0xff]
    %v9266 = vld [vmem:[%s3 + $0x1a8] sm:$0xff]
    %v9267 = vld [vmem:[%s3 + $0x1b0] sm:$0xff]
    %v9268 = vld [vmem:[%s3 + $0x1b8] sm:$0xff]
    %v9269 = vld [vmem:[%s3 + $0x1c0] sm:$0xff]
    %v9270 = vld [vmem:[%s3 + $0x1c8] sm:$0xff]
    %v9271 = vld [vmem:[%s3 + $0x1d0] sm:$0xff]
    %v9272 = vld [vmem:[%s3 + $0x1d8] sm:$0xff]
    %v9273 = vld [vmem:[%s3 + $0x1e0] sm:$0xff]
    %v9274 = vld [vmem:[%s3 + $0x1e8] sm:$0xff]
    %v9275 = vld [vmem:[%s3 + $0x1f0] sm:$0xff]
    %v9276 = vld [vmem:[%s3 + $0x1f8] sm:$0xff]
    %v9277 = vld [vmem:[%s3 + $0x200] sm:$0xff]
    %v9278 = vld [vmem:[%s3 + $0x208] sm:$0xff]
    %v9279 = vld [vmem:[%s3 + $0x210] sm:$0xff]
    %v9280 = vld [vmem:[%s3 + $0x218] sm:$0xff]
    %v9281 = vld [vmem:[%s3 + $0x220] sm:$0xff]
    %v9282 = vld [vmem:[%s3 + $0x228] sm:$0xff]
    %v9283 = vld [vmem:[%s3 + $0x230] sm:$0xff]
    %v9284 = vld [vmem:[%s3 + $0x238] sm:$0xff]
    %v9286 = vlaneseq
    %v9287 = vshrl.u32 %v9286, 7
    %v9288 = vsub.s32 0, %v9287
    %v9289 = vrot.slane %v32, %v9288
    %v9290 = vlaneseq
    %v9291 = vshrl.u32 %v9290, 7
    %v9292 = vsub.s32 1, %v9291
    %v9293 = vrot.slane %v32, %v9292
    %9294 = vrot.lane.b32.xlu0 %v9289, 64
    %v9295 = vpop.permute.xlu0 %9294
    %9296 = vrot.lane.b32.xlu0 %v9293, 64
    %v9297 = vpop.permute.xlu0 %9296
    %v9298 = vsel %vm8917, %v9295, %v9297
    %v9301 = vsel %vm8917, %v9197, 0
    %v9304 = vsel %vm8917, %v9202, 0
    %v9307 = vsel %vm8917, %v9207, 0
    %v9310 = vsel %vm8917, %v9212, 0
    %9312 = vmatprep.subr.mxu0 0.0
    %9313 = vmatpush1.msra.mxu0 %v9213
    %9314 = vmatprep.subr.mxu0 0.0
    %9315 = vmatpush1.msra.mxu0 %v9214
    %9316 = vmatprep.subr.mxu0 0.0
    %9317 = vmatpush1.msra.mxu0 %v9215
    %9318 = vmatprep.subr.mxu0 0.0
    %9319 = vmatpush1.msra.mxu0 %v9216
    %9320 = vmatprep.subr.mxu0 0.0
    %9321 = vmatpush1.msra.mxu0 %v9217
    %9322 = vmatprep.subr.mxu0 0.0
    %9323 = vmatpush1.msra.mxu0 %v9218
    %9324 = vmatprep.subr.mxu0 0.0
    %9325 = vmatpush1.msra.mxu0 %v9219
    %9326 = vmatprep.subr.mxu0 0.0
    %9327 = vmatpush1.msra.mxu0 %v9220
    %9328 = vmatprep.subr.mxu0 0.0
    %9329 = vmatpush1.msra.mxu0 %v9221
    %9330 = vmatprep.subr.mxu0 0.0
    %9331 = vmatpush1.msra.mxu0 %v9222
    %9332 = vmatprep.subr.mxu0 0.0
    %9333 = vmatpush1.msra.mxu0 %v9223
    %9334 = vmatprep.subr.mxu0 0.0
    %9335 = vmatpush1.msra.mxu0 %v9224
    %9336 = vmatprep.subr.mxu0 0.0
    %9337 = vmatpush1.msra.mxu0 %v9225
    %9338 = vmatprep.subr.mxu0 0.0
    %9339 = vmatpush1.msra.mxu0 %v9226
    %9340 = vmatprep.subr.mxu0 0.0
    %9341 = vmatpush1.msra.mxu0 %v9227
    %9342 = vmatprep.subr.mxu0 0.0
    %9343 = vmatpush1.msra.mxu0 %v9228
    %9344 = vmatprep.subr.mxu0 0.0
    %9345 = vmatpush1.msra.mxu0 %v9229
    %9346 = vmatprep.subr.mxu0 0.0
    %9347 = vmatpush1.msra.mxu0 %v9230
    %9348 = vmatprep.subr.mxu0 0.0
    %9349 = vmatpush1.msra.mxu0 %v9231
    %9350 = vmatprep.subr.mxu0 0.0
    %9351 = vmatpush1.msra.mxu0 %v9232
    %9352 = vmatprep.subr.mxu0 0.0
    %9353 = vmatpush1.msra.mxu0 %v9233
    %9354 = vmatprep.subr.mxu0 0.0
    %9355 = vmatpush1.msra.mxu0 %v9234
    %9356 = vmatprep.subr.mxu0 0.0
    %9357 = vmatpush1.msra.mxu0 %v9235
    %9358 = vmatprep.subr.mxu0 0.0
    %9359 = vmatpush1.msra.mxu0 %v9236
    %9360 = vmatprep.subr.mxu0 0.0
    %9361 = vmatpush1.msra.mxu0 %v9237
    %9362 = vmatprep.subr.mxu0 0.0
    %9363 = vmatpush1.msra.mxu0 %v9238
    %9364 = vmatprep.subr.mxu0 0.0
    %9365 = vmatpush1.msra.mxu0 %v9239
    %9366 = vmatprep.subr.mxu0 0.0
    %9367 = vmatpush1.msra.mxu0 %v9240
    %9368 = vmatprep.subr.mxu0 0.0
    %9369 = vmatpush1.msra.mxu0 %v9241
    %9370 = vmatprep.subr.mxu0 0.0
    %9371 = vmatpush1.msra.mxu0 %v9242
    %9372 = vmatprep.subr.mxu0 0.0
    %9373 = vmatpush1.msra.mxu0 %v9243
    %9374 = vmatprep.subr.mxu0 0.0
    %9375 = vmatpush1.msra.mxu0 %v9244
    %9376 = vmatprep.mubr.f32.mxu0 %v9194
    %9377 = vmatmul.mubr.f32.gmra.mrb[0].mxu0 %v9193
    %v9378 = vpop.f32.mrb[0].mxu0
    %v9379 = vadd.f32 %v9298, %v9378
    %v9380 = vpop.f32.mrb[0].mxu0
    %9381 = vmatprep.mubr.f32.mxu0 %v9199
    %9382 = vmatmul.mubr.f32.gmra.mrb[0].mxu0 %v9198
    %v9383 = vpop.f32.mrb[0].mxu0
    %v9384 = vadd.f32 %v9298, %v9383
    %v9385 = vpop.f32.mrb[0].mxu0
    %9386 = vmatprep.mubr.f32.mxu0 %v9204
    %9387 = vmatmul.mubr.f32.gmra.mrb[0].mxu0 %v9203
    %v9388 = vpop.f32.mrb[0].mxu0
    %v9389 = vadd.f32 %v9298, %v9388
    %v9390 = vpop.f32.mrb[0].mxu0
    %9391 = vmatprep.mubr.f32.mxu0 %v9209
    %9392 = vmatmul.mubr.f32.gmra.mrb[0].mxu0 %v9208
    %v9393 = vpop.f32.mrb[0].mxu0
    %v9394 = vadd.f32 %v9298, %v9393
    %v9395 = vpop.f32.mrb[0].mxu0
    %9396 = vdwg.mxu0
    %9397 = vmatprep.subr.mxu0 0.0
    %9398 = vmatpush1.msra.mxu0 %v9245
    %9399 = vmatprep.subr.mxu0 0.0
    %9400 = vmatpush1.msra.mxu0 %v9246
    %9401 = vmatprep.subr.mxu0 0.0
    %9402 = vmatpush1.msra.mxu0 %v9247
    %9403 = vmatprep.subr.mxu0 0.0
    %9404 = vmatpush1.msra.mxu0 %v9248
    %9405 = vmatprep.subr.mxu0 0.0
    %9406 = vmatpush1.msra.mxu0 %v9249
    %9407 = vmatprep.subr.mxu0 0.0
    %9408 = vmatpush1.msra.mxu0 %v9250
    %9409 = vmatprep.subr.mxu0 0.0
    %9410 = vmatpush1.msra.mxu0 %v9251
    %9411 = vmatprep.subr.mxu0 0.0
    %9412 = vmatpush1.msra.mxu0 %v9252
    %9413 = vmatprep.subr.mxu0 0.0
    %9414 = vmatpush1.msra.mxu0 %v9253
    %9415 = vmatprep.subr.mxu0 0.0
    %9416 = vmatpush1.msra.mxu0 %v9254
    %9417 = vmatprep.subr.mxu0 0.0
    %9418 = vmatpush1.msra.mxu0 %v9255
    %9419 = vmatprep.subr.mxu0 0.0
    %9420 = vmatpush1.msra.mxu0 %v9256
    %9421 = vmatprep.subr.mxu0 0.0
    %9422 = vmatpush1.msra.mxu0 %v9257
    %9423 = vmatprep.subr.mxu0 0.0
    %9424 = vmatpush1.msra.mxu0 %v9258
    %9425 = vmatprep.subr.mxu0 0.0
    %9426 = vmatpush1.msra.mxu0 %v9259
    %9427 = vmatprep.subr.mxu0 0.0
    %9428 = vmatpush1.msra.mxu0 %v9260
    %9429 = vmatprep.subr.mxu0 0.0
    %9430 = vmatpush1.msra.mxu0 %v9261
    %9431 = vmatprep.subr.mxu0 0.0
    %9432 = vmatpush1.msra.mxu0 %v9262
    %9433 = vmatprep.subr.mxu0 0.0
    %9434 = vmatpush1.msra.mxu0 %v9263
    %9435 = vmatprep.subr.mxu0 0.0
    %9436 = vmatpush1.msra.mxu0 %v9264
    %9437 = vmatprep.subr.mxu0 0.0
    %9438 = vmatpush1.msra.mxu0 %v9265
    %9439 = vmatprep.subr.mxu0 0.0
    %9440 = vmatpush1.msra.mxu0 %v9266
    %9441 = vmatprep.subr.mxu0 0.0
    %9442 = vmatpush1.msra.mxu0 %v9267
    %9443 = vmatprep.subr.mxu0 0.0
    %9444 = vmatpush1.msra.mxu0 %v9268
    %9445 = vmatprep.subr.mxu0 0.0
    %9446 = vmatpush1.msra.mxu0 %v9269
    %9447 = vmatprep.subr.mxu0 0.0
    %9448 = vmatpush1.msra.mxu0 %v9270
    %9449 = vmatprep.subr.mxu0 0.0
    %9450 = vmatpush1.msra.mxu0 %v9271
    %9451 = vmatprep.subr.mxu0 0.0
    %9452 = vmatpush1.msra.mxu0 %v9272
    %9453 = vmatprep.subr.mxu0 0.0
    %9454 = vmatpush1.msra.mxu0 %v9273
    %9455 = vmatprep.subr.mxu0 0.0
    %9456 = vmatpush1.msra.mxu0 %v9274
    %9457 = vmatprep.subr.mxu0 0.0
    %9458 = vmatpush1.msra.mxu0 %v9275
    %9459 = vmatprep.subr.mxu0 0.0
    %9460 = vmatpush1.msra.mxu0 %v9276
    %9461 = vmatprep.mubr.f32.mxu0 %v9196
    %9462 = vmatmul.mubr.f32.gmra.mrb[0].mxu0 %v9195
    %v9463 = vpop.f32.mrb[0].mxu0
    %v9464 = vadd.f32 %v9379, %v9463
    %v9465 = vpop.f32.mrb[0].mxu0
    %9466 = vmatprep.mubr.f32.mxu0 %v9201
    %9467 = vmatmul.mubr.f32.gmra.mrb[0].mxu0 %v9200
    %v9468 = vpop.f32.mrb[0].mxu0
    %v9469 = vadd.f32 %v9384, %v9468
    %v9470 = vpop.f32.mrb[0].mxu0
    %9471 = vmatprep.mubr.f32.mxu0 %v9206
    %9472 = vmatmul.mubr.f32.gmra.mrb[0].mxu0 %v9205
    %v9473 = vpop.f32.mrb[0].mxu0
    %v9474 = vadd.f32 %v9389, %v9473
    %v9475 = vpop.f32.mrb[0].mxu0
    %9476 = vmatprep.mubr.f32.mxu0 %v9211
    %9477 = vmatmul.mubr.f32.gmra.mrb[0].mxu0 %v9210
    %v9478 = vpop.f32.mrb[0].mxu0
    %v9479 = vadd.f32 %v9394, %v9478
    %v9480 = vpop.f32.mrb[0].mxu0
    %9481 = vdwg.mxu0
    %9482 = vmatprep.subr.mxu0 0.0
    %9483 = vmatpush1.msra.mxu0 %v9277
    %9484 = vmatprep.subr.mxu0 0.0
    %9485 = vmatpush1.msra.mxu0 %v9278
    %9486 = vmatprep.subr.mxu0 0.0
    %9487 = vmatpush1.msra.mxu0 %v9279
    %9488 = vmatprep.subr.mxu0 0.0
    %9489 = vmatpush1.msra.mxu0 %v9280
    %9490 = vmatprep.subr.mxu0 0.0
    %9491 = vmatpush1.msra.mxu0 %v9281
    %9492 = vmatprep.subr.mxu0 0.0
    %9493 = vmatpush1.msra.mxu0 %v9282
    %9494 = vmatprep.subr.mxu0 0.0
    %9495 = vmatpush1.msra.mxu0 %v9283
    %9496 = vmatprep.subr.mxu0 0.0
    %9497 = vmatpush1.msra.mxu0 %v9284
    %9498 = vmatprep.subr.mxu0 0.0
    %9499 = vmatpush1.msra.mxu0 0.0
    %9500 = vmatprep.subr.mxu0 0.0
    %9501 = vmatpush1.msra.mxu0 0.0
    %9502 = vmatprep.subr.mxu0 0.0
    %9503 = vmatpush1.msra.mxu0 0.0
    %9504 = vmatprep.subr.mxu0 0.0
    %9505 = vmatpush1.msra.mxu0 0.0
    %9506 = vmatprep.subr.mxu0 0.0
    %9507 = vmatpush1.msra.mxu0 0.0
    %9508 = vmatprep.subr.mxu0 0.0
    %9509 = vmatpush1.msra.mxu0 0.0
    %9510 = vmatprep.subr.mxu0 0.0
    %9511 = vmatpush1.msra.mxu0 0.0
    %9512 = vmatprep.subr.mxu0 0.0
    %9513 = vmatpush1.msra.mxu0 0.0
    %9514 = vmatprep.subr.mxu0 0.0
    %9515 = vmatpush1.msra.mxu0 0.0
    %9516 = vmatprep.subr.mxu0 0.0
    %9517 = vmatpush1.msra.mxu0 0.0
    %9518 = vmatprep.subr.mxu0 0.0
    %9519 = vmatpush1.msra.mxu0 0.0
    %9520 = vmatprep.subr.mxu0 0.0
    %9521 = vmatpush1.msra.mxu0 0.0
    %9522 = vmatprep.subr.mxu0 0.0
    %9523 = vmatpush1.msra.mxu0 0.0
    %9524 = vmatprep.subr.mxu0 0.0
    %9525 = vmatpush1.msra.mxu0 0.0
    %9526 = vmatprep.subr.mxu0 0.0
    %9527 = vmatpush1.msra.mxu0 0.0
    %9528 = vmatprep.subr.mxu0 0.0
    %9529 = vmatpush1.msra.mxu0 0.0
    %9530 = vmatprep.subr.mxu0 0.0
    %9531 = vmatpush1.msra.mxu0 0.0
    %9532 = vmatprep.subr.mxu0 0.0
    %9533 = vmatpush1.msra.mxu0 0.0
    %9534 = vmatprep.subr.mxu0 0.0
    %9535 = vmatpush1.msra.mxu0 0.0
    %9536 = vmatprep.subr.mxu0 0.0
    %9537 = vmatpush1.msra.mxu0 0.0
    %9538 = vmatprep.subr.mxu0 0.0
    %9539 = vmatpush1.msra.mxu0 0.0
    %9540 = vmatprep.subr.mxu0 0.0
    %9541 = vmatpush1.msra.mxu0 0.0
    %9542 = vmatprep.subr.mxu0 0.0
    %9543 = vmatpush1.msra.mxu0 0.0
    %9544 = vmatprep.subr.mxu0 0.0
    %9545 = vmatpush1.msra.mxu0 0.0
    %9546 = vmatprep.mubr.f32.mxu0 0.0
    %9547 = vmatmul.mubr.f32.gmra.mrb[0].mxu0 %v9301
    %v9548 = vpop.f32.mrb[0].mxu0
    %v9549 = vadd.f32 %v9464, %v9548
    %v9550 = vpop.f32.mrb[0].mxu0
    %9551 = vmatprep.mubr.f32.mxu0 0.0
    %9552 = vmatmul.mubr.f32.gmra.mrb[0].mxu0 %v9304
    %v9553 = vpop.f32.mrb[0].mxu0
    %v9554 = vadd.f32 %v9469, %v9553
    %v9555 = vpop.f32.mrb[0].mxu0
    %9556 = vmatprep.mubr.f32.mxu0 0.0
    %9557 = vmatmul.mubr.f32.gmra.mrb[0].mxu0 %v9307
    %v9558 = vpop.f32.mrb[0].mxu0
    %v9559 = vadd.f32 %v9474, %v9558
    %v9560 = vpop.f32.mrb[0].mxu0
    %9561 = vmatprep.mubr.f32.mxu0 0.0
    %9562 = vmatmul.mubr.f32.gmra.mrb[0].mxu0 %v9310
    %v9563 = vpop.f32.mrb[0].mxu0
    %v9564 = vadd.f32 %v9479, %v9563
    %v9565 = vpop.f32.mrb[0].mxu0
    %9566 = vdwg.mxu0
    %v9567 = vmax.f32 %v9549, 0.0
    %v9568 = vmax.f32 %v9554, 0.0
    %v9569 = vmax.f32 %v9559, 0.0
    %v9570 = vmax.f32 %v9564, 0.0
    %v9571 = vld [vmem:[%s7 + $0x280] sm:$0x3]
    %v9573 = vsel %vm7156, %v9571, 0
    %9575 = vmatprep.subr.mxu0 0.0
    %9576 = vmatpush1.msra.mxu0 %v9567
    %9577 = vmatprep.subr.mxu0 0.0
    %9578 = vmatpush1.msra.mxu0 %v9568
    %9579 = vmatprep.subr.mxu0 0.0
    %9580 = vmatpush1.msra.mxu0 %v9569
    %9581 = vmatprep.subr.mxu0 0.0
    %9582 = vmatpush1.msra.mxu0 %v9570
    %9583 = vmatprep.subr.mxu0 0.0
    %9584 = vmatpush1.msra.mxu0 0.0
    %9585 = vmatprep.subr.mxu0 0.0
    %9586 = vmatpush1.msra.mxu0 0.0
    %9587 = vmatprep.subr.mxu0 0.0
    %9588 = vmatpush1.msra.mxu0 0.0
    %9589 = vmatprep.subr.mxu0 0.0
    %9590 = vmatpush1.msra.mxu0 0.0
    %9591 = vmatprep.subr.mxu0 0.0
    %9592 = vmatpush1.msra.mxu0 0.0
    %9593 = vmatprep.subr.mxu0 0.0
    %9594 = vmatpush1.msra.mxu0 0.0
    %9595 = vmatprep.subr.mxu0 0.0
    %9596 = vmatpush1.msra.mxu0 0.0
    %9597 = vmatprep.subr.mxu0 0.0
    %9598 = vmatpush1.msra.mxu0 0.0
    %9599 = vmatprep.subr.mxu0 0.0
    %9600 = vmatpush1.msra.mxu0 0.0
    %9601 = vmatprep.subr.mxu0 0.0
    %9602 = vmatpush1.msra.mxu0 0.0
    %9603 = vmatprep.subr.mxu0 0.0
    %9604 = vmatpush1.msra.mxu0 0.0
    %9605 = vmatprep.subr.mxu0 0.0
    %9606 = vmatpush1.msra.mxu0 0.0
    %9607 = vmatprep.subr.mxu0 0.0
    %9608 = vmatpush1.msra.mxu0 0.0
    %9609 = vmatprep.subr.mxu0 0.0
    %9610 = vmatpush1.msra.mxu0 0.0
    %9611 = vmatprep.subr.mxu0 0.0
    %9612 = vmatpush1.msra.mxu0 0.0
    %9613 = vmatprep.subr.mxu0 0.0
    %9614 = vmatpush1.msra.mxu0 0.0
    %9615 = vmatprep.subr.mxu0 0.0
    %9616 = vmatpush1.msra.mxu0 0.0
    %9617 = vmatprep.subr.mxu0 0.0
    %9618 = vmatpush1.msra.mxu0 0.0
    %9619 = vmatprep.subr.mxu0 0.0
    %9620 = vmatpush1.msra.mxu0 0.0
    %9621 = vmatprep.subr.mxu0 0.0
    %9622 = vmatpush1.msra.mxu0 0.0
    %9623 = vmatprep.subr.mxu0 0.0
    %9624 = vmatpush1.msra.mxu0 0.0
    %9625 = vmatprep.subr.mxu0 0.0
    %9626 = vmatpush1.msra.mxu0 0.0
    %9627 = vmatprep.subr.mxu0 0.0
    %9628 = vmatpush1.msra.mxu0 0.0
    %9629 = vmatprep.subr.mxu0 0.0
    %9630 = vmatpush1.msra.mxu0 0.0
    %9631 = vmatprep.subr.mxu0 0.0
    %9632 = vmatpush1.msra.mxu0 0.0
    %9633 = vmatprep.subr.mxu0 0.0
    %9634 = vmatpush1.msra.mxu0 0.0
    %9635 = vmatprep.subr.mxu0 0.0
    %9636 = vmatpush1.msra.mxu0 0.0
    %9637 = vmatprep.subr.mxu0 0.0
    %9638 = vmatpush1.msra.mxu0 0.0
    %9639 = vmatprep.mubr.f32.mxu0 0.0
    %9640 = vmatmul.mubr.f32.gmra.mrb[0].mxu0 %v9573
    %v9641 = vpop.f32.mrb[0].mxu0
    %v9642 = vadd.f32 0.0, %v9641
    %v9643 = vpop.f32.mrb[0].mxu0
    %9644 = vdwg.mxu0
    %v9645 = vld [vmem:[%s4] sm:$0xff]
    %v9646 = vld [vmem:[%s4 + $0x8] sm:$0xff]
    %v9647 = vld [vmem:[%s4 + $0x10] sm:$0xff]
    %v9648 = vld [vmem:[%s4 + $0x18] sm:$0xff]
    %v9649 = vld [vmem:[%s4 + $0x20] sm:$0xff]
    %v9650 = vld [vmem:[%s4 + $0x28] sm:$0xff]
    %v9651 = vld [vmem:[%s4 + $0x30] sm:$0xff]
    %v9652 = vld [vmem:[%s4 + $0x38] sm:$0xff]
    %v9653 = vld [vmem:[%s4 + $0x40] sm:$0xff]
    %v9654 = vld [vmem:[%s4 + $0x48] sm:$0xff]
    %v9655 = vld [vmem:[%s4 + $0x50] sm:$0xff]
    %v9656 = vld [vmem:[%s4 + $0x58] sm:$0xff]
    %v9657 = vld [vmem:[%s4 + $0x60] sm:$0xff]
    %v9658 = vld [vmem:[%s4 + $0x68] sm:$0xff]
    %v9659 = vld [vmem:[%s4 + $0x70] sm:$0xff]
    %v9660 = vld [vmem:[%s4 + $0x78] sm:$0xff]
    %v9662 = vlaneseq
    %v9663 = vshrl.u32 %v9662, 7
    %v9664 = vsub.s32 0, %v9663
    %v9665 = vrot.slane %v33, %v9664
    %9666 = vrot.lane.b32.xlu0 %v9665, 64
    %v9667 = vpop.permute.xlu0 %9666
    %9669 = vmatprep.subr.mxu0 0.0
    %9670 = vmatpush1.msra.mxu0 %v9645
    %9671 = vmatprep.subr.mxu0 0.0
    %9672 = vmatpush1.msra.mxu0 %v9646
    %9673 = vmatprep.subr.mxu0 0.0
    %9674 = vmatpush1.msra.mxu0 %v9647
    %9675 = vmatprep.subr.mxu0 0.0
    %9676 = vmatpush1.msra.mxu0 %v9648
    %9677 = vmatprep.subr.mxu0 0.0
    %9678 = vmatpush1.msra.mxu0 %v9649
    %9679 = vmatprep.subr.mxu0 0.0
    %9680 = vmatpush1.msra.mxu0 %v9650
    %9681 = vmatprep.subr.mxu0 0.0
    %9682 = vmatpush1.msra.mxu0 %v9651
    %9683 = vmatprep.subr.mxu0 0.0
    %9684 = vmatpush1.msra.mxu0 %v9652
    %9685 = vmatprep.subr.mxu0 0.0
    %9686 = vmatpush1.msra.mxu0 %v9653
    %9687 = vmatprep.subr.mxu0 0.0
    %9688 = vmatpush1.msra.mxu0 %v9654
    %9689 = vmatprep.subr.mxu0 0.0
    %9690 = vmatpush1.msra.mxu0 %v9655
    %9691 = vmatprep.subr.mxu0 0.0
    %9692 = vmatpush1.msra.mxu0 %v9656
    %9693 = vmatprep.subr.mxu0 0.0
    %9694 = vmatpush1.msra.mxu0 %v9657
    %9695 = vmatprep.subr.mxu0 0.0
    %9696 = vmatpush1.msra.mxu0 %v9658
    %9697 = vmatprep.subr.mxu0 0.0
    %9698 = vmatpush1.msra.mxu0 %v9659
    %9699 = vmatprep.subr.mxu0 0.0
    %9700 = vmatpush1.msra.mxu0 %v9660
    %9701 = vmatprep.subr.mxu0 0.0
    %9702 = vmatpush1.msra.mxu0 0.0
    %9703 = vmatprep.subr.mxu0 0.0
    %9704 = vmatpush1.msra.mxu0 0.0
    %9705 = vmatprep.subr.mxu0 0.0
    %9706 = vmatpush1.msra.mxu0 0.0
    %9707 = vmatprep.subr.mxu0 0.0
    %9708 = vmatpush1.msra.mxu0 0.0
    %9709 = vmatprep.subr.mxu0 0.0
    %9710 = vmatpush1.msra.mxu0 0.0
    %9711 = vmatprep.subr.mxu0 0.0
    %9712 = vmatpush1.msra.mxu0 0.0
    %9713 = vmatprep.subr.mxu0 0.0
    %9714 = vmatpush1.msra.mxu0 0.0
    %9715 = vmatprep.subr.mxu0 0.0
    %9716 = vmatpush1.msra.mxu0 0.0
    %9717 = vmatprep.subr.mxu0 0.0
    %9718 = vmatpush1.msra.mxu0 0.0
    %9719 = vmatprep.subr.mxu0 0.0
    %9720 = vmatpush1.msra.mxu0 0.0
    %9721 = vmatprep.subr.mxu0 0.0
    %9722 = vmatpush1.msra.mxu0 0.0
    %9723 = vmatprep.subr.mxu0 0.0
    %9724 = vmatpush1.msra.mxu0 0.0
    %9725 = vmatprep.subr.mxu0 0.0
    %9726 = vmatpush1.msra.mxu0 0.0
    %9727 = vmatprep.subr.mxu0 0.0
    %9728 = vmatpush1.msra.mxu0 0.0
    %9729 = vmatprep.subr.mxu0 0.0
    %9730 = vmatpush1.msra.mxu0 0.0
    %9731 = vmatprep.subr.mxu0 0.0
    %9732 = vmatpush1.msra.mxu0 0.0
    %9733 = vmatprep.mubr.f32.mxu0 0.0
    %9734 = vmatmul.mubr.f32.gmra.mrb[0].mxu0 %v9642
    %v9735 = vpop.f32.mrb[0].mxu0
    %v9736 = vadd.f32 %v9667, %v9735
    %v9737 = vpop.f32.mrb[0].mxu0
    %9738 = vdwg.mxu0
    %vm9739 = vcmask 74752
    %9740 = vst.msk [vmem:[#allocation5] sm:$0x3] %vm9739, %v9736
    // Predicated region
    $region34: #{forward.1} parent=1 // pred_check
      _
    $region35: #{forward.1} parent=1 // pred_check_branch
      %9742 = sbr.rel (0) target = $region37
    $region36: #{forward.1} parent=1 // pred_region
      %s9744 = ssub.s32 32, 32
      %9745 = vsyncadd [#allocation6], %s9744
      %s9747 = sshll.u32 [#allocation5], 4
      %s9748 = int_to_ptr.vmem [resolvable:$true] %s9747
      %9750 = dma.vmem_to_hbm [thread:$0]  %s9748, 32, %s8, [#allocation6]
    $region37: #{forward.1} parent=1 // pred_fallthru
      _
    // Predicated region
    $region38: #{forward.1} parent=1 // pred_check
      _
    $region39: #{forward.1} parent=1 // pred_check_branch
      %9752 = sbr.rel (0) target = $region41
    $region40: #{forward.1} parent=1 // pred_region
      %9753 = dma.done [#allocation6], 32
    $region41: #{forward.1} parent=1 // pred_fallthru
      _
    %9754 = vsyncpa [#allocation6], 1

</llo_original>
